<compile_context>
chip_gen: v5e
topology: v5e:2x2
jax: 0.10.0
libtpu: 0.0.40
codegen_flags: <defaults>
</compile_context>

<pallas_src>
import math

import jax
import jax.numpy as jnp
from jax.experimental import pallas as pl
from jax.experimental.pallas import tpu as pltpu

# ---- small config (consistent with DETRConfig field structure) ----
BATCH = 2
NUM_QUERIES = 8        # L : object queries (target sequence length)
NUM_TOKENS = 16        # S : encoded image tokens (source sequence length)
HIDDEN = 32            # config.hidden_size
NUM_HEADS = 4          # config.num_attention_heads
HEAD_DIM = HIDDEN // NUM_HEADS
FFN_DIM = HIDDEN * 4   # config.ffn_scale_factor (scaled down)
NUM_LAYERS = 2         # config.num_decoder_layers (scaled down)
LN_EPS = 1e-5          # config.layer_norm_eps
INIT_STD = 0.02        # config.initializer_range

_SCALE = 1.0 / math.sqrt(HEAD_DIM)
_NEG = -1e30           # additive key-padding bias (exp underflows to 0, never NaN)
# TODO(synk): a fully-masked key row gives a uniform softmax here instead of
# PyTorch's NaN — deliberate, NaN-safe deviation.


# ---------------------------------------------------------------- kernel helpers
def _layernorm(v, gamma, beta):
    mu = jnp.mean(v, axis=-1, keepdims=True)
    var = jnp.mean((v - mu) ** 2, axis=-1, keepdims=True)
    return (v - mu) * jax.lax.rsqrt(var + LN_EPS) * gamma + beta


def _linear(x, w, b):
    """x: (N, Cin) f32, w: (Cin, Cout) f32, b: (1, Cout) f32."""
    return jnp.dot(x, w, preferred_element_type=jnp.float32) + b


def _split_heads(t, rows):
    """(B*rows, H*D) -> (B*H, rows, D) with z = b*H + h.

    Only tile-aligned reshapes (HEAD_DIM == 8 == sublane tile) and minor-two-dim
    transposes; no per-head lane slices / concatenates."""
    t = t.reshape(BATCH, rows, HIDDEN)                     # split leading dim
    t = jnp.swapaxes(t, -1, -2)                            # (B, C, rows)
    t = t.reshape(BATCH * NUM_HEADS, HEAD_DIM, rows)       # C -> (H outer, D sublane)
    return jnp.swapaxes(t, -1, -2)                         # (B*H, rows, D)


def _merge_heads(y, rows):
    """(B*H, rows, D) -> (B*rows, H*D); inverse of _split_heads."""
    y = jnp.swapaxes(y, -1, -2)                            # (B*H, D, rows)
    y = y.reshape(BATCH, HIDDEN, rows)                     # merge (H, D) -> C
    y = jnp.swapaxes(y, -1, -2)                            # (B, rows, C)
    return y.reshape(BATCH * rows, HIDDEN)


def _attention(q, k, v, rows_q, rows_kv, bias=None):
    """Multi-head scaled dot-product attention; heads+batch folded into one
    leading batch axis, contraction via batched 3-D einsums."""
    qh = _split_heads(q, rows_q)           # (Z, L, D)
    kh = _split_heads(k, rows_kv)          # (Z, S, D)
    vh = _split_heads(v, rows_kv)          # (Z, S, D)
    att = jnp.einsum('zld,zsd->zls', qh, kh,
                     preferred_element_type=jnp.float32) * _SCALE
    if bias is not None:
        att = att + bias                   # (Z, 1, S) additive key-padding bias
    att = jax.nn.softmax(att, axis=-1)
    # TODO(synk): attention-prob dropout omitted (eval mode => identity)
    y = jnp.einsum('zls,zsd->zld', att, vh, preferred_element_type=jnp.float32)
    return _merge_heads(y, rows_q)


# ---------------------------------------------------------------- decoder kernel
def decoder_kernel(
    oqe_ref, enc_ref, encpos_ref, bias_ref,               # activations / mask
    ln_ref, final_ln_ref,                                  # LayerNorm params
    sa_w_ref, sa_b_ref, ca_w_ref, ca_b_ref,                # attention q/k/v/o
    ffn1_w_ref, ffn1_b_ref, ffn2_w_ref, ffn2_b_ref,        # FFN
    out_ref,                                               # (num_layers, B, L, C)
):
    oqe = oqe_ref[...]                         # (B*L, C)
    enc = enc_ref[...]                         # (B*S, C)
    encpos = encpos_ref[...]                   # (B*S, C)
    bias = bias_ref[...][:, None, :]           # (B*H, 1, S)
    fg, fb = final_ln_ref[0:1], final_ln_ref[1:2]

    # x = torch.zeros_like(object_query_embedding), flattened to (B*L, C)
    x = jnp.zeros((BATCH * NUM_QUERIES, HIDDEN), jnp.float32)

    # Static unroll over layers: everything already resident in VMEM.
    for l in range(NUM_LAYERS):
        ln = ln_ref[l]                                     # (6, C)
        sa_w, sa_b = sa_w_ref[l], sa_b_ref[l]              # (4, C, C), (4, C)
        ca_w, ca_b = ca_w_ref[l], ca_b_ref[l]

        # ---- self-attention: q = k = norm1(x) + oqe, v = norm1(x), no mask ----
        xn = _layernorm(x, ln[0:1], ln[1:2])
        qk_in = xn + oqe
        q = _linear(qk_in, sa_w[0], sa_b[0:1])
        k = _linear(qk_in, sa_w[1], sa_b[1:2])
        v = _linear(xn, sa_w[2], sa_b[2:3])
        y = _attention(q, k, v, NUM_QUERIES, NUM_QUERIES)
        x = x + _linear(y, sa_w[3], sa_b[3:4])

        # ---- cross-attention: q = norm2(x)+oqe, k = enc+pos, v = enc ----
        xn = _layernorm(x, ln[2:3], ln[3:4])
        q = _linear(xn + oqe, ca_w[0], ca_b[0:1])
        k = _linear(encpos, ca_w[1], ca_b[1:2])
        v = _linear(enc, ca_w[2], ca_b[2:3])
        y = _attention(q, k, v, NUM_QUERIES, NUM_TOKENS, bias=bias)
        x = x + _linear(y, ca_w[3], ca_b[3:4])

        # ---- FFN: Linear -> GELU(tanh) -> Linear ----
        xn = _layernorm(x, ln[4:5], ln[5:6])
        h = jax.nn.gelu(_linear(xn, ffn1_w_ref[l], ffn1_b_ref[l:l + 1]),
                        approximate=True)
        x = x + _linear(h, ffn2_w_ref[l], ffn2_b_ref[l:l + 1])

        # Decoder.norm applied to every layer's output (shared final LayerNorm)
        out_ref[l] = _layernorm(x, fg, fb).reshape(BATCH, NUM_QUERIES, HIDDEN)


# ---------------------------------------------------------------- wrapper
@jax.jit
def detr_decoder(encoded_image_tokens, position_embedding, object_query_embedding,
                 key_padding_mask, params):
    B, S, C = encoded_image_tokens.shape
    L = object_query_embedding.shape[1]
    assert (B, S, C, L) == (BATCH, NUM_TOKENS, HIDDEN, NUM_QUERIES)

    oqe = object_query_embedding.reshape(B * L, C).astype(jnp.float32)
    enc = encoded_image_tokens.reshape(B * S, C).astype(jnp.float32)
    encpos = (encoded_image_tokens + position_embedding).reshape(B * S, C)
    encpos = encpos.astype(jnp.float32)

    # additive key-padding bias in the kernel's z = b*H + h row order: (B*H, S)
    bias = jnp.where(key_padding_mask, _NEG, 0.0).astype(jnp.float32)      # (B, S)
    bias = jnp.broadcast_to(bias[:, None, :], (B, NUM_HEADS, S))
    bias = bias.reshape(B * NUM_HEADS, S)

    vmem = pl.BlockSpec(memory_space=pltpu.MemorySpace.VMEM)   # whole array in VMEM

    out = pl.pallas_call(
        decoder_kernel,
        out_shape=jax.ShapeDtypeStruct((NUM_LAYERS, B, L, C), jnp.float32),
        in_specs=[vmem] * 14,
        out_specs=vmem,
    )(
        oqe, enc, encpos, bias,
        params["ln"], params["final_ln"],
        params["sa_w"], params["sa_b"], params["ca_w"], params["ca_b"],
        params["ffn1_w"], params["ffn1_b"], params["ffn2_w"], params["ffn2_b"],
    )
    # (num_layers, B, L, C) -> (B, num_layers, L, C) == torch.stack(outputs, dim=1)
    return out.transpose(1, 0, 2, 3)


# ---------------------------------------------------------------- synthetic params
def init_params(key):
    """Follows Decoder._init_weights: Linear W ~ N(0, 0.02), b = 0; LayerNorm g=1, b=0.
    Weights stored (in, out), f32, stacked over layers; biases separate f32."""
    ks = jax.random.split(key, 4)

    def w(k, shape):
        return INIT_STD * jax.random.normal(k, shape, jnp.float32)

    ones = jnp.ones((HIDDEN,), jnp.float32)
    zeros = jnp.zeros((HIDDEN,), jnp.float32)
    ln_layer = jnp.stack([ones, zeros, ones, zeros, ones, zeros])          # (6, C)

    return {
        "ln": jnp.tile(ln_layer[None], (NUM_LAYERS, 1, 1)),                # norm1/2/3
        "final_ln": jnp.stack([ones, zeros]),                              # Decoder.norm
        "sa_w": w(ks[0], (NUM_LAYERS, 4, HIDDEN, HIDDEN)),                 # q,k,v,o
        "sa_b": jnp.zeros((NUM_LAYERS, 4, HIDDEN), jnp.float32),
        "ca_w": w(ks[1], (NUM_LAYERS, 4, HIDDEN, HIDDEN)),
        "ca_b": jnp.zeros((NUM_LAYERS, 4, HIDDEN), jnp.float32),
        "ffn1_w": w(ks[2], (NUM_LAYERS, HIDDEN, FFN_DIM)),
        "ffn1_b": jnp.zeros((NUM_LAYERS, FFN_DIM), jnp.float32),
        "ffn2_w": w(ks[3], (NUM_LAYERS, FFN_DIM, HIDDEN)),
        "ffn2_b": jnp.zeros((NUM_LAYERS, HIDDEN), jnp.float32),
    }


# ---------------------------------------------------------------- pure-JAX reference
def decoder_reference(encoded, pos, oqe, key_padding_mask, params):
    B, S, C = encoded.shape

    def layernorm(v, g, b):
        mu = v.mean(-1, keepdims=True)
        var = ((v - mu) ** 2).mean(-1, keepdims=True)
        return (v - mu) / jnp.sqrt(var + LN_EPS) * g + b

    def mha(q_in, k_in, v_in, w, b, mask=None):
        q = q_in @ w[0] + b[0]
        k = k_in @ w[1] + b[1]
        v = v_in @ w[2] + b[2]
        split = lambda t: t.reshape(B, -1, NUM_HEADS, HEAD_DIM).transpose(0, 2, 1, 3)
        q, k, v = split(q), split(k), split(v)
        att = (q @ jnp.swapaxes(k, -1, -2)) * _SCALE
        if mask is not None:
            att = att + jnp.where(mask, _NEG, 0.0)[:, None, None, :]
        att = jax.nn.softmax(att, axis=-1)
        y = (att @ v).transpose(0, 2, 1, 3).reshape(B, -1, C)
        return y @ w[3] + b[3]

    x = jnp.zeros_like(oqe)
    outs = []
    fg, fb = params["final_ln"][0], params["final_ln"][1]
    for l in range(NUM_LAYERS):
        ln = params["ln"][l]
        xn = layernorm(x, ln[0], ln[1])
        x = x + mha(xn + oqe, xn + oqe, xn, params["sa_w"][l], params["sa_b"][l])
        xn = layernorm(x, ln[2], ln[3])
        x = x + mha(xn + oqe, encoded + pos, encoded,
                    params["ca_w"][l], params["ca_b"][l], mask=key_padding_mask)
        xn = layernorm(x, ln[4], ln[5])
        h = jax.nn.gelu(xn @ params["ffn1_w"][l] + params["ffn1_b"][l],
                        approximate=True)
        x = x + h @ params["ffn2_w"][l] + params["ffn2_b"][l]
        outs.append(layernorm(x, fg, fb))
    return jnp.stack(outs, axis=1)                 # (B, num_layers, L, C)


if __name__ == "__main__":
    key = jax.random.PRNGKey(0)
    k_enc, k_pos, k_oqe, k_par = jax.random.split(key, 4)

    encoded = jax.random.normal(k_enc, (BATCH, NUM_TOKENS, HIDDEN), jnp.float32)
    pos_emb = jax.random.normal(k_pos, (BATCH, NUM_TOKENS, HIDDEN), jnp.float32)
    obj_query = jax.random.normal(k_oqe, (BATCH, NUM_QUERIES, HIDDEN), jnp.float32)
    # last 3 image-token positions of batch element 1 are padding
    key_padding_mask = jnp.zeros((BATCH, NUM_TOKENS), jnp.bool_).at[1, -3:].set(True)

    params = init_params(k_par)
    out = detr_decoder(encoded, pos_emb, obj_query, key_padding_mask, params)
    jax.block_until_ready(out)

    assert out.shape == (BATCH, NUM_LAYERS, NUM_QUERIES, HIDDEN)
    assert bool(jnp.all(jnp.isfinite(out)))

    ref = decoder_reference(encoded, pos_emb, obj_query, key_padding_mask, params)
    max_err = float(jnp.max(jnp.abs(out - ref)))
    assert max_err < 2e-2, f"kernel/reference mismatch: max abs err {max_err}"

    print("KERNEL_OK")
</pallas_src>

<mosaic_0001>
module attributes {stable_mosaic.version = 11 : i64} {
  func.func @decoder_kernel(%arg0: memref<16x32xf32, #tpu.memory_space<vmem>>, %arg1: memref<32x32xf32, #tpu.memory_space<vmem>>, %arg2: memref<32x32xf32, #tpu.memory_space<vmem>>, %arg3: memref<8x16xf32, #tpu.memory_space<vmem>>, %arg4: memref<2x6x32xf32, #tpu.memory_space<vmem>>, %arg5: memref<2x32xf32, #tpu.memory_space<vmem>>, %arg6: memref<2x4x32x32xf32, #tpu.memory_space<vmem>>, %arg7: memref<2x4x32xf32, #tpu.memory_space<vmem>>, %arg8: memref<2x4x32x32xf32, #tpu.memory_space<vmem>>, %arg9: memref<2x4x32xf32, #tpu.memory_space<vmem>>, %arg10: memref<2x32x128xf32, #tpu.memory_space<vmem>>, %arg11: memref<2x128xf32, #tpu.memory_space<vmem>>, %arg12: memref<2x128x32xf32, #tpu.memory_space<vmem>>, %arg13: memref<2x32xf32, #tpu.memory_space<vmem>>, %arg14: memref<2x2x8x32xf32, #tpu.memory_space<vmem>>) attributes {dimension_semantics = [], scalar_prefetch = 0 : i64, scratch_operands = 0 : i64, tpu.core_type = #tpu.core_type<tc>} {
    %c0 = arith.constant 0 : index
    %c0_0 = arith.constant 0 : index
    %0 = vector.load %arg0[%c0, %c0_0] : memref<16x32xf32, #tpu.memory_space<vmem>>, vector<16x32xf32>
    %c0_1 = arith.constant 0 : index
    %c0_2 = arith.constant 0 : index
    %1 = vector.load %arg1[%c0_1, %c0_2] : memref<32x32xf32, #tpu.memory_space<vmem>>, vector<32x32xf32>
    %c0_3 = arith.constant 0 : index
    %c0_4 = arith.constant 0 : index
    %2 = vector.load %arg2[%c0_3, %c0_4] : memref<32x32xf32, #tpu.memory_space<vmem>>, vector<32x32xf32>
    %c0_5 = arith.constant 0 : index
    %c0_6 = arith.constant 0 : index
    %3 = vector.load %arg3[%c0_5, %c0_6] : memref<8x16xf32, #tpu.memory_space<vmem>>, vector<8x16xf32>
    %4 = vector.shape_cast %3 : vector<8x16xf32> to vector<8x1x16xf32>
    %c0_7 = arith.constant 0 : index
    %c0_8 = arith.constant 0 : index
    %5 = vector.load %arg5[%c0_7, %c0_8] : memref<2x32xf32, #tpu.memory_space<vmem>>, vector<1x32xf32>
    %c1 = arith.constant 1 : index
    %c0_9 = arith.constant 0 : index
    %6 = vector.load %arg5[%c1, %c0_9] : memref<2x32xf32, #tpu.memory_space<vmem>>, vector<1x32xf32>
    %cst = arith.constant 0.000000e+00 : f32
    %7 = vector.broadcast %cst : f32 to vector<16x32xf32>
    %c0_10 = arith.constant 0 : index
    %c0_11 = arith.constant 0 : index
    %c0_12 = arith.constant 0 : index
    %8 = vector.load %arg4[%c0_10, %c0_11, %c0_12] : memref<2x6x32xf32, #tpu.memory_space<vmem>>, vector<1x6x32xf32>
    %9 = vector.shape_cast %8 : vector<1x6x32xf32> to vector<6x32xf32>
    %c0_13 = arith.constant 0 : index
    %c0_14 = arith.constant 0 : index
    %c0_15 = arith.constant 0 : index
    %c0_16 = arith.constant 0 : index
    %10 = vector.load %arg6[%c0_13, %c0_14, %c0_15, %c0_16] : memref<2x4x32x32xf32, #tpu.memory_space<vmem>>, vector<1x4x32x32xf32>
    %11 = vector.shape_cast %10 : vector<1x4x32x32xf32> to vector<4x32x32xf32>
    %c0_17 = arith.constant 0 : index
    %c0_18 = arith.constant 0 : index
    %c0_19 = arith.constant 0 : index
    %12 = vector.load %arg7[%c0_17, %c0_18, %c0_19] : memref<2x4x32xf32, #tpu.memory_space<vmem>>, vector<1x4x32xf32>
    %13 = vector.shape_cast %12 : vector<1x4x32xf32> to vector<4x32xf32>
    %c0_20 = arith.constant 0 : index
    %c0_21 = arith.constant 0 : index
    %c0_22 = arith.constant 0 : index
    %c0_23 = arith.constant 0 : index
    %14 = vector.load %arg8[%c0_20, %c0_21, %c0_22, %c0_23] : memref<2x4x32x32xf32, #tpu.memory_space<vmem>>, vector<1x4x32x32xf32>
    %15 = vector.shape_cast %14 : vector<1x4x32x32xf32> to vector<4x32x32xf32>
    %c0_24 = arith.constant 0 : index
    %c0_25 = arith.constant 0 : index
    %c0_26 = arith.constant 0 : index
    %16 = vector.load %arg9[%c0_24, %c0_25, %c0_26] : memref<2x4x32xf32, #tpu.memory_space<vmem>>, vector<1x4x32xf32>
    %17 = vector.shape_cast %16 : vector<1x4x32xf32> to vector<4x32xf32>
    %18 = vector.extract_strided_slice %9 {offsets = [0, 0], sizes = [1, 32], strides = [1, 1]} : vector<6x32xf32> to vector<1x32xf32>
    %19 = vector.extract_strided_slice %9 {offsets = [1, 0], sizes = [1, 32], strides = [1, 1]} : vector<6x32xf32> to vector<1x32xf32>
    %cst_27 = arith.constant dense<0.000000e+00> : vector<16xf32>
    %20 = vector.multi_reduction <add>, %7, %cst_27 [1] : vector<16x32xf32> to vector<16xf32>
    %21 = vector.shape_cast %20 : vector<16xf32> to vector<16x1xf32>
    %cst_28 = arith.constant 3.200000e+01 : f32
    %22 = vector.broadcast %cst_28 : f32 to vector<16x1xf32>
    %23 = arith.divf %21, %22 : vector<16x1xf32>
    %24 = vector.broadcast %23 : vector<16x1xf32> to vector<16x32xf32>
    %25 = arith.subf %7, %24 : vector<16x32xf32>
    %26 = arith.mulf %25, %25 : vector<16x32xf32>
    %cst_29 = arith.constant dense<0.000000e+00> : vector<16xf32>
    %27 = vector.multi_reduction <add>, %26, %cst_29 [1] : vector<16x32xf32> to vector<16xf32>
    %28 = vector.shape_cast %27 : vector<16xf32> to vector<16x1xf32>
    %cst_30 = arith.constant 3.200000e+01 : f32
    %29 = vector.broadcast %cst_30 : f32 to vector<16x1xf32>
    %30 = arith.divf %28, %29 : vector<16x1xf32>
    %31 = vector.broadcast %23 : vector<16x1xf32> to vector<16x32xf32>
    %32 = arith.subf %7, %31 : vector<16x32xf32>
    %cst_31 = arith.constant 9.99999974E-6 : f32
    %33 = vector.broadcast %cst_31 : f32 to vector<16x1xf32>
    %34 = arith.addf %30, %33 : vector<16x1xf32>
    %35 = math.rsqrt %34 : vector<16x1xf32>
    %36 = vector.broadcast %35 : vector<16x1xf32> to vector<16x32xf32>
    %37 = arith.mulf %32, %36 : vector<16x32xf32>
    %38 = vector.broadcast %18 : vector<1x32xf32> to vector<16x32xf32>
    %39 = arith.mulf %37, %38 : vector<16x32xf32>
    %40 = vector.broadcast %19 : vector<1x32xf32> to vector<16x32xf32>
    %41 = arith.addf %39, %40 : vector<16x32xf32>
    %42 = arith.addf %41, %0 : vector<16x32xf32>
    %43 = vector.extract_strided_slice %11 {offsets = [0, 0, 0], sizes = [1, 32, 32], strides = [1, 1, 1]} : vector<4x32x32xf32> to vector<1x32x32xf32>
    %44 = vector.shape_cast %43 : vector<1x32x32xf32> to vector<32x32xf32>
    %45 = vector.extract_strided_slice %13 {offsets = [0, 0], sizes = [1, 32], strides = [1, 1]} : vector<4x32xf32> to vector<1x32xf32>
    %cst_32 = arith.constant dense<0.000000e+00> : vector<16x32xf32>
    %46 = tpu.matmul %42, %44, %cst_32 {dimension_numbers = #tpu.dot_dimension_numbers<[1], [0], [0], [1], [0, 0, 1, 1], [], []>} : vector<16x32xf32>, vector<32x32xf32>, vector<16x32xf32> -> vector<16x32xf32>
    %47 = vector.broadcast %45 : vector<1x32xf32> to vector<16x32xf32>
    %48 = arith.addf %46, %47 : vector<16x32xf32>
    %49 = vector.extract_strided_slice %11 {offsets = [1, 0, 0], sizes = [1, 32, 32], strides = [1, 1, 1]} : vector<4x32x32xf32> to vector<1x32x32xf32>
    %50 = vector.shape_cast %49 : vector<1x32x32xf32> to vector<32x32xf32>
    %51 = vector.extract_strided_slice %13 {offsets = [1, 0], sizes = [1, 32], strides = [1, 1]} : vector<4x32xf32> to vector<1x32xf32>
    %cst_33 = arith.constant dense<0.000000e+00> : vector<16x32xf32>
    %52 = tpu.matmul %42, %50, %cst_33 {dimension_numbers = #tpu.dot_dimension_numbers<[1], [0], [0], [1], [0, 0, 1, 1], [], []>} : vector<16x32xf32>, vector<32x32xf32>, vector<16x32xf32> -> vector<16x32xf32>
    %53 = vector.broadcast %51 : vector<1x32xf32> to vector<16x32xf32>
    %54 = arith.addf %52, %53 : vector<16x32xf32>
    %55 = vector.extract_strided_slice %11 {offsets = [2, 0, 0], sizes = [1, 32, 32], strides = [1, 1, 1]} : vector<4x32x32xf32> to vector<1x32x32xf32>
    %56 = vector.shape_cast %55 : vector<1x32x32xf32> to vector<32x32xf32>
    %57 = vector.extract_strided_slice %13 {offsets = [2, 0], sizes = [1, 32], strides = [1, 1]} : vector<4x32xf32> to vector<1x32xf32>
    %cst_34 = arith.constant dense<0.000000e+00> : vector<16x32xf32>
    %58 = tpu.matmul %41, %56, %cst_34 {dimension_numbers = #tpu.dot_dimension_numbers<[1], [0], [0], [1], [0, 0, 1, 1], [], []>} : vector<16x32xf32>, vector<32x32xf32>, vector<16x32xf32> -> vector<16x32xf32>
    %59 = vector.broadcast %57 : vector<1x32xf32> to vector<16x32xf32>
    %60 = arith.addf %58, %59 : vector<16x32xf32>
    %61 = vector.shape_cast %48 : vector<16x32xf32> to vector<2x8x32xf32>
    %62 = tpu.transpose %61, [0, 2, 1] : vector<2x8x32xf32> -> vector<2x32x8xf32>
    %63 = vector.shape_cast %62 : vector<2x32x8xf32> to vector<8x8x8xf32>
    %64 = tpu.transpose %63, [0, 2, 1] : vector<8x8x8xf32> -> vector<8x8x8xf32>
    %65 = vector.shape_cast %54 : vector<16x32xf32> to vector<2x8x32xf32>
    %66 = tpu.transpose %65, [0, 2, 1] : vector<2x8x32xf32> -> vector<2x32x8xf32>
    %67 = vector.shape_cast %66 : vector<2x32x8xf32> to vector<8x8x8xf32>
    %68 = tpu.transpose %67, [0, 2, 1] : vector<8x8x8xf32> -> vector<8x8x8xf32>
    %69 = vector.shape_cast %60 : vector<16x32xf32> to vector<2x8x32xf32>
    %70 = tpu.transpose %69, [0, 2, 1] : vector<2x8x32xf32> -> vector<2x32x8xf32>
    %71 = vector.shape_cast %70 : vector<2x32x8xf32> to vector<8x8x8xf32>
    %72 = tpu.transpose %71, [0, 2, 1] : vector<8x8x8xf32> -> vector<8x8x8xf32>
    "tpu.trace_start"() <{level = 10 : i32, message = "zld,zsd->zls"}> : () -> ()
    %cst_35 = arith.constant dense<0.000000e+00> : vector<8x8x8xf32>
    %73 = tpu.matmul %64, %68, %cst_35 {dimension_numbers = #tpu.dot_dimension_numbers<[2], [2], [1], [1], [0, 0, 0, 1, 1, 1], [0], [0]>} : vector<8x8x8xf32>, vector<8x8x8xf32>, vector<8x8x8xf32> -> vector<8x8x8xf32>
    "tpu.trace_stop"() : () -> ()
    %cst_36 = arith.constant 0.353553385 : f32
    %74 = vector.broadcast %cst_36 : f32 to vector<8x8x8xf32>
    %75 = arith.mulf %73, %74 : vector<8x8x8xf32>
    %cst_37 = arith.constant dense<0xFF800000> : vector<8x8xf32>
    %76 = vector.multi_reduction <maximumf>, %75, %cst_37 [2] : vector<8x8x8xf32> to vector<8x8xf32>
    %cst_38 = arith.constant 0xFF800000 : f32
    %77 = vector.broadcast %cst_38 : f32 to vector<8x8xf32>
    %78 = arith.maximumf %77, %76 : vector<8x8xf32>
    %79 = vector.shape_cast %78 : vector<8x8xf32> to vector<8x8x1xf32>
    %80 = vector.broadcast %79 : vector<8x8x1xf32> to vector<8x8x8xf32>
    %81 = arith.subf %75, %80 : vector<8x8x8xf32>
    %82 = math.exp %81 : vector<8x8x8xf32>
    %cst_39 = arith.constant dense<0.000000e+00> : vector<8x8xf32>
    %83 = vector.multi_reduction <add>, %82, %cst_39 [2] : vector<8x8x8xf32> to vector<8x8xf32>
    %84 = vector.shape_cast %83 : vector<8x8xf32> to vector<8x8x1xf32>
    %85 = vector.broadcast %84 : vector<8x8x1xf32> to vector<8x8x8xf32>
    %86 = arith.divf %82, %85 : vector<8x8x8xf32>
    "tpu.trace_start"() <{level = 10 : i32, message = "zls,zsd->zld"}> : () -> ()
    %cst_40 = arith.constant dense<0.000000e+00> : vector<8x8x8xf32>
    %87 = tpu.matmul %86, %72, %cst_40 {dimension_numbers = #tpu.dot_dimension_numbers<[2], [1], [1], [2], [0, 0, 0, 1, 1, 2], [0], [0]>} : vector<8x8x8xf32>, vector<8x8x8xf32>, vector<8x8x8xf32> -> vector<8x8x8xf32>
    "tpu.trace_stop"() : () -> ()
    %88 = tpu.transpose %87, [0, 2, 1] : vector<8x8x8xf32> -> vector<8x8x8xf32>
    %89 = vector.shape_cast %88 : vector<8x8x8xf32> to vector<2x32x8xf32>
    %90 = tpu.transpose %89, [0, 2, 1] : vector<2x32x8xf32> -> vector<2x8x32xf32>
    %91 = vector.shape_cast %90 : vector<2x8x32xf32> to vector<16x32xf32>
    %92 = vector.extract_strided_slice %11 {offsets = [3, 0, 0], sizes = [1, 32, 32], strides = [1, 1, 1]} : vector<4x32x32xf32> to vector<1x32x32xf32>
    %93 = vector.shape_cast %92 : vector<1x32x32xf32> to vector<32x32xf32>
    %94 = vector.extract_strided_slice %13 {offsets = [3, 0], sizes = [1, 32], strides = [1, 1]} : vector<4x32xf32> to vector<1x32xf32>
    %cst_41 = arith.constant dense<0.000000e+00> : vector<16x32xf32>
    %95 = tpu.matmul %91, %93, %cst_41 {dimension_numbers = #tpu.dot_dimension_numbers<[1], [0], [0], [1], [0, 0, 1, 1], [], []>} : vector<16x32xf32>, vector<32x32xf32>, vector<16x32xf32> -> vector<16x32xf32>
    %96 = vector.broadcast %94 : vector<1x32xf32> to vector<16x32xf32>
    %97 = arith.addf %95, %96 : vector<16x32xf32>
    %98 = arith.addf %7, %97 : vector<16x32xf32>
    %99 = vector.extract_strided_slice %9 {offsets = [2, 0], sizes = [1, 32], strides = [1, 1]} : vector<6x32xf32> to vector<1x32xf32>
    %100 = vector.extract_strided_slice %9 {offsets = [3, 0], sizes = [1, 32], strides = [1, 1]} : vector<6x32xf32> to vector<1x32xf32>
    %cst_42 = arith.constant dense<0.000000e+00> : vector<16xf32>
    %101 = vector.multi_reduction <add>, %98, %cst_42 [1] : vector<16x32xf32> to vector<16xf32>
    %102 = vector.shape_cast %101 : vector<16xf32> to vector<16x1xf32>
    %cst_43 = arith.constant 3.200000e+01 : f32
    %103 = vector.broadcast %cst_43 : f32 to vector<16x1xf32>
    %104 = arith.divf %102, %103 : vector<16x1xf32>
    %105 = vector.broadcast %104 : vector<16x1xf32> to vector<16x32xf32>
    %106 = arith.subf %98, %105 : vector<16x32xf32>
    %107 = arith.mulf %106, %106 : vector<16x32xf32>
    %cst_44 = arith.constant dense<0.000000e+00> : vector<16xf32>
    %108 = vector.multi_reduction <add>, %107, %cst_44 [1] : vector<16x32xf32> to vector<16xf32>
    %109 = vector.shape_cast %108 : vector<16xf32> to vector<16x1xf32>
    %cst_45 = arith.constant 3.200000e+01 : f32
    %110 = vector.broadcast %cst_45 : f32 to vector<16x1xf32>
    %111 = arith.divf %109, %110 : vector<16x1xf32>
    %112 = vector.broadcast %104 : vector<16x1xf32> to vector<16x32xf32>
    %113 = arith.subf %98, %112 : vector<16x32xf32>
    %cst_46 = arith.constant 9.99999974E-6 : f32
    %114 = vector.broadcast %cst_46 : f32 to vector<16x1xf32>
    %115 = arith.addf %111, %114 : vector<16x1xf32>
    %116 = math.rsqrt %115 : vector<16x1xf32>
    %117 = vector.broadcast %116 : vector<16x1xf32> to vector<16x32xf32>
    %118 = arith.mulf %113, %117 : vector<16x32xf32>
    %119 = vector.broadcast %99 : vector<1x32xf32> to vector<16x32xf32>
    %120 = arith.mulf %118, %119 : vector<16x32xf32>
    %121 = vector.broadcast %100 : vector<1x32xf32> to vector<16x32xf32>
    %122 = arith.addf %120, %121 : vector<16x32xf32>
    %123 = arith.addf %122, %0 : vector<16x32xf32>
    %124 = vector.extract_strided_slice %15 {offsets = [0, 0, 0], sizes = [1, 32, 32], strides = [1, 1, 1]} : vector<4x32x32xf32> to vector<1x32x32xf32>
    %125 = vector.shape_cast %124 : vector<1x32x32xf32> to vector<32x32xf32>
    %126 = vector.extract_strided_slice %17 {offsets = [0, 0], sizes = [1, 32], strides = [1, 1]} : vector<4x32xf32> to vector<1x32xf32>
    %cst_47 = arith.constant dense<0.000000e+00> : vector<16x32xf32>
    %127 = tpu.matmul %123, %125, %cst_47 {dimension_numbers = #tpu.dot_dimension_numbers<[1], [0], [0], [1], [0, 0, 1, 1], [], []>} : vector<16x32xf32>, vector<32x32xf32>, vector<16x32xf32> -> vector<16x32xf32>
    %128 = vector.broadcast %126 : vector<1x32xf32> to vector<16x32xf32>
    %129 = arith.addf %127, %128 : vector<16x32xf32>
    %130 = vector.extract_strided_slice %15 {offsets = [1, 0, 0], sizes = [1, 32, 32], strides = [1, 1, 1]} : vector<4x32x32xf32> to vector<1x32x32xf32>
    %131 = vector.shape_cast %130 : vector<1x32x32xf32> to vector<32x32xf32>
    %132 = vector.extract_strided_slice %17 {offsets = [1, 0], sizes = [1, 32], strides = [1, 1]} : vector<4x32xf32> to vector<1x32xf32>
    %cst_48 = arith.constant dense<0.000000e+00> : vector<32x32xf32>
    %133 = tpu.matmul %2, %131, %cst_48 {dimension_numbers = #tpu.dot_dimension_numbers<[1], [0], [0], [1], [0, 0, 1, 1], [], []>} : vector<32x32xf32>, vector<32x32xf32>, vector<32x32xf32> -> vector<32x32xf32>
    %134 = vector.broadcast %132 : vector<1x32xf32> to vector<32x32xf32>
    %135 = arith.addf %133, %134 : vector<32x32xf32>
    %136 = vector.extract_strided_slice %15 {offsets = [2, 0, 0], sizes = [1, 32, 32], strides = [1, 1, 1]} : vector<4x32x32xf32> to vector<1x32x32xf32>
    %137 = vector.shape_cast %136 : vector<1x32x32xf32> to vector<32x32xf32>
    %138 = vector.extract_strided_slice %17 {offsets = [2, 0], sizes = [1, 32], strides = [1, 1]} : vector<4x32xf32> to vector<1x32xf32>
    %cst_49 = arith.constant dense<0.000000e+00> : vector<32x32xf32>
    %139 = tpu.matmul %1, %137, %cst_49 {dimension_numbers = #tpu.dot_dimension_numbers<[1], [0], [0], [1], [0, 0, 1, 1], [], []>} : vector<32x32xf32>, vector<32x32xf32>, vector<32x32xf32> -> vector<32x32xf32>
    %140 = vector.broadcast %138 : vector<1x32xf32> to vector<32x32xf32>
    %141 = arith.addf %139, %140 : vector<32x32xf32>
    %142 = vector.shape_cast %129 : vector<16x32xf32> to vector<2x8x32xf32>
    %143 = tpu.transpose %142, [0, 2, 1] : vector<2x8x32xf32> -> vector<2x32x8xf32>
    %144 = vector.shape_cast %143 : vector<2x32x8xf32> to vector<8x8x8xf32>
    %145 = tpu.transpose %144, [0, 2, 1] : vector<8x8x8xf32> -> vector<8x8x8xf32>
    %146 = vector.shape_cast %135 : vector<32x32xf32> to vector<2x16x32xf32>
    %147 = tpu.transpose %146, [0, 2, 1] : vector<2x16x32xf32> -> vector<2x32x16xf32>
    %148 = vector.shape_cast %147 : vector<2x32x16xf32> to vector<8x8x16xf32>
    %149 = tpu.transpose %148, [0, 2, 1] : vector<8x8x16xf32> -> vector<8x16x8xf32>
    %150 = vector.shape_cast %141 : vector<32x32xf32> to vector<2x16x32xf32>
    %151 = tpu.transpose %150, [0, 2, 1] : vector<2x16x32xf32> -> vector<2x32x16xf32>
    %152 = vector.shape_cast %151 : vector<2x32x16xf32> to vector<8x8x16xf32>
    %153 = tpu.transpose %152, [0, 2, 1] : vector<8x8x16xf32> -> vector<8x16x8xf32>
    "tpu.trace_start"() <{level = 10 : i32, message = "zld,zsd->zls"}> : () -> ()
    %cst_50 = arith.constant dense<0.000000e+00> : vector<8x8x16xf32>
    %154 = tpu.matmul %145, %149, %cst_50 {dimension_numbers = #tpu.dot_dimension_numbers<[2], [2], [1], [1], [0, 0, 0, 1, 1, 1], [0], [0]>} : vector<8x8x8xf32>, vector<8x16x8xf32>, vector<8x8x16xf32> -> vector<8x8x16xf32>
    "tpu.trace_stop"() : () -> ()
    %cst_51 = arith.constant 0.353553385 : f32
    %155 = vector.broadcast %cst_51 : f32 to vector<8x8x16xf32>
    %156 = arith.mulf %154, %155 : vector<8x8x16xf32>
    %157 = vector.broadcast %4 : vector<8x1x16xf32> to vector<8x8x16xf32>
    %158 = arith.addf %156, %157 : vector<8x8x16xf32>
    %cst_52 = arith.constant dense<0xFF800000> : vector<8x8xf32>
    %159 = vector.multi_reduction <maximumf>, %158, %cst_52 [2] : vector<8x8x16xf32> to vector<8x8xf32>
    %cst_53 = arith.constant 0xFF800000 : f32
    %160 = vector.broadcast %cst_53 : f32 to vector<8x8xf32>
    %161 = arith.maximumf %160, %159 : vector<8x8xf32>
    %162 = vector.shape_cast %161 : vector<8x8xf32> to vector<8x8x1xf32>
    %163 = vector.broadcast %162 : vector<8x8x1xf32> to vector<8x8x16xf32>
    %164 = arith.subf %158, %163 : vector<8x8x16xf32>
    %165 = math.exp %164 : vector<8x8x16xf32>
    %cst_54 = arith.constant dense<0.000000e+00> : vector<8x8xf32>
    %166 = vector.multi_reduction <add>, %165, %cst_54 [2] : vector<8x8x16xf32> to vector<8x8xf32>
    %167 = vector.shape_cast %166 : vector<8x8xf32> to vector<8x8x1xf32>
    %168 = vector.broadcast %167 : vector<8x8x1xf32> to vector<8x8x16xf32>
    %169 = arith.divf %165, %168 : vector<8x8x16xf32>
    "tpu.trace_start"() <{level = 10 : i32, message = "zls,zsd->zld"}> : () -> ()
    %cst_55 = arith.constant dense<0.000000e+00> : vector<8x8x8xf32>
    %170 = tpu.matmul %169, %153, %cst_55 {dimension_numbers = #tpu.dot_dimension_numbers<[2], [1], [1], [2], [0, 0, 0, 1, 1, 2], [0], [0]>} : vector<8x8x16xf32>, vector<8x16x8xf32>, vector<8x8x8xf32> -> vector<8x8x8xf32>
    "tpu.trace_stop"() : () -> ()
    %171 = tpu.transpose %170, [0, 2, 1] : vector<8x8x8xf32> -> vector<8x8x8xf32>
    %172 = vector.shape_cast %171 : vector<8x8x8xf32> to vector<2x32x8xf32>
    %173 = tpu.transpose %172, [0, 2, 1] : vector<2x32x8xf32> -> vector<2x8x32xf32>
    %174 = vector.shape_cast %173 : vector<2x8x32xf32> to vector<16x32xf32>
    %175 = vector.extract_strided_slice %15 {offsets = [3, 0, 0], sizes = [1, 32, 32], strides = [1, 1, 1]} : vector<4x32x32xf32> to vector<1x32x32xf32>
    %176 = vector.shape_cast %175 : vector<1x32x32xf32> to vector<32x32xf32>
    %177 = vector.extract_strided_slice %17 {offsets = [3, 0], sizes = [1, 32], strides = [1, 1]} : vector<4x32xf32> to vector<1x32xf32>
    %cst_56 = arith.constant dense<0.000000e+00> : vector<16x32xf32>
    %178 = tpu.matmul %174, %176, %cst_56 {dimension_numbers = #tpu.dot_dimension_numbers<[1], [0], [0], [1], [0, 0, 1, 1], [], []>} : vector<16x32xf32>, vector<32x32xf32>, vector<16x32xf32> -> vector<16x32xf32>
    %179 = vector.broadcast %177 : vector<1x32xf32> to vector<16x32xf32>
    %180 = arith.addf %178, %179 : vector<16x32xf32>
    %181 = arith.addf %98, %180 : vector<16x32xf32>
    %182 = vector.extract_strided_slice %9 {offsets = [4, 0], sizes = [1, 32], strides = [1, 1]} : vector<6x32xf32> to vector<1x32xf32>
    %183 = vector.extract_strided_slice %9 {offsets = [5, 0], sizes = [1, 32], strides = [1, 1]} : vector<6x32xf32> to vector<1x32xf32>
    %cst_57 = arith.constant dense<0.000000e+00> : vector<16xf32>
    %184 = vector.multi_reduction <add>, %181, %cst_57 [1] : vector<16x32xf32> to vector<16xf32>
    %185 = vector.shape_cast %184 : vector<16xf32> to vector<16x1xf32>
    %cst_58 = arith.constant 3.200000e+01 : f32
    %186 = vector.broadcast %cst_58 : f32 to vector<16x1xf32>
    %187 = arith.divf %185, %186 : vector<16x1xf32>
    %188 = vector.broadcast %187 : vector<16x1xf32> to vector<16x32xf32>
    %189 = arith.subf %181, %188 : vector<16x32xf32>
    %190 = arith.mulf %189, %189 : vector<16x32xf32>
    %cst_59 = arith.constant dense<0.000000e+00> : vector<16xf32>
    %191 = vector.multi_reduction <add>, %190, %cst_59 [1] : vector<16x32xf32> to vector<16xf32>
    %192 = vector.shape_cast %191 : vector<16xf32> to vector<16x1xf32>
    %cst_60 = arith.constant 3.200000e+01 : f32
    %193 = vector.broadcast %cst_60 : f32 to vector<16x1xf32>
    %194 = arith.divf %192, %193 : vector<16x1xf32>
    %195 = vector.broadcast %187 : vector<16x1xf32> to vector<16x32xf32>
    %196 = arith.subf %181, %195 : vector<16x32xf32>
    %cst_61 = arith.constant 9.99999974E-6 : f32
    %197 = vector.broadcast %cst_61 : f32 to vector<16x1xf32>
    %198 = arith.addf %194, %197 : vector<16x1xf32>
    %199 = math.rsqrt %198 : vector<16x1xf32>
    %200 = vector.broadcast %199 : vector<16x1xf32> to vector<16x32xf32>
    %201 = arith.mulf %196, %200 : vector<16x32xf32>
    %202 = vector.broadcast %182 : vector<1x32xf32> to vector<16x32xf32>
    %203 = arith.mulf %201, %202 : vector<16x32xf32>
    %204 = vector.broadcast %183 : vector<1x32xf32> to vector<16x32xf32>
    %205 = arith.addf %203, %204 : vector<16x32xf32>
    %c0_62 = arith.constant 0 : index
    %c0_63 = arith.constant 0 : index
    %c0_64 = arith.constant 0 : index
    %206 = vector.load %arg10[%c0_62, %c0_63, %c0_64] : memref<2x32x128xf32, #tpu.memory_space<vmem>>, vector<1x32x128xf32>
    %207 = vector.shape_cast %206 : vector<1x32x128xf32> to vector<32x128xf32>
    %c0_65 = arith.constant 0 : index
    %c0_66 = arith.constant 0 : index
    %208 = vector.load %arg11[%c0_65, %c0_66] : memref<2x128xf32, #tpu.memory_space<vmem>>, vector<1x128xf32>
    %cst_67 = arith.constant dense<0.000000e+00> : vector<16x128xf32>
    %209 = tpu.matmul %205, %207, %cst_67 {dimension_numbers = #tpu.dot_dimension_numbers<[1], [0], [0], [1], [0, 0, 1, 1], [], []>} : vector<16x32xf32>, vector<32x128xf32>, vector<16x128xf32> -> vector<16x128xf32>
    %210 = vector.broadcast %208 : vector<1x128xf32> to vector<16x128xf32>
    %211 = arith.addf %209, %210 : vector<16x128xf32>
    %212 = arith.mulf %211, %211 : vector<16x128xf32>
    %213 = arith.mulf %211, %212 : vector<16x128xf32>
    %cst_68 = arith.constant 4.471500e-02 : f32
    %214 = vector.broadcast %cst_68 : f32 to vector<16x128xf32>
    %215 = arith.mulf %214, %213 : vector<16x128xf32>
    %216 = arith.addf %211, %215 : vector<16x128xf32>
    %cst_69 = arith.constant 0.797884583 : f32
    %217 = vector.broadcast %cst_69 : f32 to vector<16x128xf32>
    %218 = arith.mulf %217, %216 : vector<16x128xf32>
    %219 = math.tanh %218 : vector<16x128xf32>
    %cst_70 = arith.constant 1.000000e+00 : f32
    %220 = vector.broadcast %cst_70 : f32 to vector<16x128xf32>
    %221 = arith.addf %220, %219 : vector<16x128xf32>
    %cst_71 = arith.constant 5.000000e-01 : f32
    %222 = vector.broadcast %cst_71 : f32 to vector<16x128xf32>
    %223 = arith.mulf %222, %221 : vector<16x128xf32>
    %224 = arith.mulf %211, %223 : vector<16x128xf32>
    %c0_72 = arith.constant 0 : index
    %c0_73 = arith.constant 0 : index
    %c0_74 = arith.constant 0 : index
    %225 = vector.load %arg12[%c0_72, %c0_73, %c0_74] : memref<2x128x32xf32, #tpu.memory_space<vmem>>, vector<1x128x32xf32>
    %226 = vector.shape_cast %225 : vector<1x128x32xf32> to vector<128x32xf32>
    %c0_75 = arith.constant 0 : index
    %c0_76 = arith.constant 0 : index
    %227 = vector.load %arg13[%c0_75, %c0_76] : memref<2x32xf32, #tpu.memory_space<vmem>>, vector<1x32xf32>
    %cst_77 = arith.constant dense<0.000000e+00> : vector<16x32xf32>
    %228 = tpu.matmul %224, %226, %cst_77 {dimension_numbers = #tpu.dot_dimension_numbers<[1], [0], [0], [1], [0, 0, 1, 1], [], []>} : vector<16x128xf32>, vector<128x32xf32>, vector<16x32xf32> -> vector<16x32xf32>
    %229 = vector.broadcast %227 : vector<1x32xf32> to vector<16x32xf32>
    %230 = arith.addf %228, %229 : vector<16x32xf32>
    %231 = arith.addf %181, %230 : vector<16x32xf32>
    %cst_78 = arith.constant dense<0.000000e+00> : vector<16xf32>
    %232 = vector.multi_reduction <add>, %231, %cst_78 [1] : vector<16x32xf32> to vector<16xf32>
    %233 = vector.shape_cast %232 : vector<16xf32> to vector<16x1xf32>
    %cst_79 = arith.constant 3.200000e+01 : f32
    %234 = vector.broadcast %cst_79 : f32 to vector<16x1xf32>
    %235 = arith.divf %233, %234 : vector<16x1xf32>
    %236 = vector.broadcast %235 : vector<16x1xf32> to vector<16x32xf32>
    %237 = arith.subf %231, %236 : vector<16x32xf32>
    %238 = arith.mulf %237, %237 : vector<16x32xf32>
    %cst_80 = arith.constant dense<0.000000e+00> : vector<16xf32>
    %239 = vector.multi_reduction <add>, %238, %cst_80 [1] : vector<16x32xf32> to vector<16xf32>
    %240 = vector.shape_cast %239 : vector<16xf32> to vector<16x1xf32>
    %cst_81 = arith.constant 3.200000e+01 : f32
    %241 = vector.broadcast %cst_81 : f32 to vector<16x1xf32>
    %242 = arith.divf %240, %241 : vector<16x1xf32>
    %243 = vector.broadcast %235 : vector<16x1xf32> to vector<16x32xf32>
    %244 = arith.subf %231, %243 : vector<16x32xf32>
    %cst_82 = arith.constant 9.99999974E-6 : f32
    %245 = vector.broadcast %cst_82 : f32 to vector<16x1xf32>
    %246 = arith.addf %242, %245 : vector<16x1xf32>
    %247 = math.rsqrt %246 : vector<16x1xf32>
    %248 = vector.broadcast %247 : vector<16x1xf32> to vector<16x32xf32>
    %249 = arith.mulf %244, %248 : vector<16x32xf32>
    %250 = vector.broadcast %5 : vector<1x32xf32> to vector<16x32xf32>
    %251 = arith.mulf %249, %250 : vector<16x32xf32>
    %252 = vector.broadcast %6 : vector<1x32xf32> to vector<16x32xf32>
    %253 = arith.addf %251, %252 : vector<16x32xf32>
    %254 = vector.shape_cast %253 : vector<16x32xf32> to vector<2x8x32xf32>
    %c0_83 = arith.constant 0 : index
    %c0_84 = arith.constant 0 : index
    %c0_85 = arith.constant 0 : index
    %c0_86 = arith.constant 0 : index
    %255 = vector.load %arg14[%c0_83, %c0_84, %c0_85, %c0_86] : memref<2x2x8x32xf32, #tpu.memory_space<vmem>>, vector<1x2x8x32xf32>
    %256 = vector.shape_cast %255 : vector<1x2x8x32xf32> to vector<2x8x32xf32>
    %257 = vector.shape_cast %254 : vector<2x8x32xf32> to vector<1x2x8x32xf32>
    tpu.vector_store %arg14[%c0_83, %c0_84, %c0_85, %c0_86], %257 {strides = array<i32>} : memref<2x2x8x32xf32, #tpu.memory_space<vmem>>, vector<1x2x8x32xf32>,
    %c1_87 = arith.constant 1 : index
    %c0_88 = arith.constant 0 : index
    %c0_89 = arith.constant 0 : index
    %258 = vector.load %arg4[%c1_87, %c0_88, %c0_89] : memref<2x6x32xf32, #tpu.memory_space<vmem>>, vector<1x6x32xf32>
    %259 = vector.shape_cast %258 : vector<1x6x32xf32> to vector<6x32xf32>
    %c1_90 = arith.constant 1 : index
    %c0_91 = arith.constant 0 : index
    %c0_92 = arith.constant 0 : index
    %c0_93 = arith.constant 0 : index
    %260 = vector.load %arg6[%c1_90, %c0_91, %c0_92, %c0_93] : memref<2x4x32x32xf32, #tpu.memory_space<vmem>>, vector<1x4x32x32xf32>
    %261 = vector.shape_cast %260 : vector<1x4x32x32xf32> to vector<4x32x32xf32>
    %c1_94 = arith.constant 1 : index
    %c0_95 = arith.constant 0 : index
    %c0_96 = arith.constant 0 : index
    %262 = vector.load %arg7[%c1_94, %c0_95, %c0_96] : memref<2x4x32xf32, #tpu.memory_space<vmem>>, vector<1x4x32xf32>
    %263 = vector.shape_cast %262 : vector<1x4x32xf32> to vector<4x32xf32>
    %c1_97 = arith.constant 1 : index
    %c0_98 = arith.constant 0 : index
    %c0_99 = arith.constant 0 : index
    %c0_100 = arith.constant 0 : index
    %264 = vector.load %arg8[%c1_97, %c0_98, %c0_99, %c0_100] : memref<2x4x32x32xf32, #tpu.memory_space<vmem>>, vector<1x4x32x32xf32>
    %265 = vector.shape_cast %264 : vector<1x4x32x32xf32> to vector<4x32x32xf32>
    %c1_101 = arith.constant 1 : index
    %c0_102 = arith.constant 0 : index
    %c0_103 = arith.constant 0 : index
    %266 = vector.load %arg9[%c1_101, %c0_102, %c0_103] : memref<2x4x32xf32, #tpu.memory_space<vmem>>, vector<1x4x32xf32>
    %267 = vector.shape_cast %266 : vector<1x4x32xf32> to vector<4x32xf32>
    %268 = vector.extract_strided_slice %259 {offsets = [0, 0], sizes = [1, 32], strides = [1, 1]} : vector<6x32xf32> to vector<1x32xf32>
    %269 = vector.extract_strided_slice %259 {offsets = [1, 0], sizes = [1, 32], strides = [1, 1]} : vector<6x32xf32> to vector<1x32xf32>
    %cst_104 = arith.constant dense<0.000000e+00> : vector<16xf32>
    %270 = vector.multi_reduction <add>, %231, %cst_104 [1] : vector<16x32xf32> to vector<16xf32>
    %271 = vector.shape_cast %270 : vector<16xf32> to vector<16x1xf32>
    %cst_105 = arith.constant 3.200000e+01 : f32
    %272 = vector.broadcast %cst_105 : f32 to vector<16x1xf32>
    %273 = arith.divf %271, %272 : vector<16x1xf32>
    %274 = vector.broadcast %273 : vector<16x1xf32> to vector<16x32xf32>
    %275 = arith.subf %231, %274 : vector<16x32xf32>
    %276 = arith.mulf %275, %275 : vector<16x32xf32>
    %cst_106 = arith.constant dense<0.000000e+00> : vector<16xf32>
    %277 = vector.multi_reduction <add>, %276, %cst_106 [1] : vector<16x32xf32> to vector<16xf32>
    %278 = vector.shape_cast %277 : vector<16xf32> to vector<16x1xf32>
    %cst_107 = arith.constant 3.200000e+01 : f32
    %279 = vector.broadcast %cst_107 : f32 to vector<16x1xf32>
    %280 = arith.divf %278, %279 : vector<16x1xf32>
    %281 = vector.broadcast %273 : vector<16x1xf32> to vector<16x32xf32>
    %282 = arith.subf %231, %281 : vector<16x32xf32>
    %cst_108 = arith.constant 9.99999974E-6 : f32
    %283 = vector.broadcast %cst_108 : f32 to vector<16x1xf32>
    %284 = arith.addf %280, %283 : vector<16x1xf32>
    %285 = math.rsqrt %284 : vector<16x1xf32>
    %286 = vector.broadcast %285 : vector<16x1xf32> to vector<16x32xf32>
    %287 = arith.mulf %282, %286 : vector<16x32xf32>
    %288 = vector.broadcast %268 : vector<1x32xf32> to vector<16x32xf32>
    %289 = arith.mulf %287, %288 : vector<16x32xf32>
    %290 = vector.broadcast %269 : vector<1x32xf32> to vector<16x32xf32>
    %291 = arith.addf %289, %290 : vector<16x32xf32>
    %292 = arith.addf %291, %0 : vector<16x32xf32>
    %293 = vector.extract_strided_slice %261 {offsets = [0, 0, 0], sizes = [1, 32, 32], strides = [1, 1, 1]} : vector<4x32x32xf32> to vector<1x32x32xf32>
    %294 = vector.shape_cast %293 : vector<1x32x32xf32> to vector<32x32xf32>
    %295 = vector.extract_strided_slice %263 {offsets = [0, 0], sizes = [1, 32], strides = [1, 1]} : vector<4x32xf32> to vector<1x32xf32>
    %cst_109 = arith.constant dense<0.000000e+00> : vector<16x32xf32>
    %296 = tpu.matmul %292, %294, %cst_109 {dimension_numbers = #tpu.dot_dimension_numbers<[1], [0], [0], [1], [0, 0, 1, 1], [], []>} : vector<16x32xf32>, vector<32x32xf32>, vector<16x32xf32> -> vector<16x32xf32>
    %297 = vector.broadcast %295 : vector<1x32xf32> to vector<16x32xf32>
    %298 = arith.addf %296, %297 : vector<16x32xf32>
    %299 = vector.extract_strided_slice %261 {offsets = [1, 0, 0], sizes = [1, 32, 32], strides = [1, 1, 1]} : vector<4x32x32xf32> to vector<1x32x32xf32>
    %300 = vector.shape_cast %299 : vector<1x32x32xf32> to vector<32x32xf32>
    %301 = vector.extract_strided_slice %263 {offsets = [1, 0], sizes = [1, 32], strides = [1, 1]} : vector<4x32xf32> to vector<1x32xf32>
    %cst_110 = arith.constant dense<0.000000e+00> : vector<16x32xf32>
    %302 = tpu.matmul %292, %300, %cst_110 {dimension_numbers = #tpu.dot_dimension_numbers<[1], [0], [0], [1], [0, 0, 1, 1], [], []>} : vector<16x32xf32>, vector<32x32xf32>, vector<16x32xf32> -> vector<16x32xf32>
    %303 = vector.broadcast %301 : vector<1x32xf32> to vector<16x32xf32>
    %304 = arith.addf %302, %303 : vector<16x32xf32>
    %305 = vector.extract_strided_slice %261 {offsets = [2, 0, 0], sizes = [1, 32, 32], strides = [1, 1, 1]} : vector<4x32x32xf32> to vector<1x32x32xf32>
    %306 = vector.shape_cast %305 : vector<1x32x32xf32> to vector<32x32xf32>
    %307 = vector.extract_strided_slice %263 {offsets = [2, 0], sizes = [1, 32], strides = [1, 1]} : vector<4x32xf32> to vector<1x32xf32>
    %cst_111 = arith.constant dense<0.000000e+00> : vector<16x32xf32>
    %308 = tpu.matmul %291, %306, %cst_111 {dimension_numbers = #tpu.dot_dimension_numbers<[1], [0], [0], [1], [0, 0, 1, 1], [], []>} : vector<16x32xf32>, vector<32x32xf32>, vector<16x32xf32> -> vector<16x32xf32>
    %309 = vector.broadcast %307 : vector<1x32xf32> to vector<16x32xf32>
    %310 = arith.addf %308, %309 : vector<16x32xf32>
    %311 = vector.shape_cast %298 : vector<16x32xf32> to vector<2x8x32xf32>
    %312 = tpu.transpose %311, [0, 2, 1] : vector<2x8x32xf32> -> vector<2x32x8xf32>
    %313 = vector.shape_cast %312 : vector<2x32x8xf32> to vector<8x8x8xf32>
    %314 = tpu.transpose %313, [0, 2, 1] : vector<8x8x8xf32> -> vector<8x8x8xf32>
    %315 = vector.shape_cast %304 : vector<16x32xf32> to vector<2x8x32xf32>
    %316 = tpu.transpose %315, [0, 2, 1] : vector<2x8x32xf32> -> vector<2x32x8xf32>
    %317 = vector.shape_cast %316 : vector<2x32x8xf32> to vector<8x8x8xf32>
    %318 = tpu.transpose %317, [0, 2, 1] : vector<8x8x8xf32> -> vector<8x8x8xf32>
    %319 = vector.shape_cast %310 : vector<16x32xf32> to vector<2x8x32xf32>
    %320 = tpu.transpose %319, [0, 2, 1] : vector<2x8x32xf32> -> vector<2x32x8xf32>
    %321 = vector.shape_cast %320 : vector<2x32x8xf32> to vector<8x8x8xf32>
    %322 = tpu.transpose %321, [0, 2, 1] : vector<8x8x8xf32> -> vector<8x8x8xf32>
    "tpu.trace_start"() <{level = 10 : i32, message = "zld,zsd->zls"}> : () -> ()
    %cst_112 = arith.constant dense<0.000000e+00> : vector<8x8x8xf32>
    %323 = tpu.matmul %314, %318, %cst_112 {dimension_numbers = #tpu.dot_dimension_numbers<[2], [2], [1], [1], [0, 0, 0, 1, 1, 1], [0], [0]>} : vector<8x8x8xf32>, vector<8x8x8xf32>, vector<8x8x8xf32> -> vector<8x8x8xf32>
    "tpu.trace_stop"() : () -> ()
    %cst_113 = arith.constant 0.353553385 : f32
    %324 = vector.broadcast %cst_113 : f32 to vector<8x8x8xf32>
    %325 = arith.mulf %323, %324 : vector<8x8x8xf32>
    %cst_114 = arith.constant dense<0xFF800000> : vector<8x8xf32>
    %326 = vector.multi_reduction <maximumf>, %325, %cst_114 [2] : vector<8x8x8xf32> to vector<8x8xf32>
    %cst_115 = arith.constant 0xFF800000 : f32
    %327 = vector.broadcast %cst_115 : f32 to vector<8x8xf32>
    %328 = arith.maximumf %327, %326 : vector<8x8xf32>
    %329 = vector.shape_cast %328 : vector<8x8xf32> to vector<8x8x1xf32>
    %330 = vector.broadcast %329 : vector<8x8x1xf32> to vector<8x8x8xf32>
    %331 = arith.subf %325, %330 : vector<8x8x8xf32>
    %332 = math.exp %331 : vector<8x8x8xf32>
    %cst_116 = arith.constant dense<0.000000e+00> : vector<8x8xf32>
    %333 = vector.multi_reduction <add>, %332, %cst_116 [2] : vector<8x8x8xf32> to vector<8x8xf32>
    %334 = vector.shape_cast %333 : vector<8x8xf32> to vector<8x8x1xf32>
    %335 = vector.broadcast %334 : vector<8x8x1xf32> to vector<8x8x8xf32>
    %336 = arith.divf %332, %335 : vector<8x8x8xf32>
    "tpu.trace_start"() <{level = 10 : i32, message = "zls,zsd->zld"}> : () -> ()
    %cst_117 = arith.constant dense<0.000000e+00> : vector<8x8x8xf32>
    %337 = tpu.matmul %336, %322, %cst_117 {dimension_numbers = #tpu.dot_dimension_numbers<[2], [1], [1], [2], [0, 0, 0, 1, 1, 2], [0], [0]>} : vector<8x8x8xf32>, vector<8x8x8xf32>, vector<8x8x8xf32> -> vector<8x8x8xf32>
    "tpu.trace_stop"() : () -> ()
    %338 = tpu.transpose %337, [0, 2, 1] : vector<8x8x8xf32> -> vector<8x8x8xf32>
    %339 = vector.shape_cast %338 : vector<8x8x8xf32> to vector<2x32x8xf32>
    %340 = tpu.transpose %339, [0, 2, 1] : vector<2x32x8xf32> -> vector<2x8x32xf32>
    %341 = vector.shape_cast %340 : vector<2x8x32xf32> to vector<16x32xf32>
    %342 = vector.extract_strided_slice %261 {offsets = [3, 0, 0], sizes = [1, 32, 32], strides = [1, 1, 1]} : vector<4x32x32xf32> to vector<1x32x32xf32>
    %343 = vector.shape_cast %342 : vector<1x32x32xf32> to vector<32x32xf32>
    %344 = vector.extract_strided_slice %263 {offsets = [3, 0], sizes = [1, 32], strides = [1, 1]} : vector<4x32xf32> to vector<1x32xf32>
    %cst_118 = arith.constant dense<0.000000e+00> : vector<16x32xf32>
    %345 = tpu.matmul %341, %343, %cst_118 {dimension_numbers = #tpu.dot_dimension_numbers<[1], [0], [0], [1], [0, 0, 1, 1], [], []>} : vector<16x32xf32>, vector<32x32xf32>, vector<16x32xf32> -> vector<16x32xf32>
    %346 = vector.broadcast %344 : vector<1x32xf32> to vector<16x32xf32>
    %347 = arith.addf %345, %346 : vector<16x32xf32>
    %348 = arith.addf %231, %347 : vector<16x32xf32>
    %349 = vector.extract_strided_slice %259 {offsets = [2, 0], sizes = [1, 32], strides = [1, 1]} : vector<6x32xf32> to vector<1x32xf32>
    %350 = vector.extract_strided_slice %259 {offsets = [3, 0], sizes = [1, 32], strides = [1, 1]} : vector<6x32xf32> to vector<1x32xf32>
    %cst_119 = arith.constant dense<0.000000e+00> : vector<16xf32>
    %351 = vector.multi_reduction <add>, %348, %cst_119 [1] : vector<16x32xf32> to vector<16xf32>
    %352 = vector.shape_cast %351 : vector<16xf32> to vector<16x1xf32>
    %cst_120 = arith.constant 3.200000e+01 : f32
    %353 = vector.broadcast %cst_120 : f32 to vector<16x1xf32>
    %354 = arith.divf %352, %353 : vector<16x1xf32>
    %355 = vector.broadcast %354 : vector<16x1xf32> to vector<16x32xf32>
    %356 = arith.subf %348, %355 : vector<16x32xf32>
    %357 = arith.mulf %356, %356 : vector<16x32xf32>
    %cst_121 = arith.constant dense<0.000000e+00> : vector<16xf32>
    %358 = vector.multi_reduction <add>, %357, %cst_121 [1] : vector<16x32xf32> to vector<16xf32>
    %359 = vector.shape_cast %358 : vector<16xf32> to vector<16x1xf32>
    %cst_122 = arith.constant 3.200000e+01 : f32
    %360 = vector.broadcast %cst_122 : f32 to vector<16x1xf32>
    %361 = arith.divf %359, %360 : vector<16x1xf32>
    %362 = vector.broadcast %354 : vector<16x1xf32> to vector<16x32xf32>
    %363 = arith.subf %348, %362 : vector<16x32xf32>
    %cst_123 = arith.constant 9.99999974E-6 : f32
    %364 = vector.broadcast %cst_123 : f32 to vector<16x1xf32>
    %365 = arith.addf %361, %364 : vector<16x1xf32>
    %366 = math.rsqrt %365 : vector<16x1xf32>
    %367 = vector.broadcast %366 : vector<16x1xf32> to vector<16x32xf32>
    %368 = arith.mulf %363, %367 : vector<16x32xf32>
    %369 = vector.broadcast %349 : vector<1x32xf32> to vector<16x32xf32>
    %370 = arith.mulf %368, %369 : vector<16x32xf32>
    %371 = vector.broadcast %350 : vector<1x32xf32> to vector<16x32xf32>
    %372 = arith.addf %370, %371 : vector<16x32xf32>
    %373 = arith.addf %372, %0 : vector<16x32xf32>
    %374 = vector.extract_strided_slice %265 {offsets = [0, 0, 0], sizes = [1, 32, 32], strides = [1, 1, 1]} : vector<4x32x32xf32> to vector<1x32x32xf32>
    %375 = vector.shape_cast %374 : vector<1x32x32xf32> to vector<32x32xf32>
    %376 = vector.extract_strided_slice %267 {offsets = [0, 0], sizes = [1, 32], strides = [1, 1]} : vector<4x32xf32> to vector<1x32xf32>
    %cst_124 = arith.constant dense<0.000000e+00> : vector<16x32xf32>
    %377 = tpu.matmul %373, %375, %cst_124 {dimension_numbers = #tpu.dot_dimension_numbers<[1], [0], [0], [1], [0, 0, 1, 1], [], []>} : vector<16x32xf32>, vector<32x32xf32>, vector<16x32xf32> -> vector<16x32xf32>
    %378 = vector.broadcast %376 : vector<1x32xf32> to vector<16x32xf32>
    %379 = arith.addf %377, %378 : vector<16x32xf32>
    %380 = vector.extract_strided_slice %265 {offsets = [1, 0, 0], sizes = [1, 32, 32], strides = [1, 1, 1]} : vector<4x32x32xf32> to vector<1x32x32xf32>
    %381 = vector.shape_cast %380 : vector<1x32x32xf32> to vector<32x32xf32>
    %382 = vector.extract_strided_slice %267 {offsets = [1, 0], sizes = [1, 32], strides = [1, 1]} : vector<4x32xf32> to vector<1x32xf32>
    %cst_125 = arith.constant dense<0.000000e+00> : vector<32x32xf32>
    %383 = tpu.matmul %2, %381, %cst_125 {dimension_numbers = #tpu.dot_dimension_numbers<[1], [0], [0], [1], [0, 0, 1, 1], [], []>} : vector<32x32xf32>, vector<32x32xf32>, vector<32x32xf32> -> vector<32x32xf32>
    %384 = vector.broadcast %382 : vector<1x32xf32> to vector<32x32xf32>
    %385 = arith.addf %383, %384 : vector<32x32xf32>
    %386 = vector.extract_strided_slice %265 {offsets = [2, 0, 0], sizes = [1, 32, 32], strides = [1, 1, 1]} : vector<4x32x32xf32> to vector<1x32x32xf32>
    %387 = vector.shape_cast %386 : vector<1x32x32xf32> to vector<32x32xf32>
    %388 = vector.extract_strided_slice %267 {offsets = [2, 0], sizes = [1, 32], strides = [1, 1]} : vector<4x32xf32> to vector<1x32xf32>
    %cst_126 = arith.constant dense<0.000000e+00> : vector<32x32xf32>
    %389 = tpu.matmul %1, %387, %cst_126 {dimension_numbers = #tpu.dot_dimension_numbers<[1], [0], [0], [1], [0, 0, 1, 1], [], []>} : vector<32x32xf32>, vector<32x32xf32>, vector<32x32xf32> -> vector<32x32xf32>
    %390 = vector.broadcast %388 : vector<1x32xf32> to vector<32x32xf32>
    %391 = arith.addf %389, %390 : vector<32x32xf32>
    %392 = vector.shape_cast %379 : vector<16x32xf32> to vector<2x8x32xf32>
    %393 = tpu.transpose %392, [0, 2, 1] : vector<2x8x32xf32> -> vector<2x32x8xf32>
    %394 = vector.shape_cast %393 : vector<2x32x8xf32> to vector<8x8x8xf32>
    %395 = tpu.transpose %394, [0, 2, 1] : vector<8x8x8xf32> -> vector<8x8x8xf32>
    %396 = vector.shape_cast %385 : vector<32x32xf32> to vector<2x16x32xf32>
    %397 = tpu.transpose %396, [0, 2, 1] : vector<2x16x32xf32> -> vector<2x32x16xf32>
    %398 = vector.shape_cast %397 : vector<2x32x16xf32> to vector<8x8x16xf32>
    %399 = tpu.transpose %398, [0, 2, 1] : vector<8x8x16xf32> -> vector<8x16x8xf32>
    %400 = vector.shape_cast %391 : vector<32x32xf32> to vector<2x16x32xf32>
    %401 = tpu.transpose %400, [0, 2, 1] : vector<2x16x32xf32> -> vector<2x32x16xf32>
    %402 = vector.shape_cast %401 : vector<2x32x16xf32> to vector<8x8x16xf32>
    %403 = tpu.transpose %402, [0, 2, 1] : vector<8x8x16xf32> -> vector<8x16x8xf32>
    "tpu.trace_start"() <{level = 10 : i32, message = "zld,zsd->zls"}> : () -> ()
    %cst_127 = arith.constant dense<0.000000e+00> : vector<8x8x16xf32>
    %404 = tpu.matmul %395, %399, %cst_127 {dimension_numbers = #tpu.dot_dimension_numbers<[2], [2], [1], [1], [0, 0, 0, 1, 1, 1], [0], [0]>} : vector<8x8x8xf32>, vector<8x16x8xf32>, vector<8x8x16xf32> -> vector<8x8x16xf32>
    "tpu.trace_stop"() : () -> ()
    %cst_128 = arith.constant 0.353553385 : f32
    %405 = vector.broadcast %cst_128 : f32 to vector<8x8x16xf32>
    %406 = arith.mulf %404, %405 : vector<8x8x16xf32>
    %407 = vector.broadcast %4 : vector<8x1x16xf32> to vector<8x8x16xf32>
    %408 = arith.addf %406, %407 : vector<8x8x16xf32>
    %cst_129 = arith.constant dense<0xFF800000> : vector<8x8xf32>
    %409 = vector.multi_reduction <maximumf>, %408, %cst_129 [2] : vector<8x8x16xf32> to vector<8x8xf32>
    %cst_130 = arith.constant 0xFF800000 : f32
    %410 = vector.broadcast %cst_130 : f32 to vector<8x8xf32>
    %411 = arith.maximumf %410, %409 : vector<8x8xf32>
    %412 = vector.shape_cast %411 : vector<8x8xf32> to vector<8x8x1xf32>
    %413 = vector.broadcast %412 : vector<8x8x1xf32> to vector<8x8x16xf32>
    %414 = arith.subf %408, %413 : vector<8x8x16xf32>
    %415 = math.exp %414 : vector<8x8x16xf32>
    %cst_131 = arith.constant dense<0.000000e+00> : vector<8x8xf32>
    %416 = vector.multi_reduction <add>, %415, %cst_131 [2] : vector<8x8x16xf32> to vector<8x8xf32>
    %417 = vector.shape_cast %416 : vector<8x8xf32> to vector<8x8x1xf32>
    %418 = vector.broadcast %417 : vector<8x8x1xf32> to vector<8x8x16xf32>
    %419 = arith.divf %415, %418 : vector<8x8x16xf32>
    "tpu.trace_start"() <{level = 10 : i32, message = "zls,zsd->zld"}> : () -> ()
    %cst_132 = arith.constant dense<0.000000e+00> : vector<8x8x8xf32>
    %420 = tpu.matmul %419, %403, %cst_132 {dimension_numbers = #tpu.dot_dimension_numbers<[2], [1], [1], [2], [0, 0, 0, 1, 1, 2], [0], [0]>} : vector<8x8x16xf32>, vector<8x16x8xf32>, vector<8x8x8xf32> -> vector<8x8x8xf32>
    "tpu.trace_stop"() : () -> ()
    %421 = tpu.transpose %420, [0, 2, 1] : vector<8x8x8xf32> -> vector<8x8x8xf32>
    %422 = vector.shape_cast %421 : vector<8x8x8xf32> to vector<2x32x8xf32>
    %423 = tpu.transpose %422, [0, 2, 1] : vector<2x32x8xf32> -> vector<2x8x32xf32>
    %424 = vector.shape_cast %423 : vector<2x8x32xf32> to vector<16x32xf32>
    %425 = vector.extract_strided_slice %265 {offsets = [3, 0, 0], sizes = [1, 32, 32], strides = [1, 1, 1]} : vector<4x32x32xf32> to vector<1x32x32xf32>
    %426 = vector.shape_cast %425 : vector<1x32x32xf32> to vector<32x32xf32>
    %427 = vector.extract_strided_slice %267 {offsets = [3, 0], sizes = [1, 32], strides = [1, 1]} : vector<4x32xf32> to vector<1x32xf32>
    %cst_133 = arith.constant dense<0.000000e+00> : vector<16x32xf32>
    %428 = tpu.matmul %424, %426, %cst_133 {dimension_numbers = #tpu.dot_dimension_numbers<[1], [0], [0], [1], [0, 0, 1, 1], [], []>} : vector<16x32xf32>, vector<32x32xf32>, vector<16x32xf32> -> vector<16x32xf32>
    %429 = vector.broadcast %427 : vector<1x32xf32> to vector<16x32xf32>
    %430 = arith.addf %428, %429 : vector<16x32xf32>
    %431 = arith.addf %348, %430 : vector<16x32xf32>
    %432 = vector.extract_strided_slice %259 {offsets = [4, 0], sizes = [1, 32], strides = [1, 1]} : vector<6x32xf32> to vector<1x32xf32>
    %433 = vector.extract_strided_slice %259 {offsets = [5, 0], sizes = [1, 32], strides = [1, 1]} : vector<6x32xf32> to vector<1x32xf32>
    %cst_134 = arith.constant dense<0.000000e+00> : vector<16xf32>
    %434 = vector.multi_reduction <add>, %431, %cst_134 [1] : vector<16x32xf32> to vector<16xf32>
    %435 = vector.shape_cast %434 : vector<16xf32> to vector<16x1xf32>
    %cst_135 = arith.constant 3.200000e+01 : f32
    %436 = vector.broadcast %cst_135 : f32 to vector<16x1xf32>
    %437 = arith.divf %435, %436 : vector<16x1xf32>
    %438 = vector.broadcast %437 : vector<16x1xf32> to vector<16x32xf32>
    %439 = arith.subf %431, %438 : vector<16x32xf32>
    %440 = arith.mulf %439, %439 : vector<16x32xf32>
    %cst_136 = arith.constant dense<0.000000e+00> : vector<16xf32>
    %441 = vector.multi_reduction <add>, %440, %cst_136 [1] : vector<16x32xf32> to vector<16xf32>
    %442 = vector.shape_cast %441 : vector<16xf32> to vector<16x1xf32>
    %cst_137 = arith.constant 3.200000e+01 : f32
    %443 = vector.broadcast %cst_137 : f32 to vector<16x1xf32>
    %444 = arith.divf %442, %443 : vector<16x1xf32>
    %445 = vector.broadcast %437 : vector<16x1xf32> to vector<16x32xf32>
    %446 = arith.subf %431, %445 : vector<16x32xf32>
    %cst_138 = arith.constant 9.99999974E-6 : f32
    %447 = vector.broadcast %cst_138 : f32 to vector<16x1xf32>
    %448 = arith.addf %444, %447 : vector<16x1xf32>
    %449 = math.rsqrt %448 : vector<16x1xf32>
    %450 = vector.broadcast %449 : vector<16x1xf32> to vector<16x32xf32>
    %451 = arith.mulf %446, %450 : vector<16x32xf32>
    %452 = vector.broadcast %432 : vector<1x32xf32> to vector<16x32xf32>
    %453 = arith.mulf %451, %452 : vector<16x32xf32>
    %454 = vector.broadcast %433 : vector<1x32xf32> to vector<16x32xf32>
    %455 = arith.addf %453, %454 : vector<16x32xf32>
    %c1_139 = arith.constant 1 : index
    %c0_140 = arith.constant 0 : index
    %c0_141 = arith.constant 0 : index
    %456 = vector.load %arg10[%c1_139, %c0_140, %c0_141] : memref<2x32x128xf32, #tpu.memory_space<vmem>>, vector<1x32x128xf32>
    %457 = vector.shape_cast %456 : vector<1x32x128xf32> to vector<32x128xf32>
    %c1_142 = arith.constant 1 : index
    %c0_143 = arith.constant 0 : index
    %458 = vector.load %arg11[%c1_142, %c0_143] : memref<2x128xf32, #tpu.memory_space<vmem>>, vector<1x128xf32>
    %cst_144 = arith.constant dense<0.000000e+00> : vector<16x128xf32>
    %459 = tpu.matmul %455, %457, %cst_144 {dimension_numbers = #tpu.dot_dimension_numbers<[1], [0], [0], [1], [0, 0, 1, 1], [], []>} : vector<16x32xf32>, vector<32x128xf32>, vector<16x128xf32> -> vector<16x128xf32>
    %460 = vector.broadcast %458 : vector<1x128xf32> to vector<16x128xf32>
    %461 = arith.addf %459, %460 : vector<16x128xf32>
    %462 = arith.mulf %461, %461 : vector<16x128xf32>
    %463 = arith.mulf %461, %462 : vector<16x128xf32>
    %cst_145 = arith.constant 4.471500e-02 : f32
    %464 = vector.broadcast %cst_145 : f32 to vector<16x128xf32>
    %465 = arith.mulf %464, %463 : vector<16x128xf32>
    %466 = arith.addf %461, %465 : vector<16x128xf32>
    %cst_146 = arith.constant 0.797884583 : f32
    %467 = vector.broadcast %cst_146 : f32 to vector<16x128xf32>
    %468 = arith.mulf %467, %466 : vector<16x128xf32>
    %469 = math.tanh %468 : vector<16x128xf32>
    %cst_147 = arith.constant 1.000000e+00 : f32
    %470 = vector.broadcast %cst_147 : f32 to vector<16x128xf32>
    %471 = arith.addf %470, %469 : vector<16x128xf32>
    %cst_148 = arith.constant 5.000000e-01 : f32
    %472 = vector.broadcast %cst_148 : f32 to vector<16x128xf32>
    %473 = arith.mulf %472, %471 : vector<16x128xf32>
    %474 = arith.mulf %461, %473 : vector<16x128xf32>
    %c1_149 = arith.constant 1 : index
    %c0_150 = arith.constant 0 : index
    %c0_151 = arith.constant 0 : index
    %475 = vector.load %arg12[%c1_149, %c0_150, %c0_151] : memref<2x128x32xf32, #tpu.memory_space<vmem>>, vector<1x128x32xf32>
    %476 = vector.shape_cast %475 : vector<1x128x32xf32> to vector<128x32xf32>
    %c1_152 = arith.constant 1 : index
    %c0_153 = arith.constant 0 : index
    %477 = vector.load %arg13[%c1_152, %c0_153] : memref<2x32xf32, #tpu.memory_space<vmem>>, vector<1x32xf32>
    %cst_154 = arith.constant dense<0.000000e+00> : vector<16x32xf32>
    %478 = tpu.matmul %474, %476, %cst_154 {dimension_numbers = #tpu.dot_dimension_numbers<[1], [0], [0], [1], [0, 0, 1, 1], [], []>} : vector<16x128xf32>, vector<128x32xf32>, vector<16x32xf32> -> vector<16x32xf32>
    %479 = vector.broadcast %477 : vector<1x32xf32> to vector<16x32xf32>
    %480 = arith.addf %478, %479 : vector<16x32xf32>
    %481 = arith.addf %431, %480 : vector<16x32xf32>
    %cst_155 = arith.constant dense<0.000000e+00> : vector<16xf32>
    %482 = vector.multi_reduction <add>, %481, %cst_155 [1] : vector<16x32xf32> to vector<16xf32>
    %483 = vector.shape_cast %482 : vector<16xf32> to vector<16x1xf32>
    %cst_156 = arith.constant 3.200000e+01 : f32
    %484 = vector.broadcast %cst_156 : f32 to vector<16x1xf32>
    %485 = arith.divf %483, %484 : vector<16x1xf32>
    %486 = vector.broadcast %485 : vector<16x1xf32> to vector<16x32xf32>
    %487 = arith.subf %481, %486 : vector<16x32xf32>
    %488 = arith.mulf %487, %487 : vector<16x32xf32>
    %cst_157 = arith.constant dense<0.000000e+00> : vector<16xf32>
    %489 = vector.multi_reduction <add>, %488, %cst_157 [1] : vector<16x32xf32> to vector<16xf32>
    %490 = vector.shape_cast %489 : vector<16xf32> to vector<16x1xf32>
    %cst_158 = arith.constant 3.200000e+01 : f32
    %491 = vector.broadcast %cst_158 : f32 to vector<16x1xf32>
    %492 = arith.divf %490, %491 : vector<16x1xf32>
    %493 = vector.broadcast %485 : vector<16x1xf32> to vector<16x32xf32>
    %494 = arith.subf %481, %493 : vector<16x32xf32>
    %cst_159 = arith.constant 9.99999974E-6 : f32
    %495 = vector.broadcast %cst_159 : f32 to vector<16x1xf32>
    %496 = arith.addf %492, %495 : vector<16x1xf32>
    %497 = math.rsqrt %496 : vector<16x1xf32>
    %498 = vector.broadcast %497 : vector<16x1xf32> to vector<16x32xf32>
    %499 = arith.mulf %494, %498 : vector<16x32xf32>
    %500 = vector.broadcast %5 : vector<1x32xf32> to vector<16x32xf32>
    %501 = arith.mulf %499, %500 : vector<16x32xf32>
    %502 = vector.broadcast %6 : vector<1x32xf32> to vector<16x32xf32>
    %503 = arith.addf %501, %502 : vector<16x32xf32>
    %504 = vector.shape_cast %503 : vector<16x32xf32> to vector<2x8x32xf32>
    %c1_160 = arith.constant 1 : index
    %c0_161 = arith.constant 0 : index
    %c0_162 = arith.constant 0 : index
    %c0_163 = arith.constant 0 : index
    %505 = vector.load %arg14[%c1_160, %c0_161, %c0_162, %c0_163] : memref<2x2x8x32xf32, #tpu.memory_space<vmem>>, vector<1x2x8x32xf32>
    %506 = vector.shape_cast %505 : vector<1x2x8x32xf32> to vector<2x8x32xf32>
    %507 = vector.shape_cast %504 : vector<2x8x32xf32> to vector<1x2x8x32xf32>
    tpu.vector_store %arg14[%c1_160, %c0_161, %c0_162, %c0_163], %507 {strides = array<i32>} : memref<2x2x8x32xf32, #tpu.memory_space<vmem>>, vector<1x2x8x32xf32>,
    return
  }
}

</mosaic_0001>

<llo_original>
// kernel: detr_decoder.1
$region0: #{detr_decoder.1}
  #allocation0 [shape = 'u32[]', space=smem, size = 0x4, offset = 0x4, fixed_abs, tag = 'smem constant byte address 0x4 - core index']
  #allocation1 [shape = 'u32[72,128]{1,0:T(1,128)}', space=vmem, size = 0x9000, scoped, tag = 'internal scratch']
  %s0 = inlined_call_operand.hbm [shape: f32[16,32], index: 0, kind: input, shape index: {}]
  %s1 = inlined_call_operand.vmem [shape: f32[32,32], index: 1, kind: input, shape index: {}]
  %s2 = inlined_call_operand.vmem [shape: f32[32,32], index: 2, kind: input, shape index: {}]
  %s3 = inlined_call_operand.vmem [shape: f32[8,16], index: 3, kind: input, shape index: {}]
  %s4 = inlined_call_operand.vmem [shape: f32[2,6,32], index: 4, kind: input, shape index: {}]
  %s5 = inlined_call_operand.hbm [shape: f32[2,32], index: 5, kind: input, shape index: {}]
  %s6 = inlined_call_operand.vmem [shape: f32[2,4,32,32], index: 6, kind: input, shape index: {}]
  %s7 = inlined_call_operand.vmem [shape: f32[2,4,32], index: 7, kind: input, shape index: {}]
  %s8 = inlined_call_operand.hbm [shape: f32[2,4,32,32], index: 8, kind: input, shape index: {}]
  %s9 = inlined_call_operand.hbm [shape: f32[2,4,32], index: 9, kind: input, shape index: {}]
  %s10 = inlined_call_operand.vmem [shape: f32[2,32,128], index: 10, kind: input, shape index: {}]
  %s11 = inlined_call_operand.hbm [shape: f32[2,128], index: 11, kind: input, shape index: {}]
  %s12 = inlined_call_operand.vmem [shape: f32[2,128,32], index: 12, kind: input, shape index: {}]
  %s13 = inlined_call_operand.hbm [shape: f32[2,32], index: 13, kind: input, shape index: {}]
  %s14 = inlined_call_operand.vmem [shape: f32[2,2,8,32], index: 14, kind: output, shape index: {}]
  %s15 = sld [smem:[#allocation0]]
  $region90: #{detr_decoder.1} parent=0
    _
  %s17 = ssub.s32 1, %s15
  %s18 = scalar_select 0, %s17, %s15
  $region1: #{detr_decoder.1} parent=0
    #allocation2 [shape = 'u8[8192]{0}', space=vmem, size = 0x2000, scoped, tag = 'input window, operand 0, single buffered']
    #allocation3 [shape = 's32[1]{0}', space=sflag, size = 0x4, scoped, tag = 'scoped memory for detr_decoder.1']
    #allocation4 [shape = 'u8[1024]{0}', space=vmem, size = 0x400, scoped, tag = 'input window, operand 5, single buffered']
    #allocation5 [shape = 's32[1]{0}', space=sflag, size = 0x4, scoped, tag = 'scoped memory for detr_decoder.1']
    #allocation6 [shape = 'u8[131072]{0}', space=vmem, size = 0x20000, scoped, tag = 'input window, operand 8, single buffered']
    #allocation7 [shape = 'u8[4096]{0}', space=vmem, size = 0x1000, scoped, tag = 'input window, operand 9, single buffered']
    #allocation8 [shape = 's32[1]{0}', space=sflag, size = 0x4, scoped, tag = 'scoped memory for detr_decoder.1']
    #allocation9 [shape = 'u8[1024]{0}', space=vmem, size = 0x400, scoped, tag = 'input window, operand 11, single buffered']
    #allocation10 [shape = 'u8[1024]{0}', space=vmem, size = 0x400, scoped, tag = 'input window, operand 13, single buffered']
    #allocation11 [shape = 's32[1]{0}', space=sflag, size = 0x4, scoped, tag = 'scoped memory for detr_decoder.1']
    %19 = vsyncpa [#allocation3], 0
    %20 = vsyncpa [#allocation5], 0
    %21 = vsyncpa [#allocation8], 0
    %22 = vsyncpa [#allocation11], 0
    // Predicated region
    $region2: #{detr_decoder.1} parent=1 // pred_check
      _
    $region3: #{detr_decoder.1} parent=1 // pred_check_branch
      %24 = sbr.rel (0) target = $region5
    $region4: #{detr_decoder.1} parent=1 // pred_region
      %26 = vsyncadd [#allocation3], 0
      %s27 = sshll.u32 %s0, 4
      %s28 = int_to_ptr.hbm [resolvable:$true] %s27
      %s29 = sshll.u32 [#allocation2], 4
      %s30 = int_to_ptr.vmem [resolvable:$true] %s29
      %35 = dma.hbm_to_vmem [thread:$0]  %s28, 256, %s30, [#allocation3], 128, 128, 8
    $region5: #{detr_decoder.1} parent=1 // pred_fallthru
      _
    // Predicated region
    $region6: #{detr_decoder.1} parent=1 // pred_check
      _
    $region7: #{detr_decoder.1} parent=1 // pred_check_branch
      %37 = sbr.rel (0) target = $region9
    $region8: #{detr_decoder.1} parent=1 // pred_region
      _
    $region9: #{detr_decoder.1} parent=1 // pred_fallthru
      _
    // Predicated region
    $region10: #{detr_decoder.1} parent=1 // pred_check
      _
    $region11: #{detr_decoder.1} parent=1 // pred_check_branch
      %39 = sbr.rel (0) target = $region13
    $region12: #{detr_decoder.1} parent=1 // pred_region
      _
    $region13: #{detr_decoder.1} parent=1 // pred_fallthru
      _
    // Predicated region
    $region14: #{detr_decoder.1} parent=1 // pred_check
      _
    $region15: #{detr_decoder.1} parent=1 // pred_check_branch
      %41 = sbr.rel (0) target = $region17
    $region16: #{detr_decoder.1} parent=1 // pred_region
      _
    $region17: #{detr_decoder.1} parent=1 // pred_fallthru
      _
    // Predicated region
    $region18: #{detr_decoder.1} parent=1 // pred_check
      _
    $region19: #{detr_decoder.1} parent=1 // pred_check_branch
      %43 = sbr.rel (0) target = $region21
    $region20: #{detr_decoder.1} parent=1 // pred_region
      _
    $region21: #{detr_decoder.1} parent=1 // pred_fallthru
      _
    // Predicated region
    $region22: #{detr_decoder.1} parent=1 // pred_check
      _
    $region23: #{detr_decoder.1} parent=1 // pred_check_branch
      %45 = sbr.rel (0) target = $region25
    $region24: #{detr_decoder.1} parent=1 // pred_region
      %47 = vsyncadd [#allocation5], 0
      %s49 = sshll.u32 %s5, 4
      %s50 = int_to_ptr.hbm [resolvable:$true] %s49
      %s51 = sshll.u32 [#allocation4], 4
      %s52 = int_to_ptr.vmem [resolvable:$true] %s51
      %54 = dma.hbm_to_vmem [thread:$0]  %s50, 32, %s52, [#allocation5]
    $region25: #{detr_decoder.1} parent=1 // pred_fallthru
      _
    // Predicated region
    $region26: #{detr_decoder.1} parent=1 // pred_check
      _
    $region27: #{detr_decoder.1} parent=1 // pred_check_branch
      %56 = sbr.rel (0) target = $region29
    $region28: #{detr_decoder.1} parent=1 // pred_region
      _
    $region29: #{detr_decoder.1} parent=1 // pred_fallthru
      _
    // Predicated region
    $region30: #{detr_decoder.1} parent=1 // pred_check
      _
    $region31: #{detr_decoder.1} parent=1 // pred_check_branch
      %58 = sbr.rel (0) target = $region33
    $region32: #{detr_decoder.1} parent=1 // pred_region
      _
    $region33: #{detr_decoder.1} parent=1 // pred_fallthru
      _
    // Predicated region
    $region34: #{detr_decoder.1} parent=1 // pred_check
      _
    $region35: #{detr_decoder.1} parent=1 // pred_check_branch
      %60 = sbr.rel (0) target = $region37
    $region36: #{detr_decoder.1} parent=1 // pred_region
      %62 = vsyncadd [#allocation5], 0
      %s63 = sshll.u32 %s8, 4
      %s64 = int_to_ptr.hbm [resolvable:$true] %s63
      %s65 = sshll.u32 [#allocation6], 4
      %s66 = int_to_ptr.vmem [resolvable:$true] %s65
      %71 = dma.hbm_to_vmem [thread:$0]  %s64, 4096, %s66, [#allocation5], 128, 128, 8
    $region37: #{detr_decoder.1} parent=1 // pred_fallthru
      _
    // Predicated region
    $region38: #{detr_decoder.1} parent=1 // pred_check
      _
    $region39: #{detr_decoder.1} parent=1 // pred_check_branch
      %73 = sbr.rel (0) target = $region41
    $region40: #{detr_decoder.1} parent=1 // pred_region
      %75 = vsyncadd [#allocation8], 0
      %s76 = sshll.u32 %s9, 4
      %s77 = int_to_ptr.hbm [resolvable:$true] %s76
      %s78 = sshll.u32 [#allocation7], 4
      %s79 = int_to_ptr.vmem [resolvable:$true] %s78
      %84 = dma.hbm_to_vmem [thread:$0]  %s77, 128, %s79, [#allocation8], 64, 64, 4
    $region41: #{detr_decoder.1} parent=1 // pred_fallthru
      _
    // Predicated region
    $region42: #{detr_decoder.1} parent=1 // pred_check
      _
    $region43: #{detr_decoder.1} parent=1 // pred_check_branch
      %86 = sbr.rel (0) target = $region45
    $region44: #{detr_decoder.1} parent=1 // pred_region
      _
    $region45: #{detr_decoder.1} parent=1 // pred_fallthru
      _
    // Predicated region
    $region46: #{detr_decoder.1} parent=1 // pred_check
      _
    $region47: #{detr_decoder.1} parent=1 // pred_check_branch
      %88 = sbr.rel (0) target = $region49
    $region48: #{detr_decoder.1} parent=1 // pred_region
      %90 = vsyncadd [#allocation8], 0
      %s92 = sshll.u32 %s11, 4
      %s93 = int_to_ptr.hbm [resolvable:$true] %s92
      %s94 = sshll.u32 [#allocation9], 4
      %s95 = int_to_ptr.vmem [resolvable:$true] %s94
      %97 = dma.hbm_to_vmem [thread:$0]  %s93, 32, %s95, [#allocation8]
    $region49: #{detr_decoder.1} parent=1 // pred_fallthru
      _
    // Predicated region
    $region50: #{detr_decoder.1} parent=1 // pred_check
      _
    $region51: #{detr_decoder.1} parent=1 // pred_check_branch
      %99 = sbr.rel (0) target = $region53
    $region52: #{detr_decoder.1} parent=1 // pred_region
      _
    $region53: #{detr_decoder.1} parent=1 // pred_fallthru
      _
    // Predicated region
    $region54: #{detr_decoder.1} parent=1 // pred_check
      _
    $region55: #{detr_decoder.1} parent=1 // pred_check_branch
      %101 = sbr.rel (0) target = $region57
    $region56: #{detr_decoder.1} parent=1 // pred_region
      %103 = vsyncadd [#allocation11], 0
      %s105 = sshll.u32 %s13, 4
      %s106 = int_to_ptr.hbm [resolvable:$true] %s105
      %s107 = sshll.u32 [#allocation10], 4
      %s108 = int_to_ptr.vmem [resolvable:$true] %s107
      %110 = dma.hbm_to_vmem [thread:$0]  %s106, 32, %s108, [#allocation11]
    $region57: #{detr_decoder.1} parent=1 // pred_fallthru
      _
    // Predicated region
    $region58: #{detr_decoder.1} parent=1 // pred_check
      _
    $region59: #{detr_decoder.1} parent=1 // pred_check_branch
      %112 = sbr.rel (0) target = $region61
    $region60: #{detr_decoder.1} parent=1 // pred_region
      %114 = dma.done [#allocation3], 256
    $region61: #{detr_decoder.1} parent=1 // pred_fallthru
      _
    // Predicated region
    $region62: #{detr_decoder.1} parent=1 // pred_check
      _
    $region63: #{detr_decoder.1} parent=1 // pred_check_branch
      %116 = sbr.rel (0) target = $region65
    $region64: #{detr_decoder.1} parent=1 // pred_region
      %118 = dma.done [#allocation5], 32
    $region65: #{detr_decoder.1} parent=1 // pred_fallthru
      _
    // Predicated region
    $region66: #{detr_decoder.1} parent=1 // pred_check
      _
    $region67: #{detr_decoder.1} parent=1 // pred_check_branch
      %120 = sbr.rel (0) target = $region69
    $region68: #{detr_decoder.1} parent=1 // pred_region
      %122 = dma.done [#allocation5], 4096
    $region69: #{detr_decoder.1} parent=1 // pred_fallthru
      _
    // Predicated region
    $region70: #{detr_decoder.1} parent=1 // pred_check
      _
    $region71: #{detr_decoder.1} parent=1 // pred_check_branch
      %124 = sbr.rel (0) target = $region73
    $region72: #{detr_decoder.1} parent=1 // pred_region
      %126 = dma.done [#allocation8], 128
    $region73: #{detr_decoder.1} parent=1 // pred_fallthru
      _
    // Predicated region
    $region74: #{detr_decoder.1} parent=1 // pred_check
      _
    $region75: #{detr_decoder.1} parent=1 // pred_check_branch
      %128 = sbr.rel (0) target = $region77
    $region76: #{detr_decoder.1} parent=1 // pred_region
      %130 = dma.done [#allocation8], 32
    $region77: #{detr_decoder.1} parent=1 // pred_fallthru
      _
    // Predicated region
    $region78: #{detr_decoder.1} parent=1 // pred_check
      _
    $region79: #{detr_decoder.1} parent=1 // pred_check_branch
      %132 = sbr.rel (0) target = $region81
    $region80: #{detr_decoder.1} parent=1 // pred_region
      %134 = dma.done [#allocation11], 32
    $region81: #{detr_decoder.1} parent=1 // pred_fallthru
      _
    %v135 = vld [vmem:[#allocation2] sm:$0xff]
    %v136 = vld [vmem:[#allocation2 + $0x8] sm:$0xff]
    %v137 = vld [vmem:[%s1] sm:$0xff]
    %v138 = vld [vmem:[%s1 + $0x8] sm:$0xff]
    %v139 = vld [vmem:[%s1 + $0x10] sm:$0xff]
    %v140 = vld [vmem:[%s1 + $0x18] sm:$0xff]
    %v141 = vld [vmem:[%s2] sm:$0xff]
    %v142 = vld [vmem:[%s2 + $0x8] sm:$0xff]
    %v143 = vld [vmem:[%s2 + $0x10] sm:$0xff]
    %v144 = vld [vmem:[%s2 + $0x18] sm:$0xff]
    %v145 = vld [vmem:[%s3] sm:$0xff]
    %v147 = vrot.slane %v145, 1
    %v148 = vrot.slane %v145, 2
    %v149 = vrot.slane %v145, 3
    %v150 = vrot.slane %v145, 4
    %v151 = vrot.slane %v145, 5
    %v152 = vrot.slane %v145, 6
    %v153 = vrot.slane %v145, 7
    %v154 = vld [vmem:[#allocation4] sm:$0x1]
    %v155 = vld [vmem:[#allocation4 + $0x1] sm:$0x1]
    %v156 = vld [vmem:[%s4] sm:$0x3f]
    %v157 = vld [vmem:[%s6] sm:$0xff]
    %v158 = vld [vmem:[%s6 + $0x8] sm:$0xff]
    %v159 = vld [vmem:[%s6 + $0x10] sm:$0xff]
    %v160 = vld [vmem:[%s6 + $0x18] sm:$0xff]
    %v161 = vld [vmem:[%s6 + $0x20] sm:$0xff]
    %v162 = vld [vmem:[%s6 + $0x28] sm:$0xff]
    %v163 = vld [vmem:[%s6 + $0x30] sm:$0xff]
    %v164 = vld [vmem:[%s6 + $0x38] sm:$0xff]
    %v165 = vld [vmem:[%s6 + $0x40] sm:$0xff]
    %v166 = vld [vmem:[%s6 + $0x48] sm:$0xff]
    %v167 = vld [vmem:[%s6 + $0x50] sm:$0xff]
    %v168 = vld [vmem:[%s6 + $0x58] sm:$0xff]
    %v169 = vld [vmem:[%s6 + $0x60] sm:$0xff]
    %v170 = vld [vmem:[%s6 + $0x68] sm:$0xff]
    %v171 = vld [vmem:[%s6 + $0x70] sm:$0xff]
    %v172 = vld [vmem:[%s6 + $0x78] sm:$0xff]
    %v173 = vld [vmem:[%s7] sm:$0xf]
    %v174 = vld [vmem:[#allocation6] sm:$0xff]
    %v175 = vld [vmem:[#allocation6 + $0x8] sm:$0xff]
    %v176 = vld [vmem:[#allocation6 + $0x10] sm:$0xff]
    %v177 = vld [vmem:[#allocation6 + $0x18] sm:$0xff]
    %v178 = vld [vmem:[#allocation6 + $0x20] sm:$0xff]
    %v179 = vld [vmem:[#allocation6 + $0x28] sm:$0xff]
    %v180 = vld [vmem:[#allocation6 + $0x30] sm:$0xff]
    %v181 = vld [vmem:[#allocation6 + $0x38] sm:$0xff]
    %v182 = vld [vmem:[#allocation6 + $0x40] sm:$0xff]
    %v183 = vld [vmem:[#allocation6 + $0x48] sm:$0xff]
    %v184 = vld [vmem:[#allocation6 + $0x50] sm:$0xff]
    %v185 = vld [vmem:[#allocation6 + $0x58] sm:$0xff]
    %v186 = vld [vmem:[#allocation6 + $0x60] sm:$0xff]
    %v187 = vld [vmem:[#allocation6 + $0x68] sm:$0xff]
    %v188 = vld [vmem:[#allocation6 + $0x70] sm:$0xff]
    %v189 = vld [vmem:[#allocation6 + $0x78] sm:$0xff]
    %v190 = vld [vmem:[#allocation7] sm:$0xf]
    %191 = vadd.xlane.f32.xlu0 0.0
    %v192 = vpop.xlane.xlu0 %191
    %v193 = vrcp.pop 32.0
    %v194 = vmul.f32 32.0, %v193
    %v195 = vsub.f32 1.0, %v194
    %v196 = vmul.f32 %v193, %v195
    %v197 = vadd.f32 %v193, %v196
    %vm198 = vweird.f32 %v193
    %v199 = vsel %vm198, %v193, %v197
    %v200 = vmul.f32 %v192, %v199
    %v201 = vsub.f32 0.0, %v200
    %v202 = vmul.f32 %v201, %v201
    %vm203 = vcmask 261120
    %v204 = vsel %vm203, %v202, 0.0
    %205 = vadd.xlane.f32.xlu0 %v204
    %v206 = vpop.xlane.xlu0 %205
    %v207 = vmul.f32 %v206, %v199
    %v208 = vadd.f32 %v207, 1e-05
    %v209 = vrsqrt.pop %v208
    %v210 = vmul.f32 %v209, %v208
    %v211 = vmul.f32 %v210, %v209
    %v212 = vmul.f32 0.5, %v211
    %v213 = vsub.f32 1.5, %v212
    %v214 = vmul.f32 %v209, %v213
    %vm215 = vweird.f32 %v208
    %vm216 = vweird.f32 %v209
    %vm217 = vmor %vm215, %vm216
    %v218 = vsel %vm217, %v209, %v214
    %v219 = vmul.f32 %v201, %v218
    %v220 = vperm.slane %v156, 0
    %v221 = vmul.f32 %v219, %v220
    %v222 = vperm.slane %v156, 1
    %v223 = vadd.f32 %v221, %v222
    %v224 = vadd.f32 %v223, %v135
    %v225 = vadd.f32 %v223, %v136
    %v226 = vperm.slane %v173, 0
    %v228 = vsel %vm203, %v224, 0
    %v231 = vsel %vm203, %v225, 0
    %233 = vmatpush.msra.mxu0 0.0
    %234 = vmatpush.msra.mxu0 0.0
    %235 = vmatpush.msra.mxu0 0.0
    %236 = vmatpush.msra.mxu0 0.0
    %237 = vmatpush.msra.mxu0 0.0
    %238 = vmatpush.msra.mxu0 0.0
    %239 = vmatpush.msra.mxu0 0.0
    %240 = vmatpush.msra.mxu0 0.0
    %241 = vmatpush.msra.mxu0 0.0
    %242 = vmatpush.msra.mxu0 0.0
    %243 = vmatpush.msra.mxu0 0.0
    %244 = vmatpush.msra.mxu0 0.0
    %245 = vmatpush.msra.mxu0 %v160
    %246 = vmatpush.msra.mxu0 %v159
    %247 = vmatpush.msra.mxu0 %v158
    %248 = vmatpush.msra.mxu0 %v157
    %249 = vmatmul.f32.gmra.mxu0 %v228
    %v250 = vpop.f32.mrf.mxu0
    %v251 = vadd.f32 %v226, %v250
    %252 = vmatmul.f32.gmra.mxu0 %v231
    %v253 = vpop.f32.mrf.mxu0
    %v254 = vadd.f32 %v226, %v253
    %255 = vdwg.mxu0
    %v256 = vperm.slane %v173, 1
    %257 = vmatpush.msra.mxu0 0.0
    %258 = vmatpush.msra.mxu0 0.0
    %259 = vmatpush.msra.mxu0 0.0
    %260 = vmatpush.msra.mxu0 0.0
    %261 = vmatpush.msra.mxu0 0.0
    %262 = vmatpush.msra.mxu0 0.0
    %263 = vmatpush.msra.mxu0 0.0
    %264 = vmatpush.msra.mxu0 0.0
    %265 = vmatpush.msra.mxu0 0.0
    %266 = vmatpush.msra.mxu0 0.0
    %267 = vmatpush.msra.mxu0 0.0
    %268 = vmatpush.msra.mxu0 0.0
    %269 = vmatpush.msra.mxu0 %v164
    %270 = vmatpush.msra.mxu0 %v163
    %271 = vmatpush.msra.mxu0 %v162
    %272 = vmatpush.msra.mxu0 %v161
    %273 = vmatmul.f32.gmra.mxu0 %v228
    %v274 = vpop.f32.mrf.mxu0
    %v275 = vadd.f32 %v256, %v274
    %276 = vmatmul.f32.gmra.mxu0 %v231
    %v277 = vpop.f32.mrf.mxu0
    %v278 = vadd.f32 %v256, %v277
    %279 = vdwg.mxu0
    %v280 = vperm.slane %v173, 2
    %v282 = vsel %vm203, %v223, 0
    %284 = vmatpush.msra.mxu0 0.0
    %285 = vmatpush.msra.mxu0 0.0
    %286 = vmatpush.msra.mxu0 0.0
    %287 = vmatpush.msra.mxu0 0.0
    %288 = vmatpush.msra.mxu0 0.0
    %289 = vmatpush.msra.mxu0 0.0
    %290 = vmatpush.msra.mxu0 0.0
    %291 = vmatpush.msra.mxu0 0.0
    %292 = vmatpush.msra.mxu0 0.0
    %293 = vmatpush.msra.mxu0 0.0
    %294 = vmatpush.msra.mxu0 0.0
    %295 = vmatpush.msra.mxu0 0.0
    %296 = vmatpush.msra.mxu0 %v168
    %297 = vmatpush.msra.mxu0 %v167
    %298 = vmatpush.msra.mxu0 %v166
    %299 = vmatpush.msra.mxu0 %v165
    %300 = vmatmul.f32.gmra.mxu0 %v282
    %v301 = vpop.f32.mrf.mxu0
    %v302 = vadd.f32 %v280, %v301
    %303 = vmatmul.f32.gmra.mxu0 %v282
    %v304 = vpop.f32.mrf.mxu0
    %v305 = vadd.f32 %v280, %v304
    %306 = vdwg.mxu0
    %307 = vxpose.xlu0.b32.start [1/16] %v251, 128
    %308 = vxpose.xlu0.b32.cont [2/16] 0.0, 128
    %309 = vxpose.xlu0.b32.cont [3/16] 0.0, 128
    %310 = vxpose.xlu0.b32.cont [4/16] 0.0, 128
    %311 = vxpose.xlu0.b32.cont [5/16] 0.0, 128
    %312 = vxpose.xlu0.b32.cont [6/16] 0.0, 128
    %313 = vxpose.xlu0.b32.cont [7/16] 0.0, 128
    %314 = vxpose.xlu0.b32.cont [8/16] 0.0, 128
    %315 = vxpose.xlu0.b32.cont [9/16] 0.0, 128
    %316 = vxpose.xlu0.b32.cont [10/16] 0.0, 128
    %317 = vxpose.xlu0.b32.cont [11/16] 0.0, 128
    %318 = vxpose.xlu0.b32.cont [12/16] 0.0, 128
    %319 = vxpose.xlu0.b32.cont [13/16] 0.0, 128
    %320 = vxpose.xlu0.b32.cont [14/16] 0.0, 128
    %321 = vxpose.xlu0.b32.cont [15/16] 0.0, 128
    %322 = vxpose.xlu0.b32.end [16/16] 0.0, 128
    %v323 = vpop.trf.xlu0
    %v324 = vpop.trf.xlu0
    %v325 = vpop.trf.xlu0
    %v326 = vpop.trf.xlu0
    %v327 = vpop.trf.xlu0
    %v328 = vpop.trf.xlu0
    %v329 = vpop.trf.xlu0
    %v330 = vpop.trf.xlu0
    %v331 = vpop.trf.xlu0
    %v332 = vpop.trf.xlu0
    %v333 = vpop.trf.xlu0
    %v334 = vpop.trf.xlu0
    %v335 = vpop.trf.xlu0
    %v336 = vpop.trf.xlu0
    %v337 = vpop.trf.xlu0
    %v338 = vpop.trf.xlu0
    %339 = vxpose.xlu0.b32.start [1/16] %v254, 128
    %340 = vxpose.xlu0.b32.cont [2/16] 0.0, 128
    %341 = vxpose.xlu0.b32.cont [3/16] 0.0, 128
    %342 = vxpose.xlu0.b32.cont [4/16] 0.0, 128
    %343 = vxpose.xlu0.b32.cont [5/16] 0.0, 128
    %344 = vxpose.xlu0.b32.cont [6/16] 0.0, 128
    %345 = vxpose.xlu0.b32.cont [7/16] 0.0, 128
    %346 = vxpose.xlu0.b32.cont [8/16] 0.0, 128
    %347 = vxpose.xlu0.b32.cont [9/16] 0.0, 128
    %348 = vxpose.xlu0.b32.cont [10/16] 0.0, 128
    %349 = vxpose.xlu0.b32.cont [11/16] 0.0, 128
    %350 = vxpose.xlu0.b32.cont [12/16] 0.0, 128
    %351 = vxpose.xlu0.b32.cont [13/16] 0.0, 128
    %352 = vxpose.xlu0.b32.cont [14/16] 0.0, 128
    %353 = vxpose.xlu0.b32.cont [15/16] 0.0, 128
    %354 = vxpose.xlu0.b32.end [16/16] 0.0, 128
    %v355 = vpop.trf.xlu0
    %v356 = vpop.trf.xlu0
    %v357 = vpop.trf.xlu0
    %v358 = vpop.trf.xlu0
    %v359 = vpop.trf.xlu0
    %v360 = vpop.trf.xlu0
    %v361 = vpop.trf.xlu0
    %v362 = vpop.trf.xlu0
    %v363 = vpop.trf.xlu0
    %v364 = vpop.trf.xlu0
    %v365 = vpop.trf.xlu0
    %v366 = vpop.trf.xlu0
    %v367 = vpop.trf.xlu0
    %v368 = vpop.trf.xlu0
    %v369 = vpop.trf.xlu0
    %v370 = vpop.trf.xlu0
    %371 = vxpose.xlu0.b32.start [1/16] %v323, 128
    %372 = vxpose.xlu0.b32.cont [2/16] 0.0, 128
    %373 = vxpose.xlu0.b32.cont [3/16] 0.0, 128
    %374 = vxpose.xlu0.b32.cont [4/16] 0.0, 128
    %375 = vxpose.xlu0.b32.cont [5/16] 0.0, 128
    %376 = vxpose.xlu0.b32.cont [6/16] 0.0, 128
    %377 = vxpose.xlu0.b32.cont [7/16] 0.0, 128
    %378 = vxpose.xlu0.b32.cont [8/16] 0.0, 128
    %379 = vxpose.xlu0.b32.cont [9/16] 0.0, 128
    %380 = vxpose.xlu0.b32.cont [10/16] 0.0, 128
    %381 = vxpose.xlu0.b32.cont [11/16] 0.0, 128
    %382 = vxpose.xlu0.b32.cont [12/16] 0.0, 128
    %383 = vxpose.xlu0.b32.cont [13/16] 0.0, 128
    %384 = vxpose.xlu0.b32.cont [14/16] 0.0, 128
    %385 = vxpose.xlu0.b32.cont [15/16] 0.0, 128
    %386 = vxpose.xlu0.b32.end [16/16] 0.0, 128
    %v387 = vpop.trf.xlu0
    %v388 = vpop.trf.xlu0
    %v389 = vpop.trf.xlu0
    %v390 = vpop.trf.xlu0
    %v391 = vpop.trf.xlu0
    %v392 = vpop.trf.xlu0
    %v393 = vpop.trf.xlu0
    %v394 = vpop.trf.xlu0
    %v395 = vpop.trf.xlu0
    %v396 = vpop.trf.xlu0
    %v397 = vpop.trf.xlu0
    %v398 = vpop.trf.xlu0
    %v399 = vpop.trf.xlu0
    %v400 = vpop.trf.xlu0
    %v401 = vpop.trf.xlu0
    %v402 = vpop.trf.xlu0
    %403 = vxpose.xlu0.b32.start [1/16] %v324, 128
    %404 = vxpose.xlu0.b32.cont [2/16] 0.0, 128
    %405 = vxpose.xlu0.b32.cont [3/16] 0.0, 128
    %406 = vxpose.xlu0.b32.cont [4/16] 0.0, 128
    %407 = vxpose.xlu0.b32.cont [5/16] 0.0, 128
    %408 = vxpose.xlu0.b32.cont [6/16] 0.0, 128
    %409 = vxpose.xlu0.b32.cont [7/16] 0.0, 128
    %410 = vxpose.xlu0.b32.cont [8/16] 0.0, 128
    %411 = vxpose.xlu0.b32.cont [9/16] 0.0, 128
    %412 = vxpose.xlu0.b32.cont [10/16] 0.0, 128
    %413 = vxpose.xlu0.b32.cont [11/16] 0.0, 128
    %414 = vxpose.xlu0.b32.cont [12/16] 0.0, 128
    %415 = vxpose.xlu0.b32.cont [13/16] 0.0, 128
    %416 = vxpose.xlu0.b32.cont [14/16] 0.0, 128
    %417 = vxpose.xlu0.b32.cont [15/16] 0.0, 128
    %418 = vxpose.xlu0.b32.end [16/16] 0.0, 128
    %v419 = vpop.trf.xlu0
    %v420 = vpop.trf.xlu0
    %v421 = vpop.trf.xlu0
    %v422 = vpop.trf.xlu0
    %v423 = vpop.trf.xlu0
    %v424 = vpop.trf.xlu0
    %v425 = vpop.trf.xlu0
    %v426 = vpop.trf.xlu0
    %v427 = vpop.trf.xlu0
    %v428 = vpop.trf.xlu0
    %v429 = vpop.trf.xlu0
    %v430 = vpop.trf.xlu0
    %v431 = vpop.trf.xlu0
    %v432 = vpop.trf.xlu0
    %v433 = vpop.trf.xlu0
    %v434 = vpop.trf.xlu0
    %435 = vxpose.xlu0.b32.start [1/16] %v325, 128
    %436 = vxpose.xlu0.b32.cont [2/16] 0.0, 128
    %437 = vxpose.xlu0.b32.cont [3/16] 0.0, 128
    %438 = vxpose.xlu0.b32.cont [4/16] 0.0, 128
    %439 = vxpose.xlu0.b32.cont [5/16] 0.0, 128
    %440 = vxpose.xlu0.b32.cont [6/16] 0.0, 128
    %441 = vxpose.xlu0.b32.cont [7/16] 0.0, 128
    %442 = vxpose.xlu0.b32.cont [8/16] 0.0, 128
    %443 = vxpose.xlu0.b32.cont [9/16] 0.0, 128
    %444 = vxpose.xlu0.b32.cont [10/16] 0.0, 128
    %445 = vxpose.xlu0.b32.cont [11/16] 0.0, 128
    %446 = vxpose.xlu0.b32.cont [12/16] 0.0, 128
    %447 = vxpose.xlu0.b32.cont [13/16] 0.0, 128
    %448 = vxpose.xlu0.b32.cont [14/16] 0.0, 128
    %449 = vxpose.xlu0.b32.cont [15/16] 0.0, 128
    %450 = vxpose.xlu0.b32.end [16/16] 0.0, 128
    %v451 = vpop.trf.xlu0
    %v452 = vpop.trf.xlu0
    %v453 = vpop.trf.xlu0
    %v454 = vpop.trf.xlu0
    %v455 = vpop.trf.xlu0
    %v456 = vpop.trf.xlu0
    %v457 = vpop.trf.xlu0
    %v458 = vpop.trf.xlu0
    %v459 = vpop.trf.xlu0
    %v460 = vpop.trf.xlu0
    %v461 = vpop.trf.xlu0
    %v462 = vpop.trf.xlu0
    %v463 = vpop.trf.xlu0
    %v464 = vpop.trf.xlu0
    %v465 = vpop.trf.xlu0
    %v466 = vpop.trf.xlu0
    %467 = vxpose.xlu0.b32.start [1/16] %v326, 128
    %468 = vxpose.xlu0.b32.cont [2/16] 0.0, 128
    %469 = vxpose.xlu0.b32.cont [3/16] 0.0, 128
    %470 = vxpose.xlu0.b32.cont [4/16] 0.0, 128
    %471 = vxpose.xlu0.b32.cont [5/16] 0.0, 128
    %472 = vxpose.xlu0.b32.cont [6/16] 0.0, 128
    %473 = vxpose.xlu0.b32.cont [7/16] 0.0, 128
    %474 = vxpose.xlu0.b32.cont [8/16] 0.0, 128
    %475 = vxpose.xlu0.b32.cont [9/16] 0.0, 128
    %476 = vxpose.xlu0.b32.cont [10/16] 0.0, 128
    %477 = vxpose.xlu0.b32.cont [11/16] 0.0, 128
    %478 = vxpose.xlu0.b32.cont [12/16] 0.0, 128
    %479 = vxpose.xlu0.b32.cont [13/16] 0.0, 128
    %480 = vxpose.xlu0.b32.cont [14/16] 0.0, 128
    %481 = vxpose.xlu0.b32.cont [15/16] 0.0, 128
    %482 = vxpose.xlu0.b32.end [16/16] 0.0, 128
    %v483 = vpop.trf.xlu0
    %v484 = vpop.trf.xlu0
    %v485 = vpop.trf.xlu0
    %v486 = vpop.trf.xlu0
    %v487 = vpop.trf.xlu0
    %v488 = vpop.trf.xlu0
    %v489 = vpop.trf.xlu0
    %v490 = vpop.trf.xlu0
    %v491 = vpop.trf.xlu0
    %v492 = vpop.trf.xlu0
    %v493 = vpop.trf.xlu0
    %v494 = vpop.trf.xlu0
    %v495 = vpop.trf.xlu0
    %v496 = vpop.trf.xlu0
    %v497 = vpop.trf.xlu0
    %v498 = vpop.trf.xlu0
    %499 = vxpose.xlu0.b32.start [1/16] %v355, 128
    %500 = vxpose.xlu0.b32.cont [2/16] 0.0, 128
    %501 = vxpose.xlu0.b32.cont [3/16] 0.0, 128
    %502 = vxpose.xlu0.b32.cont [4/16] 0.0, 128
    %503 = vxpose.xlu0.b32.cont [5/16] 0.0, 128
    %504 = vxpose.xlu0.b32.cont [6/16] 0.0, 128
    %505 = vxpose.xlu0.b32.cont [7/16] 0.0, 128
    %506 = vxpose.xlu0.b32.cont [8/16] 0.0, 128
    %507 = vxpose.xlu0.b32.cont [9/16] 0.0, 128
    %508 = vxpose.xlu0.b32.cont [10/16] 0.0, 128
    %509 = vxpose.xlu0.b32.cont [11/16] 0.0, 128
    %510 = vxpose.xlu0.b32.cont [12/16] 0.0, 128
    %511 = vxpose.xlu0.b32.cont [13/16] 0.0, 128
    %512 = vxpose.xlu0.b32.cont [14/16] 0.0, 128
    %513 = vxpose.xlu0.b32.cont [15/16] 0.0, 128
    %514 = vxpose.xlu0.b32.end [16/16] 0.0, 128
    %v515 = vpop.trf.xlu0
    %v516 = vpop.trf.xlu0
    %v517 = vpop.trf.xlu0
    %v518 = vpop.trf.xlu0
    %v519 = vpop.trf.xlu0
    %v520 = vpop.trf.xlu0
    %v521 = vpop.trf.xlu0
    %v522 = vpop.trf.xlu0
    %v523 = vpop.trf.xlu0
    %v524 = vpop.trf.xlu0
    %v525 = vpop.trf.xlu0
    %v526 = vpop.trf.xlu0
    %v527 = vpop.trf.xlu0
    %v528 = vpop.trf.xlu0
    %v529 = vpop.trf.xlu0
    %v530 = vpop.trf.xlu0
    %531 = vxpose.xlu0.b32.start [1/16] %v356, 128
    %532 = vxpose.xlu0.b32.cont [2/16] 0.0, 128
    %533 = vxpose.xlu0.b32.cont [3/16] 0.0, 128
    %534 = vxpose.xlu0.b32.cont [4/16] 0.0, 128
    %535 = vxpose.xlu0.b32.cont [5/16] 0.0, 128
    %536 = vxpose.xlu0.b32.cont [6/16] 0.0, 128
    %537 = vxpose.xlu0.b32.cont [7/16] 0.0, 128
    %538 = vxpose.xlu0.b32.cont [8/16] 0.0, 128
    %539 = vxpose.xlu0.b32.cont [9/16] 0.0, 128
    %540 = vxpose.xlu0.b32.cont [10/16] 0.0, 128
    %541 = vxpose.xlu0.b32.cont [11/16] 0.0, 128
    %542 = vxpose.xlu0.b32.cont [12/16] 0.0, 128
    %543 = vxpose.xlu0.b32.cont [13/16] 0.0, 128
    %544 = vxpose.xlu0.b32.cont [14/16] 0.0, 128
    %545 = vxpose.xlu0.b32.cont [15/16] 0.0, 128
    %546 = vxpose.xlu0.b32.end [16/16] 0.0, 128
    %v547 = vpop.trf.xlu0
    %v548 = vpop.trf.xlu0
    %v549 = vpop.trf.xlu0
    %v550 = vpop.trf.xlu0
    %v551 = vpop.trf.xlu0
    %v552 = vpop.trf.xlu0
    %v553 = vpop.trf.xlu0
    %v554 = vpop.trf.xlu0
    %v555 = vpop.trf.xlu0
    %v556 = vpop.trf.xlu0
    %v557 = vpop.trf.xlu0
    %v558 = vpop.trf.xlu0
    %v559 = vpop.trf.xlu0
    %v560 = vpop.trf.xlu0
    %v561 = vpop.trf.xlu0
    %v562 = vpop.trf.xlu0
    %563 = vxpose.xlu0.b32.start [1/16] %v357, 128
    %564 = vxpose.xlu0.b32.cont [2/16] 0.0, 128
    %565 = vxpose.xlu0.b32.cont [3/16] 0.0, 128
    %566 = vxpose.xlu0.b32.cont [4/16] 0.0, 128
    %567 = vxpose.xlu0.b32.cont [5/16] 0.0, 128
    %568 = vxpose.xlu0.b32.cont [6/16] 0.0, 128
    %569 = vxpose.xlu0.b32.cont [7/16] 0.0, 128
    %570 = vxpose.xlu0.b32.cont [8/16] 0.0, 128
    %571 = vxpose.xlu0.b32.cont [9/16] 0.0, 128
    %572 = vxpose.xlu0.b32.cont [10/16] 0.0, 128
    %573 = vxpose.xlu0.b32.cont [11/16] 0.0, 128
    %574 = vxpose.xlu0.b32.cont [12/16] 0.0, 128
    %575 = vxpose.xlu0.b32.cont [13/16] 0.0, 128
    %576 = vxpose.xlu0.b32.cont [14/16] 0.0, 128
    %577 = vxpose.xlu0.b32.cont [15/16] 0.0, 128
    %578 = vxpose.xlu0.b32.end [16/16] 0.0, 128
    %v579 = vpop.trf.xlu0
    %v580 = vpop.trf.xlu0
    %v581 = vpop.trf.xlu0
    %v582 = vpop.trf.xlu0
    %v583 = vpop.trf.xlu0
    %v584 = vpop.trf.xlu0
    %v585 = vpop.trf.xlu0
    %v586 = vpop.trf.xlu0
    %v587 = vpop.trf.xlu0
    %v588 = vpop.trf.xlu0
    %v589 = vpop.trf.xlu0
    %v590 = vpop.trf.xlu0
    %v591 = vpop.trf.xlu0
    %v592 = vpop.trf.xlu0
    %v593 = vpop.trf.xlu0
    %v594 = vpop.trf.xlu0
    %595 = vxpose.xlu0.b32.start [1/16] %v358, 128
    %596 = vxpose.xlu0.b32.cont [2/16] 0.0, 128
    %597 = vxpose.xlu0.b32.cont [3/16] 0.0, 128
    %598 = vxpose.xlu0.b32.cont [4/16] 0.0, 128
    %599 = vxpose.xlu0.b32.cont [5/16] 0.0, 128
    %600 = vxpose.xlu0.b32.cont [6/16] 0.0, 128
    %601 = vxpose.xlu0.b32.cont [7/16] 0.0, 128
    %602 = vxpose.xlu0.b32.cont [8/16] 0.0, 128
    %603 = vxpose.xlu0.b32.cont [9/16] 0.0, 128
    %604 = vxpose.xlu0.b32.cont [10/16] 0.0, 128
    %605 = vxpose.xlu0.b32.cont [11/16] 0.0, 128
    %606 = vxpose.xlu0.b32.cont [12/16] 0.0, 128
    %607 = vxpose.xlu0.b32.cont [13/16] 0.0, 128
    %608 = vxpose.xlu0.b32.cont [14/16] 0.0, 128
    %609 = vxpose.xlu0.b32.cont [15/16] 0.0, 128
    %610 = vxpose.xlu0.b32.end [16/16] 0.0, 128
    %v611 = vpop.trf.xlu0
    %v612 = vpop.trf.xlu0
    %v613 = vpop.trf.xlu0
    %v614 = vpop.trf.xlu0
    %v615 = vpop.trf.xlu0
    %v616 = vpop.trf.xlu0
    %v617 = vpop.trf.xlu0
    %v618 = vpop.trf.xlu0
    %v619 = vpop.trf.xlu0
    %v620 = vpop.trf.xlu0
    %v621 = vpop.trf.xlu0
    %v622 = vpop.trf.xlu0
    %v623 = vpop.trf.xlu0
    %v624 = vpop.trf.xlu0
    %v625 = vpop.trf.xlu0
    %v626 = vpop.trf.xlu0
    %627 = vxpose.xlu0.b32.start [1/16] %v275, 128
    %628 = vxpose.xlu0.b32.cont [2/16] 0.0, 128
    %629 = vxpose.xlu0.b32.cont [3/16] 0.0, 128
    %630 = vxpose.xlu0.b32.cont [4/16] 0.0, 128
    %631 = vxpose.xlu0.b32.cont [5/16] 0.0, 128
    %632 = vxpose.xlu0.b32.cont [6/16] 0.0, 128
    %633 = vxpose.xlu0.b32.cont [7/16] 0.0, 128
    %634 = vxpose.xlu0.b32.cont [8/16] 0.0, 128
    %635 = vxpose.xlu0.b32.cont [9/16] 0.0, 128
    %636 = vxpose.xlu0.b32.cont [10/16] 0.0, 128
    %637 = vxpose.xlu0.b32.cont [11/16] 0.0, 128
    %638 = vxpose.xlu0.b32.cont [12/16] 0.0, 128
    %639 = vxpose.xlu0.b32.cont [13/16] 0.0, 128
    %640 = vxpose.xlu0.b32.cont [14/16] 0.0, 128
    %641 = vxpose.xlu0.b32.cont [15/16] 0.0, 128
    %642 = vxpose.xlu0.b32.end [16/16] 0.0, 128
    %v643 = vpop.trf.xlu0
    %v644 = vpop.trf.xlu0
    %v645 = vpop.trf.xlu0
    %v646 = vpop.trf.xlu0
    %v647 = vpop.trf.xlu0
    %v648 = vpop.trf.xlu0
    %v649 = vpop.trf.xlu0
    %v650 = vpop.trf.xlu0
    %v651 = vpop.trf.xlu0
    %v652 = vpop.trf.xlu0
    %v653 = vpop.trf.xlu0
    %v654 = vpop.trf.xlu0
    %v655 = vpop.trf.xlu0
    %v656 = vpop.trf.xlu0
    %v657 = vpop.trf.xlu0
    %v658 = vpop.trf.xlu0
    %659 = vxpose.xlu0.b32.start [1/16] %v278, 128
    %660 = vxpose.xlu0.b32.cont [2/16] 0.0, 128
    %661 = vxpose.xlu0.b32.cont [3/16] 0.0, 128
    %662 = vxpose.xlu0.b32.cont [4/16] 0.0, 128
    %663 = vxpose.xlu0.b32.cont [5/16] 0.0, 128
    %664 = vxpose.xlu0.b32.cont [6/16] 0.0, 128
    %665 = vxpose.xlu0.b32.cont [7/16] 0.0, 128
    %666 = vxpose.xlu0.b32.cont [8/16] 0.0, 128
    %667 = vxpose.xlu0.b32.cont [9/16] 0.0, 128
    %668 = vxpose.xlu0.b32.cont [10/16] 0.0, 128
    %669 = vxpose.xlu0.b32.cont [11/16] 0.0, 128
    %670 = vxpose.xlu0.b32.cont [12/16] 0.0, 128
    %671 = vxpose.xlu0.b32.cont [13/16] 0.0, 128
    %672 = vxpose.xlu0.b32.cont [14/16] 0.0, 128
    %673 = vxpose.xlu0.b32.cont [15/16] 0.0, 128
    %674 = vxpose.xlu0.b32.end [16/16] 0.0, 128
    %v675 = vpop.trf.xlu0
    %v676 = vpop.trf.xlu0
    %v677 = vpop.trf.xlu0
    %v678 = vpop.trf.xlu0
    %v679 = vpop.trf.xlu0
    %v680 = vpop.trf.xlu0
    %v681 = vpop.trf.xlu0
    %v682 = vpop.trf.xlu0
    %v683 = vpop.trf.xlu0
    %v684 = vpop.trf.xlu0
    %v685 = vpop.trf.xlu0
    %v686 = vpop.trf.xlu0
    %v687 = vpop.trf.xlu0
    %v688 = vpop.trf.xlu0
    %v689 = vpop.trf.xlu0
    %v690 = vpop.trf.xlu0
    %691 = vxpose.xlu0.b32.start [1/16] %v302, 128
    %692 = vxpose.xlu0.b32.cont [2/16] 0.0, 128
    %693 = vxpose.xlu0.b32.cont [3/16] 0.0, 128
    %694 = vxpose.xlu0.b32.cont [4/16] 0.0, 128
    %695 = vxpose.xlu0.b32.cont [5/16] 0.0, 128
    %696 = vxpose.xlu0.b32.cont [6/16] 0.0, 128
    %697 = vxpose.xlu0.b32.cont [7/16] 0.0, 128
    %698 = vxpose.xlu0.b32.cont [8/16] 0.0, 128
    %699 = vxpose.xlu0.b32.cont [9/16] 0.0, 128
    %700 = vxpose.xlu0.b32.cont [10/16] 0.0, 128
    %701 = vxpose.xlu0.b32.cont [11/16] 0.0, 128
    %702 = vxpose.xlu0.b32.cont [12/16] 0.0, 128
    %703 = vxpose.xlu0.b32.cont [13/16] 0.0, 128
    %704 = vxpose.xlu0.b32.cont [14/16] 0.0, 128
    %705 = vxpose.xlu0.b32.cont [15/16] 0.0, 128
    %706 = vxpose.xlu0.b32.end [16/16] 0.0, 128
    %v707 = vpop.trf.xlu0
    %v708 = vpop.trf.xlu0
    %v709 = vpop.trf.xlu0
    %v710 = vpop.trf.xlu0
    %v711 = vpop.trf.xlu0
    %v712 = vpop.trf.xlu0
    %v713 = vpop.trf.xlu0
    %v714 = vpop.trf.xlu0
    %v715 = vpop.trf.xlu0
    %v716 = vpop.trf.xlu0
    %v717 = vpop.trf.xlu0
    %v718 = vpop.trf.xlu0
    %v719 = vpop.trf.xlu0
    %v720 = vpop.trf.xlu0
    %v721 = vpop.trf.xlu0
    %v722 = vpop.trf.xlu0
    %723 = vxpose.xlu0.b32.start [1/16] %v305, 128
    %724 = vxpose.xlu0.b32.cont [2/16] 0.0, 128
    %725 = vxpose.xlu0.b32.cont [3/16] 0.0, 128
    %726 = vxpose.xlu0.b32.cont [4/16] 0.0, 128
    %727 = vxpose.xlu0.b32.cont [5/16] 0.0, 128
    %728 = vxpose.xlu0.b32.cont [6/16] 0.0, 128
    %729 = vxpose.xlu0.b32.cont [7/16] 0.0, 128
    %730 = vxpose.xlu0.b32.cont [8/16] 0.0, 128
    %731 = vxpose.xlu0.b32.cont [9/16] 0.0, 128
    %732 = vxpose.xlu0.b32.cont [10/16] 0.0, 128
    %733 = vxpose.xlu0.b32.cont [11/16] 0.0, 128
    %734 = vxpose.xlu0.b32.cont [12/16] 0.0, 128
    %735 = vxpose.xlu0.b32.cont [13/16] 0.0, 128
    %736 = vxpose.xlu0.b32.cont [14/16] 0.0, 128
    %737 = vxpose.xlu0.b32.cont [15/16] 0.0, 128
    %738 = vxpose.xlu0.b32.end [16/16] 0.0, 128
    %v739 = vpop.trf.xlu0
    %v740 = vpop.trf.xlu0
    %v741 = vpop.trf.xlu0
    %v742 = vpop.trf.xlu0
    %v743 = vpop.trf.xlu0
    %v744 = vpop.trf.xlu0
    %v745 = vpop.trf.xlu0
    %v746 = vpop.trf.xlu0
    %v747 = vpop.trf.xlu0
    %v748 = vpop.trf.xlu0
    %v749 = vpop.trf.xlu0
    %v750 = vpop.trf.xlu0
    %v751 = vpop.trf.xlu0
    %v752 = vpop.trf.xlu0
    %v753 = vpop.trf.xlu0
    %v754 = vpop.trf.xlu0
    %vm755 = vcmask 64512
    %v757 = vsel %vm755, %v387, 0
    %759 = vmatpush.msra.mxu0 0.0
    %760 = vmatpush.msra.mxu0 0.0
    %761 = vmatpush.msra.mxu0 0.0
    %762 = vmatpush.msra.mxu0 0.0
    %763 = vmatpush.msra.mxu0 0.0
    %764 = vmatpush.msra.mxu0 0.0
    %765 = vmatpush.msra.mxu0 0.0
    %766 = vmatpush.msra.mxu0 0.0
    %767 = vmatpush.msra.mxu0 0.0
    %768 = vmatpush.msra.mxu0 0.0
    %769 = vmatpush.msra.mxu0 0.0
    %770 = vmatpush.msra.mxu0 0.0
    %771 = vmatpush.msra.mxu0 0.0
    %772 = vmatpush.msra.mxu0 0.0
    %773 = vmatpush.msra.mxu0 0.0
    %774 = vmatpush.msra.mxu0 %v643
    %775 = vmatmul.f32.gmra.mxu0 %v757
    %v776 = vpop.f32.mrf.mxu0
    %v777 = vadd.f32 0.0, %v776
    %778 = vdwg.mxu0
    %v780 = vsel %vm755, %v419, 0
    %782 = vmatpush.msra.mxu0 0.0
    %783 = vmatpush.msra.mxu0 0.0
    %784 = vmatpush.msra.mxu0 0.0
    %785 = vmatpush.msra.mxu0 0.0
    %786 = vmatpush.msra.mxu0 0.0
    %787 = vmatpush.msra.mxu0 0.0
    %788 = vmatpush.msra.mxu0 0.0
    %789 = vmatpush.msra.mxu0 0.0
    %790 = vmatpush.msra.mxu0 0.0
    %791 = vmatpush.msra.mxu0 0.0
    %792 = vmatpush.msra.mxu0 0.0
    %793 = vmatpush.msra.mxu0 0.0
    %794 = vmatpush.msra.mxu0 0.0
    %795 = vmatpush.msra.mxu0 0.0
    %796 = vmatpush.msra.mxu0 0.0
    %797 = vmatpush.msra.mxu0 %v644
    %798 = vmatmul.f32.gmra.mxu0 %v780
    %v799 = vpop.f32.mrf.mxu0
    %v800 = vadd.f32 0.0, %v799
    %801 = vdwg.mxu0
    %v803 = vsel %vm755, %v451, 0
    %805 = vmatpush.msra.mxu0 0.0
    %806 = vmatpush.msra.mxu0 0.0
    %807 = vmatpush.msra.mxu0 0.0
    %808 = vmatpush.msra.mxu0 0.0
    %809 = vmatpush.msra.mxu0 0.0
    %810 = vmatpush.msra.mxu0 0.0
    %811 = vmatpush.msra.mxu0 0.0
    %812 = vmatpush.msra.mxu0 0.0
    %813 = vmatpush.msra.mxu0 0.0
    %814 = vmatpush.msra.mxu0 0.0
    %815 = vmatpush.msra.mxu0 0.0
    %816 = vmatpush.msra.mxu0 0.0
    %817 = vmatpush.msra.mxu0 0.0
    %818 = vmatpush.msra.mxu0 0.0
    %819 = vmatpush.msra.mxu0 0.0
    %820 = vmatpush.msra.mxu0 %v645
    %821 = vmatmul.f32.gmra.mxu0 %v803
    %v822 = vpop.f32.mrf.mxu0
    %v823 = vadd.f32 0.0, %v822
    %824 = vdwg.mxu0
    %v826 = vsel %vm755, %v483, 0
    %828 = vmatpush.msra.mxu0 0.0
    %829 = vmatpush.msra.mxu0 0.0
    %830 = vmatpush.msra.mxu0 0.0
    %831 = vmatpush.msra.mxu0 0.0
    %832 = vmatpush.msra.mxu0 0.0
    %833 = vmatpush.msra.mxu0 0.0
    %834 = vmatpush.msra.mxu0 0.0
    %835 = vmatpush.msra.mxu0 0.0
    %836 = vmatpush.msra.mxu0 0.0
    %837 = vmatpush.msra.mxu0 0.0
    %838 = vmatpush.msra.mxu0 0.0
    %839 = vmatpush.msra.mxu0 0.0
    %840 = vmatpush.msra.mxu0 0.0
    %841 = vmatpush.msra.mxu0 0.0
    %842 = vmatpush.msra.mxu0 0.0
    %843 = vmatpush.msra.mxu0 %v646
    %844 = vmatmul.f32.gmra.mxu0 %v826
    %v845 = vpop.f32.mrf.mxu0
    %v846 = vadd.f32 0.0, %v845
    %847 = vdwg.mxu0
    %v849 = vsel %vm755, %v515, 0
    %851 = vmatpush.msra.mxu0 0.0
    %852 = vmatpush.msra.mxu0 0.0
    %853 = vmatpush.msra.mxu0 0.0
    %854 = vmatpush.msra.mxu0 0.0
    %855 = vmatpush.msra.mxu0 0.0
    %856 = vmatpush.msra.mxu0 0.0
    %857 = vmatpush.msra.mxu0 0.0
    %858 = vmatpush.msra.mxu0 0.0
    %859 = vmatpush.msra.mxu0 0.0
    %860 = vmatpush.msra.mxu0 0.0
    %861 = vmatpush.msra.mxu0 0.0
    %862 = vmatpush.msra.mxu0 0.0
    %863 = vmatpush.msra.mxu0 0.0
    %864 = vmatpush.msra.mxu0 0.0
    %865 = vmatpush.msra.mxu0 0.0
    %866 = vmatpush.msra.mxu0 %v675
    %867 = vmatmul.f32.gmra.mxu0 %v849
    %v868 = vpop.f32.mrf.mxu0
    %v869 = vadd.f32 0.0, %v868
    %870 = vdwg.mxu0
    %v872 = vsel %vm755, %v547, 0
    %874 = vmatpush.msra.mxu0 0.0
    %875 = vmatpush.msra.mxu0 0.0
    %876 = vmatpush.msra.mxu0 0.0
    %877 = vmatpush.msra.mxu0 0.0
    %878 = vmatpush.msra.mxu0 0.0
    %879 = vmatpush.msra.mxu0 0.0
    %880 = vmatpush.msra.mxu0 0.0
    %881 = vmatpush.msra.mxu0 0.0
    %882 = vmatpush.msra.mxu0 0.0
    %883 = vmatpush.msra.mxu0 0.0
    %884 = vmatpush.msra.mxu0 0.0
    %885 = vmatpush.msra.mxu0 0.0
    %886 = vmatpush.msra.mxu0 0.0
    %887 = vmatpush.msra.mxu0 0.0
    %888 = vmatpush.msra.mxu0 0.0
    %889 = vmatpush.msra.mxu0 %v676
    %890 = vmatmul.f32.gmra.mxu0 %v872
    %v891 = vpop.f32.mrf.mxu0
    %v892 = vadd.f32 0.0, %v891
    %893 = vdwg.mxu0
    %v895 = vsel %vm755, %v579, 0
    %897 = vmatpush.msra.mxu0 0.0
    %898 = vmatpush.msra.mxu0 0.0
    %899 = vmatpush.msra.mxu0 0.0
    %900 = vmatpush.msra.mxu0 0.0
    %901 = vmatpush.msra.mxu0 0.0
    %902 = vmatpush.msra.mxu0 0.0
    %903 = vmatpush.msra.mxu0 0.0
    %904 = vmatpush.msra.mxu0 0.0
    %905 = vmatpush.msra.mxu0 0.0
    %906 = vmatpush.msra.mxu0 0.0
    %907 = vmatpush.msra.mxu0 0.0
    %908 = vmatpush.msra.mxu0 0.0
    %909 = vmatpush.msra.mxu0 0.0
    %910 = vmatpush.msra.mxu0 0.0
    %911 = vmatpush.msra.mxu0 0.0
    %912 = vmatpush.msra.mxu0 %v677
    %913 = vmatmul.f32.gmra.mxu0 %v895
    %v914 = vpop.f32.mrf.mxu0
    %v915 = vadd.f32 0.0, %v914
    %916 = vdwg.mxu0
    %v918 = vsel %vm755, %v611, 0
    %920 = vmatpush.msra.mxu0 0.0
    %921 = vmatpush.msra.mxu0 0.0
    %922 = vmatpush.msra.mxu0 0.0
    %923 = vmatpush.msra.mxu0 0.0
    %924 = vmatpush.msra.mxu0 0.0
    %925 = vmatpush.msra.mxu0 0.0
    %926 = vmatpush.msra.mxu0 0.0
    %927 = vmatpush.msra.mxu0 0.0
    %928 = vmatpush.msra.mxu0 0.0
    %929 = vmatpush.msra.mxu0 0.0
    %930 = vmatpush.msra.mxu0 0.0
    %931 = vmatpush.msra.mxu0 0.0
    %932 = vmatpush.msra.mxu0 0.0
    %933 = vmatpush.msra.mxu0 0.0
    %934 = vmatpush.msra.mxu0 0.0
    %935 = vmatpush.msra.mxu0 %v678
    %936 = vmatmul.f32.gmra.mxu0 %v918
    %v937 = vpop.f32.mrf.mxu0
    %v938 = vadd.f32 0.0, %v937
    %939 = vdwg.mxu0
    %v940 = vmul.f32 %v777, 0.35355338
    %v941 = vmul.f32 %v800, 0.35355338
    %v942 = vmul.f32 %v823, 0.35355338
    %v943 = vmul.f32 %v846, 0.35355338
    %v944 = vmul.f32 %v869, 0.35355338
    %v945 = vmul.f32 %v892, 0.35355338
    %v946 = vmul.f32 %v915, 0.35355338
    %v947 = vmul.f32 %v938, 0.35355338
    %v948 = vsel %vm755, %v940, -inf
    %949 = vmax.xlane.f32.xlu0 %v948
    %v950 = vpop.xlane.xlu0 %949
    %v951 = vsel %vm755, %v941, -inf
    %952 = vmax.xlane.f32.xlu0 %v951
    %v953 = vpop.xlane.xlu0 %952
    %v954 = vsel %vm755, %v942, -inf
    %955 = vmax.xlane.f32.xlu0 %v954
    %v956 = vpop.xlane.xlu0 %955
    %v957 = vsel %vm755, %v943, -inf
    %958 = vmax.xlane.f32.xlu0 %v957
    %v959 = vpop.xlane.xlu0 %958
    %v960 = vsel %vm755, %v944, -inf
    %961 = vmax.xlane.f32.xlu0 %v960
    %v962 = vpop.xlane.xlu0 %961
    %v963 = vsel %vm755, %v945, -inf
    %964 = vmax.xlane.f32.xlu0 %v963
    %v965 = vpop.xlane.xlu0 %964
    %v966 = vsel %vm755, %v946, -inf
    %967 = vmax.xlane.f32.xlu0 %v966
    %v968 = vpop.xlane.xlu0 %967
    %v969 = vsel %vm755, %v947, -inf
    %970 = vmax.xlane.f32.xlu0 %v969
    %v971 = vpop.xlane.xlu0 %970
    %v972 = vsub.f32 %v940, %v950
    %v973 = vsub.f32 %v941, %v953
    %v974 = vsub.f32 %v942, %v956
    %v975 = vsub.f32 %v943, %v959
    %v976 = vsub.f32 %v944, %v962
    %v977 = vsub.f32 %v945, %v965
    %v978 = vsub.f32 %v946, %v968
    %v979 = vsub.f32 %v947, %v971
    %v980 = vmul.f32 %v972, 1.442695
    %v981 = vpow.pop %v980
    %v982 = vmul.f32 %v973, 1.442695
    %v983 = vpow.pop %v982
    %v984 = vmul.f32 %v974, 1.442695
    %v985 = vpow.pop %v984
    %v986 = vmul.f32 %v975, 1.442695
    %v987 = vpow.pop %v986
    %v988 = vmul.f32 %v976, 1.442695
    %v989 = vpow.pop %v988
    %v990 = vmul.f32 %v977, 1.442695
    %v991 = vpow.pop %v990
    %v992 = vmul.f32 %v978, 1.442695
    %v993 = vpow.pop %v992
    %v994 = vmul.f32 %v979, 1.442695
    %v995 = vpow.pop %v994
    %v996 = vsel %vm755, %v981, 0.0
    %997 = vadd.xlane.f32.xlu0 %v996
    %v998 = vpop.xlane.xlu0 %997
    %v999 = vsel %vm755, %v983, 0.0
    %1000 = vadd.xlane.f32.xlu0 %v999
    %v1001 = vpop.xlane.xlu0 %1000
    %v1002 = vsel %vm755, %v985, 0.0
    %1003 = vadd.xlane.f32.xlu0 %v1002
    %v1004 = vpop.xlane.xlu0 %1003
    %v1005 = vsel %vm755, %v987, 0.0
    %1006 = vadd.xlane.f32.xlu0 %v1005
    %v1007 = vpop.xlane.xlu0 %1006
    %v1008 = vsel %vm755, %v989, 0.0
    %1009 = vadd.xlane.f32.xlu0 %v1008
    %v1010 = vpop.xlane.xlu0 %1009
    %v1011 = vsel %vm755, %v991, 0.0
    %1012 = vadd.xlane.f32.xlu0 %v1011
    %v1013 = vpop.xlane.xlu0 %1012
    %v1014 = vsel %vm755, %v993, 0.0
    %1015 = vadd.xlane.f32.xlu0 %v1014
    %v1016 = vpop.xlane.xlu0 %1015
    %v1017 = vsel %vm755, %v995, 0.0
    %1018 = vadd.xlane.f32.xlu0 %v1017
    %v1019 = vpop.xlane.xlu0 %1018
    %v1020 = vrcp.pop %v998
    %v1021 = vmul.f32 %v998, %v1020
    %v1022 = vsub.f32 1.0, %v1021
    %v1023 = vmul.f32 %v1020, %v1022
    %v1024 = vadd.f32 %v1020, %v1023
    %vm1025 = vweird.f32 %v998
    %vm1026 = vweird.f32 %v1020
    %vm1027 = vmor %vm1025, %vm1026
    %v1028 = vsel %vm1027, %v1020, %v1024
    %v1029 = vand.u32 2147483647, %v998
    %vm1030 = vcmp.eq.f32.partialorder %v1029, 8.507059e+37
    %v1031 = vand.u32 %v998, 2147483648
    %v1032 = vor.u32 1.1754944e-38, %v1031
    %v1033 = vsel %vm1030, %v1032, %v1028
    %v1034 = vmul.f32 %v981, %v1033
    %v1035 = vrcp.pop %v1001
    %v1036 = vmul.f32 %v1001, %v1035
    %v1037 = vsub.f32 1.0, %v1036
    %v1038 = vmul.f32 %v1035, %v1037
    %v1039 = vadd.f32 %v1035, %v1038
    %vm1040 = vweird.f32 %v1001
    %vm1041 = vweird.f32 %v1035
    %vm1042 = vmor %vm1040, %vm1041
    %v1043 = vsel %vm1042, %v1035, %v1039
    %v1044 = vand.u32 2147483647, %v1001
    %vm1045 = vcmp.eq.f32.partialorder %v1044, 8.507059e+37
    %v1046 = vand.u32 %v1001, 2147483648
    %v1047 = vor.u32 1.1754944e-38, %v1046
    %v1048 = vsel %vm1045, %v1047, %v1043
    %v1049 = vmul.f32 %v983, %v1048
    %v1050 = vrcp.pop %v1004
    %v1051 = vmul.f32 %v1004, %v1050
    %v1052 = vsub.f32 1.0, %v1051
    %v1053 = vmul.f32 %v1050, %v1052
    %v1054 = vadd.f32 %v1050, %v1053
    %vm1055 = vweird.f32 %v1004
    %vm1056 = vweird.f32 %v1050
    %vm1057 = vmor %vm1055, %vm1056
    %v1058 = vsel %vm1057, %v1050, %v1054
    %v1059 = vand.u32 2147483647, %v1004
    %vm1060 = vcmp.eq.f32.partialorder %v1059, 8.507059e+37
    %v1061 = vand.u32 %v1004, 2147483648
    %v1062 = vor.u32 1.1754944e-38, %v1061
    %v1063 = vsel %vm1060, %v1062, %v1058
    %v1064 = vmul.f32 %v985, %v1063
    %v1065 = vrcp.pop %v1007
    %v1066 = vmul.f32 %v1007, %v1065
    %v1067 = vsub.f32 1.0, %v1066
    %v1068 = vmul.f32 %v1065, %v1067
    %v1069 = vadd.f32 %v1065, %v1068
    %vm1070 = vweird.f32 %v1007
    %vm1071 = vweird.f32 %v1065
    %vm1072 = vmor %vm1070, %vm1071
    %v1073 = vsel %vm1072, %v1065, %v1069
    %v1074 = vand.u32 2147483647, %v1007
    %vm1075 = vcmp.eq.f32.partialorder %v1074, 8.507059e+37
    %v1076 = vand.u32 %v1007, 2147483648
    %v1077 = vor.u32 1.1754944e-38, %v1076
    %v1078 = vsel %vm1075, %v1077, %v1073
    %v1079 = vmul.f32 %v987, %v1078
    %v1080 = vrcp.pop %v1010
    %v1081 = vmul.f32 %v1010, %v1080
    %v1082 = vsub.f32 1.0, %v1081
    %v1083 = vmul.f32 %v1080, %v1082
    %v1084 = vadd.f32 %v1080, %v1083
    %vm1085 = vweird.f32 %v1010
    %vm1086 = vweird.f32 %v1080
    %vm1087 = vmor %vm1085, %vm1086
    %v1088 = vsel %vm1087, %v1080, %v1084
    %v1089 = vand.u32 2147483647, %v1010
    %vm1090 = vcmp.eq.f32.partialorder %v1089, 8.507059e+37
    %v1091 = vand.u32 %v1010, 2147483648
    %v1092 = vor.u32 1.1754944e-38, %v1091
    %v1093 = vsel %vm1090, %v1092, %v1088
    %v1094 = vmul.f32 %v989, %v1093
    %v1095 = vrcp.pop %v1013
    %v1096 = vmul.f32 %v1013, %v1095
    %v1097 = vsub.f32 1.0, %v1096
    %v1098 = vmul.f32 %v1095, %v1097
    %v1099 = vadd.f32 %v1095, %v1098
    %vm1100 = vweird.f32 %v1013
    %vm1101 = vweird.f32 %v1095
    %vm1102 = vmor %vm1100, %vm1101
    %v1103 = vsel %vm1102, %v1095, %v1099
    %v1104 = vand.u32 2147483647, %v1013
    %vm1105 = vcmp.eq.f32.partialorder %v1104, 8.507059e+37
    %v1106 = vand.u32 %v1013, 2147483648
    %v1107 = vor.u32 1.1754944e-38, %v1106
    %v1108 = vsel %vm1105, %v1107, %v1103
    %v1109 = vmul.f32 %v991, %v1108
    %v1110 = vrcp.pop %v1016
    %v1111 = vmul.f32 %v1016, %v1110
    %v1112 = vsub.f32 1.0, %v1111
    %v1113 = vmul.f32 %v1110, %v1112
    %v1114 = vadd.f32 %v1110, %v1113
    %vm1115 = vweird.f32 %v1016
    %vm1116 = vweird.f32 %v1110
    %vm1117 = vmor %vm1115, %vm1116
    %v1118 = vsel %vm1117, %v1110, %v1114
    %v1119 = vand.u32 2147483647, %v1016
    %vm1120 = vcmp.eq.f32.partialorder %v1119, 8.507059e+37
    %v1121 = vand.u32 %v1016, 2147483648
    %v1122 = vor.u32 1.1754944e-38, %v1121
    %v1123 = vsel %vm1120, %v1122, %v1118
    %v1124 = vmul.f32 %v993, %v1123
    %v1125 = vrcp.pop %v1019
    %v1126 = vmul.f32 %v1019, %v1125
    %v1127 = vsub.f32 1.0, %v1126
    %v1128 = vmul.f32 %v1125, %v1127
    %v1129 = vadd.f32 %v1125, %v1128
    %vm1130 = vweird.f32 %v1019
    %vm1131 = vweird.f32 %v1125
    %vm1132 = vmor %vm1130, %vm1131
    %v1133 = vsel %vm1132, %v1125, %v1129
    %v1134 = vand.u32 2147483647, %v1019
    %vm1135 = vcmp.eq.f32.partialorder %v1134, 8.507059e+37
    %v1136 = vand.u32 %v1019, 2147483648
    %v1137 = vor.u32 1.1754944e-38, %v1136
    %v1138 = vsel %vm1135, %v1137, %v1133
    %v1139 = vmul.f32 %v995, %v1138
    %v1141 = vsel %vm755, %v1034, 0
    %v1144 = vsel %vm755, %v707, 0
    %1146 = vmatpush.xpose.msra.mxu0 0.0
    %1147 = vmatpush.xpose.msra.mxu0 0.0
    %1148 = vmatpush.xpose.msra.mxu0 0.0
    %1149 = vmatpush.xpose.msra.mxu0 0.0
    %1150 = vmatpush.xpose.msra.mxu0 0.0
    %1151 = vmatpush.xpose.msra.mxu0 0.0
    %1152 = vmatpush.xpose.msra.mxu0 0.0
    %1153 = vmatpush.xpose.msra.mxu0 0.0
    %1154 = vmatpush.xpose.msra.mxu0 0.0
    %1155 = vmatpush.xpose.msra.mxu0 0.0
    %1156 = vmatpush.xpose.msra.mxu0 0.0
    %1157 = vmatpush.xpose.msra.mxu0 0.0
    %1158 = vmatpush.xpose.msra.mxu0 0.0
    %1159 = vmatpush.xpose.msra.mxu0 0.0
    %1160 = vmatpush.xpose.msra.mxu0 0.0
    %1161 = vmatpush.xpose.msra.mxu0 %v1144
    %1162 = vmatmul.f32.gmra.mxu0 %v1141
    %v1163 = vpop.f32.mrf.mxu0
    %v1164 = vadd.f32 0.0, %v1163
    %1165 = vdwg.mxu0
    %v1167 = vsel %vm755, %v1049, 0
    %v1170 = vsel %vm755, %v708, 0
    %1172 = vmatpush.xpose.msra.mxu0 0.0
    %1173 = vmatpush.xpose.msra.mxu0 0.0
    %1174 = vmatpush.xpose.msra.mxu0 0.0
    %1175 = vmatpush.xpose.msra.mxu0 0.0
    %1176 = vmatpush.xpose.msra.mxu0 0.0
    %1177 = vmatpush.xpose.msra.mxu0 0.0
    %1178 = vmatpush.xpose.msra.mxu0 0.0
    %1179 = vmatpush.xpose.msra.mxu0 0.0
    %1180 = vmatpush.xpose.msra.mxu0 0.0
    %1181 = vmatpush.xpose.msra.mxu0 0.0
    %1182 = vmatpush.xpose.msra.mxu0 0.0
    %1183 = vmatpush.xpose.msra.mxu0 0.0
    %1184 = vmatpush.xpose.msra.mxu0 0.0
    %1185 = vmatpush.xpose.msra.mxu0 0.0
    %1186 = vmatpush.xpose.msra.mxu0 0.0
    %1187 = vmatpush.xpose.msra.mxu0 %v1170
    %1188 = vmatmul.f32.gmra.mxu0 %v1167
    %v1189 = vpop.f32.mrf.mxu0
    %v1190 = vadd.f32 0.0, %v1189
    %1191 = vdwg.mxu0
    %v1193 = vsel %vm755, %v1064, 0
    %v1196 = vsel %vm755, %v709, 0
    %1198 = vmatpush.xpose.msra.mxu0 0.0
    %1199 = vmatpush.xpose.msra.mxu0 0.0
    %1200 = vmatpush.xpose.msra.mxu0 0.0
    %1201 = vmatpush.xpose.msra.mxu0 0.0
    %1202 = vmatpush.xpose.msra.mxu0 0.0
    %1203 = vmatpush.xpose.msra.mxu0 0.0
    %1204 = vmatpush.xpose.msra.mxu0 0.0
    %1205 = vmatpush.xpose.msra.mxu0 0.0
    %1206 = vmatpush.xpose.msra.mxu0 0.0
    %1207 = vmatpush.xpose.msra.mxu0 0.0
    %1208 = vmatpush.xpose.msra.mxu0 0.0
    %1209 = vmatpush.xpose.msra.mxu0 0.0
    %1210 = vmatpush.xpose.msra.mxu0 0.0
    %1211 = vmatpush.xpose.msra.mxu0 0.0
    %1212 = vmatpush.xpose.msra.mxu0 0.0
    %1213 = vmatpush.xpose.msra.mxu0 %v1196
    %1214 = vmatmul.f32.gmra.mxu0 %v1193
    %v1215 = vpop.f32.mrf.mxu0
    %v1216 = vadd.f32 0.0, %v1215
    %1217 = vdwg.mxu0
    %v1219 = vsel %vm755, %v1079, 0
    %v1222 = vsel %vm755, %v710, 0
    %1224 = vmatpush.xpose.msra.mxu0 0.0
    %1225 = vmatpush.xpose.msra.mxu0 0.0
    %1226 = vmatpush.xpose.msra.mxu0 0.0
    %1227 = vmatpush.xpose.msra.mxu0 0.0
    %1228 = vmatpush.xpose.msra.mxu0 0.0
    %1229 = vmatpush.xpose.msra.mxu0 0.0
    %1230 = vmatpush.xpose.msra.mxu0 0.0
    %1231 = vmatpush.xpose.msra.mxu0 0.0
    %1232 = vmatpush.xpose.msra.mxu0 0.0
    %1233 = vmatpush.xpose.msra.mxu0 0.0
    %1234 = vmatpush.xpose.msra.mxu0 0.0
    %1235 = vmatpush.xpose.msra.mxu0 0.0
    %1236 = vmatpush.xpose.msra.mxu0 0.0
    %1237 = vmatpush.xpose.msra.mxu0 0.0
    %1238 = vmatpush.xpose.msra.mxu0 0.0
    %1239 = vmatpush.xpose.msra.mxu0 %v1222
    %1240 = vmatmul.f32.gmra.mxu0 %v1219
    %v1241 = vpop.f32.mrf.mxu0
    %v1242 = vadd.f32 0.0, %v1241
    %1243 = vdwg.mxu0
    %v1245 = vsel %vm755, %v1094, 0
    %v1248 = vsel %vm755, %v739, 0
    %1250 = vmatpush.xpose.msra.mxu0 0.0
    %1251 = vmatpush.xpose.msra.mxu0 0.0
    %1252 = vmatpush.xpose.msra.mxu0 0.0
    %1253 = vmatpush.xpose.msra.mxu0 0.0
    %1254 = vmatpush.xpose.msra.mxu0 0.0
    %1255 = vmatpush.xpose.msra.mxu0 0.0
    %1256 = vmatpush.xpose.msra.mxu0 0.0
    %1257 = vmatpush.xpose.msra.mxu0 0.0
    %1258 = vmatpush.xpose.msra.mxu0 0.0
    %1259 = vmatpush.xpose.msra.mxu0 0.0
    %1260 = vmatpush.xpose.msra.mxu0 0.0
    %1261 = vmatpush.xpose.msra.mxu0 0.0
    %1262 = vmatpush.xpose.msra.mxu0 0.0
    %1263 = vmatpush.xpose.msra.mxu0 0.0
    %1264 = vmatpush.xpose.msra.mxu0 0.0
    %1265 = vmatpush.xpose.msra.mxu0 %v1248
    %1266 = vmatmul.f32.gmra.mxu0 %v1245
    %v1267 = vpop.f32.mrf.mxu0
    %v1268 = vadd.f32 0.0, %v1267
    %1269 = vdwg.mxu0
    %v1271 = vsel %vm755, %v1109, 0
    %v1274 = vsel %vm755, %v740, 0
    %1276 = vmatpush.xpose.msra.mxu0 0.0
    %1277 = vmatpush.xpose.msra.mxu0 0.0
    %1278 = vmatpush.xpose.msra.mxu0 0.0
    %1279 = vmatpush.xpose.msra.mxu0 0.0
    %1280 = vmatpush.xpose.msra.mxu0 0.0
    %1281 = vmatpush.xpose.msra.mxu0 0.0
    %1282 = vmatpush.xpose.msra.mxu0 0.0
    %1283 = vmatpush.xpose.msra.mxu0 0.0
    %1284 = vmatpush.xpose.msra.mxu0 0.0
    %1285 = vmatpush.xpose.msra.mxu0 0.0
    %1286 = vmatpush.xpose.msra.mxu0 0.0
    %1287 = vmatpush.xpose.msra.mxu0 0.0
    %1288 = vmatpush.xpose.msra.mxu0 0.0
    %1289 = vmatpush.xpose.msra.mxu0 0.0
    %1290 = vmatpush.xpose.msra.mxu0 0.0
    %1291 = vmatpush.xpose.msra.mxu0 %v1274
    %1292 = vmatmul.f32.gmra.mxu0 %v1271
    %v1293 = vpop.f32.mrf.mxu0
    %v1294 = vadd.f32 0.0, %v1293
    %1295 = vdwg.mxu0
    %v1297 = vsel %vm755, %v1124, 0
    %v1300 = vsel %vm755, %v741, 0
    %1302 = vmatpush.xpose.msra.mxu0 0.0
    %1303 = vmatpush.xpose.msra.mxu0 0.0
    %1304 = vmatpush.xpose.msra.mxu0 0.0
    %1305 = vmatpush.xpose.msra.mxu0 0.0
    %1306 = vmatpush.xpose.msra.mxu0 0.0
    %1307 = vmatpush.xpose.msra.mxu0 0.0
    %1308 = vmatpush.xpose.msra.mxu0 0.0
    %1309 = vmatpush.xpose.msra.mxu0 0.0
    %1310 = vmatpush.xpose.msra.mxu0 0.0
    %1311 = vmatpush.xpose.msra.mxu0 0.0
    %1312 = vmatpush.xpose.msra.mxu0 0.0
    %1313 = vmatpush.xpose.msra.mxu0 0.0
    %1314 = vmatpush.xpose.msra.mxu0 0.0
    %1315 = vmatpush.xpose.msra.mxu0 0.0
    %1316 = vmatpush.xpose.msra.mxu0 0.0
    %1317 = vmatpush.xpose.msra.mxu0 %v1300
    %1318 = vmatmul.f32.gmra.mxu0 %v1297
    %v1319 = vpop.f32.mrf.mxu0
    %v1320 = vadd.f32 0.0, %v1319
    %1321 = vdwg.mxu0
    %v1323 = vsel %vm755, %v1139, 0
    %v1326 = vsel %vm755, %v742, 0
    %1328 = vmatpush.xpose.msra.mxu0 0.0
    %1329 = vmatpush.xpose.msra.mxu0 0.0
    %1330 = vmatpush.xpose.msra.mxu0 0.0
    %1331 = vmatpush.xpose.msra.mxu0 0.0
    %1332 = vmatpush.xpose.msra.mxu0 0.0
    %1333 = vmatpush.xpose.msra.mxu0 0.0
    %1334 = vmatpush.xpose.msra.mxu0 0.0
    %1335 = vmatpush.xpose.msra.mxu0 0.0
    %1336 = vmatpush.xpose.msra.mxu0 0.0
    %1337 = vmatpush.xpose.msra.mxu0 0.0
    %1338 = vmatpush.xpose.msra.mxu0 0.0
    %1339 = vmatpush.xpose.msra.mxu0 0.0
    %1340 = vmatpush.xpose.msra.mxu0 0.0
    %1341 = vmatpush.xpose.msra.mxu0 0.0
    %1342 = vmatpush.xpose.msra.mxu0 0.0
    %1343 = vmatpush.xpose.msra.mxu0 %v1326
    %1344 = vmatmul.f32.gmra.mxu0 %v1323
    %v1345 = vpop.f32.mrf.mxu0
    %v1346 = vadd.f32 0.0, %v1345
    %1347 = vdwg.mxu0
    %1348 = vxpose.xlu0.b32.start [1/16] %v1164, 128
    %1349 = vxpose.xlu0.b32.cont [2/16] 0.0, 128
    %1350 = vxpose.xlu0.b32.cont [3/16] 0.0, 128
    %1351 = vxpose.xlu0.b32.cont [4/16] 0.0, 128
    %1352 = vxpose.xlu0.b32.cont [5/16] 0.0, 128
    %1353 = vxpose.xlu0.b32.cont [6/16] 0.0, 128
    %1354 = vxpose.xlu0.b32.cont [7/16] 0.0, 128
    %1355 = vxpose.xlu0.b32.cont [8/16] 0.0, 128
    %1356 = vxpose.xlu0.b32.cont [9/16] 0.0, 128
    %1357 = vxpose.xlu0.b32.cont [10/16] 0.0, 128
    %1358 = vxpose.xlu0.b32.cont [11/16] 0.0, 128
    %1359 = vxpose.xlu0.b32.cont [12/16] 0.0, 128
    %1360 = vxpose.xlu0.b32.cont [13/16] 0.0, 128
    %1361 = vxpose.xlu0.b32.cont [14/16] 0.0, 128
    %1362 = vxpose.xlu0.b32.cont [15/16] 0.0, 128
    %1363 = vxpose.xlu0.b32.end [16/16] 0.0, 128
    %v1364 = vpop.trf.xlu0
    %v1365 = vpop.trf.xlu0
    %v1366 = vpop.trf.xlu0
    %v1367 = vpop.trf.xlu0
    %v1368 = vpop.trf.xlu0
    %v1369 = vpop.trf.xlu0
    %v1370 = vpop.trf.xlu0
    %v1371 = vpop.trf.xlu0
    %v1372 = vpop.trf.xlu0
    %v1373 = vpop.trf.xlu0
    %v1374 = vpop.trf.xlu0
    %v1375 = vpop.trf.xlu0
    %v1376 = vpop.trf.xlu0
    %v1377 = vpop.trf.xlu0
    %v1378 = vpop.trf.xlu0
    %v1379 = vpop.trf.xlu0
    %1380 = vxpose.xlu0.b32.start [1/16] %v1190, 128
    %1381 = vxpose.xlu0.b32.cont [2/16] 0.0, 128
    %1382 = vxpose.xlu0.b32.cont [3/16] 0.0, 128
    %1383 = vxpose.xlu0.b32.cont [4/16] 0.0, 128
    %1384 = vxpose.xlu0.b32.cont [5/16] 0.0, 128
    %1385 = vxpose.xlu0.b32.cont [6/16] 0.0, 128
    %1386 = vxpose.xlu0.b32.cont [7/16] 0.0, 128
    %1387 = vxpose.xlu0.b32.cont [8/16] 0.0, 128
    %1388 = vxpose.xlu0.b32.cont [9/16] 0.0, 128
    %1389 = vxpose.xlu0.b32.cont [10/16] 0.0, 128
    %1390 = vxpose.xlu0.b32.cont [11/16] 0.0, 128
    %1391 = vxpose.xlu0.b32.cont [12/16] 0.0, 128
    %1392 = vxpose.xlu0.b32.cont [13/16] 0.0, 128
    %1393 = vxpose.xlu0.b32.cont [14/16] 0.0, 128
    %1394 = vxpose.xlu0.b32.cont [15/16] 0.0, 128
    %1395 = vxpose.xlu0.b32.end [16/16] 0.0, 128
    %v1396 = vpop.trf.xlu0
    %v1397 = vpop.trf.xlu0
    %v1398 = vpop.trf.xlu0
    %v1399 = vpop.trf.xlu0
    %v1400 = vpop.trf.xlu0
    %v1401 = vpop.trf.xlu0
    %v1402 = vpop.trf.xlu0
    %v1403 = vpop.trf.xlu0
    %v1404 = vpop.trf.xlu0
    %v1405 = vpop.trf.xlu0
    %v1406 = vpop.trf.xlu0
    %v1407 = vpop.trf.xlu0
    %v1408 = vpop.trf.xlu0
    %v1409 = vpop.trf.xlu0
    %v1410 = vpop.trf.xlu0
    %v1411 = vpop.trf.xlu0
    %1412 = vxpose.xlu0.b32.start [1/16] %v1216, 128
    %1413 = vxpose.xlu0.b32.cont [2/16] 0.0, 128
    %1414 = vxpose.xlu0.b32.cont [3/16] 0.0, 128
    %1415 = vxpose.xlu0.b32.cont [4/16] 0.0, 128
    %1416 = vxpose.xlu0.b32.cont [5/16] 0.0, 128
    %1417 = vxpose.xlu0.b32.cont [6/16] 0.0, 128
    %1418 = vxpose.xlu0.b32.cont [7/16] 0.0, 128
    %1419 = vxpose.xlu0.b32.cont [8/16] 0.0, 128
    %1420 = vxpose.xlu0.b32.cont [9/16] 0.0, 128
    %1421 = vxpose.xlu0.b32.cont [10/16] 0.0, 128
    %1422 = vxpose.xlu0.b32.cont [11/16] 0.0, 128
    %1423 = vxpose.xlu0.b32.cont [12/16] 0.0, 128
    %1424 = vxpose.xlu0.b32.cont [13/16] 0.0, 128
    %1425 = vxpose.xlu0.b32.cont [14/16] 0.0, 128
    %1426 = vxpose.xlu0.b32.cont [15/16] 0.0, 128
    %1427 = vxpose.xlu0.b32.end [16/16] 0.0, 128
    %v1428 = vpop.trf.xlu0
    %v1429 = vpop.trf.xlu0
    %v1430 = vpop.trf.xlu0
    %v1431 = vpop.trf.xlu0
    %v1432 = vpop.trf.xlu0
    %v1433 = vpop.trf.xlu0
    %v1434 = vpop.trf.xlu0
    %v1435 = vpop.trf.xlu0
    %v1436 = vpop.trf.xlu0
    %v1437 = vpop.trf.xlu0
    %v1438 = vpop.trf.xlu0
    %v1439 = vpop.trf.xlu0
    %v1440 = vpop.trf.xlu0
    %v1441 = vpop.trf.xlu0
    %v1442 = vpop.trf.xlu0
    %v1443 = vpop.trf.xlu0
    %1444 = vxpose.xlu0.b32.start [1/16] %v1242, 128
    %1445 = vxpose.xlu0.b32.cont [2/16] 0.0, 128
    %1446 = vxpose.xlu0.b32.cont [3/16] 0.0, 128
    %1447 = vxpose.xlu0.b32.cont [4/16] 0.0, 128
    %1448 = vxpose.xlu0.b32.cont [5/16] 0.0, 128
    %1449 = vxpose.xlu0.b32.cont [6/16] 0.0, 128
    %1450 = vxpose.xlu0.b32.cont [7/16] 0.0, 128
    %1451 = vxpose.xlu0.b32.cont [8/16] 0.0, 128
    %1452 = vxpose.xlu0.b32.cont [9/16] 0.0, 128
    %1453 = vxpose.xlu0.b32.cont [10/16] 0.0, 128
    %1454 = vxpose.xlu0.b32.cont [11/16] 0.0, 128
    %1455 = vxpose.xlu0.b32.cont [12/16] 0.0, 128
    %1456 = vxpose.xlu0.b32.cont [13/16] 0.0, 128
    %1457 = vxpose.xlu0.b32.cont [14/16] 0.0, 128
    %1458 = vxpose.xlu0.b32.cont [15/16] 0.0, 128
    %1459 = vxpose.xlu0.b32.end [16/16] 0.0, 128
    %v1460 = vpop.trf.xlu0
    %v1461 = vpop.trf.xlu0
    %v1462 = vpop.trf.xlu0
    %v1463 = vpop.trf.xlu0
    %v1464 = vpop.trf.xlu0
    %v1465 = vpop.trf.xlu0
    %v1466 = vpop.trf.xlu0
    %v1467 = vpop.trf.xlu0
    %v1468 = vpop.trf.xlu0
    %v1469 = vpop.trf.xlu0
    %v1470 = vpop.trf.xlu0
    %v1471 = vpop.trf.xlu0
    %v1472 = vpop.trf.xlu0
    %v1473 = vpop.trf.xlu0
    %v1474 = vpop.trf.xlu0
    %v1475 = vpop.trf.xlu0
    %1476 = vxpose.xlu0.b32.start [1/16] %v1268, 128
    %1477 = vxpose.xlu0.b32.cont [2/16] 0.0, 128
    %1478 = vxpose.xlu0.b32.cont [3/16] 0.0, 128
    %1479 = vxpose.xlu0.b32.cont [4/16] 0.0, 128
    %1480 = vxpose.xlu0.b32.cont [5/16] 0.0, 128
    %1481 = vxpose.xlu0.b32.cont [6/16] 0.0, 128
    %1482 = vxpose.xlu0.b32.cont [7/16] 0.0, 128
    %1483 = vxpose.xlu0.b32.cont [8/16] 0.0, 128
    %1484 = vxpose.xlu0.b32.cont [9/16] 0.0, 128
    %1485 = vxpose.xlu0.b32.cont [10/16] 0.0, 128
    %1486 = vxpose.xlu0.b32.cont [11/16] 0.0, 128
    %1487 = vxpose.xlu0.b32.cont [12/16] 0.0, 128
    %1488 = vxpose.xlu0.b32.cont [13/16] 0.0, 128
    %1489 = vxpose.xlu0.b32.cont [14/16] 0.0, 128
    %1490 = vxpose.xlu0.b32.cont [15/16] 0.0, 128
    %1491 = vxpose.xlu0.b32.end [16/16] 0.0, 128
    %v1492 = vpop.trf.xlu0
    %v1493 = vpop.trf.xlu0
    %v1494 = vpop.trf.xlu0
    %v1495 = vpop.trf.xlu0
    %v1496 = vpop.trf.xlu0
    %v1497 = vpop.trf.xlu0
    %v1498 = vpop.trf.xlu0
    %v1499 = vpop.trf.xlu0
    %v1500 = vpop.trf.xlu0
    %v1501 = vpop.trf.xlu0
    %v1502 = vpop.trf.xlu0
    %v1503 = vpop.trf.xlu0
    %v1504 = vpop.trf.xlu0
    %v1505 = vpop.trf.xlu0
    %v1506 = vpop.trf.xlu0
    %v1507 = vpop.trf.xlu0
    %1508 = vxpose.xlu0.b32.start [1/16] %v1294, 128
    %1509 = vxpose.xlu0.b32.cont [2/16] 0.0, 128
    %1510 = vxpose.xlu0.b32.cont [3/16] 0.0, 128
    %1511 = vxpose.xlu0.b32.cont [4/16] 0.0, 128
    %1512 = vxpose.xlu0.b32.cont [5/16] 0.0, 128
    %1513 = vxpose.xlu0.b32.cont [6/16] 0.0, 128
    %1514 = vxpose.xlu0.b32.cont [7/16] 0.0, 128
    %1515 = vxpose.xlu0.b32.cont [8/16] 0.0, 128
    %1516 = vxpose.xlu0.b32.cont [9/16] 0.0, 128
    %1517 = vxpose.xlu0.b32.cont [10/16] 0.0, 128
    %1518 = vxpose.xlu0.b32.cont [11/16] 0.0, 128
    %1519 = vxpose.xlu0.b32.cont [12/16] 0.0, 128
    %1520 = vxpose.xlu0.b32.cont [13/16] 0.0, 128
    %1521 = vxpose.xlu0.b32.cont [14/16] 0.0, 128
    %1522 = vxpose.xlu0.b32.cont [15/16] 0.0, 128
    %1523 = vxpose.xlu0.b32.end [16/16] 0.0, 128
    %v1524 = vpop.trf.xlu0
    %v1525 = vpop.trf.xlu0
    %v1526 = vpop.trf.xlu0
    %v1527 = vpop.trf.xlu0
    %v1528 = vpop.trf.xlu0
    %v1529 = vpop.trf.xlu0
    %v1530 = vpop.trf.xlu0
    %v1531 = vpop.trf.xlu0
    %v1532 = vpop.trf.xlu0
    %v1533 = vpop.trf.xlu0
    %v1534 = vpop.trf.xlu0
    %v1535 = vpop.trf.xlu0
    %v1536 = vpop.trf.xlu0
    %v1537 = vpop.trf.xlu0
    %v1538 = vpop.trf.xlu0
    %v1539 = vpop.trf.xlu0
    %1540 = vxpose.xlu0.b32.start [1/16] %v1320, 128
    %1541 = vxpose.xlu0.b32.cont [2/16] 0.0, 128
    %1542 = vxpose.xlu0.b32.cont [3/16] 0.0, 128
    %1543 = vxpose.xlu0.b32.cont [4/16] 0.0, 128
    %1544 = vxpose.xlu0.b32.cont [5/16] 0.0, 128
    %1545 = vxpose.xlu0.b32.cont [6/16] 0.0, 128
    %1546 = vxpose.xlu0.b32.cont [7/16] 0.0, 128
    %1547 = vxpose.xlu0.b32.cont [8/16] 0.0, 128
    %1548 = vxpose.xlu0.b32.cont [9/16] 0.0, 128
    %1549 = vxpose.xlu0.b32.cont [10/16] 0.0, 128
    %1550 = vxpose.xlu0.b32.cont [11/16] 0.0, 128
    %1551 = vxpose.xlu0.b32.cont [12/16] 0.0, 128
    %1552 = vxpose.xlu0.b32.cont [13/16] 0.0, 128
    %1553 = vxpose.xlu0.b32.cont [14/16] 0.0, 128
    %1554 = vxpose.xlu0.b32.cont [15/16] 0.0, 128
    %1555 = vxpose.xlu0.b32.end [16/16] 0.0, 128
    %v1556 = vpop.trf.xlu0
    %v1557 = vpop.trf.xlu0
    %v1558 = vpop.trf.xlu0
    %v1559 = vpop.trf.xlu0
    %v1560 = vpop.trf.xlu0
    %v1561 = vpop.trf.xlu0
    %v1562 = vpop.trf.xlu0
    %v1563 = vpop.trf.xlu0
    %v1564 = vpop.trf.xlu0
    %v1565 = vpop.trf.xlu0
    %v1566 = vpop.trf.xlu0
    %v1567 = vpop.trf.xlu0
    %v1568 = vpop.trf.xlu0
    %v1569 = vpop.trf.xlu0
    %v1570 = vpop.trf.xlu0
    %v1571 = vpop.trf.xlu0
    %1572 = vxpose.xlu0.b32.start [1/16] %v1346, 128
    %1573 = vxpose.xlu0.b32.cont [2/16] 0.0, 128
    %1574 = vxpose.xlu0.b32.cont [3/16] 0.0, 128
    %1575 = vxpose.xlu0.b32.cont [4/16] 0.0, 128
    %1576 = vxpose.xlu0.b32.cont [5/16] 0.0, 128
    %1577 = vxpose.xlu0.b32.cont [6/16] 0.0, 128
    %1578 = vxpose.xlu0.b32.cont [7/16] 0.0, 128
    %1579 = vxpose.xlu0.b32.cont [8/16] 0.0, 128
    %1580 = vxpose.xlu0.b32.cont [9/16] 0.0, 128
    %1581 = vxpose.xlu0.b32.cont [10/16] 0.0, 128
    %1582 = vxpose.xlu0.b32.cont [11/16] 0.0, 128
    %1583 = vxpose.xlu0.b32.cont [12/16] 0.0, 128
    %1584 = vxpose.xlu0.b32.cont [13/16] 0.0, 128
    %1585 = vxpose.xlu0.b32.cont [14/16] 0.0, 128
    %1586 = vxpose.xlu0.b32.cont [15/16] 0.0, 128
    %1587 = vxpose.xlu0.b32.end [16/16] 0.0, 128
    %v1588 = vpop.trf.xlu0
    %v1589 = vpop.trf.xlu0
    %v1590 = vpop.trf.xlu0
    %v1591 = vpop.trf.xlu0
    %v1592 = vpop.trf.xlu0
    %v1593 = vpop.trf.xlu0
    %v1594 = vpop.trf.xlu0
    %v1595 = vpop.trf.xlu0
    %v1596 = vpop.trf.xlu0
    %v1597 = vpop.trf.xlu0
    %v1598 = vpop.trf.xlu0
    %v1599 = vpop.trf.xlu0
    %v1600 = vpop.trf.xlu0
    %v1601 = vpop.trf.xlu0
    %v1602 = vpop.trf.xlu0
    %v1603 = vpop.trf.xlu0
    %1604 = vxpose.xlu0.b32.start [1/16] %v1364, 128
    %1605 = vxpose.xlu0.b32.cont [2/16] %v1396, 128
    %1606 = vxpose.xlu0.b32.cont [3/16] %v1428, 128
    %1607 = vxpose.xlu0.b32.cont [4/16] %v1460, 128
    %1608 = vxpose.xlu0.b32.cont [5/16] 0.0, 128
    %1609 = vxpose.xlu0.b32.cont [6/16] 0.0, 128
    %1610 = vxpose.xlu0.b32.cont [7/16] 0.0, 128
    %1611 = vxpose.xlu0.b32.cont [8/16] 0.0, 128
    %1612 = vxpose.xlu0.b32.cont [9/16] 0.0, 128
    %1613 = vxpose.xlu0.b32.cont [10/16] 0.0, 128
    %1614 = vxpose.xlu0.b32.cont [11/16] 0.0, 128
    %1615 = vxpose.xlu0.b32.cont [12/16] 0.0, 128
    %1616 = vxpose.xlu0.b32.cont [13/16] 0.0, 128
    %1617 = vxpose.xlu0.b32.cont [14/16] 0.0, 128
    %1618 = vxpose.xlu0.b32.cont [15/16] 0.0, 128
    %1619 = vxpose.xlu0.b32.end [16/16] 0.0, 128
    %v1620 = vpop.trf.xlu0
    %v1621 = vpop.trf.xlu0
    %v1622 = vpop.trf.xlu0
    %v1623 = vpop.trf.xlu0
    %v1624 = vpop.trf.xlu0
    %v1625 = vpop.trf.xlu0
    %v1626 = vpop.trf.xlu0
    %v1627 = vpop.trf.xlu0
    %v1628 = vpop.trf.xlu0
    %v1629 = vpop.trf.xlu0
    %v1630 = vpop.trf.xlu0
    %v1631 = vpop.trf.xlu0
    %v1632 = vpop.trf.xlu0
    %v1633 = vpop.trf.xlu0
    %v1634 = vpop.trf.xlu0
    %v1635 = vpop.trf.xlu0
    %1636 = vxpose.xlu0.b32.start [1/16] %v1492, 128
    %1637 = vxpose.xlu0.b32.cont [2/16] %v1524, 128
    %1638 = vxpose.xlu0.b32.cont [3/16] %v1556, 128
    %1639 = vxpose.xlu0.b32.cont [4/16] %v1588, 128
    %1640 = vxpose.xlu0.b32.cont [5/16] 0.0, 128
    %1641 = vxpose.xlu0.b32.cont [6/16] 0.0, 128
    %1642 = vxpose.xlu0.b32.cont [7/16] 0.0, 128
    %1643 = vxpose.xlu0.b32.cont [8/16] 0.0, 128
    %1644 = vxpose.xlu0.b32.cont [9/16] 0.0, 128
    %1645 = vxpose.xlu0.b32.cont [10/16] 0.0, 128
    %1646 = vxpose.xlu0.b32.cont [11/16] 0.0, 128
    %1647 = vxpose.xlu0.b32.cont [12/16] 0.0, 128
    %1648 = vxpose.xlu0.b32.cont [13/16] 0.0, 128
    %1649 = vxpose.xlu0.b32.cont [14/16] 0.0, 128
    %1650 = vxpose.xlu0.b32.cont [15/16] 0.0, 128
    %1651 = vxpose.xlu0.b32.end [16/16] 0.0, 128
    %v1652 = vpop.trf.xlu0
    %v1653 = vpop.trf.xlu0
    %v1654 = vpop.trf.xlu0
    %v1655 = vpop.trf.xlu0
    %v1656 = vpop.trf.xlu0
    %v1657 = vpop.trf.xlu0
    %v1658 = vpop.trf.xlu0
    %v1659 = vpop.trf.xlu0
    %v1660 = vpop.trf.xlu0
    %v1661 = vpop.trf.xlu0
    %v1662 = vpop.trf.xlu0
    %v1663 = vpop.trf.xlu0
    %v1664 = vpop.trf.xlu0
    %v1665 = vpop.trf.xlu0
    %v1666 = vpop.trf.xlu0
    %v1667 = vpop.trf.xlu0
    %v1668 = vperm.slane %v173, 3
    %v1670 = vsel %vm203, %v1620, 0
    %v1673 = vsel %vm203, %v1652, 0
    %1675 = vmatpush.msra.mxu0 0.0
    %1676 = vmatpush.msra.mxu0 0.0
    %1677 = vmatpush.msra.mxu0 0.0
    %1678 = vmatpush.msra.mxu0 0.0
    %1679 = vmatpush.msra.mxu0 0.0
    %1680 = vmatpush.msra.mxu0 0.0
    %1681 = vmatpush.msra.mxu0 0.0
    %1682 = vmatpush.msra.mxu0 0.0
    %1683 = vmatpush.msra.mxu0 0.0
    %1684 = vmatpush.msra.mxu0 0.0
    %1685 = vmatpush.msra.mxu0 0.0
    %1686 = vmatpush.msra.mxu0 0.0
    %1687 = vmatpush.msra.mxu0 %v172
    %1688 = vmatpush.msra.mxu0 %v171
    %1689 = vmatpush.msra.mxu0 %v170
    %1690 = vmatpush.msra.mxu0 %v169
    %1691 = vmatmul.f32.gmra.mxu0 %v1670
    %v1692 = vpop.f32.mrf.mxu0
    %v1693 = vadd.f32 %v1668, %v1692
    %1694 = vmatmul.f32.gmra.mxu0 %v1673
    %v1695 = vpop.f32.mrf.mxu0
    %v1696 = vadd.f32 %v1668, %v1695
    %1697 = vdwg.mxu0
    %v1698 = vadd.f32 %v1693, 0.0
    %v1699 = vadd.f32 %v1696, 0.0
    %v1700 = vsel %vm203, %v1698, 0.0
    %1701 = vadd.xlane.f32.xlu0 %v1700
    %v1702 = vpop.xlane.xlu0 %1701
    %v1703 = vsel %vm203, %v1699, 0.0
    %1704 = vadd.xlane.f32.xlu0 %v1703
    %v1705 = vpop.xlane.xlu0 %1704
    %v1706 = vmul.f32 %v1702, %v199
    %v1707 = vmul.f32 %v1705, %v199
    %v1708 = vsub.f32 %v1698, %v1706
    %v1709 = vsub.f32 %v1699, %v1707
    %v1710 = vmul.f32 %v1708, %v1708
    %v1711 = vmul.f32 %v1709, %v1709
    %v1712 = vsel %vm203, %v1710, 0.0
    %1713 = vadd.xlane.f32.xlu0 %v1712
    %v1714 = vpop.xlane.xlu0 %1713
    %v1715 = vsel %vm203, %v1711, 0.0
    %1716 = vadd.xlane.f32.xlu0 %v1715
    %v1717 = vpop.xlane.xlu0 %1716
    %v1718 = vmul.f32 %v1714, %v199
    %v1719 = vmul.f32 %v1717, %v199
    %v1720 = vadd.f32 %v1718, 1e-05
    %v1721 = vadd.f32 %v1719, 1e-05
    %v1722 = vrsqrt.pop %v1720
    %v1723 = vmul.f32 %v1722, %v1720
    %v1724 = vmul.f32 %v1723, %v1722
    %v1725 = vmul.f32 0.5, %v1724
    %v1726 = vsub.f32 1.5, %v1725
    %v1727 = vmul.f32 %v1722, %v1726
    %vm1728 = vweird.f32 %v1720
    %vm1729 = vweird.f32 %v1722
    %vm1730 = vmor %vm1728, %vm1729
    %v1731 = vsel %vm1730, %v1722, %v1727
    %v1732 = vrsqrt.pop %v1721
    %v1733 = vmul.f32 %v1732, %v1721
    %v1734 = vmul.f32 %v1733, %v1732
    %v1735 = vmul.f32 0.5, %v1734
    %v1736 = vsub.f32 1.5, %v1735
    %v1737 = vmul.f32 %v1732, %v1736
    %vm1738 = vweird.f32 %v1721
    %vm1739 = vweird.f32 %v1732
    %vm1740 = vmor %vm1738, %vm1739
    %v1741 = vsel %vm1740, %v1732, %v1737
    %v1742 = vmul.f32 %v1708, %v1731
    %v1743 = vmul.f32 %v1709, %v1741
    %v1744 = vperm.slane %v156, 2
    %v1745 = vmul.f32 %v1742, %v1744
    %v1746 = vmul.f32 %v1743, %v1744
    %v1747 = vperm.slane %v156, 3
    %v1748 = vadd.f32 %v1745, %v1747
    %v1749 = vadd.f32 %v1746, %v1747
    %v1750 = vadd.f32 %v1748, %v135
    %v1751 = vadd.f32 %v1749, %v136
    %v1752 = vperm.slane %v190, 0
    %v1754 = vsel %vm203, %v1750, 0
    %v1757 = vsel %vm203, %v1751, 0
    %1759 = vmatpush.msra.mxu0 0.0
    %1760 = vmatpush.msra.mxu0 0.0
    %1761 = vmatpush.msra.mxu0 0.0
    %1762 = vmatpush.msra.mxu0 0.0
    %1763 = vmatpush.msra.mxu0 0.0
    %1764 = vmatpush.msra.mxu0 0.0
    %1765 = vmatpush.msra.mxu0 0.0
    %1766 = vmatpush.msra.mxu0 0.0
    %1767 = vmatpush.msra.mxu0 0.0
    %1768 = vmatpush.msra.mxu0 0.0
    %1769 = vmatpush.msra.mxu0 0.0
    %1770 = vmatpush.msra.mxu0 0.0
    %1771 = vmatpush.msra.mxu0 %v177
    %1772 = vmatpush.msra.mxu0 %v176
    %1773 = vmatpush.msra.mxu0 %v175
    %1774 = vmatpush.msra.mxu0 %v174
    %1775 = vmatmul.f32.gmra.mxu0 %v1754
    %v1776 = vpop.f32.mrf.mxu0
    %v1777 = vadd.f32 %v1752, %v1776
    %1778 = vmatmul.f32.gmra.mxu0 %v1757
    %v1779 = vpop.f32.mrf.mxu0
    %v1780 = vadd.f32 %v1752, %v1779
    %1781 = vdwg.mxu0
    %v1782 = vperm.slane %v190, 1
    %v1784 = vsel %vm203, %v141, 0
    %v1787 = vsel %vm203, %v142, 0
    %v1790 = vsel %vm203, %v143, 0
    %v1793 = vsel %vm203, %v144, 0
    %1795 = vmatpush.msra.mxu0 0.0
    %1796 = vmatpush.msra.mxu0 0.0
    %1797 = vmatpush.msra.mxu0 0.0
    %1798 = vmatpush.msra.mxu0 0.0
    %1799 = vmatpush.msra.mxu0 0.0
    %1800 = vmatpush.msra.mxu0 0.0
    %1801 = vmatpush.msra.mxu0 0.0
    %1802 = vmatpush.msra.mxu0 0.0
    %1803 = vmatpush.msra.mxu0 0.0
    %1804 = vmatpush.msra.mxu0 0.0
    %1805 = vmatpush.msra.mxu0 0.0
    %1806 = vmatpush.msra.mxu0 0.0
    %1807 = vmatpush.msra.mxu0 %v181
    %1808 = vmatpush.msra.mxu0 %v180
    %1809 = vmatpush.msra.mxu0 %v179
    %1810 = vmatpush.msra.mxu0 %v178
    %1811 = vmatmul.f32.gmra.mxu0 %v1784
    %v1812 = vpop.f32.mrf.mxu0
    %v1813 = vadd.f32 %v1782, %v1812
    %1814 = vmatmul.f32.gmra.mxu0 %v1787
    %v1815 = vpop.f32.mrf.mxu0
    %v1816 = vadd.f32 %v1782, %v1815
    %1817 = vmatmul.f32.gmra.mxu0 %v1790
    %v1818 = vpop.f32.mrf.mxu0
    %v1819 = vadd.f32 %v1782, %v1818
    %1820 = vmatmul.f32.gmra.mxu0 %v1793
    %v1821 = vpop.f32.mrf.mxu0
    %v1822 = vadd.f32 %v1782, %v1821
    %1823 = vdwg.mxu0
    %v1824 = vperm.slane %v190, 2
    %v1826 = vsel %vm203, %v137, 0
    %v1829 = vsel %vm203, %v138, 0
    %v1832 = vsel %vm203, %v139, 0
    %v1835 = vsel %vm203, %v140, 0
    %1837 = vmatpush.msra.mxu0 0.0
    %1838 = vmatpush.msra.mxu0 0.0
    %1839 = vmatpush.msra.mxu0 0.0
    %1840 = vmatpush.msra.mxu0 0.0
    %1841 = vmatpush.msra.mxu0 0.0
    %1842 = vmatpush.msra.mxu0 0.0
    %1843 = vmatpush.msra.mxu0 0.0
    %1844 = vmatpush.msra.mxu0 0.0
    %1845 = vmatpush.msra.mxu0 0.0
    %1846 = vmatpush.msra.mxu0 0.0
    %1847 = vmatpush.msra.mxu0 0.0
    %1848 = vmatpush.msra.mxu0 0.0
    %1849 = vmatpush.msra.mxu0 %v185
    %1850 = vmatpush.msra.mxu0 %v184
    %1851 = vmatpush.msra.mxu0 %v183
    %1852 = vmatpush.msra.mxu0 %v182
    %1853 = vmatmul.f32.gmra.mxu0 %v1826
    %v1854 = vpop.f32.mrf.mxu0
    %v1855 = vadd.f32 %v1824, %v1854
    %1856 = vmatmul.f32.gmra.mxu0 %v1829
    %v1857 = vpop.f32.mrf.mxu0
    %v1858 = vadd.f32 %v1824, %v1857
    %1859 = vmatmul.f32.gmra.mxu0 %v1832
    %v1860 = vpop.f32.mrf.mxu0
    %v1861 = vadd.f32 %v1824, %v1860
    %1862 = vmatmul.f32.gmra.mxu0 %v1835
    %v1863 = vpop.f32.mrf.mxu0
    %v1864 = vadd.f32 %v1824, %v1863
    %1865 = vdwg.mxu0
    %1866 = vxpose.xlu0.b32.start [1/16] %v1777, 128
    %1867 = vxpose.xlu0.b32.cont [2/16] 0.0, 128
    %1868 = vxpose.xlu0.b32.cont [3/16] 0.0, 128
    %1869 = vxpose.xlu0.b32.cont [4/16] 0.0, 128
    %1870 = vxpose.xlu0.b32.cont [5/16] 0.0, 128
    %1871 = vxpose.xlu0.b32.cont [6/16] 0.0, 128
    %1872 = vxpose.xlu0.b32.cont [7/16] 0.0, 128
    %1873 = vxpose.xlu0.b32.cont [8/16] 0.0, 128
    %1874 = vxpose.xlu0.b32.cont [9/16] 0.0, 128
    %1875 = vxpose.xlu0.b32.cont [10/16] 0.0, 128
    %1876 = vxpose.xlu0.b32.cont [11/16] 0.0, 128
    %1877 = vxpose.xlu0.b32.cont [12/16] 0.0, 128
    %1878 = vxpose.xlu0.b32.cont [13/16] 0.0, 128
    %1879 = vxpose.xlu0.b32.cont [14/16] 0.0, 128
    %1880 = vxpose.xlu0.b32.cont [15/16] 0.0, 128
    %1881 = vxpose.xlu0.b32.end [16/16] 0.0, 128
    %v1882 = vpop.trf.xlu0
    %v1883 = vpop.trf.xlu0
    %v1884 = vpop.trf.xlu0
    %v1885 = vpop.trf.xlu0
    %v1886 = vpop.trf.xlu0
    %v1887 = vpop.trf.xlu0
    %v1888 = vpop.trf.xlu0
    %v1889 = vpop.trf.xlu0
    %v1890 = vpop.trf.xlu0
    %v1891 = vpop.trf.xlu0
    %v1892 = vpop.trf.xlu0
    %v1893 = vpop.trf.xlu0
    %v1894 = vpop.trf.xlu0
    %v1895 = vpop.trf.xlu0
    %v1896 = vpop.trf.xlu0
    %v1897 = vpop.trf.xlu0
    %1898 = vxpose.xlu0.b32.start [1/16] %v1780, 128
    %1899 = vxpose.xlu0.b32.cont [2/16] 0.0, 128
    %1900 = vxpose.xlu0.b32.cont [3/16] 0.0, 128
    %1901 = vxpose.xlu0.b32.cont [4/16] 0.0, 128
    %1902 = vxpose.xlu0.b32.cont [5/16] 0.0, 128
    %1903 = vxpose.xlu0.b32.cont [6/16] 0.0, 128
    %1904 = vxpose.xlu0.b32.cont [7/16] 0.0, 128
    %1905 = vxpose.xlu0.b32.cont [8/16] 0.0, 128
    %1906 = vxpose.xlu0.b32.cont [9/16] 0.0, 128
    %1907 = vxpose.xlu0.b32.cont [10/16] 0.0, 128
    %1908 = vxpose.xlu0.b32.cont [11/16] 0.0, 128
    %1909 = vxpose.xlu0.b32.cont [12/16] 0.0, 128
    %1910 = vxpose.xlu0.b32.cont [13/16] 0.0, 128
    %1911 = vxpose.xlu0.b32.cont [14/16] 0.0, 128
    %1912 = vxpose.xlu0.b32.cont [15/16] 0.0, 128
    %1913 = vxpose.xlu0.b32.end [16/16] 0.0, 128
    %v1914 = vpop.trf.xlu0
    %v1915 = vpop.trf.xlu0
    %v1916 = vpop.trf.xlu0
    %v1917 = vpop.trf.xlu0
    %v1918 = vpop.trf.xlu0
    %v1919 = vpop.trf.xlu0
    %v1920 = vpop.trf.xlu0
    %v1921 = vpop.trf.xlu0
    %v1922 = vpop.trf.xlu0
    %v1923 = vpop.trf.xlu0
    %v1924 = vpop.trf.xlu0
    %v1925 = vpop.trf.xlu0
    %v1926 = vpop.trf.xlu0
    %v1927 = vpop.trf.xlu0
    %v1928 = vpop.trf.xlu0
    %v1929 = vpop.trf.xlu0
    %1930 = vxpose.xlu0.b32.start [1/16] %v1882, 128
    %1931 = vxpose.xlu0.b32.cont [2/16] 0.0, 128
    %1932 = vxpose.xlu0.b32.cont [3/16] 0.0, 128
    %1933 = vxpose.xlu0.b32.cont [4/16] 0.0, 128
    %1934 = vxpose.xlu0.b32.cont [5/16] 0.0, 128
    %1935 = vxpose.xlu0.b32.cont [6/16] 0.0, 128
    %1936 = vxpose.xlu0.b32.cont [7/16] 0.0, 128
    %1937 = vxpose.xlu0.b32.cont [8/16] 0.0, 128
    %1938 = vxpose.xlu0.b32.cont [9/16] 0.0, 128
    %1939 = vxpose.xlu0.b32.cont [10/16] 0.0, 128
    %1940 = vxpose.xlu0.b32.cont [11/16] 0.0, 128
    %1941 = vxpose.xlu0.b32.cont [12/16] 0.0, 128
    %1942 = vxpose.xlu0.b32.cont [13/16] 0.0, 128
    %1943 = vxpose.xlu0.b32.cont [14/16] 0.0, 128
    %1944 = vxpose.xlu0.b32.cont [15/16] 0.0, 128
    %1945 = vxpose.xlu0.b32.end [16/16] 0.0, 128
    %v1946 = vpop.trf.xlu0
    %v1947 = vpop.trf.xlu0
    %v1948 = vpop.trf.xlu0
    %v1949 = vpop.trf.xlu0
    %v1950 = vpop.trf.xlu0
    %v1951 = vpop.trf.xlu0
    %v1952 = vpop.trf.xlu0
    %v1953 = vpop.trf.xlu0
    %v1954 = vpop.trf.xlu0
    %v1955 = vpop.trf.xlu0
    %v1956 = vpop.trf.xlu0
    %v1957 = vpop.trf.xlu0
    %v1958 = vpop.trf.xlu0
    %v1959 = vpop.trf.xlu0
    %v1960 = vpop.trf.xlu0
    %v1961 = vpop.trf.xlu0
    %1962 = vxpose.xlu0.b32.start [1/16] %v1883, 128
    %1963 = vxpose.xlu0.b32.cont [2/16] 0.0, 128
    %1964 = vxpose.xlu0.b32.cont [3/16] 0.0, 128
    %1965 = vxpose.xlu0.b32.cont [4/16] 0.0, 128
    %1966 = vxpose.xlu0.b32.cont [5/16] 0.0, 128
    %1967 = vxpose.xlu0.b32.cont [6/16] 0.0, 128
    %1968 = vxpose.xlu0.b32.cont [7/16] 0.0, 128
    %1969 = vxpose.xlu0.b32.cont [8/16] 0.0, 128
    %1970 = vxpose.xlu0.b32.cont [9/16] 0.0, 128
    %1971 = vxpose.xlu0.b32.cont [10/16] 0.0, 128
    %1972 = vxpose.xlu0.b32.cont [11/16] 0.0, 128
    %1973 = vxpose.xlu0.b32.cont [12/16] 0.0, 128
    %1974 = vxpose.xlu0.b32.cont [13/16] 0.0, 128
    %1975 = vxpose.xlu0.b32.cont [14/16] 0.0, 128
    %1976 = vxpose.xlu0.b32.cont [15/16] 0.0, 128
    %1977 = vxpose.xlu0.b32.end [16/16] 0.0, 128
    %v1978 = vpop.trf.xlu0
    %v1979 = vpop.trf.xlu0
    %v1980 = vpop.trf.xlu0
    %v1981 = vpop.trf.xlu0
    %v1982 = vpop.trf.xlu0
    %v1983 = vpop.trf.xlu0
    %v1984 = vpop.trf.xlu0
    %v1985 = vpop.trf.xlu0
    %v1986 = vpop.trf.xlu0
    %v1987 = vpop.trf.xlu0
    %v1988 = vpop.trf.xlu0
    %v1989 = vpop.trf.xlu0
    %v1990 = vpop.trf.xlu0
    %v1991 = vpop.trf.xlu0
    %v1992 = vpop.trf.xlu0
    %v1993 = vpop.trf.xlu0
    %1994 = vxpose.xlu0.b32.start [1/16] %v1884, 128
    %1995 = vxpose.xlu0.b32.cont [2/16] 0.0, 128
    %1996 = vxpose.xlu0.b32.cont [3/16] 0.0, 128
    %1997 = vxpose.xlu0.b32.cont [4/16] 0.0, 128
    %1998 = vxpose.xlu0.b32.cont [5/16] 0.0, 128
    %1999 = vxpose.xlu0.b32.cont [6/16] 0.0, 128
    %2000 = vxpose.xlu0.b32.cont [7/16] 0.0, 128
    %2001 = vxpose.xlu0.b32.cont [8/16] 0.0, 128
    %2002 = vxpose.xlu0.b32.cont [9/16] 0.0, 128
    %2003 = vxpose.xlu0.b32.cont [10/16] 0.0, 128
    %2004 = vxpose.xlu0.b32.cont [11/16] 0.0, 128
    %2005 = vxpose.xlu0.b32.cont [12/16] 0.0, 128
    %2006 = vxpose.xlu0.b32.cont [13/16] 0.0, 128
    %2007 = vxpose.xlu0.b32.cont [14/16] 0.0, 128
    %2008 = vxpose.xlu0.b32.cont [15/16] 0.0, 128
    %2009 = vxpose.xlu0.b32.end [16/16] 0.0, 128
    %v2010 = vpop.trf.xlu0
    %v2011 = vpop.trf.xlu0
    %v2012 = vpop.trf.xlu0
    %v2013 = vpop.trf.xlu0
    %v2014 = vpop.trf.xlu0
    %v2015 = vpop.trf.xlu0
    %v2016 = vpop.trf.xlu0
    %v2017 = vpop.trf.xlu0
    %v2018 = vpop.trf.xlu0
    %v2019 = vpop.trf.xlu0
    %v2020 = vpop.trf.xlu0
    %v2021 = vpop.trf.xlu0
    %v2022 = vpop.trf.xlu0
    %v2023 = vpop.trf.xlu0
    %v2024 = vpop.trf.xlu0
    %v2025 = vpop.trf.xlu0
    %2026 = vxpose.xlu0.b32.start [1/16] %v1885, 128
    %2027 = vxpose.xlu0.b32.cont [2/16] 0.0, 128
    %2028 = vxpose.xlu0.b32.cont [3/16] 0.0, 128
    %2029 = vxpose.xlu0.b32.cont [4/16] 0.0, 128
    %2030 = vxpose.xlu0.b32.cont [5/16] 0.0, 128
    %2031 = vxpose.xlu0.b32.cont [6/16] 0.0, 128
    %2032 = vxpose.xlu0.b32.cont [7/16] 0.0, 128
    %2033 = vxpose.xlu0.b32.cont [8/16] 0.0, 128
    %2034 = vxpose.xlu0.b32.cont [9/16] 0.0, 128
    %2035 = vxpose.xlu0.b32.cont [10/16] 0.0, 128
    %2036 = vxpose.xlu0.b32.cont [11/16] 0.0, 128
    %2037 = vxpose.xlu0.b32.cont [12/16] 0.0, 128
    %2038 = vxpose.xlu0.b32.cont [13/16] 0.0, 128
    %2039 = vxpose.xlu0.b32.cont [14/16] 0.0, 128
    %2040 = vxpose.xlu0.b32.cont [15/16] 0.0, 128
    %2041 = vxpose.xlu0.b32.end [16/16] 0.0, 128
    %v2042 = vpop.trf.xlu0
    %v2043 = vpop.trf.xlu0
    %v2044 = vpop.trf.xlu0
    %v2045 = vpop.trf.xlu0
    %v2046 = vpop.trf.xlu0
    %v2047 = vpop.trf.xlu0
    %v2048 = vpop.trf.xlu0
    %v2049 = vpop.trf.xlu0
    %v2050 = vpop.trf.xlu0
    %v2051 = vpop.trf.xlu0
    %v2052 = vpop.trf.xlu0
    %v2053 = vpop.trf.xlu0
    %v2054 = vpop.trf.xlu0
    %v2055 = vpop.trf.xlu0
    %v2056 = vpop.trf.xlu0
    %v2057 = vpop.trf.xlu0
    %2058 = vxpose.xlu0.b32.start [1/16] %v1914, 128
    %2059 = vxpose.xlu0.b32.cont [2/16] 0.0, 128
    %2060 = vxpose.xlu0.b32.cont [3/16] 0.0, 128
    %2061 = vxpose.xlu0.b32.cont [4/16] 0.0, 128
    %2062 = vxpose.xlu0.b32.cont [5/16] 0.0, 128
    %2063 = vxpose.xlu0.b32.cont [6/16] 0.0, 128
    %2064 = vxpose.xlu0.b32.cont [7/16] 0.0, 128
    %2065 = vxpose.xlu0.b32.cont [8/16] 0.0, 128
    %2066 = vxpose.xlu0.b32.cont [9/16] 0.0, 128
    %2067 = vxpose.xlu0.b32.cont [10/16] 0.0, 128
    %2068 = vxpose.xlu0.b32.cont [11/16] 0.0, 128
    %2069 = vxpose.xlu0.b32.cont [12/16] 0.0, 128
    %2070 = vxpose.xlu0.b32.cont [13/16] 0.0, 128
    %2071 = vxpose.xlu0.b32.cont [14/16] 0.0, 128
    %2072 = vxpose.xlu0.b32.cont [15/16] 0.0, 128
    %2073 = vxpose.xlu0.b32.end [16/16] 0.0, 128
    %v2074 = vpop.trf.xlu0
    %v2075 = vpop.trf.xlu0
    %v2076 = vpop.trf.xlu0
    %v2077 = vpop.trf.xlu0
    %v2078 = vpop.trf.xlu0
    %v2079 = vpop.trf.xlu0
    %v2080 = vpop.trf.xlu0
    %v2081 = vpop.trf.xlu0
    %v2082 = vpop.trf.xlu0
    %v2083 = vpop.trf.xlu0
    %v2084 = vpop.trf.xlu0
    %v2085 = vpop.trf.xlu0
    %v2086 = vpop.trf.xlu0
    %v2087 = vpop.trf.xlu0
    %v2088 = vpop.trf.xlu0
    %v2089 = vpop.trf.xlu0
    %2090 = vxpose.xlu0.b32.start [1/16] %v1915, 128
    %2091 = vxpose.xlu0.b32.cont [2/16] 0.0, 128
    %2092 = vxpose.xlu0.b32.cont [3/16] 0.0, 128
    %2093 = vxpose.xlu0.b32.cont [4/16] 0.0, 128
    %2094 = vxpose.xlu0.b32.cont [5/16] 0.0, 128
    %2095 = vxpose.xlu0.b32.cont [6/16] 0.0, 128
    %2096 = vxpose.xlu0.b32.cont [7/16] 0.0, 128
    %2097 = vxpose.xlu0.b32.cont [8/16] 0.0, 128
    %2098 = vxpose.xlu0.b32.cont [9/16] 0.0, 128
    %2099 = vxpose.xlu0.b32.cont [10/16] 0.0, 128
    %2100 = vxpose.xlu0.b32.cont [11/16] 0.0, 128
    %2101 = vxpose.xlu0.b32.cont [12/16] 0.0, 128
    %2102 = vxpose.xlu0.b32.cont [13/16] 0.0, 128
    %2103 = vxpose.xlu0.b32.cont [14/16] 0.0, 128
    %2104 = vxpose.xlu0.b32.cont [15/16] 0.0, 128
    %2105 = vxpose.xlu0.b32.end [16/16] 0.0, 128
    %v2106 = vpop.trf.xlu0
    %v2107 = vpop.trf.xlu0
    %v2108 = vpop.trf.xlu0
    %v2109 = vpop.trf.xlu0
    %v2110 = vpop.trf.xlu0
    %v2111 = vpop.trf.xlu0
    %v2112 = vpop.trf.xlu0
    %v2113 = vpop.trf.xlu0
    %v2114 = vpop.trf.xlu0
    %v2115 = vpop.trf.xlu0
    %v2116 = vpop.trf.xlu0
    %v2117 = vpop.trf.xlu0
    %v2118 = vpop.trf.xlu0
    %v2119 = vpop.trf.xlu0
    %v2120 = vpop.trf.xlu0
    %v2121 = vpop.trf.xlu0
    %2122 = vxpose.xlu0.b32.start [1/16] %v1916, 128
    %2123 = vxpose.xlu0.b32.cont [2/16] 0.0, 128
    %2124 = vxpose.xlu0.b32.cont [3/16] 0.0, 128
    %2125 = vxpose.xlu0.b32.cont [4/16] 0.0, 128
    %2126 = vxpose.xlu0.b32.cont [5/16] 0.0, 128
    %2127 = vxpose.xlu0.b32.cont [6/16] 0.0, 128
    %2128 = vxpose.xlu0.b32.cont [7/16] 0.0, 128
    %2129 = vxpose.xlu0.b32.cont [8/16] 0.0, 128
    %2130 = vxpose.xlu0.b32.cont [9/16] 0.0, 128
    %2131 = vxpose.xlu0.b32.cont [10/16] 0.0, 128
    %2132 = vxpose.xlu0.b32.cont [11/16] 0.0, 128
    %2133 = vxpose.xlu0.b32.cont [12/16] 0.0, 128
    %2134 = vxpose.xlu0.b32.cont [13/16] 0.0, 128
    %2135 = vxpose.xlu0.b32.cont [14/16] 0.0, 128
    %2136 = vxpose.xlu0.b32.cont [15/16] 0.0, 128
    %2137 = vxpose.xlu0.b32.end [16/16] 0.0, 128
    %v2138 = vpop.trf.xlu0
    %v2139 = vpop.trf.xlu0
    %v2140 = vpop.trf.xlu0
    %v2141 = vpop.trf.xlu0
    %v2142 = vpop.trf.xlu0
    %v2143 = vpop.trf.xlu0
    %v2144 = vpop.trf.xlu0
    %v2145 = vpop.trf.xlu0
    %v2146 = vpop.trf.xlu0
    %v2147 = vpop.trf.xlu0
    %v2148 = vpop.trf.xlu0
    %v2149 = vpop.trf.xlu0
    %v2150 = vpop.trf.xlu0
    %v2151 = vpop.trf.xlu0
    %v2152 = vpop.trf.xlu0
    %v2153 = vpop.trf.xlu0
    %2154 = vxpose.xlu0.b32.start [1/16] %v1917, 128
    %2155 = vxpose.xlu0.b32.cont [2/16] 0.0, 128
    %2156 = vxpose.xlu0.b32.cont [3/16] 0.0, 128
    %2157 = vxpose.xlu0.b32.cont [4/16] 0.0, 128
    %2158 = vxpose.xlu0.b32.cont [5/16] 0.0, 128
    %2159 = vxpose.xlu0.b32.cont [6/16] 0.0, 128
    %2160 = vxpose.xlu0.b32.cont [7/16] 0.0, 128
    %2161 = vxpose.xlu0.b32.cont [8/16] 0.0, 128
    %2162 = vxpose.xlu0.b32.cont [9/16] 0.0, 128
    %2163 = vxpose.xlu0.b32.cont [10/16] 0.0, 128
    %2164 = vxpose.xlu0.b32.cont [11/16] 0.0, 128
    %2165 = vxpose.xlu0.b32.cont [12/16] 0.0, 128
    %2166 = vxpose.xlu0.b32.cont [13/16] 0.0, 128
    %2167 = vxpose.xlu0.b32.cont [14/16] 0.0, 128
    %2168 = vxpose.xlu0.b32.cont [15/16] 0.0, 128
    %2169 = vxpose.xlu0.b32.end [16/16] 0.0, 128
    %v2170 = vpop.trf.xlu0
    %v2171 = vpop.trf.xlu0
    %v2172 = vpop.trf.xlu0
    %v2173 = vpop.trf.xlu0
    %v2174 = vpop.trf.xlu0
    %v2175 = vpop.trf.xlu0
    %v2176 = vpop.trf.xlu0
    %v2177 = vpop.trf.xlu0
    %v2178 = vpop.trf.xlu0
    %v2179 = vpop.trf.xlu0
    %v2180 = vpop.trf.xlu0
    %v2181 = vpop.trf.xlu0
    %v2182 = vpop.trf.xlu0
    %v2183 = vpop.trf.xlu0
    %v2184 = vpop.trf.xlu0
    %v2185 = vpop.trf.xlu0
    %2186 = vxpose.xlu0.b32.start [1/16] %v1813, 128
    %2187 = vxpose.xlu0.b32.cont [2/16] %v1816, 128
    %2188 = vxpose.xlu0.b32.cont [3/16] 0.0, 128
    %2189 = vxpose.xlu0.b32.cont [4/16] 0.0, 128
    %2190 = vxpose.xlu0.b32.cont [5/16] 0.0, 128
    %2191 = vxpose.xlu0.b32.cont [6/16] 0.0, 128
    %2192 = vxpose.xlu0.b32.cont [7/16] 0.0, 128
    %2193 = vxpose.xlu0.b32.cont [8/16] 0.0, 128
    %2194 = vxpose.xlu0.b32.cont [9/16] 0.0, 128
    %2195 = vxpose.xlu0.b32.cont [10/16] 0.0, 128
    %2196 = vxpose.xlu0.b32.cont [11/16] 0.0, 128
    %2197 = vxpose.xlu0.b32.cont [12/16] 0.0, 128
    %2198 = vxpose.xlu0.b32.cont [13/16] 0.0, 128
    %2199 = vxpose.xlu0.b32.cont [14/16] 0.0, 128
    %2200 = vxpose.xlu0.b32.cont [15/16] 0.0, 128
    %2201 = vxpose.xlu0.b32.end [16/16] 0.0, 128
    %v2202 = vpop.trf.xlu0
    %v2203 = vpop.trf.xlu0
    %v2204 = vpop.trf.xlu0
    %v2205 = vpop.trf.xlu0
    %v2206 = vpop.trf.xlu0
    %v2207 = vpop.trf.xlu0
    %v2208 = vpop.trf.xlu0
    %v2209 = vpop.trf.xlu0
    %v2210 = vpop.trf.xlu0
    %v2211 = vpop.trf.xlu0
    %v2212 = vpop.trf.xlu0
    %v2213 = vpop.trf.xlu0
    %v2214 = vpop.trf.xlu0
    %v2215 = vpop.trf.xlu0
    %v2216 = vpop.trf.xlu0
    %v2217 = vpop.trf.xlu0
    %2218 = vxpose.xlu0.b32.start [1/16] %v1819, 128
    %2219 = vxpose.xlu0.b32.cont [2/16] %v1822, 128
    %2220 = vxpose.xlu0.b32.cont [3/16] 0.0, 128
    %2221 = vxpose.xlu0.b32.cont [4/16] 0.0, 128
    %2222 = vxpose.xlu0.b32.cont [5/16] 0.0, 128
    %2223 = vxpose.xlu0.b32.cont [6/16] 0.0, 128
    %2224 = vxpose.xlu0.b32.cont [7/16] 0.0, 128
    %2225 = vxpose.xlu0.b32.cont [8/16] 0.0, 128
    %2226 = vxpose.xlu0.b32.cont [9/16] 0.0, 128
    %2227 = vxpose.xlu0.b32.cont [10/16] 0.0, 128
    %2228 = vxpose.xlu0.b32.cont [11/16] 0.0, 128
    %2229 = vxpose.xlu0.b32.cont [12/16] 0.0, 128
    %2230 = vxpose.xlu0.b32.cont [13/16] 0.0, 128
    %2231 = vxpose.xlu0.b32.cont [14/16] 0.0, 128
    %2232 = vxpose.xlu0.b32.cont [15/16] 0.0, 128
    %2233 = vxpose.xlu0.b32.end [16/16] 0.0, 128
    %v2234 = vpop.trf.xlu0
    %v2235 = vpop.trf.xlu0
    %v2236 = vpop.trf.xlu0
    %v2237 = vpop.trf.xlu0
    %v2238 = vpop.trf.xlu0
    %v2239 = vpop.trf.xlu0
    %v2240 = vpop.trf.xlu0
    %v2241 = vpop.trf.xlu0
    %v2242 = vpop.trf.xlu0
    %v2243 = vpop.trf.xlu0
    %v2244 = vpop.trf.xlu0
    %v2245 = vpop.trf.xlu0
    %v2246 = vpop.trf.xlu0
    %v2247 = vpop.trf.xlu0
    %v2248 = vpop.trf.xlu0
    %v2249 = vpop.trf.xlu0
    %2250 = vxpose.xlu0.b32.start [1/16] %v1855, 128
    %2251 = vxpose.xlu0.b32.cont [2/16] %v1858, 128
    %2252 = vxpose.xlu0.b32.cont [3/16] 0.0, 128
    %2253 = vxpose.xlu0.b32.cont [4/16] 0.0, 128
    %2254 = vxpose.xlu0.b32.cont [5/16] 0.0, 128
    %2255 = vxpose.xlu0.b32.cont [6/16] 0.0, 128
    %2256 = vxpose.xlu0.b32.cont [7/16] 0.0, 128
    %2257 = vxpose.xlu0.b32.cont [8/16] 0.0, 128
    %2258 = vxpose.xlu0.b32.cont [9/16] 0.0, 128
    %2259 = vxpose.xlu0.b32.cont [10/16] 0.0, 128
    %2260 = vxpose.xlu0.b32.cont [11/16] 0.0, 128
    %2261 = vxpose.xlu0.b32.cont [12/16] 0.0, 128
    %2262 = vxpose.xlu0.b32.cont [13/16] 0.0, 128
    %2263 = vxpose.xlu0.b32.cont [14/16] 0.0, 128
    %2264 = vxpose.xlu0.b32.cont [15/16] 0.0, 128
    %2265 = vxpose.xlu0.b32.end [16/16] 0.0, 128
    %v2266 = vpop.trf.xlu0
    %v2267 = vpop.trf.xlu0
    %v2268 = vpop.trf.xlu0
    %v2269 = vpop.trf.xlu0
    %v2270 = vpop.trf.xlu0
    %v2271 = vpop.trf.xlu0
    %v2272 = vpop.trf.xlu0
    %v2273 = vpop.trf.xlu0
    %v2274 = vpop.trf.xlu0
    %v2275 = vpop.trf.xlu0
    %v2276 = vpop.trf.xlu0
    %v2277 = vpop.trf.xlu0
    %v2278 = vpop.trf.xlu0
    %v2279 = vpop.trf.xlu0
    %v2280 = vpop.trf.xlu0
    %v2281 = vpop.trf.xlu0
    %2282 = vxpose.xlu0.b32.start [1/16] %v1861, 128
    %2283 = vxpose.xlu0.b32.cont [2/16] %v1864, 128
    %2284 = vxpose.xlu0.b32.cont [3/16] 0.0, 128
    %2285 = vxpose.xlu0.b32.cont [4/16] 0.0, 128
    %2286 = vxpose.xlu0.b32.cont [5/16] 0.0, 128
    %2287 = vxpose.xlu0.b32.cont [6/16] 0.0, 128
    %2288 = vxpose.xlu0.b32.cont [7/16] 0.0, 128
    %2289 = vxpose.xlu0.b32.cont [8/16] 0.0, 128
    %2290 = vxpose.xlu0.b32.cont [9/16] 0.0, 128
    %2291 = vxpose.xlu0.b32.cont [10/16] 0.0, 128
    %2292 = vxpose.xlu0.b32.cont [11/16] 0.0, 128
    %2293 = vxpose.xlu0.b32.cont [12/16] 0.0, 128
    %2294 = vxpose.xlu0.b32.cont [13/16] 0.0, 128
    %2295 = vxpose.xlu0.b32.cont [14/16] 0.0, 128
    %2296 = vxpose.xlu0.b32.cont [15/16] 0.0, 128
    %2297 = vxpose.xlu0.b32.end [16/16] 0.0, 128
    %v2298 = vpop.trf.xlu0
    %v2299 = vpop.trf.xlu0
    %v2300 = vpop.trf.xlu0
    %v2301 = vpop.trf.xlu0
    %v2302 = vpop.trf.xlu0
    %v2303 = vpop.trf.xlu0
    %v2304 = vpop.trf.xlu0
    %v2305 = vpop.trf.xlu0
    %v2306 = vpop.trf.xlu0
    %v2307 = vpop.trf.xlu0
    %v2308 = vpop.trf.xlu0
    %v2309 = vpop.trf.xlu0
    %v2310 = vpop.trf.xlu0
    %v2311 = vpop.trf.xlu0
    %v2312 = vpop.trf.xlu0
    %v2313 = vpop.trf.xlu0
    %v2315 = vsel %vm755, %v1946, 0
    %2317 = vmatpush.msra.mxu0 0.0
    %2318 = vmatpush.msra.mxu0 0.0
    %2319 = vmatpush.msra.mxu0 0.0
    %2320 = vmatpush.msra.mxu0 0.0
    %2321 = vmatpush.msra.mxu0 0.0
    %2322 = vmatpush.msra.mxu0 0.0
    %2323 = vmatpush.msra.mxu0 0.0
    %2324 = vmatpush.msra.mxu0 0.0
    %2325 = vmatpush.msra.mxu0 0.0
    %2326 = vmatpush.msra.mxu0 0.0
    %2327 = vmatpush.msra.mxu0 0.0
    %2328 = vmatpush.msra.mxu0 0.0
    %2329 = vmatpush.msra.mxu0 0.0
    %2330 = vmatpush.msra.mxu0 0.0
    %2331 = vmatpush.msra.mxu0 0.0
    %2332 = vmatpush.msra.mxu0 %v2202
    %2333 = vmatmul.f32.gmra.mxu0 %v2315
    %v2334 = vpop.f32.mrf.mxu0
    %v2335 = vadd.f32 0.0, %v2334
    %2336 = vdwg.mxu0
    %v2338 = vsel %vm755, %v1978, 0
    %2340 = vmatpush.msra.mxu0 0.0
    %2341 = vmatpush.msra.mxu0 0.0
    %2342 = vmatpush.msra.mxu0 0.0
    %2343 = vmatpush.msra.mxu0 0.0
    %2344 = vmatpush.msra.mxu0 0.0
    %2345 = vmatpush.msra.mxu0 0.0
    %2346 = vmatpush.msra.mxu0 0.0
    %2347 = vmatpush.msra.mxu0 0.0
    %2348 = vmatpush.msra.mxu0 0.0
    %2349 = vmatpush.msra.mxu0 0.0
    %2350 = vmatpush.msra.mxu0 0.0
    %2351 = vmatpush.msra.mxu0 0.0
    %2352 = vmatpush.msra.mxu0 0.0
    %2353 = vmatpush.msra.mxu0 0.0
    %2354 = vmatpush.msra.mxu0 0.0
    %2355 = vmatpush.msra.mxu0 %v2203
    %2356 = vmatmul.f32.gmra.mxu0 %v2338
    %v2357 = vpop.f32.mrf.mxu0
    %v2358 = vadd.f32 0.0, %v2357
    %2359 = vdwg.mxu0
    %v2361 = vsel %vm755, %v2010, 0
    %2363 = vmatpush.msra.mxu0 0.0
    %2364 = vmatpush.msra.mxu0 0.0
    %2365 = vmatpush.msra.mxu0 0.0
    %2366 = vmatpush.msra.mxu0 0.0
    %2367 = vmatpush.msra.mxu0 0.0
    %2368 = vmatpush.msra.mxu0 0.0
    %2369 = vmatpush.msra.mxu0 0.0
    %2370 = vmatpush.msra.mxu0 0.0
    %2371 = vmatpush.msra.mxu0 0.0
    %2372 = vmatpush.msra.mxu0 0.0
    %2373 = vmatpush.msra.mxu0 0.0
    %2374 = vmatpush.msra.mxu0 0.0
    %2375 = vmatpush.msra.mxu0 0.0
    %2376 = vmatpush.msra.mxu0 0.0
    %2377 = vmatpush.msra.mxu0 0.0
    %2378 = vmatpush.msra.mxu0 %v2204
    %2379 = vmatmul.f32.gmra.mxu0 %v2361
    %v2380 = vpop.f32.mrf.mxu0
    %v2381 = vadd.f32 0.0, %v2380
    %2382 = vdwg.mxu0
    %v2384 = vsel %vm755, %v2042, 0
    %2386 = vmatpush.msra.mxu0 0.0
    %2387 = vmatpush.msra.mxu0 0.0
    %2388 = vmatpush.msra.mxu0 0.0
    %2389 = vmatpush.msra.mxu0 0.0
    %2390 = vmatpush.msra.mxu0 0.0
    %2391 = vmatpush.msra.mxu0 0.0
    %2392 = vmatpush.msra.mxu0 0.0
    %2393 = vmatpush.msra.mxu0 0.0
    %2394 = vmatpush.msra.mxu0 0.0
    %2395 = vmatpush.msra.mxu0 0.0
    %2396 = vmatpush.msra.mxu0 0.0
    %2397 = vmatpush.msra.mxu0 0.0
    %2398 = vmatpush.msra.mxu0 0.0
    %2399 = vmatpush.msra.mxu0 0.0
    %2400 = vmatpush.msra.mxu0 0.0
    %2401 = vmatpush.msra.mxu0 %v2205
    %2402 = vmatmul.f32.gmra.mxu0 %v2384
    %v2403 = vpop.f32.mrf.mxu0
    %v2404 = vadd.f32 0.0, %v2403
    %2405 = vdwg.mxu0
    %v2407 = vsel %vm755, %v2074, 0
    %2409 = vmatpush.msra.mxu0 0.0
    %2410 = vmatpush.msra.mxu0 0.0
    %2411 = vmatpush.msra.mxu0 0.0
    %2412 = vmatpush.msra.mxu0 0.0
    %2413 = vmatpush.msra.mxu0 0.0
    %2414 = vmatpush.msra.mxu0 0.0
    %2415 = vmatpush.msra.mxu0 0.0
    %2416 = vmatpush.msra.mxu0 0.0
    %2417 = vmatpush.msra.mxu0 0.0
    %2418 = vmatpush.msra.mxu0 0.0
    %2419 = vmatpush.msra.mxu0 0.0
    %2420 = vmatpush.msra.mxu0 0.0
    %2421 = vmatpush.msra.mxu0 0.0
    %2422 = vmatpush.msra.mxu0 0.0
    %2423 = vmatpush.msra.mxu0 0.0
    %2424 = vmatpush.msra.mxu0 %v2234
    %2425 = vmatmul.f32.gmra.mxu0 %v2407
    %v2426 = vpop.f32.mrf.mxu0
    %v2427 = vadd.f32 0.0, %v2426
    %2428 = vdwg.mxu0
    %v2430 = vsel %vm755, %v2106, 0
    %2432 = vmatpush.msra.mxu0 0.0
    %2433 = vmatpush.msra.mxu0 0.0
    %2434 = vmatpush.msra.mxu0 0.0
    %2435 = vmatpush.msra.mxu0 0.0
    %2436 = vmatpush.msra.mxu0 0.0
    %2437 = vmatpush.msra.mxu0 0.0
    %2438 = vmatpush.msra.mxu0 0.0
    %2439 = vmatpush.msra.mxu0 0.0
    %2440 = vmatpush.msra.mxu0 0.0
    %2441 = vmatpush.msra.mxu0 0.0
    %2442 = vmatpush.msra.mxu0 0.0
    %2443 = vmatpush.msra.mxu0 0.0
    %2444 = vmatpush.msra.mxu0 0.0
    %2445 = vmatpush.msra.mxu0 0.0
    %2446 = vmatpush.msra.mxu0 0.0
    %2447 = vmatpush.msra.mxu0 %v2235
    %2448 = vmatmul.f32.gmra.mxu0 %v2430
    %v2449 = vpop.f32.mrf.mxu0
    %v2450 = vadd.f32 0.0, %v2449
    %2451 = vdwg.mxu0
    %v2453 = vsel %vm755, %v2138, 0
    %2455 = vmatpush.msra.mxu0 0.0
    %2456 = vmatpush.msra.mxu0 0.0
    %2457 = vmatpush.msra.mxu0 0.0
    %2458 = vmatpush.msra.mxu0 0.0
    %2459 = vmatpush.msra.mxu0 0.0
    %2460 = vmatpush.msra.mxu0 0.0
    %2461 = vmatpush.msra.mxu0 0.0
    %2462 = vmatpush.msra.mxu0 0.0
    %2463 = vmatpush.msra.mxu0 0.0
    %2464 = vmatpush.msra.mxu0 0.0
    %2465 = vmatpush.msra.mxu0 0.0
    %2466 = vmatpush.msra.mxu0 0.0
    %2467 = vmatpush.msra.mxu0 0.0
    %2468 = vmatpush.msra.mxu0 0.0
    %2469 = vmatpush.msra.mxu0 0.0
    %2470 = vmatpush.msra.mxu0 %v2236
    %2471 = vmatmul.f32.gmra.mxu0 %v2453
    %v2472 = vpop.f32.mrf.mxu0
    %v2473 = vadd.f32 0.0, %v2472
    %2474 = vdwg.mxu0
    %v2476 = vsel %vm755, %v2170, 0
    %2478 = vmatpush.msra.mxu0 0.0
    %2479 = vmatpush.msra.mxu0 0.0
    %2480 = vmatpush.msra.mxu0 0.0
    %2481 = vmatpush.msra.mxu0 0.0
    %2482 = vmatpush.msra.mxu0 0.0
    %2483 = vmatpush.msra.mxu0 0.0
    %2484 = vmatpush.msra.mxu0 0.0
    %2485 = vmatpush.msra.mxu0 0.0
    %2486 = vmatpush.msra.mxu0 0.0
    %2487 = vmatpush.msra.mxu0 0.0
    %2488 = vmatpush.msra.mxu0 0.0
    %2489 = vmatpush.msra.mxu0 0.0
    %2490 = vmatpush.msra.mxu0 0.0
    %2491 = vmatpush.msra.mxu0 0.0
    %2492 = vmatpush.msra.mxu0 0.0
    %2493 = vmatpush.msra.mxu0 %v2237
    %2494 = vmatmul.f32.gmra.mxu0 %v2476
    %v2495 = vpop.f32.mrf.mxu0
    %v2496 = vadd.f32 0.0, %v2495
    %2497 = vdwg.mxu0
    %v2498 = vmul.f32 %v2335, 0.35355338
    %v2499 = vmul.f32 %v2358, 0.35355338
    %v2500 = vmul.f32 %v2381, 0.35355338
    %v2501 = vmul.f32 %v2404, 0.35355338
    %v2502 = vmul.f32 %v2427, 0.35355338
    %v2503 = vmul.f32 %v2450, 0.35355338
    %v2504 = vmul.f32 %v2473, 0.35355338
    %v2505 = vmul.f32 %v2496, 0.35355338
    %v2506 = vperm.slane %v145, 0
    %v2507 = vperm.slane %v147, 0
    %v2508 = vperm.slane %v148, 0
    %v2509 = vperm.slane %v149, 0
    %v2510 = vperm.slane %v150, 0
    %v2511 = vperm.slane %v151, 0
    %v2512 = vperm.slane %v152, 0
    %v2513 = vperm.slane %v153, 0
    %v2522 = vadd.f32 %v2498, %v2506
    %v2523 = vadd.f32 %v2499, %v2507
    %v2524 = vadd.f32 %v2500, %v2508
    %v2525 = vadd.f32 %v2501, %v2509
    %v2526 = vadd.f32 %v2502, %v2510
    %v2527 = vadd.f32 %v2503, %v2511
    %v2528 = vadd.f32 %v2504, %v2512
    %v2529 = vadd.f32 %v2505, %v2513
    %vm2530 = vcmask 130048
    %v2531 = vsel %vm2530, %v2522, -inf
    %2532 = vmax.xlane.f32.xlu0 %v2531
    %v2533 = vpop.xlane.xlu0 %2532
    %v2534 = vsel %vm2530, %v2523, -inf
    %2535 = vmax.xlane.f32.xlu0 %v2534
    %v2536 = vpop.xlane.xlu0 %2535
    %v2537 = vsel %vm2530, %v2524, -inf
    %2538 = vmax.xlane.f32.xlu0 %v2537
    %v2539 = vpop.xlane.xlu0 %2538
    %v2540 = vsel %vm2530, %v2525, -inf
    %2541 = vmax.xlane.f32.xlu0 %v2540
    %v2542 = vpop.xlane.xlu0 %2541
    %v2543 = vsel %vm2530, %v2526, -inf
    %2544 = vmax.xlane.f32.xlu0 %v2543
    %v2545 = vpop.xlane.xlu0 %2544
    %v2546 = vsel %vm2530, %v2527, -inf
    %2547 = vmax.xlane.f32.xlu0 %v2546
    %v2548 = vpop.xlane.xlu0 %2547
    %v2549 = vsel %vm2530, %v2528, -inf
    %2550 = vmax.xlane.f32.xlu0 %v2549
    %v2551 = vpop.xlane.xlu0 %2550
    %v2552 = vsel %vm2530, %v2529, -inf
    %2553 = vmax.xlane.f32.xlu0 %v2552
    %v2554 = vpop.xlane.xlu0 %2553
    %v2555 = vsub.f32 %v2522, %v2533
    %v2556 = vsub.f32 %v2523, %v2536
    %v2557 = vsub.f32 %v2524, %v2539
    %v2558 = vsub.f32 %v2525, %v2542
    %v2559 = vsub.f32 %v2526, %v2545
    %v2560 = vsub.f32 %v2527, %v2548
    %v2561 = vsub.f32 %v2528, %v2551
    %v2562 = vsub.f32 %v2529, %v2554
    %v2563 = vmul.f32 %v2555, 1.442695
    %v2564 = vpow.pop %v2563
    %v2565 = vmul.f32 %v2556, 1.442695
    %v2566 = vpow.pop %v2565
    %v2567 = vmul.f32 %v2557, 1.442695
    %v2568 = vpow.pop %v2567
    %v2569 = vmul.f32 %v2558, 1.442695
    %v2570 = vpow.pop %v2569
    %v2571 = vmul.f32 %v2559, 1.442695
    %v2572 = vpow.pop %v2571
    %v2573 = vmul.f32 %v2560, 1.442695
    %v2574 = vpow.pop %v2573
    %v2575 = vmul.f32 %v2561, 1.442695
    %v2576 = vpow.pop %v2575
    %v2577 = vmul.f32 %v2562, 1.442695
    %v2578 = vpow.pop %v2577
    %v2579 = vsel %vm2530, %v2564, 0.0
    %2580 = vadd.xlane.f32.xlu0 %v2579
    %v2581 = vpop.xlane.xlu0 %2580
    %v2582 = vsel %vm2530, %v2566, 0.0
    %2583 = vadd.xlane.f32.xlu0 %v2582
    %v2584 = vpop.xlane.xlu0 %2583
    %v2585 = vsel %vm2530, %v2568, 0.0
    %2586 = vadd.xlane.f32.xlu0 %v2585
    %v2587 = vpop.xlane.xlu0 %2586
    %v2588 = vsel %vm2530, %v2570, 0.0
    %2589 = vadd.xlane.f32.xlu0 %v2588
    %v2590 = vpop.xlane.xlu0 %2589
    %v2591 = vsel %vm2530, %v2572, 0.0
    %2592 = vadd.xlane.f32.xlu0 %v2591
    %v2593 = vpop.xlane.xlu0 %2592
    %v2594 = vsel %vm2530, %v2574, 0.0
    %2595 = vadd.xlane.f32.xlu0 %v2594
    %v2596 = vpop.xlane.xlu0 %2595
    %v2597 = vsel %vm2530, %v2576, 0.0
    %2598 = vadd.xlane.f32.xlu0 %v2597
    %v2599 = vpop.xlane.xlu0 %2598
    %v2600 = vsel %vm2530, %v2578, 0.0
    %2601 = vadd.xlane.f32.xlu0 %v2600
    %v2602 = vpop.xlane.xlu0 %2601
    %v2603 = vrcp.pop %v2581
    %v2604 = vmul.f32 %v2581, %v2603
    %v2605 = vsub.f32 1.0, %v2604
    %v2606 = vmul.f32 %v2603, %v2605
    %v2607 = vadd.f32 %v2603, %v2606
    %vm2608 = vweird.f32 %v2581
    %vm2609 = vweird.f32 %v2603
    %vm2610 = vmor %vm2608, %vm2609
    %v2611 = vsel %vm2610, %v2603, %v2607
    %v2612 = vand.u32 2147483647, %v2581
    %vm2613 = vcmp.eq.f32.partialorder %v2612, 8.507059e+37
    %v2614 = vand.u32 %v2581, 2147483648
    %v2615 = vor.u32 1.1754944e-38, %v2614
    %v2616 = vsel %vm2613, %v2615, %v2611
    %v2617 = vmul.f32 %v2564, %v2616
    %v2618 = vrcp.pop %v2584
    %v2619 = vmul.f32 %v2584, %v2618
    %v2620 = vsub.f32 1.0, %v2619
    %v2621 = vmul.f32 %v2618, %v2620
    %v2622 = vadd.f32 %v2618, %v2621
    %vm2623 = vweird.f32 %v2584
    %vm2624 = vweird.f32 %v2618
    %vm2625 = vmor %vm2623, %vm2624
    %v2626 = vsel %vm2625, %v2618, %v2622
    %v2627 = vand.u32 2147483647, %v2584
    %vm2628 = vcmp.eq.f32.partialorder %v2627, 8.507059e+37
    %v2629 = vand.u32 %v2584, 2147483648
    %v2630 = vor.u32 1.1754944e-38, %v2629
    %v2631 = vsel %vm2628, %v2630, %v2626
    %v2632 = vmul.f32 %v2566, %v2631
    %v2633 = vrcp.pop %v2587
    %v2634 = vmul.f32 %v2587, %v2633
    %v2635 = vsub.f32 1.0, %v2634
    %v2636 = vmul.f32 %v2633, %v2635
    %v2637 = vadd.f32 %v2633, %v2636
    %vm2638 = vweird.f32 %v2587
    %vm2639 = vweird.f32 %v2633
    %vm2640 = vmor %vm2638, %vm2639
    %v2641 = vsel %vm2640, %v2633, %v2637
    %v2642 = vand.u32 2147483647, %v2587
    %vm2643 = vcmp.eq.f32.partialorder %v2642, 8.507059e+37
    %v2644 = vand.u32 %v2587, 2147483648
    %v2645 = vor.u32 1.1754944e-38, %v2644
    %v2646 = vsel %vm2643, %v2645, %v2641
    %v2647 = vmul.f32 %v2568, %v2646
    %v2648 = vrcp.pop %v2590
    %v2649 = vmul.f32 %v2590, %v2648
    %v2650 = vsub.f32 1.0, %v2649
    %v2651 = vmul.f32 %v2648, %v2650
    %v2652 = vadd.f32 %v2648, %v2651
    %vm2653 = vweird.f32 %v2590
    %vm2654 = vweird.f32 %v2648
    %vm2655 = vmor %vm2653, %vm2654
    %v2656 = vsel %vm2655, %v2648, %v2652
    %v2657 = vand.u32 2147483647, %v2590
    %vm2658 = vcmp.eq.f32.partialorder %v2657, 8.507059e+37
    %v2659 = vand.u32 %v2590, 2147483648
    %v2660 = vor.u32 1.1754944e-38, %v2659
    %v2661 = vsel %vm2658, %v2660, %v2656
    %v2662 = vmul.f32 %v2570, %v2661
    %v2663 = vrcp.pop %v2593
    %v2664 = vmul.f32 %v2593, %v2663
    %v2665 = vsub.f32 1.0, %v2664
    %v2666 = vmul.f32 %v2663, %v2665
    %v2667 = vadd.f32 %v2663, %v2666
    %vm2668 = vweird.f32 %v2593
    %vm2669 = vweird.f32 %v2663
    %vm2670 = vmor %vm2668, %vm2669
    %v2671 = vsel %vm2670, %v2663, %v2667
    %v2672 = vand.u32 2147483647, %v2593
    %vm2673 = vcmp.eq.f32.partialorder %v2672, 8.507059e+37
    %v2674 = vand.u32 %v2593, 2147483648
    %v2675 = vor.u32 1.1754944e-38, %v2674
    %v2676 = vsel %vm2673, %v2675, %v2671
    %v2677 = vmul.f32 %v2572, %v2676
    %v2678 = vrcp.pop %v2596
    %v2679 = vmul.f32 %v2596, %v2678
    %v2680 = vsub.f32 1.0, %v2679
    %v2681 = vmul.f32 %v2678, %v2680
    %v2682 = vadd.f32 %v2678, %v2681
    %vm2683 = vweird.f32 %v2596
    %vm2684 = vweird.f32 %v2678
    %vm2685 = vmor %vm2683, %vm2684
    %v2686 = vsel %vm2685, %v2678, %v2682
    %v2687 = vand.u32 2147483647, %v2596
    %vm2688 = vcmp.eq.f32.partialorder %v2687, 8.507059e+37
    %v2689 = vand.u32 %v2596, 2147483648
    %v2690 = vor.u32 1.1754944e-38, %v2689
    %v2691 = vsel %vm2688, %v2690, %v2686
    %v2692 = vmul.f32 %v2574, %v2691
    %v2693 = vrcp.pop %v2599
    %v2694 = vmul.f32 %v2599, %v2693
    %v2695 = vsub.f32 1.0, %v2694
    %v2696 = vmul.f32 %v2693, %v2695
    %v2697 = vadd.f32 %v2693, %v2696
    %vm2698 = vweird.f32 %v2599
    %vm2699 = vweird.f32 %v2693
    %vm2700 = vmor %vm2698, %vm2699
    %v2701 = vsel %vm2700, %v2693, %v2697
    %v2702 = vand.u32 2147483647, %v2599
    %vm2703 = vcmp.eq.f32.partialorder %v2702, 8.507059e+37
    %v2704 = vand.u32 %v2599, 2147483648
    %v2705 = vor.u32 1.1754944e-38, %v2704
    %v2706 = vsel %vm2703, %v2705, %v2701
    %v2707 = vmul.f32 %v2576, %v2706
    %v2708 = vrcp.pop %v2602
    %v2709 = vmul.f32 %v2602, %v2708
    %v2710 = vsub.f32 1.0, %v2709
    %v2711 = vmul.f32 %v2708, %v2710
    %v2712 = vadd.f32 %v2708, %v2711
    %vm2713 = vweird.f32 %v2602
    %vm2714 = vweird.f32 %v2708
    %vm2715 = vmor %vm2713, %vm2714
    %v2716 = vsel %vm2715, %v2708, %v2712
    %v2717 = vand.u32 2147483647, %v2602
    %vm2718 = vcmp.eq.f32.partialorder %v2717, 8.507059e+37
    %v2719 = vand.u32 %v2602, 2147483648
    %v2720 = vor.u32 1.1754944e-38, %v2719
    %v2721 = vsel %vm2718, %v2720, %v2716
    %v2722 = vmul.f32 %v2578, %v2721
    %v2724 = vsel %vm2530, %v2617, 0
    %v2727 = vsel %vm2530, %v2266, 0
    %2729 = vmatpush.xpose.msra.mxu0 0.0
    %2730 = vmatpush.xpose.msra.mxu0 0.0
    %2731 = vmatpush.xpose.msra.mxu0 0.0
    %2732 = vmatpush.xpose.msra.mxu0 0.0
    %2733 = vmatpush.xpose.msra.mxu0 0.0
    %2734 = vmatpush.xpose.msra.mxu0 0.0
    %2735 = vmatpush.xpose.msra.mxu0 0.0
    %2736 = vmatpush.xpose.msra.mxu0 0.0
    %2737 = vmatpush.xpose.msra.mxu0 0.0
    %2738 = vmatpush.xpose.msra.mxu0 0.0
    %2739 = vmatpush.xpose.msra.mxu0 0.0
    %2740 = vmatpush.xpose.msra.mxu0 0.0
    %2741 = vmatpush.xpose.msra.mxu0 0.0
    %2742 = vmatpush.xpose.msra.mxu0 0.0
    %2743 = vmatpush.xpose.msra.mxu0 0.0
    %2744 = vmatpush.xpose.msra.mxu0 %v2727
    %2745 = vmatmul.f32.gmra.mxu0 %v2724
    %v2746 = vpop.f32.mrf.mxu0
    %v2747 = vadd.f32 0.0, %v2746
    %2748 = vdwg.mxu0
    %v2750 = vsel %vm2530, %v2632, 0
    %v2753 = vsel %vm2530, %v2267, 0
    %2755 = vmatpush.xpose.msra.mxu0 0.0
    %2756 = vmatpush.xpose.msra.mxu0 0.0
    %2757 = vmatpush.xpose.msra.mxu0 0.0
    %2758 = vmatpush.xpose.msra.mxu0 0.0
    %2759 = vmatpush.xpose.msra.mxu0 0.0
    %2760 = vmatpush.xpose.msra.mxu0 0.0
    %2761 = vmatpush.xpose.msra.mxu0 0.0
    %2762 = vmatpush.xpose.msra.mxu0 0.0
    %2763 = vmatpush.xpose.msra.mxu0 0.0
    %2764 = vmatpush.xpose.msra.mxu0 0.0
    %2765 = vmatpush.xpose.msra.mxu0 0.0
    %2766 = vmatpush.xpose.msra.mxu0 0.0
    %2767 = vmatpush.xpose.msra.mxu0 0.0
    %2768 = vmatpush.xpose.msra.mxu0 0.0
    %2769 = vmatpush.xpose.msra.mxu0 0.0
    %2770 = vmatpush.xpose.msra.mxu0 %v2753
    %2771 = vmatmul.f32.gmra.mxu0 %v2750
    %v2772 = vpop.f32.mrf.mxu0
    %v2773 = vadd.f32 0.0, %v2772
    %2774 = vdwg.mxu0
    %v2776 = vsel %vm2530, %v2647, 0
    %v2779 = vsel %vm2530, %v2268, 0
    %2781 = vmatpush.xpose.msra.mxu0 0.0
    %2782 = vmatpush.xpose.msra.mxu0 0.0
    %2783 = vmatpush.xpose.msra.mxu0 0.0
    %2784 = vmatpush.xpose.msra.mxu0 0.0
    %2785 = vmatpush.xpose.msra.mxu0 0.0
    %2786 = vmatpush.xpose.msra.mxu0 0.0
    %2787 = vmatpush.xpose.msra.mxu0 0.0
    %2788 = vmatpush.xpose.msra.mxu0 0.0
    %2789 = vmatpush.xpose.msra.mxu0 0.0
    %2790 = vmatpush.xpose.msra.mxu0 0.0
    %2791 = vmatpush.xpose.msra.mxu0 0.0
    %2792 = vmatpush.xpose.msra.mxu0 0.0
    %2793 = vmatpush.xpose.msra.mxu0 0.0
    %2794 = vmatpush.xpose.msra.mxu0 0.0
    %2795 = vmatpush.xpose.msra.mxu0 0.0
    %2796 = vmatpush.xpose.msra.mxu0 %v2779
    %2797 = vmatmul.f32.gmra.mxu0 %v2776
    %v2798 = vpop.f32.mrf.mxu0
    %v2799 = vadd.f32 0.0, %v2798
    %2800 = vdwg.mxu0
    %v2802 = vsel %vm2530, %v2662, 0
    %v2805 = vsel %vm2530, %v2269, 0
    %2807 = vmatpush.xpose.msra.mxu0 0.0
    %2808 = vmatpush.xpose.msra.mxu0 0.0
    %2809 = vmatpush.xpose.msra.mxu0 0.0
    %2810 = vmatpush.xpose.msra.mxu0 0.0
    %2811 = vmatpush.xpose.msra.mxu0 0.0
    %2812 = vmatpush.xpose.msra.mxu0 0.0
    %2813 = vmatpush.xpose.msra.mxu0 0.0
    %2814 = vmatpush.xpose.msra.mxu0 0.0
    %2815 = vmatpush.xpose.msra.mxu0 0.0
    %2816 = vmatpush.xpose.msra.mxu0 0.0
    %2817 = vmatpush.xpose.msra.mxu0 0.0
    %2818 = vmatpush.xpose.msra.mxu0 0.0
    %2819 = vmatpush.xpose.msra.mxu0 0.0
    %2820 = vmatpush.xpose.msra.mxu0 0.0
    %2821 = vmatpush.xpose.msra.mxu0 0.0
    %2822 = vmatpush.xpose.msra.mxu0 %v2805
    %2823 = vmatmul.f32.gmra.mxu0 %v2802
    %v2824 = vpop.f32.mrf.mxu0
    %v2825 = vadd.f32 0.0, %v2824
    %2826 = vdwg.mxu0
    %v2828 = vsel %vm2530, %v2677, 0
    %v2831 = vsel %vm2530, %v2298, 0
    %2833 = vmatpush.xpose.msra.mxu0 0.0
    %2834 = vmatpush.xpose.msra.mxu0 0.0
    %2835 = vmatpush.xpose.msra.mxu0 0.0
    %2836 = vmatpush.xpose.msra.mxu0 0.0
    %2837 = vmatpush.xpose.msra.mxu0 0.0
    %2838 = vmatpush.xpose.msra.mxu0 0.0
    %2839 = vmatpush.xpose.msra.mxu0 0.0
    %2840 = vmatpush.xpose.msra.mxu0 0.0
    %2841 = vmatpush.xpose.msra.mxu0 0.0
    %2842 = vmatpush.xpose.msra.mxu0 0.0
    %2843 = vmatpush.xpose.msra.mxu0 0.0
    %2844 = vmatpush.xpose.msra.mxu0 0.0
    %2845 = vmatpush.xpose.msra.mxu0 0.0
    %2846 = vmatpush.xpose.msra.mxu0 0.0
    %2847 = vmatpush.xpose.msra.mxu0 0.0
    %2848 = vmatpush.xpose.msra.mxu0 %v2831
    %2849 = vmatmul.f32.gmra.mxu0 %v2828
    %v2850 = vpop.f32.mrf.mxu0
    %v2851 = vadd.f32 0.0, %v2850
    %2852 = vdwg.mxu0
    %v2854 = vsel %vm2530, %v2692, 0
    %v2857 = vsel %vm2530, %v2299, 0
    %2859 = vmatpush.xpose.msra.mxu0 0.0
    %2860 = vmatpush.xpose.msra.mxu0 0.0
    %2861 = vmatpush.xpose.msra.mxu0 0.0
    %2862 = vmatpush.xpose.msra.mxu0 0.0
    %2863 = vmatpush.xpose.msra.mxu0 0.0
    %2864 = vmatpush.xpose.msra.mxu0 0.0
    %2865 = vmatpush.xpose.msra.mxu0 0.0
    %2866 = vmatpush.xpose.msra.mxu0 0.0
    %2867 = vmatpush.xpose.msra.mxu0 0.0
    %2868 = vmatpush.xpose.msra.mxu0 0.0
    %2869 = vmatpush.xpose.msra.mxu0 0.0
    %2870 = vmatpush.xpose.msra.mxu0 0.0
    %2871 = vmatpush.xpose.msra.mxu0 0.0
    %2872 = vmatpush.xpose.msra.mxu0 0.0
    %2873 = vmatpush.xpose.msra.mxu0 0.0
    %2874 = vmatpush.xpose.msra.mxu0 %v2857
    %2875 = vmatmul.f32.gmra.mxu0 %v2854
    %v2876 = vpop.f32.mrf.mxu0
    %v2877 = vadd.f32 0.0, %v2876
    %2878 = vdwg.mxu0
    %v2880 = vsel %vm2530, %v2707, 0
    %v2883 = vsel %vm2530, %v2300, 0
    %2885 = vmatpush.xpose.msra.mxu0 0.0
    %2886 = vmatpush.xpose.msra.mxu0 0.0
    %2887 = vmatpush.xpose.msra.mxu0 0.0
    %2888 = vmatpush.xpose.msra.mxu0 0.0
    %2889 = vmatpush.xpose.msra.mxu0 0.0
    %2890 = vmatpush.xpose.msra.mxu0 0.0
    %2891 = vmatpush.xpose.msra.mxu0 0.0
    %2892 = vmatpush.xpose.msra.mxu0 0.0
    %2893 = vmatpush.xpose.msra.mxu0 0.0
    %2894 = vmatpush.xpose.msra.mxu0 0.0
    %2895 = vmatpush.xpose.msra.mxu0 0.0
    %2896 = vmatpush.xpose.msra.mxu0 0.0
    %2897 = vmatpush.xpose.msra.mxu0 0.0
    %2898 = vmatpush.xpose.msra.mxu0 0.0
    %2899 = vmatpush.xpose.msra.mxu0 0.0
    %2900 = vmatpush.xpose.msra.mxu0 %v2883
    %2901 = vmatmul.f32.gmra.mxu0 %v2880
    %v2902 = vpop.f32.mrf.mxu0
    %v2903 = vadd.f32 0.0, %v2902
    %2904 = vdwg.mxu0
    %v2906 = vsel %vm2530, %v2722, 0
    %v2909 = vsel %vm2530, %v2301, 0
    %2911 = vmatpush.xpose.msra.mxu0 0.0
    %2912 = vmatpush.xpose.msra.mxu0 0.0
    %2913 = vmatpush.xpose.msra.mxu0 0.0
    %2914 = vmatpush.xpose.msra.mxu0 0.0
    %2915 = vmatpush.xpose.msra.mxu0 0.0
    %2916 = vmatpush.xpose.msra.mxu0 0.0
    %2917 = vmatpush.xpose.msra.mxu0 0.0
    %2918 = vmatpush.xpose.msra.mxu0 0.0
    %2919 = vmatpush.xpose.msra.mxu0 0.0
    %2920 = vmatpush.xpose.msra.mxu0 0.0
    %2921 = vmatpush.xpose.msra.mxu0 0.0
    %2922 = vmatpush.xpose.msra.mxu0 0.0
    %2923 = vmatpush.xpose.msra.mxu0 0.0
    %2924 = vmatpush.xpose.msra.mxu0 0.0
    %2925 = vmatpush.xpose.msra.mxu0 0.0
    %2926 = vmatpush.xpose.msra.mxu0 %v2909
    %2927 = vmatmul.f32.gmra.mxu0 %v2906
    %v2928 = vpop.f32.mrf.mxu0
    %v2929 = vadd.f32 0.0, %v2928
    %2930 = vdwg.mxu0
    %2931 = vxpose.xlu0.b32.start [1/16] %v2747, 128
    %2932 = vxpose.xlu0.b32.cont [2/16] 0.0, 128
    %2933 = vxpose.xlu0.b32.cont [3/16] 0.0, 128
    %2934 = vxpose.xlu0.b32.cont [4/16] 0.0, 128
    %2935 = vxpose.xlu0.b32.cont [5/16] 0.0, 128
    %2936 = vxpose.xlu0.b32.cont [6/16] 0.0, 128
    %2937 = vxpose.xlu0.b32.cont [7/16] 0.0, 128
    %2938 = vxpose.xlu0.b32.cont [8/16] 0.0, 128
    %2939 = vxpose.xlu0.b32.cont [9/16] 0.0, 128
    %2940 = vxpose.xlu0.b32.cont [10/16] 0.0, 128
    %2941 = vxpose.xlu0.b32.cont [11/16] 0.0, 128
    %2942 = vxpose.xlu0.b32.cont [12/16] 0.0, 128
    %2943 = vxpose.xlu0.b32.cont [13/16] 0.0, 128
    %2944 = vxpose.xlu0.b32.cont [14/16] 0.0, 128
    %2945 = vxpose.xlu0.b32.cont [15/16] 0.0, 128
    %2946 = vxpose.xlu0.b32.end [16/16] 0.0, 128
    %v2947 = vpop.trf.xlu0
    %v2948 = vpop.trf.xlu0
    %v2949 = vpop.trf.xlu0
    %v2950 = vpop.trf.xlu0
    %v2951 = vpop.trf.xlu0
    %v2952 = vpop.trf.xlu0
    %v2953 = vpop.trf.xlu0
    %v2954 = vpop.trf.xlu0
    %v2955 = vpop.trf.xlu0
    %v2956 = vpop.trf.xlu0
    %v2957 = vpop.trf.xlu0
    %v2958 = vpop.trf.xlu0
    %v2959 = vpop.trf.xlu0
    %v2960 = vpop.trf.xlu0
    %v2961 = vpop.trf.xlu0
    %v2962 = vpop.trf.xlu0
    %2963 = vxpose.xlu0.b32.start [1/16] %v2773, 128
    %2964 = vxpose.xlu0.b32.cont [2/16] 0.0, 128
    %2965 = vxpose.xlu0.b32.cont [3/16] 0.0, 128
    %2966 = vxpose.xlu0.b32.cont [4/16] 0.0, 128
    %2967 = vxpose.xlu0.b32.cont [5/16] 0.0, 128
    %2968 = vxpose.xlu0.b32.cont [6/16] 0.0, 128
    %2969 = vxpose.xlu0.b32.cont [7/16] 0.0, 128
    %2970 = vxpose.xlu0.b32.cont [8/16] 0.0, 128
    %2971 = vxpose.xlu0.b32.cont [9/16] 0.0, 128
    %2972 = vxpose.xlu0.b32.cont [10/16] 0.0, 128
    %2973 = vxpose.xlu0.b32.cont [11/16] 0.0, 128
    %2974 = vxpose.xlu0.b32.cont [12/16] 0.0, 128
    %2975 = vxpose.xlu0.b32.cont [13/16] 0.0, 128
    %2976 = vxpose.xlu0.b32.cont [14/16] 0.0, 128
    %2977 = vxpose.xlu0.b32.cont [15/16] 0.0, 128
    %2978 = vxpose.xlu0.b32.end [16/16] 0.0, 128
    %v2979 = vpop.trf.xlu0
    %v2980 = vpop.trf.xlu0
    %v2981 = vpop.trf.xlu0
    %v2982 = vpop.trf.xlu0
    %v2983 = vpop.trf.xlu0
    %v2984 = vpop.trf.xlu0
    %v2985 = vpop.trf.xlu0
    %v2986 = vpop.trf.xlu0
    %v2987 = vpop.trf.xlu0
    %v2988 = vpop.trf.xlu0
    %v2989 = vpop.trf.xlu0
    %v2990 = vpop.trf.xlu0
    %v2991 = vpop.trf.xlu0
    %v2992 = vpop.trf.xlu0
    %v2993 = vpop.trf.xlu0
    %v2994 = vpop.trf.xlu0
    %2995 = vxpose.xlu0.b32.start [1/16] %v2799, 128
    %2996 = vxpose.xlu0.b32.cont [2/16] 0.0, 128
    %2997 = vxpose.xlu0.b32.cont [3/16] 0.0, 128
    %2998 = vxpose.xlu0.b32.cont [4/16] 0.0, 128
    %2999 = vxpose.xlu0.b32.cont [5/16] 0.0, 128
    %3000 = vxpose.xlu0.b32.cont [6/16] 0.0, 128
    %3001 = vxpose.xlu0.b32.cont [7/16] 0.0, 128
    %3002 = vxpose.xlu0.b32.cont [8/16] 0.0, 128
    %3003 = vxpose.xlu0.b32.cont [9/16] 0.0, 128
    %3004 = vxpose.xlu0.b32.cont [10/16] 0.0, 128
    %3005 = vxpose.xlu0.b32.cont [11/16] 0.0, 128
    %3006 = vxpose.xlu0.b32.cont [12/16] 0.0, 128
    %3007 = vxpose.xlu0.b32.cont [13/16] 0.0, 128
    %3008 = vxpose.xlu0.b32.cont [14/16] 0.0, 128
    %3009 = vxpose.xlu0.b32.cont [15/16] 0.0, 128
    %3010 = vxpose.xlu0.b32.end [16/16] 0.0, 128
    %v3011 = vpop.trf.xlu0
    %v3012 = vpop.trf.xlu0
    %v3013 = vpop.trf.xlu0
    %v3014 = vpop.trf.xlu0
    %v3015 = vpop.trf.xlu0
    %v3016 = vpop.trf.xlu0
    %v3017 = vpop.trf.xlu0
    %v3018 = vpop.trf.xlu0
    %v3019 = vpop.trf.xlu0
    %v3020 = vpop.trf.xlu0
    %v3021 = vpop.trf.xlu0
    %v3022 = vpop.trf.xlu0
    %v3023 = vpop.trf.xlu0
    %v3024 = vpop.trf.xlu0
    %v3025 = vpop.trf.xlu0
    %v3026 = vpop.trf.xlu0
    %3027 = vxpose.xlu0.b32.start [1/16] %v2825, 128
    %3028 = vxpose.xlu0.b32.cont [2/16] 0.0, 128
    %3029 = vxpose.xlu0.b32.cont [3/16] 0.0, 128
    %3030 = vxpose.xlu0.b32.cont [4/16] 0.0, 128
    %3031 = vxpose.xlu0.b32.cont [5/16] 0.0, 128
    %3032 = vxpose.xlu0.b32.cont [6/16] 0.0, 128
    %3033 = vxpose.xlu0.b32.cont [7/16] 0.0, 128
    %3034 = vxpose.xlu0.b32.cont [8/16] 0.0, 128
    %3035 = vxpose.xlu0.b32.cont [9/16] 0.0, 128
    %3036 = vxpose.xlu0.b32.cont [10/16] 0.0, 128
    %3037 = vxpose.xlu0.b32.cont [11/16] 0.0, 128
    %3038 = vxpose.xlu0.b32.cont [12/16] 0.0, 128
    %3039 = vxpose.xlu0.b32.cont [13/16] 0.0, 128
    %3040 = vxpose.xlu0.b32.cont [14/16] 0.0, 128
    %3041 = vxpose.xlu0.b32.cont [15/16] 0.0, 128
    %3042 = vxpose.xlu0.b32.end [16/16] 0.0, 128
    %v3043 = vpop.trf.xlu0
    %v3044 = vpop.trf.xlu0
    %v3045 = vpop.trf.xlu0
    %v3046 = vpop.trf.xlu0
    %v3047 = vpop.trf.xlu0
    %v3048 = vpop.trf.xlu0
    %v3049 = vpop.trf.xlu0
    %v3050 = vpop.trf.xlu0
    %v3051 = vpop.trf.xlu0
    %v3052 = vpop.trf.xlu0
    %v3053 = vpop.trf.xlu0
    %v3054 = vpop.trf.xlu0
    %v3055 = vpop.trf.xlu0
    %v3056 = vpop.trf.xlu0
    %v3057 = vpop.trf.xlu0
    %v3058 = vpop.trf.xlu0
    %3059 = vxpose.xlu0.b32.start [1/16] %v2851, 128
    %3060 = vxpose.xlu0.b32.cont [2/16] 0.0, 128
    %3061 = vxpose.xlu0.b32.cont [3/16] 0.0, 128
    %3062 = vxpose.xlu0.b32.cont [4/16] 0.0, 128
    %3063 = vxpose.xlu0.b32.cont [5/16] 0.0, 128
    %3064 = vxpose.xlu0.b32.cont [6/16] 0.0, 128
    %3065 = vxpose.xlu0.b32.cont [7/16] 0.0, 128
    %3066 = vxpose.xlu0.b32.cont [8/16] 0.0, 128
    %3067 = vxpose.xlu0.b32.cont [9/16] 0.0, 128
    %3068 = vxpose.xlu0.b32.cont [10/16] 0.0, 128
    %3069 = vxpose.xlu0.b32.cont [11/16] 0.0, 128
    %3070 = vxpose.xlu0.b32.cont [12/16] 0.0, 128
    %3071 = vxpose.xlu0.b32.cont [13/16] 0.0, 128
    %3072 = vxpose.xlu0.b32.cont [14/16] 0.0, 128
    %3073 = vxpose.xlu0.b32.cont [15/16] 0.0, 128
    %3074 = vxpose.xlu0.b32.end [16/16] 0.0, 128
    %v3075 = vpop.trf.xlu0
    %v3076 = vpop.trf.xlu0
    %v3077 = vpop.trf.xlu0
    %v3078 = vpop.trf.xlu0
    %v3079 = vpop.trf.xlu0
    %v3080 = vpop.trf.xlu0
    %v3081 = vpop.trf.xlu0
    %v3082 = vpop.trf.xlu0
    %v3083 = vpop.trf.xlu0
    %v3084 = vpop.trf.xlu0
    %v3085 = vpop.trf.xlu0
    %v3086 = vpop.trf.xlu0
    %v3087 = vpop.trf.xlu0
    %v3088 = vpop.trf.xlu0
    %v3089 = vpop.trf.xlu0
    %v3090 = vpop.trf.xlu0
    %3091 = vxpose.xlu0.b32.start [1/16] %v2877, 128
    %3092 = vxpose.xlu0.b32.cont [2/16] 0.0, 128
    %3093 = vxpose.xlu0.b32.cont [3/16] 0.0, 128
    %3094 = vxpose.xlu0.b32.cont [4/16] 0.0, 128
    %3095 = vxpose.xlu0.b32.cont [5/16] 0.0, 128
    %3096 = vxpose.xlu0.b32.cont [6/16] 0.0, 128
    %3097 = vxpose.xlu0.b32.cont [7/16] 0.0, 128
    %3098 = vxpose.xlu0.b32.cont [8/16] 0.0, 128
    %3099 = vxpose.xlu0.b32.cont [9/16] 0.0, 128
    %3100 = vxpose.xlu0.b32.cont [10/16] 0.0, 128
    %3101 = vxpose.xlu0.b32.cont [11/16] 0.0, 128
    %3102 = vxpose.xlu0.b32.cont [12/16] 0.0, 128
    %3103 = vxpose.xlu0.b32.cont [13/16] 0.0, 128
    %3104 = vxpose.xlu0.b32.cont [14/16] 0.0, 128
    %3105 = vxpose.xlu0.b32.cont [15/16] 0.0, 128
    %3106 = vxpose.xlu0.b32.end [16/16] 0.0, 128
    %v3107 = vpop.trf.xlu0
    %v3108 = vpop.trf.xlu0
    %v3109 = vpop.trf.xlu0
    %v3110 = vpop.trf.xlu0
    %v3111 = vpop.trf.xlu0
    %v3112 = vpop.trf.xlu0
    %v3113 = vpop.trf.xlu0
    %v3114 = vpop.trf.xlu0
    %v3115 = vpop.trf.xlu0
    %v3116 = vpop.trf.xlu0
    %v3117 = vpop.trf.xlu0
    %v3118 = vpop.trf.xlu0
    %v3119 = vpop.trf.xlu0
    %v3120 = vpop.trf.xlu0
    %v3121 = vpop.trf.xlu0
    %v3122 = vpop.trf.xlu0
    %3123 = vxpose.xlu0.b32.start [1/16] %v2903, 128
    %3124 = vxpose.xlu0.b32.cont [2/16] 0.0, 128
    %3125 = vxpose.xlu0.b32.cont [3/16] 0.0, 128
    %3126 = vxpose.xlu0.b32.cont [4/16] 0.0, 128
    %3127 = vxpose.xlu0.b32.cont [5/16] 0.0, 128
    %3128 = vxpose.xlu0.b32.cont [6/16] 0.0, 128
    %3129 = vxpose.xlu0.b32.cont [7/16] 0.0, 128
    %3130 = vxpose.xlu0.b32.cont [8/16] 0.0, 128
    %3131 = vxpose.xlu0.b32.cont [9/16] 0.0, 128
    %3132 = vxpose.xlu0.b32.cont [10/16] 0.0, 128
    %3133 = vxpose.xlu0.b32.cont [11/16] 0.0, 128
    %3134 = vxpose.xlu0.b32.cont [12/16] 0.0, 128
    %3135 = vxpose.xlu0.b32.cont [13/16] 0.0, 128
    %3136 = vxpose.xlu0.b32.cont [14/16] 0.0, 128
    %3137 = vxpose.xlu0.b32.cont [15/16] 0.0, 128
    %3138 = vxpose.xlu0.b32.end [16/16] 0.0, 128
    %v3139 = vpop.trf.xlu0
    %v3140 = vpop.trf.xlu0
    %v3141 = vpop.trf.xlu0
    %v3142 = vpop.trf.xlu0
    %v3143 = vpop.trf.xlu0
    %v3144 = vpop.trf.xlu0
    %v3145 = vpop.trf.xlu0
    %v3146 = vpop.trf.xlu0
    %v3147 = vpop.trf.xlu0
    %v3148 = vpop.trf.xlu0
    %v3149 = vpop.trf.xlu0
    %v3150 = vpop.trf.xlu0
    %v3151 = vpop.trf.xlu0
    %v3152 = vpop.trf.xlu0
    %v3153 = vpop.trf.xlu0
    %v3154 = vpop.trf.xlu0
    %3155 = vxpose.xlu0.b32.start [1/16] %v2929, 128
    %3156 = vxpose.xlu0.b32.cont [2/16] 0.0, 128
    %3157 = vxpose.xlu0.b32.cont [3/16] 0.0, 128
    %3158 = vxpose.xlu0.b32.cont [4/16] 0.0, 128
    %3159 = vxpose.xlu0.b32.cont [5/16] 0.0, 128
    %3160 = vxpose.xlu0.b32.cont [6/16] 0.0, 128
    %3161 = vxpose.xlu0.b32.cont [7/16] 0.0, 128
    %3162 = vxpose.xlu0.b32.cont [8/16] 0.0, 128
    %3163 = vxpose.xlu0.b32.cont [9/16] 0.0, 128
    %3164 = vxpose.xlu0.b32.cont [10/16] 0.0, 128
    %3165 = vxpose.xlu0.b32.cont [11/16] 0.0, 128
    %3166 = vxpose.xlu0.b32.cont [12/16] 0.0, 128
    %3167 = vxpose.xlu0.b32.cont [13/16] 0.0, 128
    %3168 = vxpose.xlu0.b32.cont [14/16] 0.0, 128
    %3169 = vxpose.xlu0.b32.cont [15/16] 0.0, 128
    %3170 = vxpose.xlu0.b32.end [16/16] 0.0, 128
    %v3171 = vpop.trf.xlu0
    %v3172 = vpop.trf.xlu0
    %v3173 = vpop.trf.xlu0
    %v3174 = vpop.trf.xlu0
    %v3175 = vpop.trf.xlu0
    %v3176 = vpop.trf.xlu0
    %v3177 = vpop.trf.xlu0
    %v3178 = vpop.trf.xlu0
    %v3179 = vpop.trf.xlu0
    %v3180 = vpop.trf.xlu0
    %v3181 = vpop.trf.xlu0
    %v3182 = vpop.trf.xlu0
    %v3183 = vpop.trf.xlu0
    %v3184 = vpop.trf.xlu0
    %v3185 = vpop.trf.xlu0
    %v3186 = vpop.trf.xlu0
    %3187 = vxpose.xlu0.b32.start [1/16] %v2947, 128
    %3188 = vxpose.xlu0.b32.cont [2/16] %v2979, 128
    %3189 = vxpose.xlu0.b32.cont [3/16] %v3011, 128
    %3190 = vxpose.xlu0.b32.cont [4/16] %v3043, 128
    %3191 = vxpose.xlu0.b32.cont [5/16] 0.0, 128
    %3192 = vxpose.xlu0.b32.cont [6/16] 0.0, 128
    %3193 = vxpose.xlu0.b32.cont [7/16] 0.0, 128
    %3194 = vxpose.xlu0.b32.cont [8/16] 0.0, 128
    %3195 = vxpose.xlu0.b32.cont [9/16] 0.0, 128
    %3196 = vxpose.xlu0.b32.cont [10/16] 0.0, 128
    %3197 = vxpose.xlu0.b32.cont [11/16] 0.0, 128
    %3198 = vxpose.xlu0.b32.cont [12/16] 0.0, 128
    %3199 = vxpose.xlu0.b32.cont [13/16] 0.0, 128
    %3200 = vxpose.xlu0.b32.cont [14/16] 0.0, 128
    %3201 = vxpose.xlu0.b32.cont [15/16] 0.0, 128
    %3202 = vxpose.xlu0.b32.end [16/16] 0.0, 128
    %v3203 = vpop.trf.xlu0
    %v3204 = vpop.trf.xlu0
    %v3205 = vpop.trf.xlu0
    %v3206 = vpop.trf.xlu0
    %v3207 = vpop.trf.xlu0
    %v3208 = vpop.trf.xlu0
    %v3209 = vpop.trf.xlu0
    %v3210 = vpop.trf.xlu0
    %v3211 = vpop.trf.xlu0
    %v3212 = vpop.trf.xlu0
    %v3213 = vpop.trf.xlu0
    %v3214 = vpop.trf.xlu0
    %v3215 = vpop.trf.xlu0
    %v3216 = vpop.trf.xlu0
    %v3217 = vpop.trf.xlu0
    %v3218 = vpop.trf.xlu0
    %3219 = vxpose.xlu0.b32.start [1/16] %v3075, 128
    %3220 = vxpose.xlu0.b32.cont [2/16] %v3107, 128
    %3221 = vxpose.xlu0.b32.cont [3/16] %v3139, 128
    %3222 = vxpose.xlu0.b32.cont [4/16] %v3171, 128
    %3223 = vxpose.xlu0.b32.cont [5/16] 0.0, 128
    %3224 = vxpose.xlu0.b32.cont [6/16] 0.0, 128
    %3225 = vxpose.xlu0.b32.cont [7/16] 0.0, 128
    %3226 = vxpose.xlu0.b32.cont [8/16] 0.0, 128
    %3227 = vxpose.xlu0.b32.cont [9/16] 0.0, 128
    %3228 = vxpose.xlu0.b32.cont [10/16] 0.0, 128
    %3229 = vxpose.xlu0.b32.cont [11/16] 0.0, 128
    %3230 = vxpose.xlu0.b32.cont [12/16] 0.0, 128
    %3231 = vxpose.xlu0.b32.cont [13/16] 0.0, 128
    %3232 = vxpose.xlu0.b32.cont [14/16] 0.0, 128
    %3233 = vxpose.xlu0.b32.cont [15/16] 0.0, 128
    %3234 = vxpose.xlu0.b32.end [16/16] 0.0, 128
    %v3235 = vpop.trf.xlu0
    %v3236 = vpop.trf.xlu0
    %v3237 = vpop.trf.xlu0
    %v3238 = vpop.trf.xlu0
    %v3239 = vpop.trf.xlu0
    %v3240 = vpop.trf.xlu0
    %v3241 = vpop.trf.xlu0
    %v3242 = vpop.trf.xlu0
    %v3243 = vpop.trf.xlu0
    %v3244 = vpop.trf.xlu0
    %v3245 = vpop.trf.xlu0
    %v3246 = vpop.trf.xlu0
    %v3247 = vpop.trf.xlu0
    %v3248 = vpop.trf.xlu0
    %v3249 = vpop.trf.xlu0
    %v3250 = vpop.trf.xlu0
    %v3251 = vperm.slane %v190, 3
    %v3253 = vsel %vm203, %v3203, 0
    %v3256 = vsel %vm203, %v3235, 0
    %3258 = vmatpush.msra.mxu0 0.0
    %3259 = vmatpush.msra.mxu0 0.0
    %3260 = vmatpush.msra.mxu0 0.0
    %3261 = vmatpush.msra.mxu0 0.0
    %3262 = vmatpush.msra.mxu0 0.0
    %3263 = vmatpush.msra.mxu0 0.0
    %3264 = vmatpush.msra.mxu0 0.0
    %3265 = vmatpush.msra.mxu0 0.0
    %3266 = vmatpush.msra.mxu0 0.0
    %3267 = vmatpush.msra.mxu0 0.0
    %3268 = vmatpush.msra.mxu0 0.0
    %3269 = vmatpush.msra.mxu0 0.0
    %3270 = vmatpush.msra.mxu0 %v189
    %3271 = vmatpush.msra.mxu0 %v188
    %3272 = vmatpush.msra.mxu0 %v187
    %3273 = vmatpush.msra.mxu0 %v186
    %3274 = vmatmul.f32.gmra.mxu0 %v3253
    %v3275 = vpop.f32.mrf.mxu0
    %v3276 = vadd.f32 %v3251, %v3275
    %3277 = vmatmul.f32.gmra.mxu0 %v3256
    %v3278 = vpop.f32.mrf.mxu0
    %v3279 = vadd.f32 %v3251, %v3278
    %3280 = vdwg.mxu0
    %v3281 = vadd.f32 %v1698, %v3276
    %v3282 = vadd.f32 %v1699, %v3279
    %v3283 = vsel %vm203, %v3281, 0.0
    %3284 = vadd.xlane.f32.xlu0 %v3283
    %v3285 = vpop.xlane.xlu0 %3284
    %v3286 = vsel %vm203, %v3282, 0.0
    %3287 = vadd.xlane.f32.xlu0 %v3286
    %v3288 = vpop.xlane.xlu0 %3287
    %v3289 = vmul.f32 %v3285, %v199
    %v3290 = vmul.f32 %v3288, %v199
    %v3291 = vsub.f32 %v3281, %v3289
    %v3292 = vsub.f32 %v3282, %v3290
    %v3293 = vmul.f32 %v3291, %v3291
    %v3294 = vmul.f32 %v3292, %v3292
    %v3295 = vsel %vm203, %v3293, 0.0
    %3296 = vadd.xlane.f32.xlu0 %v3295
    %v3297 = vpop.xlane.xlu0 %3296
    %v3298 = vsel %vm203, %v3294, 0.0
    %3299 = vadd.xlane.f32.xlu0 %v3298
    %v3300 = vpop.xlane.xlu0 %3299
    %v3301 = vmul.f32 %v3297, %v199
    %v3302 = vmul.f32 %v3300, %v199
    %v3303 = vadd.f32 %v3301, 1e-05
    %v3304 = vadd.f32 %v3302, 1e-05
    %v3305 = vrsqrt.pop %v3303
    %v3306 = vmul.f32 %v3305, %v3303
    %v3307 = vmul.f32 %v3306, %v3305
    %v3308 = vmul.f32 0.5, %v3307
    %v3309 = vsub.f32 1.5, %v3308
    %v3310 = vmul.f32 %v3305, %v3309
    %vm3311 = vweird.f32 %v3303
    %vm3312 = vweird.f32 %v3305
    %vm3313 = vmor %vm3311, %vm3312
    %v3314 = vsel %vm3313, %v3305, %v3310
    %v3315 = vrsqrt.pop %v3304
    %v3316 = vmul.f32 %v3315, %v3304
    %v3317 = vmul.f32 %v3316, %v3315
    %v3318 = vmul.f32 0.5, %v3317
    %v3319 = vsub.f32 1.5, %v3318
    %v3320 = vmul.f32 %v3315, %v3319
    %vm3321 = vweird.f32 %v3304
    %vm3322 = vweird.f32 %v3315
    %vm3323 = vmor %vm3321, %vm3322
    %v3324 = vsel %vm3323, %v3315, %v3320
    %v3325 = vmul.f32 %v3291, %v3314
    %v3326 = vmul.f32 %v3292, %v3324
    %v3327 = vperm.slane %v156, 4
    %v3328 = vmul.f32 %v3325, %v3327
    %v3329 = vmul.f32 %v3326, %v3327
    %v3330 = vperm.slane %v156, 5
    %v3331 = vadd.f32 %v3328, %v3330
    %v3332 = vadd.f32 %v3329, %v3330
    %v3333 = vld [vmem:[%s10] sm:$0xff]
    %v3334 = vld [vmem:[%s10 + $0x8] sm:$0xff]
    %v3335 = vld [vmem:[%s10 + $0x10] sm:$0xff]
    %v3336 = vld [vmem:[%s10 + $0x18] sm:$0xff]
    %v3337 = vld [vmem:[#allocation9] sm:$0x1]
    %v3338 = vperm.slane %v3337, 0
    %v3340 = vsel %vm203, %v3331, 0
    %v3343 = vsel %vm203, %v3332, 0
    %3345 = vmatpush.msra.mxu0 0.0
    %3346 = vmatpush.msra.mxu0 0.0
    %3347 = vmatpush.msra.mxu0 0.0
    %3348 = vmatpush.msra.mxu0 0.0
    %3349 = vmatpush.msra.mxu0 0.0
    %3350 = vmatpush.msra.mxu0 0.0
    %3351 = vmatpush.msra.mxu0 0.0
    %3352 = vmatpush.msra.mxu0 0.0
    %3353 = vmatpush.msra.mxu0 0.0
    %3354 = vmatpush.msra.mxu0 0.0
    %3355 = vmatpush.msra.mxu0 0.0
    %3356 = vmatpush.msra.mxu0 0.0
    %3357 = vmatpush.msra.mxu0 %v3336
    %3358 = vmatpush.msra.mxu0 %v3335
    %3359 = vmatpush.msra.mxu0 %v3334
    %3360 = vmatpush.msra.mxu0 %v3333
    %3361 = vmatmul.f32.gmra.mxu0 %v3340
    %v3362 = vpop.f32.mrf.mxu0
    %v3363 = vadd.f32 %v3338, %v3362
    %3364 = vmatmul.f32.gmra.mxu0 %v3343
    %v3365 = vpop.f32.mrf.mxu0
    %v3366 = vadd.f32 %v3338, %v3365
    %3367 = vdwg.mxu0
    %v3368 = vmul.f32 %v3363, %v3363
    %v3369 = vmul.f32 %v3366, %v3366
    %v3370 = vmul.f32 %v3363, %v3368
    %v3371 = vmul.f32 %v3366, %v3369
    %v3372 = vmul.f32 %v3370, 0.044715
    %v3373 = vmul.f32 %v3371, 0.044715
    %v3374 = vadd.f32 %v3363, %v3372
    %v3375 = vadd.f32 %v3366, %v3373
    %v3376 = vmul.f32 %v3374, 0.7978846
    %v3377 = vmul.f32 %v3375, 0.7978846
    %v3378 = vtanh.pop %v3376
    %v3379 = vtanh.pop %v3377
    %v3380 = vadd.f32 %v3378, 1.0
    %v3381 = vadd.f32 %v3379, 1.0
    %v3382 = vmul.f32 %v3380, 0.5
    %v3383 = vmul.f32 %v3381, 0.5
    %v3384 = vmul.f32 %v3363, %v3382
    %v3385 = vmul.f32 %v3366, %v3383
    %v3386 = vld [vmem:[%s12] sm:$0xff]
    %v3387 = vld [vmem:[%s12 + $0x8] sm:$0xff]
    %v3388 = vld [vmem:[%s12 + $0x10] sm:$0xff]
    %v3389 = vld [vmem:[%s12 + $0x18] sm:$0xff]
    %v3390 = vld [vmem:[%s12 + $0x20] sm:$0xff]
    %v3391 = vld [vmem:[%s12 + $0x28] sm:$0xff]
    %v3392 = vld [vmem:[%s12 + $0x30] sm:$0xff]
    %v3393 = vld [vmem:[%s12 + $0x38] sm:$0xff]
    %v3394 = vld [vmem:[%s12 + $0x40] sm:$0xff]
    %v3395 = vld [vmem:[%s12 + $0x48] sm:$0xff]
    %v3396 = vld [vmem:[%s12 + $0x50] sm:$0xff]
    %v3397 = vld [vmem:[%s12 + $0x58] sm:$0xff]
    %v3398 = vld [vmem:[%s12 + $0x60] sm:$0xff]
    %v3399 = vld [vmem:[%s12 + $0x68] sm:$0xff]
    %v3400 = vld [vmem:[%s12 + $0x70] sm:$0xff]
    %v3401 = vld [vmem:[%s12 + $0x78] sm:$0xff]
    %v3402 = vld [vmem:[#allocation10] sm:$0x1]
    %v3403 = vperm.slane %v3402, 0
    %3404 = vmatpush.msra.mxu0 %v3401
    %3405 = vmatpush.msra.mxu0 %v3400
    %3406 = vmatpush.msra.mxu0 %v3399
    %3407 = vmatpush.msra.mxu0 %v3398
    %3408 = vmatpush.msra.mxu0 %v3397
    %3409 = vmatpush.msra.mxu0 %v3396
    %3410 = vmatpush.msra.mxu0 %v3395
    %3411 = vmatpush.msra.mxu0 %v3394
    %3412 = vmatpush.msra.mxu0 %v3393
    %3413 = vmatpush.msra.mxu0 %v3392
    %3414 = vmatpush.msra.mxu0 %v3391
    %3415 = vmatpush.msra.mxu0 %v3390
    %3416 = vmatpush.msra.mxu0 %v3389
    %3417 = vmatpush.msra.mxu0 %v3388
    %3418 = vmatpush.msra.mxu0 %v3387
    %3419 = vmatpush.msra.mxu0 %v3386
    %3420 = vmatmul.f32.gmra.mxu0 %v3384
    %v3421 = vpop.f32.mrf.mxu0
    %v3422 = vadd.f32 %v3403, %v3421
    %3423 = vmatmul.f32.gmra.mxu0 %v3385
    %v3424 = vpop.f32.mrf.mxu0
    %v3425 = vadd.f32 %v3403, %v3424
    %3426 = vdwg.mxu0
    %v3427 = vadd.f32 %v3281, %v3422
    %v3428 = vadd.f32 %v3282, %v3425
    %v3429 = vsel %vm203, %v3427, 0.0
    %3430 = vadd.xlane.f32.xlu0 %v3429
    %v3431 = vpop.xlane.xlu0 %3430
    %v3432 = vsel %vm203, %v3428, 0.0
    %3433 = vadd.xlane.f32.xlu0 %v3432
    %v3434 = vpop.xlane.xlu0 %3433
    %v3435 = vmul.f32 %v3431, %v199
    %v3436 = vmul.f32 %v3434, %v199
    %v3437 = vsub.f32 %v3427, %v3435
    %v3438 = vsub.f32 %v3428, %v3436
    %v3439 = vmul.f32 %v3437, %v3437
    %v3440 = vmul.f32 %v3438, %v3438
    %v3441 = vsel %vm203, %v3439, 0.0
    %3442 = vadd.xlane.f32.xlu0 %v3441
    %v3443 = vpop.xlane.xlu0 %3442
    %v3444 = vsel %vm203, %v3440, 0.0
    %3445 = vadd.xlane.f32.xlu0 %v3444
    %v3446 = vpop.xlane.xlu0 %3445
    %v3447 = vmul.f32 %v3443, %v199
    %v3448 = vmul.f32 %v3446, %v199
    %v3449 = vadd.f32 %v3447, 1e-05
    %v3450 = vadd.f32 %v3448, 1e-05
    %v3451 = vrsqrt.pop %v3449
    %v3452 = vmul.f32 %v3451, %v3449
    %v3453 = vmul.f32 %v3452, %v3451
    %v3454 = vmul.f32 0.5, %v3453
    %v3455 = vsub.f32 1.5, %v3454
    %v3456 = vmul.f32 %v3451, %v3455
    %vm3457 = vweird.f32 %v3449
    %vm3458 = vweird.f32 %v3451
    %vm3459 = vmor %vm3457, %vm3458
    %v3460 = vsel %vm3459, %v3451, %v3456
    %v3461 = vrsqrt.pop %v3450
    %v3462 = vmul.f32 %v3461, %v3450
    %v3463 = vmul.f32 %v3462, %v3461
    %v3464 = vmul.f32 0.5, %v3463
    %v3465 = vsub.f32 1.5, %v3464
    %v3466 = vmul.f32 %v3461, %v3465
    %vm3467 = vweird.f32 %v3450
    %vm3468 = vweird.f32 %v3461
    %vm3469 = vmor %vm3467, %vm3468
    %v3470 = vsel %vm3469, %v3461, %v3466
    %v3471 = vmul.f32 %v3437, %v3460
    %v3472 = vmul.f32 %v3438, %v3470
    %v3473 = vperm.slane %v154, 0
    %v3474 = vmul.f32 %v3471, %v3473
    %v3475 = vmul.f32 %v3472, %v3473
    %v3476 = vperm.slane %v155, 0
    %v3477 = vadd.f32 %v3474, %v3476
    %v3478 = vadd.f32 %v3475, %v3476
    %3479 = vst.msk [vmem:[%s14] sm:$0xff] %vm203, %v3477
    %3480 = vst.msk [vmem:[%s14 + $0x8] sm:$0xff] %vm203, %v3478
    %s3481 = scalar_lea.vmem %s4, 8
    %v3482 = vld [vmem:[%s3481] sm:$0x3f]
    %s3483 = scalar_lea.vmem %s6, 128
    %v3484 = vld [vmem:[%s3483] sm:$0xff]
    %v3485 = vld [vmem:[%s3483 + $0x8] sm:$0xff]
    %v3486 = vld [vmem:[%s3483 + $0x10] sm:$0xff]
    %v3487 = vld [vmem:[%s3483 + $0x18] sm:$0xff]
    %v3488 = vld [vmem:[%s3483 + $0x20] sm:$0xff]
    %v3489 = vld [vmem:[%s3483 + $0x28] sm:$0xff]
    %v3490 = vld [vmem:[%s3483 + $0x30] sm:$0xff]
    %v3491 = vld [vmem:[%s3483 + $0x38] sm:$0xff]
    %v3492 = vld [vmem:[%s3483 + $0x40] sm:$0xff]
    %v3493 = vld [vmem:[%s3483 + $0x48] sm:$0xff]
    %v3494 = vld [vmem:[%s3483 + $0x50] sm:$0xff]
    %v3495 = vld [vmem:[%s3483 + $0x58] sm:$0xff]
    %v3496 = vld [vmem:[%s3483 + $0x60] sm:$0xff]
    %v3497 = vld [vmem:[%s3483 + $0x68] sm:$0xff]
    %v3498 = vld [vmem:[%s3483 + $0x70] sm:$0xff]
    %v3499 = vld [vmem:[%s3483 + $0x78] sm:$0xff]
    %s3500 = scalar_lea.vmem %s7, 4
    %v3501 = vld [vmem:[%s3500] sm:$0xf]
    %s3502 = scalar_lea.vmem [#allocation6], 128
    %v3503 = vld [vmem:[%s3502] sm:$0xff]
    %v3504 = vld [vmem:[%s3502 + $0x8] sm:$0xff]
    %v3505 = vld [vmem:[%s3502 + $0x10] sm:$0xff]
    %v3506 = vld [vmem:[%s3502 + $0x18] sm:$0xff]
    %v3507 = vld [vmem:[%s3502 + $0x20] sm:$0xff]
    %v3508 = vld [vmem:[%s3502 + $0x28] sm:$0xff]
    %v3509 = vld [vmem:[%s3502 + $0x30] sm:$0xff]
    %v3510 = vld [vmem:[%s3502 + $0x38] sm:$0xff]
    %v3511 = vld [vmem:[%s3502 + $0x40] sm:$0xff]
    %v3512 = vld [vmem:[%s3502 + $0x48] sm:$0xff]
    %v3513 = vld [vmem:[%s3502 + $0x50] sm:$0xff]
    %v3514 = vld [vmem:[%s3502 + $0x58] sm:$0xff]
    %v3515 = vld [vmem:[%s3502 + $0x60] sm:$0xff]
    %v3516 = vld [vmem:[%s3502 + $0x68] sm:$0xff]
    %v3517 = vld [vmem:[%s3502 + $0x70] sm:$0xff]
    %v3518 = vld [vmem:[%s3502 + $0x78] sm:$0xff]
    %s3519 = scalar_lea.vmem [#allocation7], 4
    %v3520 = vld [vmem:[%s3519] sm:$0xf]
    %v3521 = vperm.slane %v3482, 0
    %v3522 = vmul.f32 %v3471, %v3521
    %v3523 = vmul.f32 %v3472, %v3521
    %v3524 = vperm.slane %v3482, 1
    %v3525 = vadd.f32 %v3522, %v3524
    %v3526 = vadd.f32 %v3523, %v3524
    %v3527 = vadd.f32 %v3525, %v135
    %v3528 = vadd.f32 %v3526, %v136
    %v3529 = vperm.slane %v3501, 0
    %v3531 = vsel %vm203, %v3527, 0
    %v3534 = vsel %vm203, %v3528, 0
    %3536 = vmatpush.msra.mxu0 0.0
    %3537 = vmatpush.msra.mxu0 0.0
    %3538 = vmatpush.msra.mxu0 0.0
    %3539 = vmatpush.msra.mxu0 0.0
    %3540 = vmatpush.msra.mxu0 0.0
    %3541 = vmatpush.msra.mxu0 0.0
    %3542 = vmatpush.msra.mxu0 0.0
    %3543 = vmatpush.msra.mxu0 0.0
    %3544 = vmatpush.msra.mxu0 0.0
    %3545 = vmatpush.msra.mxu0 0.0
    %3546 = vmatpush.msra.mxu0 0.0
    %3547 = vmatpush.msra.mxu0 0.0
    %3548 = vmatpush.msra.mxu0 %v3487
    %3549 = vmatpush.msra.mxu0 %v3486
    %3550 = vmatpush.msra.mxu0 %v3485
    %3551 = vmatpush.msra.mxu0 %v3484
    %3552 = vmatmul.f32.gmra.mxu0 %v3531
    %v3553 = vpop.f32.mrf.mxu0
    %v3554 = vadd.f32 %v3529, %v3553
    %3555 = vmatmul.f32.gmra.mxu0 %v3534
    %v3556 = vpop.f32.mrf.mxu0
    %v3557 = vadd.f32 %v3529, %v3556
    %3558 = vdwg.mxu0
    %v3559 = vperm.slane %v3501, 1
    %3560 = vmatpush.msra.mxu0 0.0
    %3561 = vmatpush.msra.mxu0 0.0
    %3562 = vmatpush.msra.mxu0 0.0
    %3563 = vmatpush.msra.mxu0 0.0
    %3564 = vmatpush.msra.mxu0 0.0
    %3565 = vmatpush.msra.mxu0 0.0
    %3566 = vmatpush.msra.mxu0 0.0
    %3567 = vmatpush.msra.mxu0 0.0
    %3568 = vmatpush.msra.mxu0 0.0
    %3569 = vmatpush.msra.mxu0 0.0
    %3570 = vmatpush.msra.mxu0 0.0
    %3571 = vmatpush.msra.mxu0 0.0
    %3572 = vmatpush.msra.mxu0 %v3491
    %3573 = vmatpush.msra.mxu0 %v3490
    %3574 = vmatpush.msra.mxu0 %v3489
    %3575 = vmatpush.msra.mxu0 %v3488
    %3576 = vmatmul.f32.gmra.mxu0 %v3531
    %v3577 = vpop.f32.mrf.mxu0
    %v3578 = vadd.f32 %v3559, %v3577
    %3579 = vmatmul.f32.gmra.mxu0 %v3534
    %v3580 = vpop.f32.mrf.mxu0
    %v3581 = vadd.f32 %v3559, %v3580
    %3582 = vdwg.mxu0
    %v3583 = vperm.slane %v3501, 2
    %v3585 = vsel %vm203, %v3525, 0
    %v3588 = vsel %vm203, %v3526, 0
    %3590 = vmatpush.msra.mxu0 0.0
    %3591 = vmatpush.msra.mxu0 0.0
    %3592 = vmatpush.msra.mxu0 0.0
    %3593 = vmatpush.msra.mxu0 0.0
    %3594 = vmatpush.msra.mxu0 0.0
    %3595 = vmatpush.msra.mxu0 0.0
    %3596 = vmatpush.msra.mxu0 0.0
    %3597 = vmatpush.msra.mxu0 0.0
    %3598 = vmatpush.msra.mxu0 0.0
    %3599 = vmatpush.msra.mxu0 0.0
    %3600 = vmatpush.msra.mxu0 0.0
    %3601 = vmatpush.msra.mxu0 0.0
    %3602 = vmatpush.msra.mxu0 %v3495
    %3603 = vmatpush.msra.mxu0 %v3494
    %3604 = vmatpush.msra.mxu0 %v3493
    %3605 = vmatpush.msra.mxu0 %v3492
    %3606 = vmatmul.f32.gmra.mxu0 %v3585
    %v3607 = vpop.f32.mrf.mxu0
    %v3608 = vadd.f32 %v3583, %v3607
    %3609 = vmatmul.f32.gmra.mxu0 %v3588
    %v3610 = vpop.f32.mrf.mxu0
    %v3611 = vadd.f32 %v3583, %v3610
    %3612 = vdwg.mxu0
    %3613 = vxpose.xlu0.b32.start [1/16] %v3554, 128
    %3614 = vxpose.xlu0.b32.cont [2/16] 0.0, 128
    %3615 = vxpose.xlu0.b32.cont [3/16] 0.0, 128
    %3616 = vxpose.xlu0.b32.cont [4/16] 0.0, 128
    %3617 = vxpose.xlu0.b32.cont [5/16] 0.0, 128
    %3618 = vxpose.xlu0.b32.cont [6/16] 0.0, 128
    %3619 = vxpose.xlu0.b32.cont [7/16] 0.0, 128
    %3620 = vxpose.xlu0.b32.cont [8/16] 0.0, 128
    %3621 = vxpose.xlu0.b32.cont [9/16] 0.0, 128
    %3622 = vxpose.xlu0.b32.cont [10/16] 0.0, 128
    %3623 = vxpose.xlu0.b32.cont [11/16] 0.0, 128
    %3624 = vxpose.xlu0.b32.cont [12/16] 0.0, 128
    %3625 = vxpose.xlu0.b32.cont [13/16] 0.0, 128
    %3626 = vxpose.xlu0.b32.cont [14/16] 0.0, 128
    %3627 = vxpose.xlu0.b32.cont [15/16] 0.0, 128
    %3628 = vxpose.xlu0.b32.end [16/16] 0.0, 128
    %v3629 = vpop.trf.xlu0
    %v3630 = vpop.trf.xlu0
    %v3631 = vpop.trf.xlu0
    %v3632 = vpop.trf.xlu0
    %v3633 = vpop.trf.xlu0
    %v3634 = vpop.trf.xlu0
    %v3635 = vpop.trf.xlu0
    %v3636 = vpop.trf.xlu0
    %v3637 = vpop.trf.xlu0
    %v3638 = vpop.trf.xlu0
    %v3639 = vpop.trf.xlu0
    %v3640 = vpop.trf.xlu0
    %v3641 = vpop.trf.xlu0
    %v3642 = vpop.trf.xlu0
    %v3643 = vpop.trf.xlu0
    %v3644 = vpop.trf.xlu0
    %3645 = vxpose.xlu0.b32.start [1/16] %v3557, 128
    %3646 = vxpose.xlu0.b32.cont [2/16] 0.0, 128
    %3647 = vxpose.xlu0.b32.cont [3/16] 0.0, 128
    %3648 = vxpose.xlu0.b32.cont [4/16] 0.0, 128
    %3649 = vxpose.xlu0.b32.cont [5/16] 0.0, 128
    %3650 = vxpose.xlu0.b32.cont [6/16] 0.0, 128
    %3651 = vxpose.xlu0.b32.cont [7/16] 0.0, 128
    %3652 = vxpose.xlu0.b32.cont [8/16] 0.0, 128
    %3653 = vxpose.xlu0.b32.cont [9/16] 0.0, 128
    %3654 = vxpose.xlu0.b32.cont [10/16] 0.0, 128
    %3655 = vxpose.xlu0.b32.cont [11/16] 0.0, 128
    %3656 = vxpose.xlu0.b32.cont [12/16] 0.0, 128
    %3657 = vxpose.xlu0.b32.cont [13/16] 0.0, 128
    %3658 = vxpose.xlu0.b32.cont [14/16] 0.0, 128
    %3659 = vxpose.xlu0.b32.cont [15/16] 0.0, 128
    %3660 = vxpose.xlu0.b32.end [16/16] 0.0, 128
    %v3661 = vpop.trf.xlu0
    %v3662 = vpop.trf.xlu0
    %v3663 = vpop.trf.xlu0
    %v3664 = vpop.trf.xlu0
    %v3665 = vpop.trf.xlu0
    %v3666 = vpop.trf.xlu0
    %v3667 = vpop.trf.xlu0
    %v3668 = vpop.trf.xlu0
    %v3669 = vpop.trf.xlu0
    %v3670 = vpop.trf.xlu0
    %v3671 = vpop.trf.xlu0
    %v3672 = vpop.trf.xlu0
    %v3673 = vpop.trf.xlu0
    %v3674 = vpop.trf.xlu0
    %v3675 = vpop.trf.xlu0
    %v3676 = vpop.trf.xlu0
    %3677 = vxpose.xlu0.b32.start [1/16] %v3629, 128
    %3678 = vxpose.xlu0.b32.cont [2/16] 0.0, 128
    %3679 = vxpose.xlu0.b32.cont [3/16] 0.0, 128
    %3680 = vxpose.xlu0.b32.cont [4/16] 0.0, 128
    %3681 = vxpose.xlu0.b32.cont [5/16] 0.0, 128
    %3682 = vxpose.xlu0.b32.cont [6/16] 0.0, 128
    %3683 = vxpose.xlu0.b32.cont [7/16] 0.0, 128
    %3684 = vxpose.xlu0.b32.cont [8/16] 0.0, 128
    %3685 = vxpose.xlu0.b32.cont [9/16] 0.0, 128
    %3686 = vxpose.xlu0.b32.cont [10/16] 0.0, 128
    %3687 = vxpose.xlu0.b32.cont [11/16] 0.0, 128
    %3688 = vxpose.xlu0.b32.cont [12/16] 0.0, 128
    %3689 = vxpose.xlu0.b32.cont [13/16] 0.0, 128
    %3690 = vxpose.xlu0.b32.cont [14/16] 0.0, 128
    %3691 = vxpose.xlu0.b32.cont [15/16] 0.0, 128
    %3692 = vxpose.xlu0.b32.end [16/16] 0.0, 128
    %v3693 = vpop.trf.xlu0
    %v3694 = vpop.trf.xlu0
    %v3695 = vpop.trf.xlu0
    %v3696 = vpop.trf.xlu0
    %v3697 = vpop.trf.xlu0
    %v3698 = vpop.trf.xlu0
    %v3699 = vpop.trf.xlu0
    %v3700 = vpop.trf.xlu0
    %v3701 = vpop.trf.xlu0
    %v3702 = vpop.trf.xlu0
    %v3703 = vpop.trf.xlu0
    %v3704 = vpop.trf.xlu0
    %v3705 = vpop.trf.xlu0
    %v3706 = vpop.trf.xlu0
    %v3707 = vpop.trf.xlu0
    %v3708 = vpop.trf.xlu0
    %3709 = vxpose.xlu0.b32.start [1/16] %v3630, 128
    %3710 = vxpose.xlu0.b32.cont [2/16] 0.0, 128
    %3711 = vxpose.xlu0.b32.cont [3/16] 0.0, 128
    %3712 = vxpose.xlu0.b32.cont [4/16] 0.0, 128
    %3713 = vxpose.xlu0.b32.cont [5/16] 0.0, 128
    %3714 = vxpose.xlu0.b32.cont [6/16] 0.0, 128
    %3715 = vxpose.xlu0.b32.cont [7/16] 0.0, 128
    %3716 = vxpose.xlu0.b32.cont [8/16] 0.0, 128
    %3717 = vxpose.xlu0.b32.cont [9/16] 0.0, 128
    %3718 = vxpose.xlu0.b32.cont [10/16] 0.0, 128
    %3719 = vxpose.xlu0.b32.cont [11/16] 0.0, 128
    %3720 = vxpose.xlu0.b32.cont [12/16] 0.0, 128
    %3721 = vxpose.xlu0.b32.cont [13/16] 0.0, 128
    %3722 = vxpose.xlu0.b32.cont [14/16] 0.0, 128
    %3723 = vxpose.xlu0.b32.cont [15/16] 0.0, 128
    %3724 = vxpose.xlu0.b32.end [16/16] 0.0, 128
    %v3725 = vpop.trf.xlu0
    %v3726 = vpop.trf.xlu0
    %v3727 = vpop.trf.xlu0
    %v3728 = vpop.trf.xlu0
    %v3729 = vpop.trf.xlu0
    %v3730 = vpop.trf.xlu0
    %v3731 = vpop.trf.xlu0
    %v3732 = vpop.trf.xlu0
    %v3733 = vpop.trf.xlu0
    %v3734 = vpop.trf.xlu0
    %v3735 = vpop.trf.xlu0
    %v3736 = vpop.trf.xlu0
    %v3737 = vpop.trf.xlu0
    %v3738 = vpop.trf.xlu0
    %v3739 = vpop.trf.xlu0
    %v3740 = vpop.trf.xlu0
    %3741 = vxpose.xlu0.b32.start [1/16] %v3631, 128
    %3742 = vxpose.xlu0.b32.cont [2/16] 0.0, 128
    %3743 = vxpose.xlu0.b32.cont [3/16] 0.0, 128
    %3744 = vxpose.xlu0.b32.cont [4/16] 0.0, 128
    %3745 = vxpose.xlu0.b32.cont [5/16] 0.0, 128
    %3746 = vxpose.xlu0.b32.cont [6/16] 0.0, 128
    %3747 = vxpose.xlu0.b32.cont [7/16] 0.0, 128
    %3748 = vxpose.xlu0.b32.cont [8/16] 0.0, 128
    %3749 = vxpose.xlu0.b32.cont [9/16] 0.0, 128
    %3750 = vxpose.xlu0.b32.cont [10/16] 0.0, 128
    %3751 = vxpose.xlu0.b32.cont [11/16] 0.0, 128
    %3752 = vxpose.xlu0.b32.cont [12/16] 0.0, 128
    %3753 = vxpose.xlu0.b32.cont [13/16] 0.0, 128
    %3754 = vxpose.xlu0.b32.cont [14/16] 0.0, 128
    %3755 = vxpose.xlu0.b32.cont [15/16] 0.0, 128
    %3756 = vxpose.xlu0.b32.end [16/16] 0.0, 128
    %v3757 = vpop.trf.xlu0
    %v3758 = vpop.trf.xlu0
    %v3759 = vpop.trf.xlu0
    %v3760 = vpop.trf.xlu0
    %v3761 = vpop.trf.xlu0
    %v3762 = vpop.trf.xlu0
    %v3763 = vpop.trf.xlu0
    %v3764 = vpop.trf.xlu0
    %v3765 = vpop.trf.xlu0
    %v3766 = vpop.trf.xlu0
    %v3767 = vpop.trf.xlu0
    %v3768 = vpop.trf.xlu0
    %v3769 = vpop.trf.xlu0
    %v3770 = vpop.trf.xlu0
    %v3771 = vpop.trf.xlu0
    %v3772 = vpop.trf.xlu0
    %3773 = vxpose.xlu0.b32.start [1/16] %v3632, 128
    %3774 = vxpose.xlu0.b32.cont [2/16] 0.0, 128
    %3775 = vxpose.xlu0.b32.cont [3/16] 0.0, 128
    %3776 = vxpose.xlu0.b32.cont [4/16] 0.0, 128
    %3777 = vxpose.xlu0.b32.cont [5/16] 0.0, 128
    %3778 = vxpose.xlu0.b32.cont [6/16] 0.0, 128
    %3779 = vxpose.xlu0.b32.cont [7/16] 0.0, 128
    %3780 = vxpose.xlu0.b32.cont [8/16] 0.0, 128
    %3781 = vxpose.xlu0.b32.cont [9/16] 0.0, 128
    %3782 = vxpose.xlu0.b32.cont [10/16] 0.0, 128
    %3783 = vxpose.xlu0.b32.cont [11/16] 0.0, 128
    %3784 = vxpose.xlu0.b32.cont [12/16] 0.0, 128
    %3785 = vxpose.xlu0.b32.cont [13/16] 0.0, 128
    %3786 = vxpose.xlu0.b32.cont [14/16] 0.0, 128
    %3787 = vxpose.xlu0.b32.cont [15/16] 0.0, 128
    %3788 = vxpose.xlu0.b32.end [16/16] 0.0, 128
    %v3789 = vpop.trf.xlu0
    %v3790 = vpop.trf.xlu0
    %v3791 = vpop.trf.xlu0
    %v3792 = vpop.trf.xlu0
    %v3793 = vpop.trf.xlu0
    %v3794 = vpop.trf.xlu0
    %v3795 = vpop.trf.xlu0
    %v3796 = vpop.trf.xlu0
    %v3797 = vpop.trf.xlu0
    %v3798 = vpop.trf.xlu0
    %v3799 = vpop.trf.xlu0
    %v3800 = vpop.trf.xlu0
    %v3801 = vpop.trf.xlu0
    %v3802 = vpop.trf.xlu0
    %v3803 = vpop.trf.xlu0
    %v3804 = vpop.trf.xlu0
    %3805 = vxpose.xlu0.b32.start [1/16] %v3661, 128
    %3806 = vxpose.xlu0.b32.cont [2/16] 0.0, 128
    %3807 = vxpose.xlu0.b32.cont [3/16] 0.0, 128
    %3808 = vxpose.xlu0.b32.cont [4/16] 0.0, 128
    %3809 = vxpose.xlu0.b32.cont [5/16] 0.0, 128
    %3810 = vxpose.xlu0.b32.cont [6/16] 0.0, 128
    %3811 = vxpose.xlu0.b32.cont [7/16] 0.0, 128
    %3812 = vxpose.xlu0.b32.cont [8/16] 0.0, 128
    %3813 = vxpose.xlu0.b32.cont [9/16] 0.0, 128
    %3814 = vxpose.xlu0.b32.cont [10/16] 0.0, 128
    %3815 = vxpose.xlu0.b32.cont [11/16] 0.0, 128
    %3816 = vxpose.xlu0.b32.cont [12/16] 0.0, 128
    %3817 = vxpose.xlu0.b32.cont [13/16] 0.0, 128
    %3818 = vxpose.xlu0.b32.cont [14/16] 0.0, 128
    %3819 = vxpose.xlu0.b32.cont [15/16] 0.0, 128
    %3820 = vxpose.xlu0.b32.end [16/16] 0.0, 128
    %v3821 = vpop.trf.xlu0
    %v3822 = vpop.trf.xlu0
    %v3823 = vpop.trf.xlu0
    %v3824 = vpop.trf.xlu0
    %v3825 = vpop.trf.xlu0
    %v3826 = vpop.trf.xlu0
    %v3827 = vpop.trf.xlu0
    %v3828 = vpop.trf.xlu0
    %v3829 = vpop.trf.xlu0
    %v3830 = vpop.trf.xlu0
    %v3831 = vpop.trf.xlu0
    %v3832 = vpop.trf.xlu0
    %v3833 = vpop.trf.xlu0
    %v3834 = vpop.trf.xlu0
    %v3835 = vpop.trf.xlu0
    %v3836 = vpop.trf.xlu0
    %3837 = vxpose.xlu0.b32.start [1/16] %v3662, 128
    %3838 = vxpose.xlu0.b32.cont [2/16] 0.0, 128
    %3839 = vxpose.xlu0.b32.cont [3/16] 0.0, 128
    %3840 = vxpose.xlu0.b32.cont [4/16] 0.0, 128
    %3841 = vxpose.xlu0.b32.cont [5/16] 0.0, 128
    %3842 = vxpose.xlu0.b32.cont [6/16] 0.0, 128
    %3843 = vxpose.xlu0.b32.cont [7/16] 0.0, 128
    %3844 = vxpose.xlu0.b32.cont [8/16] 0.0, 128
    %3845 = vxpose.xlu0.b32.cont [9/16] 0.0, 128
    %3846 = vxpose.xlu0.b32.cont [10/16] 0.0, 128
    %3847 = vxpose.xlu0.b32.cont [11/16] 0.0, 128
    %3848 = vxpose.xlu0.b32.cont [12/16] 0.0, 128
    %3849 = vxpose.xlu0.b32.cont [13/16] 0.0, 128
    %3850 = vxpose.xlu0.b32.cont [14/16] 0.0, 128
    %3851 = vxpose.xlu0.b32.cont [15/16] 0.0, 128
    %3852 = vxpose.xlu0.b32.end [16/16] 0.0, 128
    %v3853 = vpop.trf.xlu0
    %v3854 = vpop.trf.xlu0
    %v3855 = vpop.trf.xlu0
    %v3856 = vpop.trf.xlu0
    %v3857 = vpop.trf.xlu0
    %v3858 = vpop.trf.xlu0
    %v3859 = vpop.trf.xlu0
    %v3860 = vpop.trf.xlu0
    %v3861 = vpop.trf.xlu0
    %v3862 = vpop.trf.xlu0
    %v3863 = vpop.trf.xlu0
    %v3864 = vpop.trf.xlu0
    %v3865 = vpop.trf.xlu0
    %v3866 = vpop.trf.xlu0
    %v3867 = vpop.trf.xlu0
    %v3868 = vpop.trf.xlu0
    %3869 = vxpose.xlu0.b32.start [1/16] %v3663, 128
    %3870 = vxpose.xlu0.b32.cont [2/16] 0.0, 128
    %3871 = vxpose.xlu0.b32.cont [3/16] 0.0, 128
    %3872 = vxpose.xlu0.b32.cont [4/16] 0.0, 128
    %3873 = vxpose.xlu0.b32.cont [5/16] 0.0, 128
    %3874 = vxpose.xlu0.b32.cont [6/16] 0.0, 128
    %3875 = vxpose.xlu0.b32.cont [7/16] 0.0, 128
    %3876 = vxpose.xlu0.b32.cont [8/16] 0.0, 128
    %3877 = vxpose.xlu0.b32.cont [9/16] 0.0, 128
    %3878 = vxpose.xlu0.b32.cont [10/16] 0.0, 128
    %3879 = vxpose.xlu0.b32.cont [11/16] 0.0, 128
    %3880 = vxpose.xlu0.b32.cont [12/16] 0.0, 128
    %3881 = vxpose.xlu0.b32.cont [13/16] 0.0, 128
    %3882 = vxpose.xlu0.b32.cont [14/16] 0.0, 128
    %3883 = vxpose.xlu0.b32.cont [15/16] 0.0, 128
    %3884 = vxpose.xlu0.b32.end [16/16] 0.0, 128
    %v3885 = vpop.trf.xlu0
    %v3886 = vpop.trf.xlu0
    %v3887 = vpop.trf.xlu0
    %v3888 = vpop.trf.xlu0
    %v3889 = vpop.trf.xlu0
    %v3890 = vpop.trf.xlu0
    %v3891 = vpop.trf.xlu0
    %v3892 = vpop.trf.xlu0
    %v3893 = vpop.trf.xlu0
    %v3894 = vpop.trf.xlu0
    %v3895 = vpop.trf.xlu0
    %v3896 = vpop.trf.xlu0
    %v3897 = vpop.trf.xlu0
    %v3898 = vpop.trf.xlu0
    %v3899 = vpop.trf.xlu0
    %v3900 = vpop.trf.xlu0
    %3901 = vxpose.xlu0.b32.start [1/16] %v3664, 128
    %3902 = vxpose.xlu0.b32.cont [2/16] 0.0, 128
    %3903 = vxpose.xlu0.b32.cont [3/16] 0.0, 128
    %3904 = vxpose.xlu0.b32.cont [4/16] 0.0, 128
    %3905 = vxpose.xlu0.b32.cont [5/16] 0.0, 128
    %3906 = vxpose.xlu0.b32.cont [6/16] 0.0, 128
    %3907 = vxpose.xlu0.b32.cont [7/16] 0.0, 128
    %3908 = vxpose.xlu0.b32.cont [8/16] 0.0, 128
    %3909 = vxpose.xlu0.b32.cont [9/16] 0.0, 128
    %3910 = vxpose.xlu0.b32.cont [10/16] 0.0, 128
    %3911 = vxpose.xlu0.b32.cont [11/16] 0.0, 128
    %3912 = vxpose.xlu0.b32.cont [12/16] 0.0, 128
    %3913 = vxpose.xlu0.b32.cont [13/16] 0.0, 128
    %3914 = vxpose.xlu0.b32.cont [14/16] 0.0, 128
    %3915 = vxpose.xlu0.b32.cont [15/16] 0.0, 128
    %3916 = vxpose.xlu0.b32.end [16/16] 0.0, 128
    %v3917 = vpop.trf.xlu0
    %v3918 = vpop.trf.xlu0
    %v3919 = vpop.trf.xlu0
    %v3920 = vpop.trf.xlu0
    %v3921 = vpop.trf.xlu0
    %v3922 = vpop.trf.xlu0
    %v3923 = vpop.trf.xlu0
    %v3924 = vpop.trf.xlu0
    %v3925 = vpop.trf.xlu0
    %v3926 = vpop.trf.xlu0
    %v3927 = vpop.trf.xlu0
    %v3928 = vpop.trf.xlu0
    %v3929 = vpop.trf.xlu0
    %v3930 = vpop.trf.xlu0
    %v3931 = vpop.trf.xlu0
    %v3932 = vpop.trf.xlu0
    %3933 = vxpose.xlu0.b32.start [1/16] %v3578, 128
    %3934 = vxpose.xlu0.b32.cont [2/16] 0.0, 128
    %3935 = vxpose.xlu0.b32.cont [3/16] 0.0, 128
    %3936 = vxpose.xlu0.b32.cont [4/16] 0.0, 128
    %3937 = vxpose.xlu0.b32.cont [5/16] 0.0, 128
    %3938 = vxpose.xlu0.b32.cont [6/16] 0.0, 128
    %3939 = vxpose.xlu0.b32.cont [7/16] 0.0, 128
    %3940 = vxpose.xlu0.b32.cont [8/16] 0.0, 128
    %3941 = vxpose.xlu0.b32.cont [9/16] 0.0, 128
    %3942 = vxpose.xlu0.b32.cont [10/16] 0.0, 128
    %3943 = vxpose.xlu0.b32.cont [11/16] 0.0, 128
    %3944 = vxpose.xlu0.b32.cont [12/16] 0.0, 128
    %3945 = vxpose.xlu0.b32.cont [13/16] 0.0, 128
    %3946 = vxpose.xlu0.b32.cont [14/16] 0.0, 128
    %3947 = vxpose.xlu0.b32.cont [15/16] 0.0, 128
    %3948 = vxpose.xlu0.b32.end [16/16] 0.0, 128
    %v3949 = vpop.trf.xlu0
    %v3950 = vpop.trf.xlu0
    %v3951 = vpop.trf.xlu0
    %v3952 = vpop.trf.xlu0
    %v3953 = vpop.trf.xlu0
    %v3954 = vpop.trf.xlu0
    %v3955 = vpop.trf.xlu0
    %v3956 = vpop.trf.xlu0
    %v3957 = vpop.trf.xlu0
    %v3958 = vpop.trf.xlu0
    %v3959 = vpop.trf.xlu0
    %v3960 = vpop.trf.xlu0
    %v3961 = vpop.trf.xlu0
    %v3962 = vpop.trf.xlu0
    %v3963 = vpop.trf.xlu0
    %v3964 = vpop.trf.xlu0
    %3965 = vxpose.xlu0.b32.start [1/16] %v3581, 128
    %3966 = vxpose.xlu0.b32.cont [2/16] 0.0, 128
    %3967 = vxpose.xlu0.b32.cont [3/16] 0.0, 128
    %3968 = vxpose.xlu0.b32.cont [4/16] 0.0, 128
    %3969 = vxpose.xlu0.b32.cont [5/16] 0.0, 128
    %3970 = vxpose.xlu0.b32.cont [6/16] 0.0, 128
    %3971 = vxpose.xlu0.b32.cont [7/16] 0.0, 128
    %3972 = vxpose.xlu0.b32.cont [8/16] 0.0, 128
    %3973 = vxpose.xlu0.b32.cont [9/16] 0.0, 128
    %3974 = vxpose.xlu0.b32.cont [10/16] 0.0, 128
    %3975 = vxpose.xlu0.b32.cont [11/16] 0.0, 128
    %3976 = vxpose.xlu0.b32.cont [12/16] 0.0, 128
    %3977 = vxpose.xlu0.b32.cont [13/16] 0.0, 128
    %3978 = vxpose.xlu0.b32.cont [14/16] 0.0, 128
    %3979 = vxpose.xlu0.b32.cont [15/16] 0.0, 128
    %3980 = vxpose.xlu0.b32.end [16/16] 0.0, 128
    %v3981 = vpop.trf.xlu0
    %v3982 = vpop.trf.xlu0
    %v3983 = vpop.trf.xlu0
    %v3984 = vpop.trf.xlu0
    %v3985 = vpop.trf.xlu0
    %v3986 = vpop.trf.xlu0
    %v3987 = vpop.trf.xlu0
    %v3988 = vpop.trf.xlu0
    %v3989 = vpop.trf.xlu0
    %v3990 = vpop.trf.xlu0
    %v3991 = vpop.trf.xlu0
    %v3992 = vpop.trf.xlu0
    %v3993 = vpop.trf.xlu0
    %v3994 = vpop.trf.xlu0
    %v3995 = vpop.trf.xlu0
    %v3996 = vpop.trf.xlu0
    %3997 = vxpose.xlu0.b32.start [1/16] %v3608, 128
    %3998 = vxpose.xlu0.b32.cont [2/16] 0.0, 128
    %3999 = vxpose.xlu0.b32.cont [3/16] 0.0, 128
    %4000 = vxpose.xlu0.b32.cont [4/16] 0.0, 128
    %4001 = vxpose.xlu0.b32.cont [5/16] 0.0, 128
    %4002 = vxpose.xlu0.b32.cont [6/16] 0.0, 128
    %4003 = vxpose.xlu0.b32.cont [7/16] 0.0, 128
    %4004 = vxpose.xlu0.b32.cont [8/16] 0.0, 128
    %4005 = vxpose.xlu0.b32.cont [9/16] 0.0, 128
    %4006 = vxpose.xlu0.b32.cont [10/16] 0.0, 128
    %4007 = vxpose.xlu0.b32.cont [11/16] 0.0, 128
    %4008 = vxpose.xlu0.b32.cont [12/16] 0.0, 128
    %4009 = vxpose.xlu0.b32.cont [13/16] 0.0, 128
    %4010 = vxpose.xlu0.b32.cont [14/16] 0.0, 128
    %4011 = vxpose.xlu0.b32.cont [15/16] 0.0, 128
    %4012 = vxpose.xlu0.b32.end [16/16] 0.0, 128
    %v4013 = vpop.trf.xlu0
    %v4014 = vpop.trf.xlu0
    %v4015 = vpop.trf.xlu0
    %v4016 = vpop.trf.xlu0
    %v4017 = vpop.trf.xlu0
    %v4018 = vpop.trf.xlu0
    %v4019 = vpop.trf.xlu0
    %v4020 = vpop.trf.xlu0
    %v4021 = vpop.trf.xlu0
    %v4022 = vpop.trf.xlu0
    %v4023 = vpop.trf.xlu0
    %v4024 = vpop.trf.xlu0
    %v4025 = vpop.trf.xlu0
    %v4026 = vpop.trf.xlu0
    %v4027 = vpop.trf.xlu0
    %v4028 = vpop.trf.xlu0
    %4029 = vxpose.xlu0.b32.start [1/16] %v3611, 128
    %4030 = vxpose.xlu0.b32.cont [2/16] 0.0, 128
    %4031 = vxpose.xlu0.b32.cont [3/16] 0.0, 128
    %4032 = vxpose.xlu0.b32.cont [4/16] 0.0, 128
    %4033 = vxpose.xlu0.b32.cont [5/16] 0.0, 128
    %4034 = vxpose.xlu0.b32.cont [6/16] 0.0, 128
    %4035 = vxpose.xlu0.b32.cont [7/16] 0.0, 128
    %4036 = vxpose.xlu0.b32.cont [8/16] 0.0, 128
    %4037 = vxpose.xlu0.b32.cont [9/16] 0.0, 128
    %4038 = vxpose.xlu0.b32.cont [10/16] 0.0, 128
    %4039 = vxpose.xlu0.b32.cont [11/16] 0.0, 128
    %4040 = vxpose.xlu0.b32.cont [12/16] 0.0, 128
    %4041 = vxpose.xlu0.b32.cont [13/16] 0.0, 128
    %4042 = vxpose.xlu0.b32.cont [14/16] 0.0, 128
    %4043 = vxpose.xlu0.b32.cont [15/16] 0.0, 128
    %4044 = vxpose.xlu0.b32.end [16/16] 0.0, 128
    %v4045 = vpop.trf.xlu0
    %v4046 = vpop.trf.xlu0
    %v4047 = vpop.trf.xlu0
    %v4048 = vpop.trf.xlu0
    %v4049 = vpop.trf.xlu0
    %v4050 = vpop.trf.xlu0
    %v4051 = vpop.trf.xlu0
    %v4052 = vpop.trf.xlu0
    %v4053 = vpop.trf.xlu0
    %v4054 = vpop.trf.xlu0
    %v4055 = vpop.trf.xlu0
    %v4056 = vpop.trf.xlu0
    %v4057 = vpop.trf.xlu0
    %v4058 = vpop.trf.xlu0
    %v4059 = vpop.trf.xlu0
    %v4060 = vpop.trf.xlu0
    %v4062 = vsel %vm755, %v3693, 0
    %4064 = vmatpush.msra.mxu0 0.0
    %4065 = vmatpush.msra.mxu0 0.0
    %4066 = vmatpush.msra.mxu0 0.0
    %4067 = vmatpush.msra.mxu0 0.0
    %4068 = vmatpush.msra.mxu0 0.0
    %4069 = vmatpush.msra.mxu0 0.0
    %4070 = vmatpush.msra.mxu0 0.0
    %4071 = vmatpush.msra.mxu0 0.0
    %4072 = vmatpush.msra.mxu0 0.0
    %4073 = vmatpush.msra.mxu0 0.0
    %4074 = vmatpush.msra.mxu0 0.0
    %4075 = vmatpush.msra.mxu0 0.0
    %4076 = vmatpush.msra.mxu0 0.0
    %4077 = vmatpush.msra.mxu0 0.0
    %4078 = vmatpush.msra.mxu0 0.0
    %4079 = vmatpush.msra.mxu0 %v3949
    %4080 = vmatmul.f32.gmra.mxu0 %v4062
    %v4081 = vpop.f32.mrf.mxu0
    %v4082 = vadd.f32 0.0, %v4081
    %4083 = vdwg.mxu0
    %v4085 = vsel %vm755, %v3725, 0
    %4087 = vmatpush.msra.mxu0 0.0
    %4088 = vmatpush.msra.mxu0 0.0
    %4089 = vmatpush.msra.mxu0 0.0
    %4090 = vmatpush.msra.mxu0 0.0
    %4091 = vmatpush.msra.mxu0 0.0
    %4092 = vmatpush.msra.mxu0 0.0
    %4093 = vmatpush.msra.mxu0 0.0
    %4094 = vmatpush.msra.mxu0 0.0
    %4095 = vmatpush.msra.mxu0 0.0
    %4096 = vmatpush.msra.mxu0 0.0
    %4097 = vmatpush.msra.mxu0 0.0
    %4098 = vmatpush.msra.mxu0 0.0
    %4099 = vmatpush.msra.mxu0 0.0
    %4100 = vmatpush.msra.mxu0 0.0
    %4101 = vmatpush.msra.mxu0 0.0
    %4102 = vmatpush.msra.mxu0 %v3950
    %4103 = vmatmul.f32.gmra.mxu0 %v4085
    %v4104 = vpop.f32.mrf.mxu0
    %v4105 = vadd.f32 0.0, %v4104
    %4106 = vdwg.mxu0
    %v4108 = vsel %vm755, %v3757, 0
    %4110 = vmatpush.msra.mxu0 0.0
    %4111 = vmatpush.msra.mxu0 0.0
    %4112 = vmatpush.msra.mxu0 0.0
    %4113 = vmatpush.msra.mxu0 0.0
    %4114 = vmatpush.msra.mxu0 0.0
    %4115 = vmatpush.msra.mxu0 0.0
    %4116 = vmatpush.msra.mxu0 0.0
    %4117 = vmatpush.msra.mxu0 0.0
    %4118 = vmatpush.msra.mxu0 0.0
    %4119 = vmatpush.msra.mxu0 0.0
    %4120 = vmatpush.msra.mxu0 0.0
    %4121 = vmatpush.msra.mxu0 0.0
    %4122 = vmatpush.msra.mxu0 0.0
    %4123 = vmatpush.msra.mxu0 0.0
    %4124 = vmatpush.msra.mxu0 0.0
    %4125 = vmatpush.msra.mxu0 %v3951
    %4126 = vmatmul.f32.gmra.mxu0 %v4108
    %v4127 = vpop.f32.mrf.mxu0
    %v4128 = vadd.f32 0.0, %v4127
    %4129 = vdwg.mxu0
    %v4131 = vsel %vm755, %v3789, 0
    %4133 = vmatpush.msra.mxu0 0.0
    %4134 = vmatpush.msra.mxu0 0.0
    %4135 = vmatpush.msra.mxu0 0.0
    %4136 = vmatpush.msra.mxu0 0.0
    %4137 = vmatpush.msra.mxu0 0.0
    %4138 = vmatpush.msra.mxu0 0.0
    %4139 = vmatpush.msra.mxu0 0.0
    %4140 = vmatpush.msra.mxu0 0.0
    %4141 = vmatpush.msra.mxu0 0.0
    %4142 = vmatpush.msra.mxu0 0.0
    %4143 = vmatpush.msra.mxu0 0.0
    %4144 = vmatpush.msra.mxu0 0.0
    %4145 = vmatpush.msra.mxu0 0.0
    %4146 = vmatpush.msra.mxu0 0.0
    %4147 = vmatpush.msra.mxu0 0.0
    %4148 = vmatpush.msra.mxu0 %v3952
    %4149 = vmatmul.f32.gmra.mxu0 %v4131
    %v4150 = vpop.f32.mrf.mxu0
    %v4151 = vadd.f32 0.0, %v4150
    %4152 = vdwg.mxu0
    %v4154 = vsel %vm755, %v3821, 0
    %4156 = vmatpush.msra.mxu0 0.0
    %4157 = vmatpush.msra.mxu0 0.0
    %4158 = vmatpush.msra.mxu0 0.0
    %4159 = vmatpush.msra.mxu0 0.0
    %4160 = vmatpush.msra.mxu0 0.0
    %4161 = vmatpush.msra.mxu0 0.0
    %4162 = vmatpush.msra.mxu0 0.0
    %4163 = vmatpush.msra.mxu0 0.0
    %4164 = vmatpush.msra.mxu0 0.0
    %4165 = vmatpush.msra.mxu0 0.0
    %4166 = vmatpush.msra.mxu0 0.0
    %4167 = vmatpush.msra.mxu0 0.0
    %4168 = vmatpush.msra.mxu0 0.0
    %4169 = vmatpush.msra.mxu0 0.0
    %4170 = vmatpush.msra.mxu0 0.0
    %4171 = vmatpush.msra.mxu0 %v3981
    %4172 = vmatmul.f32.gmra.mxu0 %v4154
    %v4173 = vpop.f32.mrf.mxu0
    %v4174 = vadd.f32 0.0, %v4173
    %4175 = vdwg.mxu0
    %v4177 = vsel %vm755, %v3853, 0
    %4179 = vmatpush.msra.mxu0 0.0
    %4180 = vmatpush.msra.mxu0 0.0
    %4181 = vmatpush.msra.mxu0 0.0
    %4182 = vmatpush.msra.mxu0 0.0
    %4183 = vmatpush.msra.mxu0 0.0
    %4184 = vmatpush.msra.mxu0 0.0
    %4185 = vmatpush.msra.mxu0 0.0
    %4186 = vmatpush.msra.mxu0 0.0
    %4187 = vmatpush.msra.mxu0 0.0
    %4188 = vmatpush.msra.mxu0 0.0
    %4189 = vmatpush.msra.mxu0 0.0
    %4190 = vmatpush.msra.mxu0 0.0
    %4191 = vmatpush.msra.mxu0 0.0
    %4192 = vmatpush.msra.mxu0 0.0
    %4193 = vmatpush.msra.mxu0 0.0
    %4194 = vmatpush.msra.mxu0 %v3982
    %4195 = vmatmul.f32.gmra.mxu0 %v4177
    %v4196 = vpop.f32.mrf.mxu0
    %v4197 = vadd.f32 0.0, %v4196
    %4198 = vdwg.mxu0
    %v4200 = vsel %vm755, %v3885, 0
    %4202 = vmatpush.msra.mxu0 0.0
    %4203 = vmatpush.msra.mxu0 0.0
    %4204 = vmatpush.msra.mxu0 0.0
    %4205 = vmatpush.msra.mxu0 0.0
    %4206 = vmatpush.msra.mxu0 0.0
    %4207 = vmatpush.msra.mxu0 0.0
    %4208 = vmatpush.msra.mxu0 0.0
    %4209 = vmatpush.msra.mxu0 0.0
    %4210 = vmatpush.msra.mxu0 0.0
    %4211 = vmatpush.msra.mxu0 0.0
    %4212 = vmatpush.msra.mxu0 0.0
    %4213 = vmatpush.msra.mxu0 0.0
    %4214 = vmatpush.msra.mxu0 0.0
    %4215 = vmatpush.msra.mxu0 0.0
    %4216 = vmatpush.msra.mxu0 0.0
    %4217 = vmatpush.msra.mxu0 %v3983
    %4218 = vmatmul.f32.gmra.mxu0 %v4200
    %v4219 = vpop.f32.mrf.mxu0
    %v4220 = vadd.f32 0.0, %v4219
    %4221 = vdwg.mxu0
    %v4223 = vsel %vm755, %v3917, 0
    %4225 = vmatpush.msra.mxu0 0.0
    %4226 = vmatpush.msra.mxu0 0.0
    %4227 = vmatpush.msra.mxu0 0.0
    %4228 = vmatpush.msra.mxu0 0.0
    %4229 = vmatpush.msra.mxu0 0.0
    %4230 = vmatpush.msra.mxu0 0.0
    %4231 = vmatpush.msra.mxu0 0.0
    %4232 = vmatpush.msra.mxu0 0.0
    %4233 = vmatpush.msra.mxu0 0.0
    %4234 = vmatpush.msra.mxu0 0.0
    %4235 = vmatpush.msra.mxu0 0.0
    %4236 = vmatpush.msra.mxu0 0.0
    %4237 = vmatpush.msra.mxu0 0.0
    %4238 = vmatpush.msra.mxu0 0.0
    %4239 = vmatpush.msra.mxu0 0.0
    %4240 = vmatpush.msra.mxu0 %v3984
    %4241 = vmatmul.f32.gmra.mxu0 %v4223
    %v4242 = vpop.f32.mrf.mxu0
    %v4243 = vadd.f32 0.0, %v4242
    %4244 = vdwg.mxu0
    %v4245 = vmul.f32 %v4082, 0.35355338
    %v4246 = vmul.f32 %v4105, 0.35355338
    %v4247 = vmul.f32 %v4128, 0.35355338
    %v4248 = vmul.f32 %v4151, 0.35355338
    %v4249 = vmul.f32 %v4174, 0.35355338
    %v4250 = vmul.f32 %v4197, 0.35355338
    %v4251 = vmul.f32 %v4220, 0.35355338
    %v4252 = vmul.f32 %v4243, 0.35355338
    %v4253 = vsel %vm755, %v4245, -inf
    %4254 = vmax.xlane.f32.xlu0 %v4253
    %v4255 = vpop.xlane.xlu0 %4254
    %v4256 = vsel %vm755, %v4246, -inf
    %4257 = vmax.xlane.f32.xlu0 %v4256
    %v4258 = vpop.xlane.xlu0 %4257
    %v4259 = vsel %vm755, %v4247, -inf
    %4260 = vmax.xlane.f32.xlu0 %v4259
    %v4261 = vpop.xlane.xlu0 %4260
    %v4262 = vsel %vm755, %v4248, -inf
    %4263 = vmax.xlane.f32.xlu0 %v4262
    %v4264 = vpop.xlane.xlu0 %4263
    %v4265 = vsel %vm755, %v4249, -inf
    %4266 = vmax.xlane.f32.xlu0 %v4265
    %v4267 = vpop.xlane.xlu0 %4266
    %v4268 = vsel %vm755, %v4250, -inf
    %4269 = vmax.xlane.f32.xlu0 %v4268
    %v4270 = vpop.xlane.xlu0 %4269
    %v4271 = vsel %vm755, %v4251, -inf
    %4272 = vmax.xlane.f32.xlu0 %v4271
    %v4273 = vpop.xlane.xlu0 %4272
    %v4274 = vsel %vm755, %v4252, -inf
    %4275 = vmax.xlane.f32.xlu0 %v4274
    %v4276 = vpop.xlane.xlu0 %4275
    %v4277 = vsub.f32 %v4245, %v4255
    %v4278 = vsub.f32 %v4246, %v4258
    %v4279 = vsub.f32 %v4247, %v4261
    %v4280 = vsub.f32 %v4248, %v4264
    %v4281 = vsub.f32 %v4249, %v4267
    %v4282 = vsub.f32 %v4250, %v4270
    %v4283 = vsub.f32 %v4251, %v4273
    %v4284 = vsub.f32 %v4252, %v4276
    %v4285 = vmul.f32 %v4277, 1.442695
    %v4286 = vpow.pop %v4285
    %v4287 = vmul.f32 %v4278, 1.442695
    %v4288 = vpow.pop %v4287
    %v4289 = vmul.f32 %v4279, 1.442695
    %v4290 = vpow.pop %v4289
    %v4291 = vmul.f32 %v4280, 1.442695
    %v4292 = vpow.pop %v4291
    %v4293 = vmul.f32 %v4281, 1.442695
    %v4294 = vpow.pop %v4293
    %v4295 = vmul.f32 %v4282, 1.442695
    %v4296 = vpow.pop %v4295
    %v4297 = vmul.f32 %v4283, 1.442695
    %v4298 = vpow.pop %v4297
    %v4299 = vmul.f32 %v4284, 1.442695
    %v4300 = vpow.pop %v4299
    %v4301 = vsel %vm755, %v4286, 0.0
    %4302 = vadd.xlane.f32.xlu0 %v4301
    %v4303 = vpop.xlane.xlu0 %4302
    %v4304 = vsel %vm755, %v4288, 0.0
    %4305 = vadd.xlane.f32.xlu0 %v4304
    %v4306 = vpop.xlane.xlu0 %4305
    %v4307 = vsel %vm755, %v4290, 0.0
    %4308 = vadd.xlane.f32.xlu0 %v4307
    %v4309 = vpop.xlane.xlu0 %4308
    %v4310 = vsel %vm755, %v4292, 0.0
    %4311 = vadd.xlane.f32.xlu0 %v4310
    %v4312 = vpop.xlane.xlu0 %4311
    %v4313 = vsel %vm755, %v4294, 0.0
    %4314 = vadd.xlane.f32.xlu0 %v4313
    %v4315 = vpop.xlane.xlu0 %4314
    %v4316 = vsel %vm755, %v4296, 0.0
    %4317 = vadd.xlane.f32.xlu0 %v4316
    %v4318 = vpop.xlane.xlu0 %4317
    %v4319 = vsel %vm755, %v4298, 0.0
    %4320 = vadd.xlane.f32.xlu0 %v4319
    %v4321 = vpop.xlane.xlu0 %4320
    %v4322 = vsel %vm755, %v4300, 0.0
    %4323 = vadd.xlane.f32.xlu0 %v4322
    %v4324 = vpop.xlane.xlu0 %4323
    %v4325 = vrcp.pop %v4303
    %v4326 = vmul.f32 %v4303, %v4325
    %v4327 = vsub.f32 1.0, %v4326
    %v4328 = vmul.f32 %v4325, %v4327
    %v4329 = vadd.f32 %v4325, %v4328
    %vm4330 = vweird.f32 %v4303
    %vm4331 = vweird.f32 %v4325
    %vm4332 = vmor %vm4330, %vm4331
    %v4333 = vsel %vm4332, %v4325, %v4329
    %v4334 = vand.u32 2147483647, %v4303
    %vm4335 = vcmp.eq.f32.partialorder %v4334, 8.507059e+37
    %v4336 = vand.u32 %v4303, 2147483648
    %v4337 = vor.u32 1.1754944e-38, %v4336
    %v4338 = vsel %vm4335, %v4337, %v4333
    %v4339 = vmul.f32 %v4286, %v4338
    %v4340 = vrcp.pop %v4306
    %v4341 = vmul.f32 %v4306, %v4340
    %v4342 = vsub.f32 1.0, %v4341
    %v4343 = vmul.f32 %v4340, %v4342
    %v4344 = vadd.f32 %v4340, %v4343
    %vm4345 = vweird.f32 %v4306
    %vm4346 = vweird.f32 %v4340
    %vm4347 = vmor %vm4345, %vm4346
    %v4348 = vsel %vm4347, %v4340, %v4344
    %v4349 = vand.u32 2147483647, %v4306
    %vm4350 = vcmp.eq.f32.partialorder %v4349, 8.507059e+37
    %v4351 = vand.u32 %v4306, 2147483648
    %v4352 = vor.u32 1.1754944e-38, %v4351
    %v4353 = vsel %vm4350, %v4352, %v4348
    %v4354 = vmul.f32 %v4288, %v4353
    %v4355 = vrcp.pop %v4309
    %v4356 = vmul.f32 %v4309, %v4355
    %v4357 = vsub.f32 1.0, %v4356
    %v4358 = vmul.f32 %v4355, %v4357
    %v4359 = vadd.f32 %v4355, %v4358
    %vm4360 = vweird.f32 %v4309
    %vm4361 = vweird.f32 %v4355
    %vm4362 = vmor %vm4360, %vm4361
    %v4363 = vsel %vm4362, %v4355, %v4359
    %v4364 = vand.u32 2147483647, %v4309
    %vm4365 = vcmp.eq.f32.partialorder %v4364, 8.507059e+37
    %v4366 = vand.u32 %v4309, 2147483648
    %v4367 = vor.u32 1.1754944e-38, %v4366
    %v4368 = vsel %vm4365, %v4367, %v4363
    %v4369 = vmul.f32 %v4290, %v4368
    %v4370 = vrcp.pop %v4312
    %v4371 = vmul.f32 %v4312, %v4370
    %v4372 = vsub.f32 1.0, %v4371
    %v4373 = vmul.f32 %v4370, %v4372
    %v4374 = vadd.f32 %v4370, %v4373
    %vm4375 = vweird.f32 %v4312
    %vm4376 = vweird.f32 %v4370
    %vm4377 = vmor %vm4375, %vm4376
    %v4378 = vsel %vm4377, %v4370, %v4374
    %v4379 = vand.u32 2147483647, %v4312
    %vm4380 = vcmp.eq.f32.partialorder %v4379, 8.507059e+37
    %v4381 = vand.u32 %v4312, 2147483648
    %v4382 = vor.u32 1.1754944e-38, %v4381
    %v4383 = vsel %vm4380, %v4382, %v4378
    %v4384 = vmul.f32 %v4292, %v4383
    %v4385 = vrcp.pop %v4315
    %v4386 = vmul.f32 %v4315, %v4385
    %v4387 = vsub.f32 1.0, %v4386
    %v4388 = vmul.f32 %v4385, %v4387
    %v4389 = vadd.f32 %v4385, %v4388
    %vm4390 = vweird.f32 %v4315
    %vm4391 = vweird.f32 %v4385
    %vm4392 = vmor %vm4390, %vm4391
    %v4393 = vsel %vm4392, %v4385, %v4389
    %v4394 = vand.u32 2147483647, %v4315
    %vm4395 = vcmp.eq.f32.partialorder %v4394, 8.507059e+37
    %v4396 = vand.u32 %v4315, 2147483648
    %v4397 = vor.u32 1.1754944e-38, %v4396
    %v4398 = vsel %vm4395, %v4397, %v4393
    %v4399 = vmul.f32 %v4294, %v4398
    %v4400 = vrcp.pop %v4318
    %v4401 = vmul.f32 %v4318, %v4400
    %v4402 = vsub.f32 1.0, %v4401
    %v4403 = vmul.f32 %v4400, %v4402
    %v4404 = vadd.f32 %v4400, %v4403
    %vm4405 = vweird.f32 %v4318
    %vm4406 = vweird.f32 %v4400
    %vm4407 = vmor %vm4405, %vm4406
    %v4408 = vsel %vm4407, %v4400, %v4404
    %v4409 = vand.u32 2147483647, %v4318
    %vm4410 = vcmp.eq.f32.partialorder %v4409, 8.507059e+37
    %v4411 = vand.u32 %v4318, 2147483648
    %v4412 = vor.u32 1.1754944e-38, %v4411
    %v4413 = vsel %vm4410, %v4412, %v4408
    %v4414 = vmul.f32 %v4296, %v4413
    %v4415 = vrcp.pop %v4321
    %v4416 = vmul.f32 %v4321, %v4415
    %v4417 = vsub.f32 1.0, %v4416
    %v4418 = vmul.f32 %v4415, %v4417
    %v4419 = vadd.f32 %v4415, %v4418
    %vm4420 = vweird.f32 %v4321
    %vm4421 = vweird.f32 %v4415
    %vm4422 = vmor %vm4420, %vm4421
    %v4423 = vsel %vm4422, %v4415, %v4419
    %v4424 = vand.u32 2147483647, %v4321
    %vm4425 = vcmp.eq.f32.partialorder %v4424, 8.507059e+37
    %v4426 = vand.u32 %v4321, 2147483648
    %v4427 = vor.u32 1.1754944e-38, %v4426
    %v4428 = vsel %vm4425, %v4427, %v4423
    %v4429 = vmul.f32 %v4298, %v4428
    %v4430 = vrcp.pop %v4324
    %v4431 = vmul.f32 %v4324, %v4430
    %v4432 = vsub.f32 1.0, %v4431
    %v4433 = vmul.f32 %v4430, %v4432
    %v4434 = vadd.f32 %v4430, %v4433
    %vm4435 = vweird.f32 %v4324
    %vm4436 = vweird.f32 %v4430
    %vm4437 = vmor %vm4435, %vm4436
    %v4438 = vsel %vm4437, %v4430, %v4434
    %v4439 = vand.u32 2147483647, %v4324
    %vm4440 = vcmp.eq.f32.partialorder %v4439, 8.507059e+37
    %v4441 = vand.u32 %v4324, 2147483648
    %v4442 = vor.u32 1.1754944e-38, %v4441
    %v4443 = vsel %vm4440, %v4442, %v4438
    %v4444 = vmul.f32 %v4300, %v4443
    %v4446 = vsel %vm755, %v4339, 0
    %v4449 = vsel %vm755, %v4013, 0
    %4451 = vmatpush.xpose.msra.mxu0 0.0
    %4452 = vmatpush.xpose.msra.mxu0 0.0
    %4453 = vmatpush.xpose.msra.mxu0 0.0
    %4454 = vmatpush.xpose.msra.mxu0 0.0
    %4455 = vmatpush.xpose.msra.mxu0 0.0
    %4456 = vmatpush.xpose.msra.mxu0 0.0
    %4457 = vmatpush.xpose.msra.mxu0 0.0
    %4458 = vmatpush.xpose.msra.mxu0 0.0
    %4459 = vmatpush.xpose.msra.mxu0 0.0
    %4460 = vmatpush.xpose.msra.mxu0 0.0
    %4461 = vmatpush.xpose.msra.mxu0 0.0
    %4462 = vmatpush.xpose.msra.mxu0 0.0
    %4463 = vmatpush.xpose.msra.mxu0 0.0
    %4464 = vmatpush.xpose.msra.mxu0 0.0
    %4465 = vmatpush.xpose.msra.mxu0 0.0
    %4466 = vmatpush.xpose.msra.mxu0 %v4449
    %4467 = vmatmul.f32.gmra.mxu0 %v4446
    %v4468 = vpop.f32.mrf.mxu0
    %v4469 = vadd.f32 0.0, %v4468
    %4470 = vdwg.mxu0
    %v4472 = vsel %vm755, %v4354, 0
    %v4475 = vsel %vm755, %v4014, 0
    %4477 = vmatpush.xpose.msra.mxu0 0.0
    %4478 = vmatpush.xpose.msra.mxu0 0.0
    %4479 = vmatpush.xpose.msra.mxu0 0.0
    %4480 = vmatpush.xpose.msra.mxu0 0.0
    %4481 = vmatpush.xpose.msra.mxu0 0.0
    %4482 = vmatpush.xpose.msra.mxu0 0.0
    %4483 = vmatpush.xpose.msra.mxu0 0.0
    %4484 = vmatpush.xpose.msra.mxu0 0.0
    %4485 = vmatpush.xpose.msra.mxu0 0.0
    %4486 = vmatpush.xpose.msra.mxu0 0.0
    %4487 = vmatpush.xpose.msra.mxu0 0.0
    %4488 = vmatpush.xpose.msra.mxu0 0.0
    %4489 = vmatpush.xpose.msra.mxu0 0.0
    %4490 = vmatpush.xpose.msra.mxu0 0.0
    %4491 = vmatpush.xpose.msra.mxu0 0.0
    %4492 = vmatpush.xpose.msra.mxu0 %v4475
    %4493 = vmatmul.f32.gmra.mxu0 %v4472
    %v4494 = vpop.f32.mrf.mxu0
    %v4495 = vadd.f32 0.0, %v4494
    %4496 = vdwg.mxu0
    %v4498 = vsel %vm755, %v4369, 0
    %v4501 = vsel %vm755, %v4015, 0
    %4503 = vmatpush.xpose.msra.mxu0 0.0
    %4504 = vmatpush.xpose.msra.mxu0 0.0
    %4505 = vmatpush.xpose.msra.mxu0 0.0
    %4506 = vmatpush.xpose.msra.mxu0 0.0
    %4507 = vmatpush.xpose.msra.mxu0 0.0
    %4508 = vmatpush.xpose.msra.mxu0 0.0
    %4509 = vmatpush.xpose.msra.mxu0 0.0
    %4510 = vmatpush.xpose.msra.mxu0 0.0
    %4511 = vmatpush.xpose.msra.mxu0 0.0
    %4512 = vmatpush.xpose.msra.mxu0 0.0
    %4513 = vmatpush.xpose.msra.mxu0 0.0
    %4514 = vmatpush.xpose.msra.mxu0 0.0
    %4515 = vmatpush.xpose.msra.mxu0 0.0
    %4516 = vmatpush.xpose.msra.mxu0 0.0
    %4517 = vmatpush.xpose.msra.mxu0 0.0
    %4518 = vmatpush.xpose.msra.mxu0 %v4501
    %4519 = vmatmul.f32.gmra.mxu0 %v4498
    %v4520 = vpop.f32.mrf.mxu0
    %v4521 = vadd.f32 0.0, %v4520
    %4522 = vdwg.mxu0
    %v4524 = vsel %vm755, %v4384, 0
    %v4527 = vsel %vm755, %v4016, 0
    %4529 = vmatpush.xpose.msra.mxu0 0.0
    %4530 = vmatpush.xpose.msra.mxu0 0.0
    %4531 = vmatpush.xpose.msra.mxu0 0.0
    %4532 = vmatpush.xpose.msra.mxu0 0.0
    %4533 = vmatpush.xpose.msra.mxu0 0.0
    %4534 = vmatpush.xpose.msra.mxu0 0.0
    %4535 = vmatpush.xpose.msra.mxu0 0.0
    %4536 = vmatpush.xpose.msra.mxu0 0.0
    %4537 = vmatpush.xpose.msra.mxu0 0.0
    %4538 = vmatpush.xpose.msra.mxu0 0.0
    %4539 = vmatpush.xpose.msra.mxu0 0.0
    %4540 = vmatpush.xpose.msra.mxu0 0.0
    %4541 = vmatpush.xpose.msra.mxu0 0.0
    %4542 = vmatpush.xpose.msra.mxu0 0.0
    %4543 = vmatpush.xpose.msra.mxu0 0.0
    %4544 = vmatpush.xpose.msra.mxu0 %v4527
    %4545 = vmatmul.f32.gmra.mxu0 %v4524
    %v4546 = vpop.f32.mrf.mxu0
    %v4547 = vadd.f32 0.0, %v4546
    %4548 = vdwg.mxu0
    %v4550 = vsel %vm755, %v4399, 0
    %v4553 = vsel %vm755, %v4045, 0
    %4555 = vmatpush.xpose.msra.mxu0 0.0
    %4556 = vmatpush.xpose.msra.mxu0 0.0
    %4557 = vmatpush.xpose.msra.mxu0 0.0
    %4558 = vmatpush.xpose.msra.mxu0 0.0
    %4559 = vmatpush.xpose.msra.mxu0 0.0
    %4560 = vmatpush.xpose.msra.mxu0 0.0
    %4561 = vmatpush.xpose.msra.mxu0 0.0
    %4562 = vmatpush.xpose.msra.mxu0 0.0
    %4563 = vmatpush.xpose.msra.mxu0 0.0
    %4564 = vmatpush.xpose.msra.mxu0 0.0
    %4565 = vmatpush.xpose.msra.mxu0 0.0
    %4566 = vmatpush.xpose.msra.mxu0 0.0
    %4567 = vmatpush.xpose.msra.mxu0 0.0
    %4568 = vmatpush.xpose.msra.mxu0 0.0
    %4569 = vmatpush.xpose.msra.mxu0 0.0
    %4570 = vmatpush.xpose.msra.mxu0 %v4553
    %4571 = vmatmul.f32.gmra.mxu0 %v4550
    %v4572 = vpop.f32.mrf.mxu0
    %v4573 = vadd.f32 0.0, %v4572
    %4574 = vdwg.mxu0
    %v4576 = vsel %vm755, %v4414, 0
    %v4579 = vsel %vm755, %v4046, 0
    %4581 = vmatpush.xpose.msra.mxu0 0.0
    %4582 = vmatpush.xpose.msra.mxu0 0.0
    %4583 = vmatpush.xpose.msra.mxu0 0.0
    %4584 = vmatpush.xpose.msra.mxu0 0.0
    %4585 = vmatpush.xpose.msra.mxu0 0.0
    %4586 = vmatpush.xpose.msra.mxu0 0.0
    %4587 = vmatpush.xpose.msra.mxu0 0.0
    %4588 = vmatpush.xpose.msra.mxu0 0.0
    %4589 = vmatpush.xpose.msra.mxu0 0.0
    %4590 = vmatpush.xpose.msra.mxu0 0.0
    %4591 = vmatpush.xpose.msra.mxu0 0.0
    %4592 = vmatpush.xpose.msra.mxu0 0.0
    %4593 = vmatpush.xpose.msra.mxu0 0.0
    %4594 = vmatpush.xpose.msra.mxu0 0.0
    %4595 = vmatpush.xpose.msra.mxu0 0.0
    %4596 = vmatpush.xpose.msra.mxu0 %v4579
    %4597 = vmatmul.f32.gmra.mxu0 %v4576
    %v4598 = vpop.f32.mrf.mxu0
    %v4599 = vadd.f32 0.0, %v4598
    %4600 = vdwg.mxu0
    %v4602 = vsel %vm755, %v4429, 0
    %v4605 = vsel %vm755, %v4047, 0
    %4607 = vmatpush.xpose.msra.mxu0 0.0
    %4608 = vmatpush.xpose.msra.mxu0 0.0
    %4609 = vmatpush.xpose.msra.mxu0 0.0
    %4610 = vmatpush.xpose.msra.mxu0 0.0
    %4611 = vmatpush.xpose.msra.mxu0 0.0
    %4612 = vmatpush.xpose.msra.mxu0 0.0
    %4613 = vmatpush.xpose.msra.mxu0 0.0
    %4614 = vmatpush.xpose.msra.mxu0 0.0
    %4615 = vmatpush.xpose.msra.mxu0 0.0
    %4616 = vmatpush.xpose.msra.mxu0 0.0
    %4617 = vmatpush.xpose.msra.mxu0 0.0
    %4618 = vmatpush.xpose.msra.mxu0 0.0
    %4619 = vmatpush.xpose.msra.mxu0 0.0
    %4620 = vmatpush.xpose.msra.mxu0 0.0
    %4621 = vmatpush.xpose.msra.mxu0 0.0
    %4622 = vmatpush.xpose.msra.mxu0 %v4605
    %4623 = vmatmul.f32.gmra.mxu0 %v4602
    %v4624 = vpop.f32.mrf.mxu0
    %v4625 = vadd.f32 0.0, %v4624
    %4626 = vdwg.mxu0
    %v4628 = vsel %vm755, %v4444, 0
    %v4631 = vsel %vm755, %v4048, 0
    %4633 = vmatpush.xpose.msra.mxu0 0.0
    %4634 = vmatpush.xpose.msra.mxu0 0.0
    %4635 = vmatpush.xpose.msra.mxu0 0.0
    %4636 = vmatpush.xpose.msra.mxu0 0.0
    %4637 = vmatpush.xpose.msra.mxu0 0.0
    %4638 = vmatpush.xpose.msra.mxu0 0.0
    %4639 = vmatpush.xpose.msra.mxu0 0.0
    %4640 = vmatpush.xpose.msra.mxu0 0.0
    %4641 = vmatpush.xpose.msra.mxu0 0.0
    %4642 = vmatpush.xpose.msra.mxu0 0.0
    %4643 = vmatpush.xpose.msra.mxu0 0.0
    %4644 = vmatpush.xpose.msra.mxu0 0.0
    %4645 = vmatpush.xpose.msra.mxu0 0.0
    %4646 = vmatpush.xpose.msra.mxu0 0.0
    %4647 = vmatpush.xpose.msra.mxu0 0.0
    %4648 = vmatpush.xpose.msra.mxu0 %v4631
    %4649 = vmatmul.f32.gmra.mxu0 %v4628
    %v4650 = vpop.f32.mrf.mxu0
    %v4651 = vadd.f32 0.0, %v4650
    %4652 = vdwg.mxu0
    %4653 = vxpose.xlu0.b32.start [1/16] %v4469, 128
    %4654 = vxpose.xlu0.b32.cont [2/16] 0.0, 128
    %4655 = vxpose.xlu0.b32.cont [3/16] 0.0, 128
    %4656 = vxpose.xlu0.b32.cont [4/16] 0.0, 128
    %4657 = vxpose.xlu0.b32.cont [5/16] 0.0, 128
    %4658 = vxpose.xlu0.b32.cont [6/16] 0.0, 128
    %4659 = vxpose.xlu0.b32.cont [7/16] 0.0, 128
    %4660 = vxpose.xlu0.b32.cont [8/16] 0.0, 128
    %4661 = vxpose.xlu0.b32.cont [9/16] 0.0, 128
    %4662 = vxpose.xlu0.b32.cont [10/16] 0.0, 128
    %4663 = vxpose.xlu0.b32.cont [11/16] 0.0, 128
    %4664 = vxpose.xlu0.b32.cont [12/16] 0.0, 128
    %4665 = vxpose.xlu0.b32.cont [13/16] 0.0, 128
    %4666 = vxpose.xlu0.b32.cont [14/16] 0.0, 128
    %4667 = vxpose.xlu0.b32.cont [15/16] 0.0, 128
    %4668 = vxpose.xlu0.b32.end [16/16] 0.0, 128
    %v4669 = vpop.trf.xlu0
    %v4670 = vpop.trf.xlu0
    %v4671 = vpop.trf.xlu0
    %v4672 = vpop.trf.xlu0
    %v4673 = vpop.trf.xlu0
    %v4674 = vpop.trf.xlu0
    %v4675 = vpop.trf.xlu0
    %v4676 = vpop.trf.xlu0
    %v4677 = vpop.trf.xlu0
    %v4678 = vpop.trf.xlu0
    %v4679 = vpop.trf.xlu0
    %v4680 = vpop.trf.xlu0
    %v4681 = vpop.trf.xlu0
    %v4682 = vpop.trf.xlu0
    %v4683 = vpop.trf.xlu0
    %v4684 = vpop.trf.xlu0
    %4685 = vxpose.xlu0.b32.start [1/16] %v4495, 128
    %4686 = vxpose.xlu0.b32.cont [2/16] 0.0, 128
    %4687 = vxpose.xlu0.b32.cont [3/16] 0.0, 128
    %4688 = vxpose.xlu0.b32.cont [4/16] 0.0, 128
    %4689 = vxpose.xlu0.b32.cont [5/16] 0.0, 128
    %4690 = vxpose.xlu0.b32.cont [6/16] 0.0, 128
    %4691 = vxpose.xlu0.b32.cont [7/16] 0.0, 128
    %4692 = vxpose.xlu0.b32.cont [8/16] 0.0, 128
    %4693 = vxpose.xlu0.b32.cont [9/16] 0.0, 128
    %4694 = vxpose.xlu0.b32.cont [10/16] 0.0, 128
    %4695 = vxpose.xlu0.b32.cont [11/16] 0.0, 128
    %4696 = vxpose.xlu0.b32.cont [12/16] 0.0, 128
    %4697 = vxpose.xlu0.b32.cont [13/16] 0.0, 128
    %4698 = vxpose.xlu0.b32.cont [14/16] 0.0, 128
    %4699 = vxpose.xlu0.b32.cont [15/16] 0.0, 128
    %4700 = vxpose.xlu0.b32.end [16/16] 0.0, 128
    %v4701 = vpop.trf.xlu0
    %v4702 = vpop.trf.xlu0
    %v4703 = vpop.trf.xlu0
    %v4704 = vpop.trf.xlu0
    %v4705 = vpop.trf.xlu0
    %v4706 = vpop.trf.xlu0
    %v4707 = vpop.trf.xlu0
    %v4708 = vpop.trf.xlu0
    %v4709 = vpop.trf.xlu0
    %v4710 = vpop.trf.xlu0
    %v4711 = vpop.trf.xlu0
    %v4712 = vpop.trf.xlu0
    %v4713 = vpop.trf.xlu0
    %v4714 = vpop.trf.xlu0
    %v4715 = vpop.trf.xlu0
    %v4716 = vpop.trf.xlu0
    %4717 = vxpose.xlu0.b32.start [1/16] %v4521, 128
    %4718 = vxpose.xlu0.b32.cont [2/16] 0.0, 128
    %4719 = vxpose.xlu0.b32.cont [3/16] 0.0, 128
    %4720 = vxpose.xlu0.b32.cont [4/16] 0.0, 128
    %4721 = vxpose.xlu0.b32.cont [5/16] 0.0, 128
    %4722 = vxpose.xlu0.b32.cont [6/16] 0.0, 128
    %4723 = vxpose.xlu0.b32.cont [7/16] 0.0, 128
    %4724 = vxpose.xlu0.b32.cont [8/16] 0.0, 128
    %4725 = vxpose.xlu0.b32.cont [9/16] 0.0, 128
    %4726 = vxpose.xlu0.b32.cont [10/16] 0.0, 128
    %4727 = vxpose.xlu0.b32.cont [11/16] 0.0, 128
    %4728 = vxpose.xlu0.b32.cont [12/16] 0.0, 128
    %4729 = vxpose.xlu0.b32.cont [13/16] 0.0, 128
    %4730 = vxpose.xlu0.b32.cont [14/16] 0.0, 128
    %4731 = vxpose.xlu0.b32.cont [15/16] 0.0, 128
    %4732 = vxpose.xlu0.b32.end [16/16] 0.0, 128
    %v4733 = vpop.trf.xlu0
    %v4734 = vpop.trf.xlu0
    %v4735 = vpop.trf.xlu0
    %v4736 = vpop.trf.xlu0
    %v4737 = vpop.trf.xlu0
    %v4738 = vpop.trf.xlu0
    %v4739 = vpop.trf.xlu0
    %v4740 = vpop.trf.xlu0
    %v4741 = vpop.trf.xlu0
    %v4742 = vpop.trf.xlu0
    %v4743 = vpop.trf.xlu0
    %v4744 = vpop.trf.xlu0
    %v4745 = vpop.trf.xlu0
    %v4746 = vpop.trf.xlu0
    %v4747 = vpop.trf.xlu0
    %v4748 = vpop.trf.xlu0
    %4749 = vxpose.xlu0.b32.start [1/16] %v4547, 128
    %4750 = vxpose.xlu0.b32.cont [2/16] 0.0, 128
    %4751 = vxpose.xlu0.b32.cont [3/16] 0.0, 128
    %4752 = vxpose.xlu0.b32.cont [4/16] 0.0, 128
    %4753 = vxpose.xlu0.b32.cont [5/16] 0.0, 128
    %4754 = vxpose.xlu0.b32.cont [6/16] 0.0, 128
    %4755 = vxpose.xlu0.b32.cont [7/16] 0.0, 128
    %4756 = vxpose.xlu0.b32.cont [8/16] 0.0, 128
    %4757 = vxpose.xlu0.b32.cont [9/16] 0.0, 128
    %4758 = vxpose.xlu0.b32.cont [10/16] 0.0, 128
    %4759 = vxpose.xlu0.b32.cont [11/16] 0.0, 128
    %4760 = vxpose.xlu0.b32.cont [12/16] 0.0, 128
    %4761 = vxpose.xlu0.b32.cont [13/16] 0.0, 128
    %4762 = vxpose.xlu0.b32.cont [14/16] 0.0, 128
    %4763 = vxpose.xlu0.b32.cont [15/16] 0.0, 128
    %4764 = vxpose.xlu0.b32.end [16/16] 0.0, 128
    %v4765 = vpop.trf.xlu0
    %v4766 = vpop.trf.xlu0
    %v4767 = vpop.trf.xlu0
    %v4768 = vpop.trf.xlu0
    %v4769 = vpop.trf.xlu0
    %v4770 = vpop.trf.xlu0
    %v4771 = vpop.trf.xlu0
    %v4772 = vpop.trf.xlu0
    %v4773 = vpop.trf.xlu0
    %v4774 = vpop.trf.xlu0
    %v4775 = vpop.trf.xlu0
    %v4776 = vpop.trf.xlu0
    %v4777 = vpop.trf.xlu0
    %v4778 = vpop.trf.xlu0
    %v4779 = vpop.trf.xlu0
    %v4780 = vpop.trf.xlu0
    %4781 = vxpose.xlu0.b32.start [1/16] %v4573, 128
    %4782 = vxpose.xlu0.b32.cont [2/16] 0.0, 128
    %4783 = vxpose.xlu0.b32.cont [3/16] 0.0, 128
    %4784 = vxpose.xlu0.b32.cont [4/16] 0.0, 128
    %4785 = vxpose.xlu0.b32.cont [5/16] 0.0, 128
    %4786 = vxpose.xlu0.b32.cont [6/16] 0.0, 128
    %4787 = vxpose.xlu0.b32.cont [7/16] 0.0, 128
    %4788 = vxpose.xlu0.b32.cont [8/16] 0.0, 128
    %4789 = vxpose.xlu0.b32.cont [9/16] 0.0, 128
    %4790 = vxpose.xlu0.b32.cont [10/16] 0.0, 128
    %4791 = vxpose.xlu0.b32.cont [11/16] 0.0, 128
    %4792 = vxpose.xlu0.b32.cont [12/16] 0.0, 128
    %4793 = vxpose.xlu0.b32.cont [13/16] 0.0, 128
    %4794 = vxpose.xlu0.b32.cont [14/16] 0.0, 128
    %4795 = vxpose.xlu0.b32.cont [15/16] 0.0, 128
    %4796 = vxpose.xlu0.b32.end [16/16] 0.0, 128
    %v4797 = vpop.trf.xlu0
    %v4798 = vpop.trf.xlu0
    %v4799 = vpop.trf.xlu0
    %v4800 = vpop.trf.xlu0
    %v4801 = vpop.trf.xlu0
    %v4802 = vpop.trf.xlu0
    %v4803 = vpop.trf.xlu0
    %v4804 = vpop.trf.xlu0
    %v4805 = vpop.trf.xlu0
    %v4806 = vpop.trf.xlu0
    %v4807 = vpop.trf.xlu0
    %v4808 = vpop.trf.xlu0
    %v4809 = vpop.trf.xlu0
    %v4810 = vpop.trf.xlu0
    %v4811 = vpop.trf.xlu0
    %v4812 = vpop.trf.xlu0
    %4813 = vxpose.xlu0.b32.start [1/16] %v4599, 128
    %4814 = vxpose.xlu0.b32.cont [2/16] 0.0, 128
    %4815 = vxpose.xlu0.b32.cont [3/16] 0.0, 128
    %4816 = vxpose.xlu0.b32.cont [4/16] 0.0, 128
    %4817 = vxpose.xlu0.b32.cont [5/16] 0.0, 128
    %4818 = vxpose.xlu0.b32.cont [6/16] 0.0, 128
    %4819 = vxpose.xlu0.b32.cont [7/16] 0.0, 128
    %4820 = vxpose.xlu0.b32.cont [8/16] 0.0, 128
    %4821 = vxpose.xlu0.b32.cont [9/16] 0.0, 128
    %4822 = vxpose.xlu0.b32.cont [10/16] 0.0, 128
    %4823 = vxpose.xlu0.b32.cont [11/16] 0.0, 128
    %4824 = vxpose.xlu0.b32.cont [12/16] 0.0, 128
    %4825 = vxpose.xlu0.b32.cont [13/16] 0.0, 128
    %4826 = vxpose.xlu0.b32.cont [14/16] 0.0, 128
    %4827 = vxpose.xlu0.b32.cont [15/16] 0.0, 128
    %4828 = vxpose.xlu0.b32.end [16/16] 0.0, 128
    %v4829 = vpop.trf.xlu0
    %v4830 = vpop.trf.xlu0
    %v4831 = vpop.trf.xlu0
    %v4832 = vpop.trf.xlu0
    %v4833 = vpop.trf.xlu0
    %v4834 = vpop.trf.xlu0
    %v4835 = vpop.trf.xlu0
    %v4836 = vpop.trf.xlu0
    %v4837 = vpop.trf.xlu0
    %v4838 = vpop.trf.xlu0
    %v4839 = vpop.trf.xlu0
    %v4840 = vpop.trf.xlu0
    %v4841 = vpop.trf.xlu0
    %v4842 = vpop.trf.xlu0
    %v4843 = vpop.trf.xlu0
    %v4844 = vpop.trf.xlu0
    %4845 = vxpose.xlu0.b32.start [1/16] %v4625, 128
    %4846 = vxpose.xlu0.b32.cont [2/16] 0.0, 128
    %4847 = vxpose.xlu0.b32.cont [3/16] 0.0, 128
    %4848 = vxpose.xlu0.b32.cont [4/16] 0.0, 128
    %4849 = vxpose.xlu0.b32.cont [5/16] 0.0, 128
    %4850 = vxpose.xlu0.b32.cont [6/16] 0.0, 128
    %4851 = vxpose.xlu0.b32.cont [7/16] 0.0, 128
    %4852 = vxpose.xlu0.b32.cont [8/16] 0.0, 128
    %4853 = vxpose.xlu0.b32.cont [9/16] 0.0, 128
    %4854 = vxpose.xlu0.b32.cont [10/16] 0.0, 128
    %4855 = vxpose.xlu0.b32.cont [11/16] 0.0, 128
    %4856 = vxpose.xlu0.b32.cont [12/16] 0.0, 128
    %4857 = vxpose.xlu0.b32.cont [13/16] 0.0, 128
    %4858 = vxpose.xlu0.b32.cont [14/16] 0.0, 128
    %4859 = vxpose.xlu0.b32.cont [15/16] 0.0, 128
    %4860 = vxpose.xlu0.b32.end [16/16] 0.0, 128
    %v4861 = vpop.trf.xlu0
    %v4862 = vpop.trf.xlu0
    %v4863 = vpop.trf.xlu0
    %v4864 = vpop.trf.xlu0
    %v4865 = vpop.trf.xlu0
    %v4866 = vpop.trf.xlu0
    %v4867 = vpop.trf.xlu0
    %v4868 = vpop.trf.xlu0
    %v4869 = vpop.trf.xlu0
    %v4870 = vpop.trf.xlu0
    %v4871 = vpop.trf.xlu0
    %v4872 = vpop.trf.xlu0
    %v4873 = vpop.trf.xlu0
    %v4874 = vpop.trf.xlu0
    %v4875 = vpop.trf.xlu0
    %v4876 = vpop.trf.xlu0
    %4877 = vxpose.xlu0.b32.start [1/16] %v4651, 128
    %4878 = vxpose.xlu0.b32.cont [2/16] 0.0, 128
    %4879 = vxpose.xlu0.b32.cont [3/16] 0.0, 128
    %4880 = vxpose.xlu0.b32.cont [4/16] 0.0, 128
    %4881 = vxpose.xlu0.b32.cont [5/16] 0.0, 128
    %4882 = vxpose.xlu0.b32.cont [6/16] 0.0, 128
    %4883 = vxpose.xlu0.b32.cont [7/16] 0.0, 128
    %4884 = vxpose.xlu0.b32.cont [8/16] 0.0, 128
    %4885 = vxpose.xlu0.b32.cont [9/16] 0.0, 128
    %4886 = vxpose.xlu0.b32.cont [10/16] 0.0, 128
    %4887 = vxpose.xlu0.b32.cont [11/16] 0.0, 128
    %4888 = vxpose.xlu0.b32.cont [12/16] 0.0, 128
    %4889 = vxpose.xlu0.b32.cont [13/16] 0.0, 128
    %4890 = vxpose.xlu0.b32.cont [14/16] 0.0, 128
    %4891 = vxpose.xlu0.b32.cont [15/16] 0.0, 128
    %4892 = vxpose.xlu0.b32.end [16/16] 0.0, 128
    %v4893 = vpop.trf.xlu0
    %v4894 = vpop.trf.xlu0
    %v4895 = vpop.trf.xlu0
    %v4896 = vpop.trf.xlu0
    %v4897 = vpop.trf.xlu0
    %v4898 = vpop.trf.xlu0
    %v4899 = vpop.trf.xlu0
    %v4900 = vpop.trf.xlu0
    %v4901 = vpop.trf.xlu0
    %v4902 = vpop.trf.xlu0
    %v4903 = vpop.trf.xlu0
    %v4904 = vpop.trf.xlu0
    %v4905 = vpop.trf.xlu0
    %v4906 = vpop.trf.xlu0
    %v4907 = vpop.trf.xlu0
    %v4908 = vpop.trf.xlu0
    %4909 = vxpose.xlu0.b32.start [1/16] %v4669, 128
    %4910 = vxpose.xlu0.b32.cont [2/16] %v4701, 128
    %4911 = vxpose.xlu0.b32.cont [3/16] %v4733, 128
    %4912 = vxpose.xlu0.b32.cont [4/16] %v4765, 128
    %4913 = vxpose.xlu0.b32.cont [5/16] 0.0, 128
    %4914 = vxpose.xlu0.b32.cont [6/16] 0.0, 128
    %4915 = vxpose.xlu0.b32.cont [7/16] 0.0, 128
    %4916 = vxpose.xlu0.b32.cont [8/16] 0.0, 128
    %4917 = vxpose.xlu0.b32.cont [9/16] 0.0, 128
    %4918 = vxpose.xlu0.b32.cont [10/16] 0.0, 128
    %4919 = vxpose.xlu0.b32.cont [11/16] 0.0, 128
    %4920 = vxpose.xlu0.b32.cont [12/16] 0.0, 128
    %4921 = vxpose.xlu0.b32.cont [13/16] 0.0, 128
    %4922 = vxpose.xlu0.b32.cont [14/16] 0.0, 128
    %4923 = vxpose.xlu0.b32.cont [15/16] 0.0, 128
    %4924 = vxpose.xlu0.b32.end [16/16] 0.0, 128
    %v4925 = vpop.trf.xlu0
    %v4926 = vpop.trf.xlu0
    %v4927 = vpop.trf.xlu0
    %v4928 = vpop.trf.xlu0
    %v4929 = vpop.trf.xlu0
    %v4930 = vpop.trf.xlu0
    %v4931 = vpop.trf.xlu0
    %v4932 = vpop.trf.xlu0
    %v4933 = vpop.trf.xlu0
    %v4934 = vpop.trf.xlu0
    %v4935 = vpop.trf.xlu0
    %v4936 = vpop.trf.xlu0
    %v4937 = vpop.trf.xlu0
    %v4938 = vpop.trf.xlu0
    %v4939 = vpop.trf.xlu0
    %v4940 = vpop.trf.xlu0
    %4941 = vxpose.xlu0.b32.start [1/16] %v4797, 128
    %4942 = vxpose.xlu0.b32.cont [2/16] %v4829, 128
    %4943 = vxpose.xlu0.b32.cont [3/16] %v4861, 128
    %4944 = vxpose.xlu0.b32.cont [4/16] %v4893, 128
    %4945 = vxpose.xlu0.b32.cont [5/16] 0.0, 128
    %4946 = vxpose.xlu0.b32.cont [6/16] 0.0, 128
    %4947 = vxpose.xlu0.b32.cont [7/16] 0.0, 128
    %4948 = vxpose.xlu0.b32.cont [8/16] 0.0, 128
    %4949 = vxpose.xlu0.b32.cont [9/16] 0.0, 128
    %4950 = vxpose.xlu0.b32.cont [10/16] 0.0, 128
    %4951 = vxpose.xlu0.b32.cont [11/16] 0.0, 128
    %4952 = vxpose.xlu0.b32.cont [12/16] 0.0, 128
    %4953 = vxpose.xlu0.b32.cont [13/16] 0.0, 128
    %4954 = vxpose.xlu0.b32.cont [14/16] 0.0, 128
    %4955 = vxpose.xlu0.b32.cont [15/16] 0.0, 128
    %4956 = vxpose.xlu0.b32.end [16/16] 0.0, 128
    %v4957 = vpop.trf.xlu0
    %v4958 = vpop.trf.xlu0
    %v4959 = vpop.trf.xlu0
    %v4960 = vpop.trf.xlu0
    %v4961 = vpop.trf.xlu0
    %v4962 = vpop.trf.xlu0
    %v4963 = vpop.trf.xlu0
    %v4964 = vpop.trf.xlu0
    %v4965 = vpop.trf.xlu0
    %v4966 = vpop.trf.xlu0
    %v4967 = vpop.trf.xlu0
    %v4968 = vpop.trf.xlu0
    %v4969 = vpop.trf.xlu0
    %v4970 = vpop.trf.xlu0
    %v4971 = vpop.trf.xlu0
    %v4972 = vpop.trf.xlu0
    %v4973 = vperm.slane %v3501, 3
    %v4975 = vsel %vm203, %v4925, 0
    %v4978 = vsel %vm203, %v4957, 0
    %4980 = vmatpush.msra.mxu0 0.0
    %4981 = vmatpush.msra.mxu0 0.0
    %4982 = vmatpush.msra.mxu0 0.0
    %4983 = vmatpush.msra.mxu0 0.0
    %4984 = vmatpush.msra.mxu0 0.0
    %4985 = vmatpush.msra.mxu0 0.0
    %4986 = vmatpush.msra.mxu0 0.0
    %4987 = vmatpush.msra.mxu0 0.0
    %4988 = vmatpush.msra.mxu0 0.0
    %4989 = vmatpush.msra.mxu0 0.0
    %4990 = vmatpush.msra.mxu0 0.0
    %4991 = vmatpush.msra.mxu0 0.0
    %4992 = vmatpush.msra.mxu0 %v3499
    %4993 = vmatpush.msra.mxu0 %v3498
    %4994 = vmatpush.msra.mxu0 %v3497
    %4995 = vmatpush.msra.mxu0 %v3496
    %4996 = vmatmul.f32.gmra.mxu0 %v4975
    %v4997 = vpop.f32.mrf.mxu0
    %v4998 = vadd.f32 %v4973, %v4997
    %4999 = vmatmul.f32.gmra.mxu0 %v4978
    %v5000 = vpop.f32.mrf.mxu0
    %v5001 = vadd.f32 %v4973, %v5000
    %5002 = vdwg.mxu0
    %v5003 = vadd.f32 %v3427, %v4998
    %v5004 = vadd.f32 %v3428, %v5001
    %v5005 = vsel %vm203, %v5003, 0.0
    %5006 = vadd.xlane.f32.xlu0 %v5005
    %v5007 = vpop.xlane.xlu0 %5006
    %v5008 = vsel %vm203, %v5004, 0.0
    %5009 = vadd.xlane.f32.xlu0 %v5008
    %v5010 = vpop.xlane.xlu0 %5009
    %v5011 = vmul.f32 %v5007, %v199
    %v5012 = vmul.f32 %v5010, %v199
    %v5013 = vsub.f32 %v5003, %v5011
    %v5014 = vsub.f32 %v5004, %v5012
    %v5015 = vmul.f32 %v5013, %v5013
    %v5016 = vmul.f32 %v5014, %v5014
    %v5017 = vsel %vm203, %v5015, 0.0
    %5018 = vadd.xlane.f32.xlu0 %v5017
    %v5019 = vpop.xlane.xlu0 %5018
    %v5020 = vsel %vm203, %v5016, 0.0
    %5021 = vadd.xlane.f32.xlu0 %v5020
    %v5022 = vpop.xlane.xlu0 %5021
    %v5023 = vmul.f32 %v5019, %v199
    %v5024 = vmul.f32 %v5022, %v199
    %v5025 = vadd.f32 %v5023, 1e-05
    %v5026 = vadd.f32 %v5024, 1e-05
    %v5027 = vrsqrt.pop %v5025
    %v5028 = vmul.f32 %v5027, %v5025
    %v5029 = vmul.f32 %v5028, %v5027
    %v5030 = vmul.f32 0.5, %v5029
    %v5031 = vsub.f32 1.5, %v5030
    %v5032 = vmul.f32 %v5027, %v5031
    %vm5033 = vweird.f32 %v5025
    %vm5034 = vweird.f32 %v5027
    %vm5035 = vmor %vm5033, %vm5034
    %v5036 = vsel %vm5035, %v5027, %v5032
    %v5037 = vrsqrt.pop %v5026
    %v5038 = vmul.f32 %v5037, %v5026
    %v5039 = vmul.f32 %v5038, %v5037
    %v5040 = vmul.f32 0.5, %v5039
    %v5041 = vsub.f32 1.5, %v5040
    %v5042 = vmul.f32 %v5037, %v5041
    %vm5043 = vweird.f32 %v5026
    %vm5044 = vweird.f32 %v5037
    %vm5045 = vmor %vm5043, %vm5044
    %v5046 = vsel %vm5045, %v5037, %v5042
    %v5047 = vmul.f32 %v5013, %v5036
    %v5048 = vmul.f32 %v5014, %v5046
    %v5049 = vperm.slane %v3482, 2
    %v5050 = vmul.f32 %v5047, %v5049
    %v5051 = vmul.f32 %v5048, %v5049
    %v5052 = vperm.slane %v3482, 3
    %v5053 = vadd.f32 %v5050, %v5052
    %v5054 = vadd.f32 %v5051, %v5052
    %v5055 = vadd.f32 %v5053, %v135
    %v5056 = vadd.f32 %v5054, %v136
    %v5057 = vperm.slane %v3520, 0
    %v5059 = vsel %vm203, %v5055, 0
    %v5062 = vsel %vm203, %v5056, 0
    %5064 = vmatpush.msra.mxu0 0.0
    %5065 = vmatpush.msra.mxu0 0.0
    %5066 = vmatpush.msra.mxu0 0.0
    %5067 = vmatpush.msra.mxu0 0.0
    %5068 = vmatpush.msra.mxu0 0.0
    %5069 = vmatpush.msra.mxu0 0.0
    %5070 = vmatpush.msra.mxu0 0.0
    %5071 = vmatpush.msra.mxu0 0.0
    %5072 = vmatpush.msra.mxu0 0.0
    %5073 = vmatpush.msra.mxu0 0.0
    %5074 = vmatpush.msra.mxu0 0.0
    %5075 = vmatpush.msra.mxu0 0.0
    %5076 = vmatpush.msra.mxu0 %v3506
    %5077 = vmatpush.msra.mxu0 %v3505
    %5078 = vmatpush.msra.mxu0 %v3504
    %5079 = vmatpush.msra.mxu0 %v3503
    %5080 = vmatmul.f32.gmra.mxu0 %v5059
    %v5081 = vpop.f32.mrf.mxu0
    %v5082 = vadd.f32 %v5057, %v5081
    %5083 = vmatmul.f32.gmra.mxu0 %v5062
    %v5084 = vpop.f32.mrf.mxu0
    %v5085 = vadd.f32 %v5057, %v5084
    %5086 = vdwg.mxu0
    %v5087 = vperm.slane %v3520, 1
    %5088 = vmatpush.msra.mxu0 0.0
    %5089 = vmatpush.msra.mxu0 0.0
    %5090 = vmatpush.msra.mxu0 0.0
    %5091 = vmatpush.msra.mxu0 0.0
    %5092 = vmatpush.msra.mxu0 0.0
    %5093 = vmatpush.msra.mxu0 0.0
    %5094 = vmatpush.msra.mxu0 0.0
    %5095 = vmatpush.msra.mxu0 0.0
    %5096 = vmatpush.msra.mxu0 0.0
    %5097 = vmatpush.msra.mxu0 0.0
    %5098 = vmatpush.msra.mxu0 0.0
    %5099 = vmatpush.msra.mxu0 0.0
    %5100 = vmatpush.msra.mxu0 %v3510
    %5101 = vmatpush.msra.mxu0 %v3509
    %5102 = vmatpush.msra.mxu0 %v3508
    %5103 = vmatpush.msra.mxu0 %v3507
    %5104 = vmatmul.f32.gmra.mxu0 %v1784
    %v5105 = vpop.f32.mrf.mxu0
    %v5106 = vadd.f32 %v5087, %v5105
    %5107 = vmatmul.f32.gmra.mxu0 %v1787
    %v5108 = vpop.f32.mrf.mxu0
    %v5109 = vadd.f32 %v5087, %v5108
    %5110 = vmatmul.f32.gmra.mxu0 %v1790
    %v5111 = vpop.f32.mrf.mxu0
    %v5112 = vadd.f32 %v5087, %v5111
    %5113 = vmatmul.f32.gmra.mxu0 %v1793
    %v5114 = vpop.f32.mrf.mxu0
    %v5115 = vadd.f32 %v5087, %v5114
    %5116 = vdwg.mxu0
    %v5117 = vperm.slane %v3520, 2
    %5118 = vmatpush.msra.mxu0 0.0
    %5119 = vmatpush.msra.mxu0 0.0
    %5120 = vmatpush.msra.mxu0 0.0
    %5121 = vmatpush.msra.mxu0 0.0
    %5122 = vmatpush.msra.mxu0 0.0
    %5123 = vmatpush.msra.mxu0 0.0
    %5124 = vmatpush.msra.mxu0 0.0
    %5125 = vmatpush.msra.mxu0 0.0
    %5126 = vmatpush.msra.mxu0 0.0
    %5127 = vmatpush.msra.mxu0 0.0
    %5128 = vmatpush.msra.mxu0 0.0
    %5129 = vmatpush.msra.mxu0 0.0
    %5130 = vmatpush.msra.mxu0 %v3514
    %5131 = vmatpush.msra.mxu0 %v3513
    %5132 = vmatpush.msra.mxu0 %v3512
    %5133 = vmatpush.msra.mxu0 %v3511
    %5134 = vmatmul.f32.gmra.mxu0 %v1826
    %v5135 = vpop.f32.mrf.mxu0
    %v5136 = vadd.f32 %v5117, %v5135
    %5137 = vmatmul.f32.gmra.mxu0 %v1829
    %v5138 = vpop.f32.mrf.mxu0
    %v5139 = vadd.f32 %v5117, %v5138
    %5140 = vmatmul.f32.gmra.mxu0 %v1832
    %v5141 = vpop.f32.mrf.mxu0
    %v5142 = vadd.f32 %v5117, %v5141
    %5143 = vmatmul.f32.gmra.mxu0 %v1835
    %v5144 = vpop.f32.mrf.mxu0
    %v5145 = vadd.f32 %v5117, %v5144
    %5146 = vdwg.mxu0
    %5147 = vxpose.xlu0.b32.start [1/16] %v5082, 128
    %5148 = vxpose.xlu0.b32.cont [2/16] 0.0, 128
    %5149 = vxpose.xlu0.b32.cont [3/16] 0.0, 128
    %5150 = vxpose.xlu0.b32.cont [4/16] 0.0, 128
    %5151 = vxpose.xlu0.b32.cont [5/16] 0.0, 128
    %5152 = vxpose.xlu0.b32.cont [6/16] 0.0, 128
    %5153 = vxpose.xlu0.b32.cont [7/16] 0.0, 128
    %5154 = vxpose.xlu0.b32.cont [8/16] 0.0, 128
    %5155 = vxpose.xlu0.b32.cont [9/16] 0.0, 128
    %5156 = vxpose.xlu0.b32.cont [10/16] 0.0, 128
    %5157 = vxpose.xlu0.b32.cont [11/16] 0.0, 128
    %5158 = vxpose.xlu0.b32.cont [12/16] 0.0, 128
    %5159 = vxpose.xlu0.b32.cont [13/16] 0.0, 128
    %5160 = vxpose.xlu0.b32.cont [14/16] 0.0, 128
    %5161 = vxpose.xlu0.b32.cont [15/16] 0.0, 128
    %5162 = vxpose.xlu0.b32.end [16/16] 0.0, 128
    %v5163 = vpop.trf.xlu0
    %v5164 = vpop.trf.xlu0
    %v5165 = vpop.trf.xlu0
    %v5166 = vpop.trf.xlu0
    %v5167 = vpop.trf.xlu0
    %v5168 = vpop.trf.xlu0
    %v5169 = vpop.trf.xlu0
    %v5170 = vpop.trf.xlu0
    %v5171 = vpop.trf.xlu0
    %v5172 = vpop.trf.xlu0
    %v5173 = vpop.trf.xlu0
    %v5174 = vpop.trf.xlu0
    %v5175 = vpop.trf.xlu0
    %v5176 = vpop.trf.xlu0
    %v5177 = vpop.trf.xlu0
    %v5178 = vpop.trf.xlu0
    %5179 = vxpose.xlu0.b32.start [1/16] %v5085, 128
    %5180 = vxpose.xlu0.b32.cont [2/16] 0.0, 128
    %5181 = vxpose.xlu0.b32.cont [3/16] 0.0, 128
    %5182 = vxpose.xlu0.b32.cont [4/16] 0.0, 128
    %5183 = vxpose.xlu0.b32.cont [5/16] 0.0, 128
    %5184 = vxpose.xlu0.b32.cont [6/16] 0.0, 128
    %5185 = vxpose.xlu0.b32.cont [7/16] 0.0, 128
    %5186 = vxpose.xlu0.b32.cont [8/16] 0.0, 128
    %5187 = vxpose.xlu0.b32.cont [9/16] 0.0, 128
    %5188 = vxpose.xlu0.b32.cont [10/16] 0.0, 128
    %5189 = vxpose.xlu0.b32.cont [11/16] 0.0, 128
    %5190 = vxpose.xlu0.b32.cont [12/16] 0.0, 128
    %5191 = vxpose.xlu0.b32.cont [13/16] 0.0, 128
    %5192 = vxpose.xlu0.b32.cont [14/16] 0.0, 128
    %5193 = vxpose.xlu0.b32.cont [15/16] 0.0, 128
    %5194 = vxpose.xlu0.b32.end [16/16] 0.0, 128
    %v5195 = vpop.trf.xlu0
    %v5196 = vpop.trf.xlu0
    %v5197 = vpop.trf.xlu0
    %v5198 = vpop.trf.xlu0
    %v5199 = vpop.trf.xlu0
    %v5200 = vpop.trf.xlu0
    %v5201 = vpop.trf.xlu0
    %v5202 = vpop.trf.xlu0
    %v5203 = vpop.trf.xlu0
    %v5204 = vpop.trf.xlu0
    %v5205 = vpop.trf.xlu0
    %v5206 = vpop.trf.xlu0
    %v5207 = vpop.trf.xlu0
    %v5208 = vpop.trf.xlu0
    %v5209 = vpop.trf.xlu0
    %v5210 = vpop.trf.xlu0
    %5211 = vxpose.xlu0.b32.start [1/16] %v5163, 128
    %5212 = vxpose.xlu0.b32.cont [2/16] 0.0, 128
    %5213 = vxpose.xlu0.b32.cont [3/16] 0.0, 128
    %5214 = vxpose.xlu0.b32.cont [4/16] 0.0, 128
    %5215 = vxpose.xlu0.b32.cont [5/16] 0.0, 128
    %5216 = vxpose.xlu0.b32.cont [6/16] 0.0, 128
    %5217 = vxpose.xlu0.b32.cont [7/16] 0.0, 128
    %5218 = vxpose.xlu0.b32.cont [8/16] 0.0, 128
    %5219 = vxpose.xlu0.b32.cont [9/16] 0.0, 128
    %5220 = vxpose.xlu0.b32.cont [10/16] 0.0, 128
    %5221 = vxpose.xlu0.b32.cont [11/16] 0.0, 128
    %5222 = vxpose.xlu0.b32.cont [12/16] 0.0, 128
    %5223 = vxpose.xlu0.b32.cont [13/16] 0.0, 128
    %5224 = vxpose.xlu0.b32.cont [14/16] 0.0, 128
    %5225 = vxpose.xlu0.b32.cont [15/16] 0.0, 128
    %5226 = vxpose.xlu0.b32.end [16/16] 0.0, 128
    %v5227 = vpop.trf.xlu0
    %v5228 = vpop.trf.xlu0
    %v5229 = vpop.trf.xlu0
    %v5230 = vpop.trf.xlu0
    %v5231 = vpop.trf.xlu0
    %v5232 = vpop.trf.xlu0
    %v5233 = vpop.trf.xlu0
    %v5234 = vpop.trf.xlu0
    %v5235 = vpop.trf.xlu0
    %v5236 = vpop.trf.xlu0
    %v5237 = vpop.trf.xlu0
    %v5238 = vpop.trf.xlu0
    %v5239 = vpop.trf.xlu0
    %v5240 = vpop.trf.xlu0
    %v5241 = vpop.trf.xlu0
    %v5242 = vpop.trf.xlu0
    %5243 = vxpose.xlu0.b32.start [1/16] %v5164, 128
    %5244 = vxpose.xlu0.b32.cont [2/16] 0.0, 128
    %5245 = vxpose.xlu0.b32.cont [3/16] 0.0, 128
    %5246 = vxpose.xlu0.b32.cont [4/16] 0.0, 128
    %5247 = vxpose.xlu0.b32.cont [5/16] 0.0, 128
    %5248 = vxpose.xlu0.b32.cont [6/16] 0.0, 128
    %5249 = vxpose.xlu0.b32.cont [7/16] 0.0, 128
    %5250 = vxpose.xlu0.b32.cont [8/16] 0.0, 128
    %5251 = vxpose.xlu0.b32.cont [9/16] 0.0, 128
    %5252 = vxpose.xlu0.b32.cont [10/16] 0.0, 128
    %5253 = vxpose.xlu0.b32.cont [11/16] 0.0, 128
    %5254 = vxpose.xlu0.b32.cont [12/16] 0.0, 128
    %5255 = vxpose.xlu0.b32.cont [13/16] 0.0, 128
    %5256 = vxpose.xlu0.b32.cont [14/16] 0.0, 128
    %5257 = vxpose.xlu0.b32.cont [15/16] 0.0, 128
    %5258 = vxpose.xlu0.b32.end [16/16] 0.0, 128
    %v5259 = vpop.trf.xlu0
    %v5260 = vpop.trf.xlu0
    %v5261 = vpop.trf.xlu0
    %v5262 = vpop.trf.xlu0
    %v5263 = vpop.trf.xlu0
    %v5264 = vpop.trf.xlu0
    %v5265 = vpop.trf.xlu0
    %v5266 = vpop.trf.xlu0
    %v5267 = vpop.trf.xlu0
    %v5268 = vpop.trf.xlu0
    %v5269 = vpop.trf.xlu0
    %v5270 = vpop.trf.xlu0
    %v5271 = vpop.trf.xlu0
    %v5272 = vpop.trf.xlu0
    %v5273 = vpop.trf.xlu0
    %v5274 = vpop.trf.xlu0
    %5275 = vxpose.xlu0.b32.start [1/16] %v5165, 128
    %5276 = vxpose.xlu0.b32.cont [2/16] 0.0, 128
    %5277 = vxpose.xlu0.b32.cont [3/16] 0.0, 128
    %5278 = vxpose.xlu0.b32.cont [4/16] 0.0, 128
    %5279 = vxpose.xlu0.b32.cont [5/16] 0.0, 128
    %5280 = vxpose.xlu0.b32.cont [6/16] 0.0, 128
    %5281 = vxpose.xlu0.b32.cont [7/16] 0.0, 128
    %5282 = vxpose.xlu0.b32.cont [8/16] 0.0, 128
    %5283 = vxpose.xlu0.b32.cont [9/16] 0.0, 128
    %5284 = vxpose.xlu0.b32.cont [10/16] 0.0, 128
    %5285 = vxpose.xlu0.b32.cont [11/16] 0.0, 128
    %5286 = vxpose.xlu0.b32.cont [12/16] 0.0, 128
    %5287 = vxpose.xlu0.b32.cont [13/16] 0.0, 128
    %5288 = vxpose.xlu0.b32.cont [14/16] 0.0, 128
    %5289 = vxpose.xlu0.b32.cont [15/16] 0.0, 128
    %5290 = vxpose.xlu0.b32.end [16/16] 0.0, 128
    %v5291 = vpop.trf.xlu0
    %v5292 = vpop.trf.xlu0
    %v5293 = vpop.trf.xlu0
    %v5294 = vpop.trf.xlu0
    %v5295 = vpop.trf.xlu0
    %v5296 = vpop.trf.xlu0
    %v5297 = vpop.trf.xlu0
    %v5298 = vpop.trf.xlu0
    %v5299 = vpop.trf.xlu0
    %v5300 = vpop.trf.xlu0
    %v5301 = vpop.trf.xlu0
    %v5302 = vpop.trf.xlu0
    %v5303 = vpop.trf.xlu0
    %v5304 = vpop.trf.xlu0
    %v5305 = vpop.trf.xlu0
    %v5306 = vpop.trf.xlu0
    %5307 = vxpose.xlu0.b32.start [1/16] %v5166, 128
    %5308 = vxpose.xlu0.b32.cont [2/16] 0.0, 128
    %5309 = vxpose.xlu0.b32.cont [3/16] 0.0, 128
    %5310 = vxpose.xlu0.b32.cont [4/16] 0.0, 128
    %5311 = vxpose.xlu0.b32.cont [5/16] 0.0, 128
    %5312 = vxpose.xlu0.b32.cont [6/16] 0.0, 128
    %5313 = vxpose.xlu0.b32.cont [7/16] 0.0, 128
    %5314 = vxpose.xlu0.b32.cont [8/16] 0.0, 128
    %5315 = vxpose.xlu0.b32.cont [9/16] 0.0, 128
    %5316 = vxpose.xlu0.b32.cont [10/16] 0.0, 128
    %5317 = vxpose.xlu0.b32.cont [11/16] 0.0, 128
    %5318 = vxpose.xlu0.b32.cont [12/16] 0.0, 128
    %5319 = vxpose.xlu0.b32.cont [13/16] 0.0, 128
    %5320 = vxpose.xlu0.b32.cont [14/16] 0.0, 128
    %5321 = vxpose.xlu0.b32.cont [15/16] 0.0, 128
    %5322 = vxpose.xlu0.b32.end [16/16] 0.0, 128
    %v5323 = vpop.trf.xlu0
    %v5324 = vpop.trf.xlu0
    %v5325 = vpop.trf.xlu0
    %v5326 = vpop.trf.xlu0
    %v5327 = vpop.trf.xlu0
    %v5328 = vpop.trf.xlu0
    %v5329 = vpop.trf.xlu0
    %v5330 = vpop.trf.xlu0
    %v5331 = vpop.trf.xlu0
    %v5332 = vpop.trf.xlu0
    %v5333 = vpop.trf.xlu0
    %v5334 = vpop.trf.xlu0
    %v5335 = vpop.trf.xlu0
    %v5336 = vpop.trf.xlu0
    %v5337 = vpop.trf.xlu0
    %v5338 = vpop.trf.xlu0
    %5339 = vxpose.xlu0.b32.start [1/16] %v5195, 128
    %5340 = vxpose.xlu0.b32.cont [2/16] 0.0, 128
    %5341 = vxpose.xlu0.b32.cont [3/16] 0.0, 128
    %5342 = vxpose.xlu0.b32.cont [4/16] 0.0, 128
    %5343 = vxpose.xlu0.b32.cont [5/16] 0.0, 128
    %5344 = vxpose.xlu0.b32.cont [6/16] 0.0, 128
    %5345 = vxpose.xlu0.b32.cont [7/16] 0.0, 128
    %5346 = vxpose.xlu0.b32.cont [8/16] 0.0, 128
    %5347 = vxpose.xlu0.b32.cont [9/16] 0.0, 128
    %5348 = vxpose.xlu0.b32.cont [10/16] 0.0, 128
    %5349 = vxpose.xlu0.b32.cont [11/16] 0.0, 128
    %5350 = vxpose.xlu0.b32.cont [12/16] 0.0, 128
    %5351 = vxpose.xlu0.b32.cont [13/16] 0.0, 128
    %5352 = vxpose.xlu0.b32.cont [14/16] 0.0, 128
    %5353 = vxpose.xlu0.b32.cont [15/16] 0.0, 128
    %5354 = vxpose.xlu0.b32.end [16/16] 0.0, 128
    %v5355 = vpop.trf.xlu0
    %v5356 = vpop.trf.xlu0
    %v5357 = vpop.trf.xlu0
    %v5358 = vpop.trf.xlu0
    %v5359 = vpop.trf.xlu0
    %v5360 = vpop.trf.xlu0
    %v5361 = vpop.trf.xlu0
    %v5362 = vpop.trf.xlu0
    %v5363 = vpop.trf.xlu0
    %v5364 = vpop.trf.xlu0
    %v5365 = vpop.trf.xlu0
    %v5366 = vpop.trf.xlu0
    %v5367 = vpop.trf.xlu0
    %v5368 = vpop.trf.xlu0
    %v5369 = vpop.trf.xlu0
    %v5370 = vpop.trf.xlu0
    %5371 = vxpose.xlu0.b32.start [1/16] %v5196, 128
    %5372 = vxpose.xlu0.b32.cont [2/16] 0.0, 128
    %5373 = vxpose.xlu0.b32.cont [3/16] 0.0, 128
    %5374 = vxpose.xlu0.b32.cont [4/16] 0.0, 128
    %5375 = vxpose.xlu0.b32.cont [5/16] 0.0, 128
    %5376 = vxpose.xlu0.b32.cont [6/16] 0.0, 128
    %5377 = vxpose.xlu0.b32.cont [7/16] 0.0, 128
    %5378 = vxpose.xlu0.b32.cont [8/16] 0.0, 128
    %5379 = vxpose.xlu0.b32.cont [9/16] 0.0, 128
    %5380 = vxpose.xlu0.b32.cont [10/16] 0.0, 128
    %5381 = vxpose.xlu0.b32.cont [11/16] 0.0, 128
    %5382 = vxpose.xlu0.b32.cont [12/16] 0.0, 128
    %5383 = vxpose.xlu0.b32.cont [13/16] 0.0, 128
    %5384 = vxpose.xlu0.b32.cont [14/16] 0.0, 128
    %5385 = vxpose.xlu0.b32.cont [15/16] 0.0, 128
    %5386 = vxpose.xlu0.b32.end [16/16] 0.0, 128
    %v5387 = vpop.trf.xlu0
    %v5388 = vpop.trf.xlu0
    %v5389 = vpop.trf.xlu0
    %v5390 = vpop.trf.xlu0
    %v5391 = vpop.trf.xlu0
    %v5392 = vpop.trf.xlu0
    %v5393 = vpop.trf.xlu0
    %v5394 = vpop.trf.xlu0
    %v5395 = vpop.trf.xlu0
    %v5396 = vpop.trf.xlu0
    %v5397 = vpop.trf.xlu0
    %v5398 = vpop.trf.xlu0
    %v5399 = vpop.trf.xlu0
    %v5400 = vpop.trf.xlu0
    %v5401 = vpop.trf.xlu0
    %v5402 = vpop.trf.xlu0
    %5403 = vxpose.xlu0.b32.start [1/16] %v5197, 128
    %5404 = vxpose.xlu0.b32.cont [2/16] 0.0, 128
    %5405 = vxpose.xlu0.b32.cont [3/16] 0.0, 128
    %5406 = vxpose.xlu0.b32.cont [4/16] 0.0, 128
    %5407 = vxpose.xlu0.b32.cont [5/16] 0.0, 128
    %5408 = vxpose.xlu0.b32.cont [6/16] 0.0, 128
    %5409 = vxpose.xlu0.b32.cont [7/16] 0.0, 128
    %5410 = vxpose.xlu0.b32.cont [8/16] 0.0, 128
    %5411 = vxpose.xlu0.b32.cont [9/16] 0.0, 128
    %5412 = vxpose.xlu0.b32.cont [10/16] 0.0, 128
    %5413 = vxpose.xlu0.b32.cont [11/16] 0.0, 128
    %5414 = vxpose.xlu0.b32.cont [12/16] 0.0, 128
    %5415 = vxpose.xlu0.b32.cont [13/16] 0.0, 128
    %5416 = vxpose.xlu0.b32.cont [14/16] 0.0, 128
    %5417 = vxpose.xlu0.b32.cont [15/16] 0.0, 128
    %5418 = vxpose.xlu0.b32.end [16/16] 0.0, 128
    %v5419 = vpop.trf.xlu0
    %v5420 = vpop.trf.xlu0
    %v5421 = vpop.trf.xlu0
    %v5422 = vpop.trf.xlu0
    %v5423 = vpop.trf.xlu0
    %v5424 = vpop.trf.xlu0
    %v5425 = vpop.trf.xlu0
    %v5426 = vpop.trf.xlu0
    %v5427 = vpop.trf.xlu0
    %v5428 = vpop.trf.xlu0
    %v5429 = vpop.trf.xlu0
    %v5430 = vpop.trf.xlu0
    %v5431 = vpop.trf.xlu0
    %v5432 = vpop.trf.xlu0
    %v5433 = vpop.trf.xlu0
    %v5434 = vpop.trf.xlu0
    %5435 = vxpose.xlu0.b32.start [1/16] %v5198, 128
    %5436 = vxpose.xlu0.b32.cont [2/16] 0.0, 128
    %5437 = vxpose.xlu0.b32.cont [3/16] 0.0, 128
    %5438 = vxpose.xlu0.b32.cont [4/16] 0.0, 128
    %5439 = vxpose.xlu0.b32.cont [5/16] 0.0, 128
    %5440 = vxpose.xlu0.b32.cont [6/16] 0.0, 128
    %5441 = vxpose.xlu0.b32.cont [7/16] 0.0, 128
    %5442 = vxpose.xlu0.b32.cont [8/16] 0.0, 128
    %5443 = vxpose.xlu0.b32.cont [9/16] 0.0, 128
    %5444 = vxpose.xlu0.b32.cont [10/16] 0.0, 128
    %5445 = vxpose.xlu0.b32.cont [11/16] 0.0, 128
    %5446 = vxpose.xlu0.b32.cont [12/16] 0.0, 128
    %5447 = vxpose.xlu0.b32.cont [13/16] 0.0, 128
    %5448 = vxpose.xlu0.b32.cont [14/16] 0.0, 128
    %5449 = vxpose.xlu0.b32.cont [15/16] 0.0, 128
    %5450 = vxpose.xlu0.b32.end [16/16] 0.0, 128
    %v5451 = vpop.trf.xlu0
    %v5452 = vpop.trf.xlu0
    %v5453 = vpop.trf.xlu0
    %v5454 = vpop.trf.xlu0
    %v5455 = vpop.trf.xlu0
    %v5456 = vpop.trf.xlu0
    %v5457 = vpop.trf.xlu0
    %v5458 = vpop.trf.xlu0
    %v5459 = vpop.trf.xlu0
    %v5460 = vpop.trf.xlu0
    %v5461 = vpop.trf.xlu0
    %v5462 = vpop.trf.xlu0
    %v5463 = vpop.trf.xlu0
    %v5464 = vpop.trf.xlu0
    %v5465 = vpop.trf.xlu0
    %v5466 = vpop.trf.xlu0
    %5467 = vxpose.xlu0.b32.start [1/16] %v5106, 128
    %5468 = vxpose.xlu0.b32.cont [2/16] %v5109, 128
    %5469 = vxpose.xlu0.b32.cont [3/16] 0.0, 128
    %5470 = vxpose.xlu0.b32.cont [4/16] 0.0, 128
    %5471 = vxpose.xlu0.b32.cont [5/16] 0.0, 128
    %5472 = vxpose.xlu0.b32.cont [6/16] 0.0, 128
    %5473 = vxpose.xlu0.b32.cont [7/16] 0.0, 128
    %5474 = vxpose.xlu0.b32.cont [8/16] 0.0, 128
    %5475 = vxpose.xlu0.b32.cont [9/16] 0.0, 128
    %5476 = vxpose.xlu0.b32.cont [10/16] 0.0, 128
    %5477 = vxpose.xlu0.b32.cont [11/16] 0.0, 128
    %5478 = vxpose.xlu0.b32.cont [12/16] 0.0, 128
    %5479 = vxpose.xlu0.b32.cont [13/16] 0.0, 128
    %5480 = vxpose.xlu0.b32.cont [14/16] 0.0, 128
    %5481 = vxpose.xlu0.b32.cont [15/16] 0.0, 128
    %5482 = vxpose.xlu0.b32.end [16/16] 0.0, 128
    %v5483 = vpop.trf.xlu0
    %v5484 = vpop.trf.xlu0
    %v5485 = vpop.trf.xlu0
    %v5486 = vpop.trf.xlu0
    %v5487 = vpop.trf.xlu0
    %v5488 = vpop.trf.xlu0
    %v5489 = vpop.trf.xlu0
    %v5490 = vpop.trf.xlu0
    %v5491 = vpop.trf.xlu0
    %v5492 = vpop.trf.xlu0
    %v5493 = vpop.trf.xlu0
    %v5494 = vpop.trf.xlu0
    %v5495 = vpop.trf.xlu0
    %v5496 = vpop.trf.xlu0
    %v5497 = vpop.trf.xlu0
    %v5498 = vpop.trf.xlu0
    %5499 = vxpose.xlu0.b32.start [1/16] %v5112, 128
    %5500 = vxpose.xlu0.b32.cont [2/16] %v5115, 128
    %5501 = vxpose.xlu0.b32.cont [3/16] 0.0, 128
    %5502 = vxpose.xlu0.b32.cont [4/16] 0.0, 128
    %5503 = vxpose.xlu0.b32.cont [5/16] 0.0, 128
    %5504 = vxpose.xlu0.b32.cont [6/16] 0.0, 128
    %5505 = vxpose.xlu0.b32.cont [7/16] 0.0, 128
    %5506 = vxpose.xlu0.b32.cont [8/16] 0.0, 128
    %5507 = vxpose.xlu0.b32.cont [9/16] 0.0, 128
    %5508 = vxpose.xlu0.b32.cont [10/16] 0.0, 128
    %5509 = vxpose.xlu0.b32.cont [11/16] 0.0, 128
    %5510 = vxpose.xlu0.b32.cont [12/16] 0.0, 128
    %5511 = vxpose.xlu0.b32.cont [13/16] 0.0, 128
    %5512 = vxpose.xlu0.b32.cont [14/16] 0.0, 128
    %5513 = vxpose.xlu0.b32.cont [15/16] 0.0, 128
    %5514 = vxpose.xlu0.b32.end [16/16] 0.0, 128
    %v5515 = vpop.trf.xlu0
    %v5516 = vpop.trf.xlu0
    %v5517 = vpop.trf.xlu0
    %v5518 = vpop.trf.xlu0
    %v5519 = vpop.trf.xlu0
    %v5520 = vpop.trf.xlu0
    %v5521 = vpop.trf.xlu0
    %v5522 = vpop.trf.xlu0
    %v5523 = vpop.trf.xlu0
    %v5524 = vpop.trf.xlu0
    %v5525 = vpop.trf.xlu0
    %v5526 = vpop.trf.xlu0
    %v5527 = vpop.trf.xlu0
    %v5528 = vpop.trf.xlu0
    %v5529 = vpop.trf.xlu0
    %v5530 = vpop.trf.xlu0
    %5531 = vxpose.xlu0.b32.start [1/16] %v5136, 128
    %5532 = vxpose.xlu0.b32.cont [2/16] %v5139, 128
    %5533 = vxpose.xlu0.b32.cont [3/16] 0.0, 128
    %5534 = vxpose.xlu0.b32.cont [4/16] 0.0, 128
    %5535 = vxpose.xlu0.b32.cont [5/16] 0.0, 128
    %5536 = vxpose.xlu0.b32.cont [6/16] 0.0, 128
    %5537 = vxpose.xlu0.b32.cont [7/16] 0.0, 128
    %5538 = vxpose.xlu0.b32.cont [8/16] 0.0, 128
    %5539 = vxpose.xlu0.b32.cont [9/16] 0.0, 128
    %5540 = vxpose.xlu0.b32.cont [10/16] 0.0, 128
    %5541 = vxpose.xlu0.b32.cont [11/16] 0.0, 128
    %5542 = vxpose.xlu0.b32.cont [12/16] 0.0, 128
    %5543 = vxpose.xlu0.b32.cont [13/16] 0.0, 128
    %5544 = vxpose.xlu0.b32.cont [14/16] 0.0, 128
    %5545 = vxpose.xlu0.b32.cont [15/16] 0.0, 128
    %5546 = vxpose.xlu0.b32.end [16/16] 0.0, 128
    %v5547 = vpop.trf.xlu0
    %v5548 = vpop.trf.xlu0
    %v5549 = vpop.trf.xlu0
    %v5550 = vpop.trf.xlu0
    %v5551 = vpop.trf.xlu0
    %v5552 = vpop.trf.xlu0
    %v5553 = vpop.trf.xlu0
    %v5554 = vpop.trf.xlu0
    %v5555 = vpop.trf.xlu0
    %v5556 = vpop.trf.xlu0
    %v5557 = vpop.trf.xlu0
    %v5558 = vpop.trf.xlu0
    %v5559 = vpop.trf.xlu0
    %v5560 = vpop.trf.xlu0
    %v5561 = vpop.trf.xlu0
    %v5562 = vpop.trf.xlu0
    %5563 = vxpose.xlu0.b32.start [1/16] %v5142, 128
    %5564 = vxpose.xlu0.b32.cont [2/16] %v5145, 128
    %5565 = vxpose.xlu0.b32.cont [3/16] 0.0, 128
    %5566 = vxpose.xlu0.b32.cont [4/16] 0.0, 128
    %5567 = vxpose.xlu0.b32.cont [5/16] 0.0, 128
    %5568 = vxpose.xlu0.b32.cont [6/16] 0.0, 128
    %5569 = vxpose.xlu0.b32.cont [7/16] 0.0, 128
    %5570 = vxpose.xlu0.b32.cont [8/16] 0.0, 128
    %5571 = vxpose.xlu0.b32.cont [9/16] 0.0, 128
    %5572 = vxpose.xlu0.b32.cont [10/16] 0.0, 128
    %5573 = vxpose.xlu0.b32.cont [11/16] 0.0, 128
    %5574 = vxpose.xlu0.b32.cont [12/16] 0.0, 128
    %5575 = vxpose.xlu0.b32.cont [13/16] 0.0, 128
    %5576 = vxpose.xlu0.b32.cont [14/16] 0.0, 128
    %5577 = vxpose.xlu0.b32.cont [15/16] 0.0, 128
    %5578 = vxpose.xlu0.b32.end [16/16] 0.0, 128
    %v5579 = vpop.trf.xlu0
    %v5580 = vpop.trf.xlu0
    %v5581 = vpop.trf.xlu0
    %v5582 = vpop.trf.xlu0
    %v5583 = vpop.trf.xlu0
    %v5584 = vpop.trf.xlu0
    %v5585 = vpop.trf.xlu0
    %v5586 = vpop.trf.xlu0
    %v5587 = vpop.trf.xlu0
    %v5588 = vpop.trf.xlu0
    %v5589 = vpop.trf.xlu0
    %v5590 = vpop.trf.xlu0
    %v5591 = vpop.trf.xlu0
    %v5592 = vpop.trf.xlu0
    %v5593 = vpop.trf.xlu0
    %v5594 = vpop.trf.xlu0
    %v5596 = vsel %vm755, %v5227, 0
    %5598 = vmatpush.msra.mxu0 0.0
    %5599 = vmatpush.msra.mxu0 0.0
    %5600 = vmatpush.msra.mxu0 0.0
    %5601 = vmatpush.msra.mxu0 0.0
    %5602 = vmatpush.msra.mxu0 0.0
    %5603 = vmatpush.msra.mxu0 0.0
    %5604 = vmatpush.msra.mxu0 0.0
    %5605 = vmatpush.msra.mxu0 0.0
    %5606 = vmatpush.msra.mxu0 0.0
    %5607 = vmatpush.msra.mxu0 0.0
    %5608 = vmatpush.msra.mxu0 0.0
    %5609 = vmatpush.msra.mxu0 0.0
    %5610 = vmatpush.msra.mxu0 0.0
    %5611 = vmatpush.msra.mxu0 0.0
    %5612 = vmatpush.msra.mxu0 0.0
    %5613 = vmatpush.msra.mxu0 %v5483
    %5614 = vmatmul.f32.gmra.mxu0 %v5596
    %v5615 = vpop.f32.mrf.mxu0
    %v5616 = vadd.f32 0.0, %v5615
    %5617 = vdwg.mxu0
    %v5619 = vsel %vm755, %v5259, 0
    %5621 = vmatpush.msra.mxu0 0.0
    %5622 = vmatpush.msra.mxu0 0.0
    %5623 = vmatpush.msra.mxu0 0.0
    %5624 = vmatpush.msra.mxu0 0.0
    %5625 = vmatpush.msra.mxu0 0.0
    %5626 = vmatpush.msra.mxu0 0.0
    %5627 = vmatpush.msra.mxu0 0.0
    %5628 = vmatpush.msra.mxu0 0.0
    %5629 = vmatpush.msra.mxu0 0.0
    %5630 = vmatpush.msra.mxu0 0.0
    %5631 = vmatpush.msra.mxu0 0.0
    %5632 = vmatpush.msra.mxu0 0.0
    %5633 = vmatpush.msra.mxu0 0.0
    %5634 = vmatpush.msra.mxu0 0.0
    %5635 = vmatpush.msra.mxu0 0.0
    %5636 = vmatpush.msra.mxu0 %v5484
    %5637 = vmatmul.f32.gmra.mxu0 %v5619
    %v5638 = vpop.f32.mrf.mxu0
    %v5639 = vadd.f32 0.0, %v5638
    %5640 = vdwg.mxu0
    %v5642 = vsel %vm755, %v5291, 0
    %5644 = vmatpush.msra.mxu0 0.0
    %5645 = vmatpush.msra.mxu0 0.0
    %5646 = vmatpush.msra.mxu0 0.0
    %5647 = vmatpush.msra.mxu0 0.0
    %5648 = vmatpush.msra.mxu0 0.0
    %5649 = vmatpush.msra.mxu0 0.0
    %5650 = vmatpush.msra.mxu0 0.0
    %5651 = vmatpush.msra.mxu0 0.0
    %5652 = vmatpush.msra.mxu0 0.0
    %5653 = vmatpush.msra.mxu0 0.0
    %5654 = vmatpush.msra.mxu0 0.0
    %5655 = vmatpush.msra.mxu0 0.0
    %5656 = vmatpush.msra.mxu0 0.0
    %5657 = vmatpush.msra.mxu0 0.0
    %5658 = vmatpush.msra.mxu0 0.0
    %5659 = vmatpush.msra.mxu0 %v5485
    %5660 = vmatmul.f32.gmra.mxu0 %v5642
    %v5661 = vpop.f32.mrf.mxu0
    %v5662 = vadd.f32 0.0, %v5661
    %5663 = vdwg.mxu0
    %v5665 = vsel %vm755, %v5323, 0
    %5667 = vmatpush.msra.mxu0 0.0
    %5668 = vmatpush.msra.mxu0 0.0
    %5669 = vmatpush.msra.mxu0 0.0
    %5670 = vmatpush.msra.mxu0 0.0
    %5671 = vmatpush.msra.mxu0 0.0
    %5672 = vmatpush.msra.mxu0 0.0
    %5673 = vmatpush.msra.mxu0 0.0
    %5674 = vmatpush.msra.mxu0 0.0
    %5675 = vmatpush.msra.mxu0 0.0
    %5676 = vmatpush.msra.mxu0 0.0
    %5677 = vmatpush.msra.mxu0 0.0
    %5678 = vmatpush.msra.mxu0 0.0
    %5679 = vmatpush.msra.mxu0 0.0
    %5680 = vmatpush.msra.mxu0 0.0
    %5681 = vmatpush.msra.mxu0 0.0
    %5682 = vmatpush.msra.mxu0 %v5486
    %5683 = vmatmul.f32.gmra.mxu0 %v5665
    %v5684 = vpop.f32.mrf.mxu0
    %v5685 = vadd.f32 0.0, %v5684
    %5686 = vdwg.mxu0
    %v5688 = vsel %vm755, %v5355, 0
    %5690 = vmatpush.msra.mxu0 0.0
    %5691 = vmatpush.msra.mxu0 0.0
    %5692 = vmatpush.msra.mxu0 0.0
    %5693 = vmatpush.msra.mxu0 0.0
    %5694 = vmatpush.msra.mxu0 0.0
    %5695 = vmatpush.msra.mxu0 0.0
    %5696 = vmatpush.msra.mxu0 0.0
    %5697 = vmatpush.msra.mxu0 0.0
    %5698 = vmatpush.msra.mxu0 0.0
    %5699 = vmatpush.msra.mxu0 0.0
    %5700 = vmatpush.msra.mxu0 0.0
    %5701 = vmatpush.msra.mxu0 0.0
    %5702 = vmatpush.msra.mxu0 0.0
    %5703 = vmatpush.msra.mxu0 0.0
    %5704 = vmatpush.msra.mxu0 0.0
    %5705 = vmatpush.msra.mxu0 %v5515
    %5706 = vmatmul.f32.gmra.mxu0 %v5688
    %v5707 = vpop.f32.mrf.mxu0
    %v5708 = vadd.f32 0.0, %v5707
    %5709 = vdwg.mxu0
    %v5711 = vsel %vm755, %v5387, 0
    %5713 = vmatpush.msra.mxu0 0.0
    %5714 = vmatpush.msra.mxu0 0.0
    %5715 = vmatpush.msra.mxu0 0.0
    %5716 = vmatpush.msra.mxu0 0.0
    %5717 = vmatpush.msra.mxu0 0.0
    %5718 = vmatpush.msra.mxu0 0.0
    %5719 = vmatpush.msra.mxu0 0.0
    %5720 = vmatpush.msra.mxu0 0.0
    %5721 = vmatpush.msra.mxu0 0.0
    %5722 = vmatpush.msra.mxu0 0.0
    %5723 = vmatpush.msra.mxu0 0.0
    %5724 = vmatpush.msra.mxu0 0.0
    %5725 = vmatpush.msra.mxu0 0.0
    %5726 = vmatpush.msra.mxu0 0.0
    %5727 = vmatpush.msra.mxu0 0.0
    %5728 = vmatpush.msra.mxu0 %v5516
    %5729 = vmatmul.f32.gmra.mxu0 %v5711
    %v5730 = vpop.f32.mrf.mxu0
    %v5731 = vadd.f32 0.0, %v5730
    %5732 = vdwg.mxu0
    %v5734 = vsel %vm755, %v5419, 0
    %5736 = vmatpush.msra.mxu0 0.0
    %5737 = vmatpush.msra.mxu0 0.0
    %5738 = vmatpush.msra.mxu0 0.0
    %5739 = vmatpush.msra.mxu0 0.0
    %5740 = vmatpush.msra.mxu0 0.0
    %5741 = vmatpush.msra.mxu0 0.0
    %5742 = vmatpush.msra.mxu0 0.0
    %5743 = vmatpush.msra.mxu0 0.0
    %5744 = vmatpush.msra.mxu0 0.0
    %5745 = vmatpush.msra.mxu0 0.0
    %5746 = vmatpush.msra.mxu0 0.0
    %5747 = vmatpush.msra.mxu0 0.0
    %5748 = vmatpush.msra.mxu0 0.0
    %5749 = vmatpush.msra.mxu0 0.0
    %5750 = vmatpush.msra.mxu0 0.0
    %5751 = vmatpush.msra.mxu0 %v5517
    %5752 = vmatmul.f32.gmra.mxu0 %v5734
    %v5753 = vpop.f32.mrf.mxu0
    %v5754 = vadd.f32 0.0, %v5753
    %5755 = vdwg.mxu0
    %v5757 = vsel %vm755, %v5451, 0
    %5759 = vmatpush.msra.mxu0 0.0
    %5760 = vmatpush.msra.mxu0 0.0
    %5761 = vmatpush.msra.mxu0 0.0
    %5762 = vmatpush.msra.mxu0 0.0
    %5763 = vmatpush.msra.mxu0 0.0
    %5764 = vmatpush.msra.mxu0 0.0
    %5765 = vmatpush.msra.mxu0 0.0
    %5766 = vmatpush.msra.mxu0 0.0
    %5767 = vmatpush.msra.mxu0 0.0
    %5768 = vmatpush.msra.mxu0 0.0
    %5769 = vmatpush.msra.mxu0 0.0
    %5770 = vmatpush.msra.mxu0 0.0
    %5771 = vmatpush.msra.mxu0 0.0
    %5772 = vmatpush.msra.mxu0 0.0
    %5773 = vmatpush.msra.mxu0 0.0
    %5774 = vmatpush.msra.mxu0 %v5518
    %5775 = vmatmul.f32.gmra.mxu0 %v5757
    %v5776 = vpop.f32.mrf.mxu0
    %v5777 = vadd.f32 0.0, %v5776
    %5778 = vdwg.mxu0
    %v5779 = vmul.f32 %v5616, 0.35355338
    %v5780 = vmul.f32 %v5639, 0.35355338
    %v5781 = vmul.f32 %v5662, 0.35355338
    %v5782 = vmul.f32 %v5685, 0.35355338
    %v5783 = vmul.f32 %v5708, 0.35355338
    %v5784 = vmul.f32 %v5731, 0.35355338
    %v5785 = vmul.f32 %v5754, 0.35355338
    %v5786 = vmul.f32 %v5777, 0.35355338
    %v5787 = vadd.f32 %v5779, %v2506
    %v5788 = vadd.f32 %v5780, %v2507
    %v5789 = vadd.f32 %v5781, %v2508
    %v5790 = vadd.f32 %v5782, %v2509
    %v5791 = vadd.f32 %v5783, %v2510
    %v5792 = vadd.f32 %v5784, %v2511
    %v5793 = vadd.f32 %v5785, %v2512
    %v5794 = vadd.f32 %v5786, %v2513
    %v5795 = vsel %vm2530, %v5787, -inf
    %5796 = vmax.xlane.f32.xlu0 %v5795
    %v5797 = vpop.xlane.xlu0 %5796
    %v5798 = vsel %vm2530, %v5788, -inf
    %5799 = vmax.xlane.f32.xlu0 %v5798
    %v5800 = vpop.xlane.xlu0 %5799
    %v5801 = vsel %vm2530, %v5789, -inf
    %5802 = vmax.xlane.f32.xlu0 %v5801
    %v5803 = vpop.xlane.xlu0 %5802
    %v5804 = vsel %vm2530, %v5790, -inf
    %5805 = vmax.xlane.f32.xlu0 %v5804
    %v5806 = vpop.xlane.xlu0 %5805
    %v5807 = vsel %vm2530, %v5791, -inf
    %5808 = vmax.xlane.f32.xlu0 %v5807
    %v5809 = vpop.xlane.xlu0 %5808
    %v5810 = vsel %vm2530, %v5792, -inf
    %5811 = vmax.xlane.f32.xlu0 %v5810
    %v5812 = vpop.xlane.xlu0 %5811
    %v5813 = vsel %vm2530, %v5793, -inf
    %5814 = vmax.xlane.f32.xlu0 %v5813
    %v5815 = vpop.xlane.xlu0 %5814
    %v5816 = vsel %vm2530, %v5794, -inf
    %5817 = vmax.xlane.f32.xlu0 %v5816
    %v5818 = vpop.xlane.xlu0 %5817
    %v5819 = vsub.f32 %v5787, %v5797
    %v5820 = vsub.f32 %v5788, %v5800
    %v5821 = vsub.f32 %v5789, %v5803
    %v5822 = vsub.f32 %v5790, %v5806
    %v5823 = vsub.f32 %v5791, %v5809
    %v5824 = vsub.f32 %v5792, %v5812
    %v5825 = vsub.f32 %v5793, %v5815
    %v5826 = vsub.f32 %v5794, %v5818
    %v5827 = vmul.f32 %v5819, 1.442695
    %v5828 = vpow.pop %v5827
    %v5829 = vmul.f32 %v5820, 1.442695
    %v5830 = vpow.pop %v5829
    %v5831 = vmul.f32 %v5821, 1.442695
    %v5832 = vpow.pop %v5831
    %v5833 = vmul.f32 %v5822, 1.442695
    %v5834 = vpow.pop %v5833
    %v5835 = vmul.f32 %v5823, 1.442695
    %v5836 = vpow.pop %v5835
    %v5837 = vmul.f32 %v5824, 1.442695
    %v5838 = vpow.pop %v5837
    %v5839 = vmul.f32 %v5825, 1.442695
    %v5840 = vpow.pop %v5839
    %v5841 = vmul.f32 %v5826, 1.442695
    %v5842 = vpow.pop %v5841
    %v5843 = vsel %vm2530, %v5828, 0.0
    %5844 = vadd.xlane.f32.xlu0 %v5843
    %v5845 = vpop.xlane.xlu0 %5844
    %v5846 = vsel %vm2530, %v5830, 0.0
    %5847 = vadd.xlane.f32.xlu0 %v5846
    %v5848 = vpop.xlane.xlu0 %5847
    %v5849 = vsel %vm2530, %v5832, 0.0
    %5850 = vadd.xlane.f32.xlu0 %v5849
    %v5851 = vpop.xlane.xlu0 %5850
    %v5852 = vsel %vm2530, %v5834, 0.0
    %5853 = vadd.xlane.f32.xlu0 %v5852
    %v5854 = vpop.xlane.xlu0 %5853
    %v5855 = vsel %vm2530, %v5836, 0.0
    %5856 = vadd.xlane.f32.xlu0 %v5855
    %v5857 = vpop.xlane.xlu0 %5856
    %v5858 = vsel %vm2530, %v5838, 0.0
    %5859 = vadd.xlane.f32.xlu0 %v5858
    %v5860 = vpop.xlane.xlu0 %5859
    %v5861 = vsel %vm2530, %v5840, 0.0
    %5862 = vadd.xlane.f32.xlu0 %v5861
    %v5863 = vpop.xlane.xlu0 %5862
    %v5864 = vsel %vm2530, %v5842, 0.0
    %5865 = vadd.xlane.f32.xlu0 %v5864
    %v5866 = vpop.xlane.xlu0 %5865
    %v5867 = vrcp.pop %v5845
    %v5868 = vmul.f32 %v5845, %v5867
    %v5869 = vsub.f32 1.0, %v5868
    %v5870 = vmul.f32 %v5867, %v5869
    %v5871 = vadd.f32 %v5867, %v5870
    %vm5872 = vweird.f32 %v5845
    %vm5873 = vweird.f32 %v5867
    %vm5874 = vmor %vm5872, %vm5873
    %v5875 = vsel %vm5874, %v5867, %v5871
    %v5876 = vand.u32 2147483647, %v5845
    %vm5877 = vcmp.eq.f32.partialorder %v5876, 8.507059e+37
    %v5878 = vand.u32 %v5845, 2147483648
    %v5879 = vor.u32 1.1754944e-38, %v5878
    %v5880 = vsel %vm5877, %v5879, %v5875
    %v5881 = vmul.f32 %v5828, %v5880
    %v5882 = vrcp.pop %v5848
    %v5883 = vmul.f32 %v5848, %v5882
    %v5884 = vsub.f32 1.0, %v5883
    %v5885 = vmul.f32 %v5882, %v5884
    %v5886 = vadd.f32 %v5882, %v5885
    %vm5887 = vweird.f32 %v5848
    %vm5888 = vweird.f32 %v5882
    %vm5889 = vmor %vm5887, %vm5888
    %v5890 = vsel %vm5889, %v5882, %v5886
    %v5891 = vand.u32 2147483647, %v5848
    %vm5892 = vcmp.eq.f32.partialorder %v5891, 8.507059e+37
    %v5893 = vand.u32 %v5848, 2147483648
    %v5894 = vor.u32 1.1754944e-38, %v5893
    %v5895 = vsel %vm5892, %v5894, %v5890
    %v5896 = vmul.f32 %v5830, %v5895
    %v5897 = vrcp.pop %v5851
    %v5898 = vmul.f32 %v5851, %v5897
    %v5899 = vsub.f32 1.0, %v5898
    %v5900 = vmul.f32 %v5897, %v5899
    %v5901 = vadd.f32 %v5897, %v5900
    %vm5902 = vweird.f32 %v5851
    %vm5903 = vweird.f32 %v5897
    %vm5904 = vmor %vm5902, %vm5903
    %v5905 = vsel %vm5904, %v5897, %v5901
    %v5906 = vand.u32 2147483647, %v5851
    %vm5907 = vcmp.eq.f32.partialorder %v5906, 8.507059e+37
    %v5908 = vand.u32 %v5851, 2147483648
    %v5909 = vor.u32 1.1754944e-38, %v5908
    %v5910 = vsel %vm5907, %v5909, %v5905
    %v5911 = vmul.f32 %v5832, %v5910
    %v5912 = vrcp.pop %v5854
    %v5913 = vmul.f32 %v5854, %v5912
    %v5914 = vsub.f32 1.0, %v5913
    %v5915 = vmul.f32 %v5912, %v5914
    %v5916 = vadd.f32 %v5912, %v5915
    %vm5917 = vweird.f32 %v5854
    %vm5918 = vweird.f32 %v5912
    %vm5919 = vmor %vm5917, %vm5918
    %v5920 = vsel %vm5919, %v5912, %v5916
    %v5921 = vand.u32 2147483647, %v5854
    %vm5922 = vcmp.eq.f32.partialorder %v5921, 8.507059e+37
    %v5923 = vand.u32 %v5854, 2147483648
    %v5924 = vor.u32 1.1754944e-38, %v5923
    %v5925 = vsel %vm5922, %v5924, %v5920
    %v5926 = vmul.f32 %v5834, %v5925
    %v5927 = vrcp.pop %v5857
    %v5928 = vmul.f32 %v5857, %v5927
    %v5929 = vsub.f32 1.0, %v5928
    %v5930 = vmul.f32 %v5927, %v5929
    %v5931 = vadd.f32 %v5927, %v5930
    %vm5932 = vweird.f32 %v5857
    %vm5933 = vweird.f32 %v5927
    %vm5934 = vmor %vm5932, %vm5933
    %v5935 = vsel %vm5934, %v5927, %v5931
    %v5936 = vand.u32 2147483647, %v5857
    %vm5937 = vcmp.eq.f32.partialorder %v5936, 8.507059e+37
    %v5938 = vand.u32 %v5857, 2147483648
    %v5939 = vor.u32 1.1754944e-38, %v5938
    %v5940 = vsel %vm5937, %v5939, %v5935
    %v5941 = vmul.f32 %v5836, %v5940
    %v5942 = vrcp.pop %v5860
    %v5943 = vmul.f32 %v5860, %v5942
    %v5944 = vsub.f32 1.0, %v5943
    %v5945 = vmul.f32 %v5942, %v5944
    %v5946 = vadd.f32 %v5942, %v5945
    %vm5947 = vweird.f32 %v5860
    %vm5948 = vweird.f32 %v5942
    %vm5949 = vmor %vm5947, %vm5948
    %v5950 = vsel %vm5949, %v5942, %v5946
    %v5951 = vand.u32 2147483647, %v5860
    %vm5952 = vcmp.eq.f32.partialorder %v5951, 8.507059e+37
    %v5953 = vand.u32 %v5860, 2147483648
    %v5954 = vor.u32 1.1754944e-38, %v5953
    %v5955 = vsel %vm5952, %v5954, %v5950
    %v5956 = vmul.f32 %v5838, %v5955
    %v5957 = vrcp.pop %v5863
    %v5958 = vmul.f32 %v5863, %v5957
    %v5959 = vsub.f32 1.0, %v5958
    %v5960 = vmul.f32 %v5957, %v5959
    %v5961 = vadd.f32 %v5957, %v5960
    %vm5962 = vweird.f32 %v5863
    %vm5963 = vweird.f32 %v5957
    %vm5964 = vmor %vm5962, %vm5963
    %v5965 = vsel %vm5964, %v5957, %v5961
    %v5966 = vand.u32 2147483647, %v5863
    %vm5967 = vcmp.eq.f32.partialorder %v5966, 8.507059e+37
    %v5968 = vand.u32 %v5863, 2147483648
    %v5969 = vor.u32 1.1754944e-38, %v5968
    %v5970 = vsel %vm5967, %v5969, %v5965
    %v5971 = vmul.f32 %v5840, %v5970
    %v5972 = vrcp.pop %v5866
    %v5973 = vmul.f32 %v5866, %v5972
    %v5974 = vsub.f32 1.0, %v5973
    %v5975 = vmul.f32 %v5972, %v5974
    %v5976 = vadd.f32 %v5972, %v5975
    %vm5977 = vweird.f32 %v5866
    %vm5978 = vweird.f32 %v5972
    %vm5979 = vmor %vm5977, %vm5978
    %v5980 = vsel %vm5979, %v5972, %v5976
    %v5981 = vand.u32 2147483647, %v5866
    %vm5982 = vcmp.eq.f32.partialorder %v5981, 8.507059e+37
    %v5983 = vand.u32 %v5866, 2147483648
    %v5984 = vor.u32 1.1754944e-38, %v5983
    %v5985 = vsel %vm5982, %v5984, %v5980
    %v5986 = vmul.f32 %v5842, %v5985
    %v5988 = vsel %vm2530, %v5881, 0
    %v5991 = vsel %vm2530, %v5547, 0
    %5993 = vmatpush.xpose.msra.mxu0 0.0
    %5994 = vmatpush.xpose.msra.mxu0 0.0
    %5995 = vmatpush.xpose.msra.mxu0 0.0
    %5996 = vmatpush.xpose.msra.mxu0 0.0
    %5997 = vmatpush.xpose.msra.mxu0 0.0
    %5998 = vmatpush.xpose.msra.mxu0 0.0
    %5999 = vmatpush.xpose.msra.mxu0 0.0
    %6000 = vmatpush.xpose.msra.mxu0 0.0
    %6001 = vmatpush.xpose.msra.mxu0 0.0
    %6002 = vmatpush.xpose.msra.mxu0 0.0
    %6003 = vmatpush.xpose.msra.mxu0 0.0
    %6004 = vmatpush.xpose.msra.mxu0 0.0
    %6005 = vmatpush.xpose.msra.mxu0 0.0
    %6006 = vmatpush.xpose.msra.mxu0 0.0
    %6007 = vmatpush.xpose.msra.mxu0 0.0
    %6008 = vmatpush.xpose.msra.mxu0 %v5991
    %6009 = vmatmul.f32.gmra.mxu0 %v5988
    %v6010 = vpop.f32.mrf.mxu0
    %v6011 = vadd.f32 0.0, %v6010
    %6012 = vdwg.mxu0
    %v6014 = vsel %vm2530, %v5896, 0
    %v6017 = vsel %vm2530, %v5548, 0
    %6019 = vmatpush.xpose.msra.mxu0 0.0
    %6020 = vmatpush.xpose.msra.mxu0 0.0
    %6021 = vmatpush.xpose.msra.mxu0 0.0
    %6022 = vmatpush.xpose.msra.mxu0 0.0
    %6023 = vmatpush.xpose.msra.mxu0 0.0
    %6024 = vmatpush.xpose.msra.mxu0 0.0
    %6025 = vmatpush.xpose.msra.mxu0 0.0
    %6026 = vmatpush.xpose.msra.mxu0 0.0
    %6027 = vmatpush.xpose.msra.mxu0 0.0
    %6028 = vmatpush.xpose.msra.mxu0 0.0
    %6029 = vmatpush.xpose.msra.mxu0 0.0
    %6030 = vmatpush.xpose.msra.mxu0 0.0
    %6031 = vmatpush.xpose.msra.mxu0 0.0
    %6032 = vmatpush.xpose.msra.mxu0 0.0
    %6033 = vmatpush.xpose.msra.mxu0 0.0
    %6034 = vmatpush.xpose.msra.mxu0 %v6017
    %6035 = vmatmul.f32.gmra.mxu0 %v6014
    %v6036 = vpop.f32.mrf.mxu0
    %v6037 = vadd.f32 0.0, %v6036
    %6038 = vdwg.mxu0
    %v6040 = vsel %vm2530, %v5911, 0
    %v6043 = vsel %vm2530, %v5549, 0
    %6045 = vmatpush.xpose.msra.mxu0 0.0
    %6046 = vmatpush.xpose.msra.mxu0 0.0
    %6047 = vmatpush.xpose.msra.mxu0 0.0
    %6048 = vmatpush.xpose.msra.mxu0 0.0
    %6049 = vmatpush.xpose.msra.mxu0 0.0
    %6050 = vmatpush.xpose.msra.mxu0 0.0
    %6051 = vmatpush.xpose.msra.mxu0 0.0
    %6052 = vmatpush.xpose.msra.mxu0 0.0
    %6053 = vmatpush.xpose.msra.mxu0 0.0
    %6054 = vmatpush.xpose.msra.mxu0 0.0
    %6055 = vmatpush.xpose.msra.mxu0 0.0
    %6056 = vmatpush.xpose.msra.mxu0 0.0
    %6057 = vmatpush.xpose.msra.mxu0 0.0
    %6058 = vmatpush.xpose.msra.mxu0 0.0
    %6059 = vmatpush.xpose.msra.mxu0 0.0
    %6060 = vmatpush.xpose.msra.mxu0 %v6043
    %6061 = vmatmul.f32.gmra.mxu0 %v6040
    %v6062 = vpop.f32.mrf.mxu0
    %v6063 = vadd.f32 0.0, %v6062
    %6064 = vdwg.mxu0
    %v6066 = vsel %vm2530, %v5926, 0
    %v6069 = vsel %vm2530, %v5550, 0
    %6071 = vmatpush.xpose.msra.mxu0 0.0
    %6072 = vmatpush.xpose.msra.mxu0 0.0
    %6073 = vmatpush.xpose.msra.mxu0 0.0
    %6074 = vmatpush.xpose.msra.mxu0 0.0
    %6075 = vmatpush.xpose.msra.mxu0 0.0
    %6076 = vmatpush.xpose.msra.mxu0 0.0
    %6077 = vmatpush.xpose.msra.mxu0 0.0
    %6078 = vmatpush.xpose.msra.mxu0 0.0
    %6079 = vmatpush.xpose.msra.mxu0 0.0
    %6080 = vmatpush.xpose.msra.mxu0 0.0
    %6081 = vmatpush.xpose.msra.mxu0 0.0
    %6082 = vmatpush.xpose.msra.mxu0 0.0
    %6083 = vmatpush.xpose.msra.mxu0 0.0
    %6084 = vmatpush.xpose.msra.mxu0 0.0
    %6085 = vmatpush.xpose.msra.mxu0 0.0
    %6086 = vmatpush.xpose.msra.mxu0 %v6069
    %6087 = vmatmul.f32.gmra.mxu0 %v6066
    %v6088 = vpop.f32.mrf.mxu0
    %v6089 = vadd.f32 0.0, %v6088
    %6090 = vdwg.mxu0
    %v6092 = vsel %vm2530, %v5941, 0
    %v6095 = vsel %vm2530, %v5579, 0
    %6097 = vmatpush.xpose.msra.mxu0 0.0
    %6098 = vmatpush.xpose.msra.mxu0 0.0
    %6099 = vmatpush.xpose.msra.mxu0 0.0
    %6100 = vmatpush.xpose.msra.mxu0 0.0
    %6101 = vmatpush.xpose.msra.mxu0 0.0
    %6102 = vmatpush.xpose.msra.mxu0 0.0
    %6103 = vmatpush.xpose.msra.mxu0 0.0
    %6104 = vmatpush.xpose.msra.mxu0 0.0
    %6105 = vmatpush.xpose.msra.mxu0 0.0
    %6106 = vmatpush.xpose.msra.mxu0 0.0
    %6107 = vmatpush.xpose.msra.mxu0 0.0
    %6108 = vmatpush.xpose.msra.mxu0 0.0
    %6109 = vmatpush.xpose.msra.mxu0 0.0
    %6110 = vmatpush.xpose.msra.mxu0 0.0
    %6111 = vmatpush.xpose.msra.mxu0 0.0
    %6112 = vmatpush.xpose.msra.mxu0 %v6095
    %6113 = vmatmul.f32.gmra.mxu0 %v6092
    %v6114 = vpop.f32.mrf.mxu0
    %v6115 = vadd.f32 0.0, %v6114
    %6116 = vdwg.mxu0
    %v6118 = vsel %vm2530, %v5956, 0
    %v6121 = vsel %vm2530, %v5580, 0
    %6123 = vmatpush.xpose.msra.mxu0 0.0
    %6124 = vmatpush.xpose.msra.mxu0 0.0
    %6125 = vmatpush.xpose.msra.mxu0 0.0
    %6126 = vmatpush.xpose.msra.mxu0 0.0
    %6127 = vmatpush.xpose.msra.mxu0 0.0
    %6128 = vmatpush.xpose.msra.mxu0 0.0
    %6129 = vmatpush.xpose.msra.mxu0 0.0
    %6130 = vmatpush.xpose.msra.mxu0 0.0
    %6131 = vmatpush.xpose.msra.mxu0 0.0
    %6132 = vmatpush.xpose.msra.mxu0 0.0
    %6133 = vmatpush.xpose.msra.mxu0 0.0
    %6134 = vmatpush.xpose.msra.mxu0 0.0
    %6135 = vmatpush.xpose.msra.mxu0 0.0
    %6136 = vmatpush.xpose.msra.mxu0 0.0
    %6137 = vmatpush.xpose.msra.mxu0 0.0
    %6138 = vmatpush.xpose.msra.mxu0 %v6121
    %6139 = vmatmul.f32.gmra.mxu0 %v6118
    %v6140 = vpop.f32.mrf.mxu0
    %v6141 = vadd.f32 0.0, %v6140
    %6142 = vdwg.mxu0
    %v6144 = vsel %vm2530, %v5971, 0
    %v6147 = vsel %vm2530, %v5581, 0
    %6149 = vmatpush.xpose.msra.mxu0 0.0
    %6150 = vmatpush.xpose.msra.mxu0 0.0
    %6151 = vmatpush.xpose.msra.mxu0 0.0
    %6152 = vmatpush.xpose.msra.mxu0 0.0
    %6153 = vmatpush.xpose.msra.mxu0 0.0
    %6154 = vmatpush.xpose.msra.mxu0 0.0
    %6155 = vmatpush.xpose.msra.mxu0 0.0
    %6156 = vmatpush.xpose.msra.mxu0 0.0
    %6157 = vmatpush.xpose.msra.mxu0 0.0
    %6158 = vmatpush.xpose.msra.mxu0 0.0
    %6159 = vmatpush.xpose.msra.mxu0 0.0
    %6160 = vmatpush.xpose.msra.mxu0 0.0
    %6161 = vmatpush.xpose.msra.mxu0 0.0
    %6162 = vmatpush.xpose.msra.mxu0 0.0
    %6163 = vmatpush.xpose.msra.mxu0 0.0
    %6164 = vmatpush.xpose.msra.mxu0 %v6147
    %6165 = vmatmul.f32.gmra.mxu0 %v6144
    %v6166 = vpop.f32.mrf.mxu0
    %v6167 = vadd.f32 0.0, %v6166
    %6168 = vdwg.mxu0
    %v6170 = vsel %vm2530, %v5986, 0
    %v6173 = vsel %vm2530, %v5582, 0
    %6175 = vmatpush.xpose.msra.mxu0 0.0
    %6176 = vmatpush.xpose.msra.mxu0 0.0
    %6177 = vmatpush.xpose.msra.mxu0 0.0
    %6178 = vmatpush.xpose.msra.mxu0 0.0
    %6179 = vmatpush.xpose.msra.mxu0 0.0
    %6180 = vmatpush.xpose.msra.mxu0 0.0
    %6181 = vmatpush.xpose.msra.mxu0 0.0
    %6182 = vmatpush.xpose.msra.mxu0 0.0
    %6183 = vmatpush.xpose.msra.mxu0 0.0
    %6184 = vmatpush.xpose.msra.mxu0 0.0
    %6185 = vmatpush.xpose.msra.mxu0 0.0
    %6186 = vmatpush.xpose.msra.mxu0 0.0
    %6187 = vmatpush.xpose.msra.mxu0 0.0
    %6188 = vmatpush.xpose.msra.mxu0 0.0
    %6189 = vmatpush.xpose.msra.mxu0 0.0
    %6190 = vmatpush.xpose.msra.mxu0 %v6173
    %6191 = vmatmul.f32.gmra.mxu0 %v6170
    %v6192 = vpop.f32.mrf.mxu0
    %v6193 = vadd.f32 0.0, %v6192
    %6194 = vdwg.mxu0
    %6195 = vxpose.xlu0.b32.start [1/16] %v6011, 128
    %6196 = vxpose.xlu0.b32.cont [2/16] 0.0, 128
    %6197 = vxpose.xlu0.b32.cont [3/16] 0.0, 128
    %6198 = vxpose.xlu0.b32.cont [4/16] 0.0, 128
    %6199 = vxpose.xlu0.b32.cont [5/16] 0.0, 128
    %6200 = vxpose.xlu0.b32.cont [6/16] 0.0, 128
    %6201 = vxpose.xlu0.b32.cont [7/16] 0.0, 128
    %6202 = vxpose.xlu0.b32.cont [8/16] 0.0, 128
    %6203 = vxpose.xlu0.b32.cont [9/16] 0.0, 128
    %6204 = vxpose.xlu0.b32.cont [10/16] 0.0, 128
    %6205 = vxpose.xlu0.b32.cont [11/16] 0.0, 128
    %6206 = vxpose.xlu0.b32.cont [12/16] 0.0, 128
    %6207 = vxpose.xlu0.b32.cont [13/16] 0.0, 128
    %6208 = vxpose.xlu0.b32.cont [14/16] 0.0, 128
    %6209 = vxpose.xlu0.b32.cont [15/16] 0.0, 128
    %6210 = vxpose.xlu0.b32.end [16/16] 0.0, 128
    %v6211 = vpop.trf.xlu0
    %v6212 = vpop.trf.xlu0
    %v6213 = vpop.trf.xlu0
    %v6214 = vpop.trf.xlu0
    %v6215 = vpop.trf.xlu0
    %v6216 = vpop.trf.xlu0
    %v6217 = vpop.trf.xlu0
    %v6218 = vpop.trf.xlu0
    %v6219 = vpop.trf.xlu0
    %v6220 = vpop.trf.xlu0
    %v6221 = vpop.trf.xlu0
    %v6222 = vpop.trf.xlu0
    %v6223 = vpop.trf.xlu0
    %v6224 = vpop.trf.xlu0
    %v6225 = vpop.trf.xlu0
    %v6226 = vpop.trf.xlu0
    %6227 = vxpose.xlu0.b32.start [1/16] %v6037, 128
    %6228 = vxpose.xlu0.b32.cont [2/16] 0.0, 128
    %6229 = vxpose.xlu0.b32.cont [3/16] 0.0, 128
    %6230 = vxpose.xlu0.b32.cont [4/16] 0.0, 128
    %6231 = vxpose.xlu0.b32.cont [5/16] 0.0, 128
    %6232 = vxpose.xlu0.b32.cont [6/16] 0.0, 128
    %6233 = vxpose.xlu0.b32.cont [7/16] 0.0, 128
    %6234 = vxpose.xlu0.b32.cont [8/16] 0.0, 128
    %6235 = vxpose.xlu0.b32.cont [9/16] 0.0, 128
    %6236 = vxpose.xlu0.b32.cont [10/16] 0.0, 128
    %6237 = vxpose.xlu0.b32.cont [11/16] 0.0, 128
    %6238 = vxpose.xlu0.b32.cont [12/16] 0.0, 128
    %6239 = vxpose.xlu0.b32.cont [13/16] 0.0, 128
    %6240 = vxpose.xlu0.b32.cont [14/16] 0.0, 128
    %6241 = vxpose.xlu0.b32.cont [15/16] 0.0, 128
    %6242 = vxpose.xlu0.b32.end [16/16] 0.0, 128
    %v6243 = vpop.trf.xlu0
    %v6244 = vpop.trf.xlu0
    %v6245 = vpop.trf.xlu0
    %v6246 = vpop.trf.xlu0
    %v6247 = vpop.trf.xlu0
    %v6248 = vpop.trf.xlu0
    %v6249 = vpop.trf.xlu0
    %v6250 = vpop.trf.xlu0
    %v6251 = vpop.trf.xlu0
    %v6252 = vpop.trf.xlu0
    %v6253 = vpop.trf.xlu0
    %v6254 = vpop.trf.xlu0
    %v6255 = vpop.trf.xlu0
    %v6256 = vpop.trf.xlu0
    %v6257 = vpop.trf.xlu0
    %v6258 = vpop.trf.xlu0
    %6259 = vxpose.xlu0.b32.start [1/16] %v6063, 128
    %6260 = vxpose.xlu0.b32.cont [2/16] 0.0, 128
    %6261 = vxpose.xlu0.b32.cont [3/16] 0.0, 128
    %6262 = vxpose.xlu0.b32.cont [4/16] 0.0, 128
    %6263 = vxpose.xlu0.b32.cont [5/16] 0.0, 128
    %6264 = vxpose.xlu0.b32.cont [6/16] 0.0, 128
    %6265 = vxpose.xlu0.b32.cont [7/16] 0.0, 128
    %6266 = vxpose.xlu0.b32.cont [8/16] 0.0, 128
    %6267 = vxpose.xlu0.b32.cont [9/16] 0.0, 128
    %6268 = vxpose.xlu0.b32.cont [10/16] 0.0, 128
    %6269 = vxpose.xlu0.b32.cont [11/16] 0.0, 128
    %6270 = vxpose.xlu0.b32.cont [12/16] 0.0, 128
    %6271 = vxpose.xlu0.b32.cont [13/16] 0.0, 128
    %6272 = vxpose.xlu0.b32.cont [14/16] 0.0, 128
    %6273 = vxpose.xlu0.b32.cont [15/16] 0.0, 128
    %6274 = vxpose.xlu0.b32.end [16/16] 0.0, 128
    %v6275 = vpop.trf.xlu0
    %v6276 = vpop.trf.xlu0
    %v6277 = vpop.trf.xlu0
    %v6278 = vpop.trf.xlu0
    %v6279 = vpop.trf.xlu0
    %v6280 = vpop.trf.xlu0
    %v6281 = vpop.trf.xlu0
    %v6282 = vpop.trf.xlu0
    %v6283 = vpop.trf.xlu0
    %v6284 = vpop.trf.xlu0
    %v6285 = vpop.trf.xlu0
    %v6286 = vpop.trf.xlu0
    %v6287 = vpop.trf.xlu0
    %v6288 = vpop.trf.xlu0
    %v6289 = vpop.trf.xlu0
    %v6290 = vpop.trf.xlu0
    %6291 = vxpose.xlu0.b32.start [1/16] %v6089, 128
    %6292 = vxpose.xlu0.b32.cont [2/16] 0.0, 128
    %6293 = vxpose.xlu0.b32.cont [3/16] 0.0, 128
    %6294 = vxpose.xlu0.b32.cont [4/16] 0.0, 128
    %6295 = vxpose.xlu0.b32.cont [5/16] 0.0, 128
    %6296 = vxpose.xlu0.b32.cont [6/16] 0.0, 128
    %6297 = vxpose.xlu0.b32.cont [7/16] 0.0, 128
    %6298 = vxpose.xlu0.b32.cont [8/16] 0.0, 128
    %6299 = vxpose.xlu0.b32.cont [9/16] 0.0, 128
    %6300 = vxpose.xlu0.b32.cont [10/16] 0.0, 128
    %6301 = vxpose.xlu0.b32.cont [11/16] 0.0, 128
    %6302 = vxpose.xlu0.b32.cont [12/16] 0.0, 128
    %6303 = vxpose.xlu0.b32.cont [13/16] 0.0, 128
    %6304 = vxpose.xlu0.b32.cont [14/16] 0.0, 128
    %6305 = vxpose.xlu0.b32.cont [15/16] 0.0, 128
    %6306 = vxpose.xlu0.b32.end [16/16] 0.0, 128
    %v6307 = vpop.trf.xlu0
    %v6308 = vpop.trf.xlu0
    %v6309 = vpop.trf.xlu0
    %v6310 = vpop.trf.xlu0
    %v6311 = vpop.trf.xlu0
    %v6312 = vpop.trf.xlu0
    %v6313 = vpop.trf.xlu0
    %v6314 = vpop.trf.xlu0
    %v6315 = vpop.trf.xlu0
    %v6316 = vpop.trf.xlu0
    %v6317 = vpop.trf.xlu0
    %v6318 = vpop.trf.xlu0
    %v6319 = vpop.trf.xlu0
    %v6320 = vpop.trf.xlu0
    %v6321 = vpop.trf.xlu0
    %v6322 = vpop.trf.xlu0
    %6323 = vxpose.xlu0.b32.start [1/16] %v6115, 128
    %6324 = vxpose.xlu0.b32.cont [2/16] 0.0, 128
    %6325 = vxpose.xlu0.b32.cont [3/16] 0.0, 128
    %6326 = vxpose.xlu0.b32.cont [4/16] 0.0, 128
    %6327 = vxpose.xlu0.b32.cont [5/16] 0.0, 128
    %6328 = vxpose.xlu0.b32.cont [6/16] 0.0, 128
    %6329 = vxpose.xlu0.b32.cont [7/16] 0.0, 128
    %6330 = vxpose.xlu0.b32.cont [8/16] 0.0, 128
    %6331 = vxpose.xlu0.b32.cont [9/16] 0.0, 128
    %6332 = vxpose.xlu0.b32.cont [10/16] 0.0, 128
    %6333 = vxpose.xlu0.b32.cont [11/16] 0.0, 128
    %6334 = vxpose.xlu0.b32.cont [12/16] 0.0, 128
    %6335 = vxpose.xlu0.b32.cont [13/16] 0.0, 128
    %6336 = vxpose.xlu0.b32.cont [14/16] 0.0, 128
    %6337 = vxpose.xlu0.b32.cont [15/16] 0.0, 128
    %6338 = vxpose.xlu0.b32.end [16/16] 0.0, 128
    %v6339 = vpop.trf.xlu0
    %v6340 = vpop.trf.xlu0
    %v6341 = vpop.trf.xlu0
    %v6342 = vpop.trf.xlu0
    %v6343 = vpop.trf.xlu0
    %v6344 = vpop.trf.xlu0
    %v6345 = vpop.trf.xlu0
    %v6346 = vpop.trf.xlu0
    %v6347 = vpop.trf.xlu0
    %v6348 = vpop.trf.xlu0
    %v6349 = vpop.trf.xlu0
    %v6350 = vpop.trf.xlu0
    %v6351 = vpop.trf.xlu0
    %v6352 = vpop.trf.xlu0
    %v6353 = vpop.trf.xlu0
    %v6354 = vpop.trf.xlu0
    %6355 = vxpose.xlu0.b32.start [1/16] %v6141, 128
    %6356 = vxpose.xlu0.b32.cont [2/16] 0.0, 128
    %6357 = vxpose.xlu0.b32.cont [3/16] 0.0, 128
    %6358 = vxpose.xlu0.b32.cont [4/16] 0.0, 128
    %6359 = vxpose.xlu0.b32.cont [5/16] 0.0, 128
    %6360 = vxpose.xlu0.b32.cont [6/16] 0.0, 128
    %6361 = vxpose.xlu0.b32.cont [7/16] 0.0, 128
    %6362 = vxpose.xlu0.b32.cont [8/16] 0.0, 128
    %6363 = vxpose.xlu0.b32.cont [9/16] 0.0, 128
    %6364 = vxpose.xlu0.b32.cont [10/16] 0.0, 128
    %6365 = vxpose.xlu0.b32.cont [11/16] 0.0, 128
    %6366 = vxpose.xlu0.b32.cont [12/16] 0.0, 128
    %6367 = vxpose.xlu0.b32.cont [13/16] 0.0, 128
    %6368 = vxpose.xlu0.b32.cont [14/16] 0.0, 128
    %6369 = vxpose.xlu0.b32.cont [15/16] 0.0, 128
    %6370 = vxpose.xlu0.b32.end [16/16] 0.0, 128
    %v6371 = vpop.trf.xlu0
    %v6372 = vpop.trf.xlu0
    %v6373 = vpop.trf.xlu0
    %v6374 = vpop.trf.xlu0
    %v6375 = vpop.trf.xlu0
    %v6376 = vpop.trf.xlu0
    %v6377 = vpop.trf.xlu0
    %v6378 = vpop.trf.xlu0
    %v6379 = vpop.trf.xlu0
    %v6380 = vpop.trf.xlu0
    %v6381 = vpop.trf.xlu0
    %v6382 = vpop.trf.xlu0
    %v6383 = vpop.trf.xlu0
    %v6384 = vpop.trf.xlu0
    %v6385 = vpop.trf.xlu0
    %v6386 = vpop.trf.xlu0
    %6387 = vxpose.xlu0.b32.start [1/16] %v6167, 128
    %6388 = vxpose.xlu0.b32.cont [2/16] 0.0, 128
    %6389 = vxpose.xlu0.b32.cont [3/16] 0.0, 128
    %6390 = vxpose.xlu0.b32.cont [4/16] 0.0, 128
    %6391 = vxpose.xlu0.b32.cont [5/16] 0.0, 128
    %6392 = vxpose.xlu0.b32.cont [6/16] 0.0, 128
    %6393 = vxpose.xlu0.b32.cont [7/16] 0.0, 128
    %6394 = vxpose.xlu0.b32.cont [8/16] 0.0, 128
    %6395 = vxpose.xlu0.b32.cont [9/16] 0.0, 128
    %6396 = vxpose.xlu0.b32.cont [10/16] 0.0, 128
    %6397 = vxpose.xlu0.b32.cont [11/16] 0.0, 128
    %6398 = vxpose.xlu0.b32.cont [12/16] 0.0, 128
    %6399 = vxpose.xlu0.b32.cont [13/16] 0.0, 128
    %6400 = vxpose.xlu0.b32.cont [14/16] 0.0, 128
    %6401 = vxpose.xlu0.b32.cont [15/16] 0.0, 128
    %6402 = vxpose.xlu0.b32.end [16/16] 0.0, 128
    %v6403 = vpop.trf.xlu0
    %v6404 = vpop.trf.xlu0
    %v6405 = vpop.trf.xlu0
    %v6406 = vpop.trf.xlu0
    %v6407 = vpop.trf.xlu0
    %v6408 = vpop.trf.xlu0
    %v6409 = vpop.trf.xlu0
    %v6410 = vpop.trf.xlu0
    %v6411 = vpop.trf.xlu0
    %v6412 = vpop.trf.xlu0
    %v6413 = vpop.trf.xlu0
    %v6414 = vpop.trf.xlu0
    %v6415 = vpop.trf.xlu0
    %v6416 = vpop.trf.xlu0
    %v6417 = vpop.trf.xlu0
    %v6418 = vpop.trf.xlu0
    %6419 = vxpose.xlu0.b32.start [1/16] %v6193, 128
    %6420 = vxpose.xlu0.b32.cont [2/16] 0.0, 128
    %6421 = vxpose.xlu0.b32.cont [3/16] 0.0, 128
    %6422 = vxpose.xlu0.b32.cont [4/16] 0.0, 128
    %6423 = vxpose.xlu0.b32.cont [5/16] 0.0, 128
    %6424 = vxpose.xlu0.b32.cont [6/16] 0.0, 128
    %6425 = vxpose.xlu0.b32.cont [7/16] 0.0, 128
    %6426 = vxpose.xlu0.b32.cont [8/16] 0.0, 128
    %6427 = vxpose.xlu0.b32.cont [9/16] 0.0, 128
    %6428 = vxpose.xlu0.b32.cont [10/16] 0.0, 128
    %6429 = vxpose.xlu0.b32.cont [11/16] 0.0, 128
    %6430 = vxpose.xlu0.b32.cont [12/16] 0.0, 128
    %6431 = vxpose.xlu0.b32.cont [13/16] 0.0, 128
    %6432 = vxpose.xlu0.b32.cont [14/16] 0.0, 128
    %6433 = vxpose.xlu0.b32.cont [15/16] 0.0, 128
    %6434 = vxpose.xlu0.b32.end [16/16] 0.0, 128
    %v6435 = vpop.trf.xlu0
    %v6436 = vpop.trf.xlu0
    %v6437 = vpop.trf.xlu0
    %v6438 = vpop.trf.xlu0
    %v6439 = vpop.trf.xlu0
    %v6440 = vpop.trf.xlu0
    %v6441 = vpop.trf.xlu0
    %v6442 = vpop.trf.xlu0
    %v6443 = vpop.trf.xlu0
    %v6444 = vpop.trf.xlu0
    %v6445 = vpop.trf.xlu0
    %v6446 = vpop.trf.xlu0
    %v6447 = vpop.trf.xlu0
    %v6448 = vpop.trf.xlu0
    %v6449 = vpop.trf.xlu0
    %v6450 = vpop.trf.xlu0
    %6451 = vxpose.xlu0.b32.start [1/16] %v6211, 128
    %6452 = vxpose.xlu0.b32.cont [2/16] %v6243, 128
    %6453 = vxpose.xlu0.b32.cont [3/16] %v6275, 128
    %6454 = vxpose.xlu0.b32.cont [4/16] %v6307, 128
    %6455 = vxpose.xlu0.b32.cont [5/16] 0.0, 128
    %6456 = vxpose.xlu0.b32.cont [6/16] 0.0, 128
    %6457 = vxpose.xlu0.b32.cont [7/16] 0.0, 128
    %6458 = vxpose.xlu0.b32.cont [8/16] 0.0, 128
    %6459 = vxpose.xlu0.b32.cont [9/16] 0.0, 128
    %6460 = vxpose.xlu0.b32.cont [10/16] 0.0, 128
    %6461 = vxpose.xlu0.b32.cont [11/16] 0.0, 128
    %6462 = vxpose.xlu0.b32.cont [12/16] 0.0, 128
    %6463 = vxpose.xlu0.b32.cont [13/16] 0.0, 128
    %6464 = vxpose.xlu0.b32.cont [14/16] 0.0, 128
    %6465 = vxpose.xlu0.b32.cont [15/16] 0.0, 128
    %6466 = vxpose.xlu0.b32.end [16/16] 0.0, 128
    %v6467 = vpop.trf.xlu0
    %v6468 = vpop.trf.xlu0
    %v6469 = vpop.trf.xlu0
    %v6470 = vpop.trf.xlu0
    %v6471 = vpop.trf.xlu0
    %v6472 = vpop.trf.xlu0
    %v6473 = vpop.trf.xlu0
    %v6474 = vpop.trf.xlu0
    %v6475 = vpop.trf.xlu0
    %v6476 = vpop.trf.xlu0
    %v6477 = vpop.trf.xlu0
    %v6478 = vpop.trf.xlu0
    %v6479 = vpop.trf.xlu0
    %v6480 = vpop.trf.xlu0
    %v6481 = vpop.trf.xlu0
    %v6482 = vpop.trf.xlu0
    %6483 = vxpose.xlu0.b32.start [1/16] %v6339, 128
    %6484 = vxpose.xlu0.b32.cont [2/16] %v6371, 128
    %6485 = vxpose.xlu0.b32.cont [3/16] %v6403, 128
    %6486 = vxpose.xlu0.b32.cont [4/16] %v6435, 128
    %6487 = vxpose.xlu0.b32.cont [5/16] 0.0, 128
    %6488 = vxpose.xlu0.b32.cont [6/16] 0.0, 128
    %6489 = vxpose.xlu0.b32.cont [7/16] 0.0, 128
    %6490 = vxpose.xlu0.b32.cont [8/16] 0.0, 128
    %6491 = vxpose.xlu0.b32.cont [9/16] 0.0, 128
    %6492 = vxpose.xlu0.b32.cont [10/16] 0.0, 128
    %6493 = vxpose.xlu0.b32.cont [11/16] 0.0, 128
    %6494 = vxpose.xlu0.b32.cont [12/16] 0.0, 128
    %6495 = vxpose.xlu0.b32.cont [13/16] 0.0, 128
    %6496 = vxpose.xlu0.b32.cont [14/16] 0.0, 128
    %6497 = vxpose.xlu0.b32.cont [15/16] 0.0, 128
    %6498 = vxpose.xlu0.b32.end [16/16] 0.0, 128
    %v6499 = vpop.trf.xlu0
    %v6500 = vpop.trf.xlu0
    %v6501 = vpop.trf.xlu0
    %v6502 = vpop.trf.xlu0
    %v6503 = vpop.trf.xlu0
    %v6504 = vpop.trf.xlu0
    %v6505 = vpop.trf.xlu0
    %v6506 = vpop.trf.xlu0
    %v6507 = vpop.trf.xlu0
    %v6508 = vpop.trf.xlu0
    %v6509 = vpop.trf.xlu0
    %v6510 = vpop.trf.xlu0
    %v6511 = vpop.trf.xlu0
    %v6512 = vpop.trf.xlu0
    %v6513 = vpop.trf.xlu0
    %v6514 = vpop.trf.xlu0
    %v6515 = vperm.slane %v3520, 3
    %v6517 = vsel %vm203, %v6467, 0
    %v6520 = vsel %vm203, %v6499, 0
    %6522 = vmatpush.msra.mxu0 0.0
    %6523 = vmatpush.msra.mxu0 0.0
    %6524 = vmatpush.msra.mxu0 0.0
    %6525 = vmatpush.msra.mxu0 0.0
    %6526 = vmatpush.msra.mxu0 0.0
    %6527 = vmatpush.msra.mxu0 0.0
    %6528 = vmatpush.msra.mxu0 0.0
    %6529 = vmatpush.msra.mxu0 0.0
    %6530 = vmatpush.msra.mxu0 0.0
    %6531 = vmatpush.msra.mxu0 0.0
    %6532 = vmatpush.msra.mxu0 0.0
    %6533 = vmatpush.msra.mxu0 0.0
    %6534 = vmatpush.msra.mxu0 %v3518
    %6535 = vmatpush.msra.mxu0 %v3517
    %6536 = vmatpush.msra.mxu0 %v3516
    %6537 = vmatpush.msra.mxu0 %v3515
    %6538 = vmatmul.f32.gmra.mxu0 %v6517
    %v6539 = vpop.f32.mrf.mxu0
    %v6540 = vadd.f32 %v6515, %v6539
    %6541 = vmatmul.f32.gmra.mxu0 %v6520
    %v6542 = vpop.f32.mrf.mxu0
    %v6543 = vadd.f32 %v6515, %v6542
    %6544 = vdwg.mxu0
    %v6545 = vadd.f32 %v5003, %v6540
    %v6546 = vadd.f32 %v5004, %v6543
    %v6547 = vsel %vm203, %v6545, 0.0
    %6548 = vadd.xlane.f32.xlu0 %v6547
    %v6549 = vpop.xlane.xlu0 %6548
    %v6550 = vsel %vm203, %v6546, 0.0
    %6551 = vadd.xlane.f32.xlu0 %v6550
    %v6552 = vpop.xlane.xlu0 %6551
    %v6553 = vmul.f32 %v6549, %v199
    %v6554 = vmul.f32 %v6552, %v199
    %v6555 = vsub.f32 %v6545, %v6553
    %v6556 = vsub.f32 %v6546, %v6554
    %v6557 = vmul.f32 %v6555, %v6555
    %v6558 = vmul.f32 %v6556, %v6556
    %v6559 = vsel %vm203, %v6557, 0.0
    %6560 = vadd.xlane.f32.xlu0 %v6559
    %v6561 = vpop.xlane.xlu0 %6560
    %v6562 = vsel %vm203, %v6558, 0.0
    %6563 = vadd.xlane.f32.xlu0 %v6562
    %v6564 = vpop.xlane.xlu0 %6563
    %v6565 = vmul.f32 %v6561, %v199
    %v6566 = vmul.f32 %v6564, %v199
    %v6567 = vadd.f32 %v6565, 1e-05
    %v6568 = vadd.f32 %v6566, 1e-05
    %v6569 = vrsqrt.pop %v6567
    %v6570 = vmul.f32 %v6569, %v6567
    %v6571 = vmul.f32 %v6570, %v6569
    %v6572 = vmul.f32 0.5, %v6571
    %v6573 = vsub.f32 1.5, %v6572
    %v6574 = vmul.f32 %v6569, %v6573
    %vm6575 = vweird.f32 %v6567
    %vm6576 = vweird.f32 %v6569
    %vm6577 = vmor %vm6575, %vm6576
    %v6578 = vsel %vm6577, %v6569, %v6574
    %v6579 = vrsqrt.pop %v6568
    %v6580 = vmul.f32 %v6579, %v6568
    %v6581 = vmul.f32 %v6580, %v6579
    %v6582 = vmul.f32 0.5, %v6581
    %v6583 = vsub.f32 1.5, %v6582
    %v6584 = vmul.f32 %v6579, %v6583
    %vm6585 = vweird.f32 %v6568
    %vm6586 = vweird.f32 %v6579
    %vm6587 = vmor %vm6585, %vm6586
    %v6588 = vsel %vm6587, %v6579, %v6584
    %v6589 = vmul.f32 %v6555, %v6578
    %v6590 = vmul.f32 %v6556, %v6588
    %v6591 = vperm.slane %v3482, 4
    %v6592 = vmul.f32 %v6589, %v6591
    %v6593 = vmul.f32 %v6590, %v6591
    %v6594 = vperm.slane %v3482, 5
    %v6595 = vadd.f32 %v6592, %v6594
    %v6596 = vadd.f32 %v6593, %v6594
    %s6597 = scalar_lea.vmem %s10, 32
    %v6598 = vld [vmem:[%s6597] sm:$0xff]
    %v6599 = vld [vmem:[%s6597 + $0x8] sm:$0xff]
    %v6600 = vld [vmem:[%s6597 + $0x10] sm:$0xff]
    %v6601 = vld [vmem:[%s6597 + $0x18] sm:$0xff]
    %v6602 = vld [vmem:[#allocation9 + $0x1] sm:$0x1]
    %v6603 = vperm.slane %v6602, 0
    %v6605 = vsel %vm203, %v6595, 0
    %v6608 = vsel %vm203, %v6596, 0
    %6610 = vmatpush.msra.mxu0 0.0
    %6611 = vmatpush.msra.mxu0 0.0
    %6612 = vmatpush.msra.mxu0 0.0
    %6613 = vmatpush.msra.mxu0 0.0
    %6614 = vmatpush.msra.mxu0 0.0
    %6615 = vmatpush.msra.mxu0 0.0
    %6616 = vmatpush.msra.mxu0 0.0
    %6617 = vmatpush.msra.mxu0 0.0
    %6618 = vmatpush.msra.mxu0 0.0
    %6619 = vmatpush.msra.mxu0 0.0
    %6620 = vmatpush.msra.mxu0 0.0
    %6621 = vmatpush.msra.mxu0 0.0
    %6622 = vmatpush.msra.mxu0 %v6601
    %6623 = vmatpush.msra.mxu0 %v6600
    %6624 = vmatpush.msra.mxu0 %v6599
    %6625 = vmatpush.msra.mxu0 %v6598
    %6626 = vmatmul.f32.gmra.mxu0 %v6605
    %v6627 = vpop.f32.mrf.mxu0
    %v6628 = vadd.f32 %v6603, %v6627
    %6629 = vmatmul.f32.gmra.mxu0 %v6608
    %v6630 = vpop.f32.mrf.mxu0
    %v6631 = vadd.f32 %v6603, %v6630
    %6632 = vdwg.mxu0
    %v6633 = vmul.f32 %v6628, %v6628
    %v6634 = vmul.f32 %v6631, %v6631
    %v6635 = vmul.f32 %v6628, %v6633
    %v6636 = vmul.f32 %v6631, %v6634
    %v6637 = vmul.f32 %v6635, 0.044715
    %v6638 = vmul.f32 %v6636, 0.044715
    %v6639 = vadd.f32 %v6628, %v6637
    %v6640 = vadd.f32 %v6631, %v6638
    %v6641 = vmul.f32 %v6639, 0.7978846
    %v6642 = vmul.f32 %v6640, 0.7978846
    %v6643 = vtanh.pop %v6641
    %v6644 = vtanh.pop %v6642
    %v6645 = vadd.f32 %v6643, 1.0
    %v6646 = vadd.f32 %v6644, 1.0
    %v6647 = vmul.f32 %v6645, 0.5
    %v6648 = vmul.f32 %v6646, 0.5
    %v6649 = vmul.f32 %v6628, %v6647
    %v6650 = vmul.f32 %v6631, %v6648
    %s6651 = scalar_lea.vmem %s12, 128
    %v6652 = vld [vmem:[%s6651] sm:$0xff]
    %v6653 = vld [vmem:[%s6651 + $0x8] sm:$0xff]
    %v6654 = vld [vmem:[%s6651 + $0x10] sm:$0xff]
    %v6655 = vld [vmem:[%s6651 + $0x18] sm:$0xff]
    %v6656 = vld [vmem:[%s6651 + $0x20] sm:$0xff]
    %v6657 = vld [vmem:[%s6651 + $0x28] sm:$0xff]
    %v6658 = vld [vmem:[%s6651 + $0x30] sm:$0xff]
    %v6659 = vld [vmem:[%s6651 + $0x38] sm:$0xff]
    %v6660 = vld [vmem:[%s6651 + $0x40] sm:$0xff]
    %v6661 = vld [vmem:[%s6651 + $0x48] sm:$0xff]
    %v6662 = vld [vmem:[%s6651 + $0x50] sm:$0xff]
    %v6663 = vld [vmem:[%s6651 + $0x58] sm:$0xff]
    %v6664 = vld [vmem:[%s6651 + $0x60] sm:$0xff]
    %v6665 = vld [vmem:[%s6651 + $0x68] sm:$0xff]
    %v6666 = vld [vmem:[%s6651 + $0x70] sm:$0xff]
    %v6667 = vld [vmem:[%s6651 + $0x78] sm:$0xff]
    %v6668 = vld [vmem:[#allocation10 + $0x1] sm:$0x1]
    %v6669 = vperm.slane %v6668, 0
    %6670 = vmatpush.msra.mxu0 %v6667
    %6671 = vmatpush.msra.mxu0 %v6666
    %6672 = vmatpush.msra.mxu0 %v6665
    %6673 = vmatpush.msra.mxu0 %v6664
    %6674 = vmatpush.msra.mxu0 %v6663
    %6675 = vmatpush.msra.mxu0 %v6662
    %6676 = vmatpush.msra.mxu0 %v6661
    %6677 = vmatpush.msra.mxu0 %v6660
    %6678 = vmatpush.msra.mxu0 %v6659
    %6679 = vmatpush.msra.mxu0 %v6658
    %6680 = vmatpush.msra.mxu0 %v6657
    %6681 = vmatpush.msra.mxu0 %v6656
    %6682 = vmatpush.msra.mxu0 %v6655
    %6683 = vmatpush.msra.mxu0 %v6654
    %6684 = vmatpush.msra.mxu0 %v6653
    %6685 = vmatpush.msra.mxu0 %v6652
    %6686 = vmatmul.f32.gmra.mxu0 %v6649
    %v6687 = vpop.f32.mrf.mxu0
    %v6688 = vadd.f32 %v6669, %v6687
    %6689 = vmatmul.f32.gmra.mxu0 %v6650
    %v6690 = vpop.f32.mrf.mxu0
    %v6691 = vadd.f32 %v6669, %v6690
    %6692 = vdwg.mxu0
    %v6693 = vadd.f32 %v6545, %v6688
    %v6694 = vadd.f32 %v6546, %v6691
    %v6695 = vsel %vm203, %v6693, 0.0
    %6696 = vadd.xlane.f32.xlu0 %v6695
    %v6697 = vpop.xlane.xlu0 %6696
    %v6698 = vsel %vm203, %v6694, 0.0
    %6699 = vadd.xlane.f32.xlu0 %v6698
    %v6700 = vpop.xlane.xlu0 %6699
    %v6701 = vmul.f32 %v6697, %v199
    %v6702 = vmul.f32 %v6700, %v199
    %v6703 = vsub.f32 %v6693, %v6701
    %v6704 = vsub.f32 %v6694, %v6702
    %v6705 = vmul.f32 %v6703, %v6703
    %v6706 = vmul.f32 %v6704, %v6704
    %v6707 = vsel %vm203, %v6705, 0.0
    %6708 = vadd.xlane.f32.xlu0 %v6707
    %v6709 = vpop.xlane.xlu0 %6708
    %v6710 = vsel %vm203, %v6706, 0.0
    %6711 = vadd.xlane.f32.xlu0 %v6710
    %v6712 = vpop.xlane.xlu0 %6711
    %v6713 = vmul.f32 %v6709, %v199
    %v6714 = vmul.f32 %v6712, %v199
    %v6715 = vadd.f32 %v6713, 1e-05
    %v6716 = vadd.f32 %v6714, 1e-05
    %v6717 = vrsqrt.pop %v6715
    %v6718 = vmul.f32 %v6717, %v6715
    %v6719 = vmul.f32 %v6718, %v6717
    %v6720 = vmul.f32 0.5, %v6719
    %v6721 = vsub.f32 1.5, %v6720
    %v6722 = vmul.f32 %v6717, %v6721
    %vm6723 = vweird.f32 %v6715
    %vm6724 = vweird.f32 %v6717
    %vm6725 = vmor %vm6723, %vm6724
    %v6726 = vsel %vm6725, %v6717, %v6722
    %v6727 = vrsqrt.pop %v6716
    %v6728 = vmul.f32 %v6727, %v6716
    %v6729 = vmul.f32 %v6728, %v6727
    %v6730 = vmul.f32 0.5, %v6729
    %v6731 = vsub.f32 1.5, %v6730
    %v6732 = vmul.f32 %v6727, %v6731
    %vm6733 = vweird.f32 %v6716
    %vm6734 = vweird.f32 %v6727
    %vm6735 = vmor %vm6733, %vm6734
    %v6736 = vsel %vm6735, %v6727, %v6732
    %v6737 = vmul.f32 %v6703, %v6726
    %v6738 = vmul.f32 %v6704, %v6736
    %v6739 = vmul.f32 %v6737, %v3473
    %v6740 = vmul.f32 %v6738, %v3473
    %v6741 = vadd.f32 %v6739, %v3476
    %v6742 = vadd.f32 %v6740, %v3476
    %s6743 = scalar_lea.vmem %s14, 16
    %6744 = vst.msk [vmem:[%s6743] sm:$0xff] %vm203, %v6741
    %6745 = vst.msk [vmem:[%s6743 + $0x8] sm:$0xff] %vm203, %v6742
    // Predicated region
    $region82: #{detr_decoder.1} parent=1 // pred_check
      _
    $region83: #{detr_decoder.1} parent=1 // pred_check_branch
      %6747 = sbr.rel (0) target = $region85
    $region84: #{detr_decoder.1} parent=1 // pred_region
      _
    $region85: #{detr_decoder.1} parent=1 // pred_fallthru
      _
    // Predicated region
    $region86: #{detr_decoder.1} parent=1 // pred_check
      _
    $region87: #{detr_decoder.1} parent=1 // pred_check_branch
      %6749 = sbr.rel (0) target = $region89
    $region88: #{detr_decoder.1} parent=1 // pred_region
      _
    $region89: #{detr_decoder.1} parent=1 // pred_fallthru
      _
    %6750 = vsyncpa [#allocation3], 1
    %6751 = vsyncpa [#allocation5], 1
    %6752 = vsyncpa [#allocation8], 1
    %6753 = vsyncpa [#allocation11], 1

</llo_original>
